<compile_context>
chip_gen: v5e
topology: v5e:2x2
jax: 0.10.0
libtpu: 0.0.40
codegen_flags: <defaults>
</compile_context>

<pallas_src>
import functools

import jax
import jax.numpy as jnp
import numpy as np
from jax import lax
from jax.experimental import pallas as pl
from jax.experimental.pallas import tpu as pltpu

# Constants from the PyTorch module.
INPUT_CHANNELS = 569
CHANNELS = 128
OUTPUT_BINS = 32
AUX_CHANNELS = 83
DA_CHANNELS = OUTPUT_BINS + AUX_CHANNELS     # merged conv_dist + conv_aux0
KH = 64            # (64, 1) grouped-conv kernel height == H == W
BN_EPS = 1e-5


def _log_softmax(x, axis):
    m = jnp.max(x, axis=axis, keepdims=True)
    s = x - m
    return s - jnp.log(jnp.sum(jnp.exp(s), axis=axis, keepdims=True))


# -----------------------------------------------------------------------------
# Fused kernel.  Grid = (N, H / rows_per_step); each step owns `th` image rows
# (tc = th * 64 pixels) of one image, in channels-first layout.
# -----------------------------------------------------------------------------
def _fused_kernel(x_ref, w1_ref, b1_ref, wda_ref, bda_ref, k_ref, bij_ref,
                  dist_ref, auxij_ref):
    c = pl.program_id(1)
    tc = x_ref.shape[-1]             # pixels per step
    th = tc // KH                    # image rows per step
    shift = KH.bit_length() - 1      # log2(64) = 6
    f32 = jnp.float32

    # --- folded bnInp -> convInp -> bn1, then ReLU (bf16 MXU, f32 acc) ------
    x = x_ref[0].astype(jnp.bfloat16)                                   # (Cin, tc)
    h = jnp.dot(w1_ref[...], x, preferred_element_type=f32)             # (128, tc)
    h = jnp.maximum(h + b1_ref[...], 0.0)

    # --- merged conv_dist + conv_aux0 (f32 for closer parity) ---------------
    da = jnp.dot(wda_ref[...], h, preferred_element_type=f32)           # (115, tc)
    da = da + bda_ref[...]

    # --- dist head: per-pixel log_softmax over 32 bins, lane-dense store ----
    dist_ref[0] = _log_softmax(da[:OUTPUT_BINS], axis=0)

    # --- aux head: depthwise (64,1) conv along W (aux_i) and H (aux_j) ------
    # Lane j of this block is the pixel (h, w) = (c*th + (j >> 6), j & 63).
    # The grouped conv is written as elementwise weighting + matmuls against
    # 0/1 selection matrices built from iota (no HBM traffic, no reshapes);
    # partial sums accumulate in the resident (83, 128) output block.
    aux = da[OUTPUT_BINS:]                                              # (83, tc)
    k = k_ref[...]                                                      # (83, 64)

    one, zero = jnp.float32(1), jnp.float32(0)
    j_r = lax.broadcasted_iota(jnp.int32, (tc, KH), 0)
    o_c = lax.broadcasted_iota(jnp.int32, (tc, KH), 1)
    sel_h = jnp.where((jnp.right_shift(j_r, shift) + c * th) == o_c, one, zero)
    sel_w = jnp.where(jnp.bitwise_and(j_r, KH - 1) == o_c, one, zero)   # (tc, 64)

    o_r = lax.broadcasted_iota(jnp.int32, (KH, tc), 0)
    j_c = lax.broadcasted_iota(jnp.int32, (KH, tc), 1)
    selT_h = jnp.where(o_r == (jnp.right_shift(j_c, shift) + c * th), one, zero)
    selT_w = jnp.where(o_r == jnp.bitwise_and(j_c, KH - 1), one, zero)  # (64, tc)

    kt = jnp.dot(k, selT_w, preferred_element_type=f32)   # (83, tc): k[ch, w(j)]
    kr = jnp.dot(k, selT_h, preferred_element_type=f32)   # (83, tc): k[ch, h(j)]
    di = jnp.dot(aux * kt, sel_h, preferred_element_type=f32)   # (83, 64) aux_i rows of chunk
    dj = jnp.dot(aux * kr, sel_w, preferred_element_type=f32)   # (83, 64) partial aux_j
    contrib = jnp.concatenate([di, dj], axis=1)                 # (83, 128) = [aux_i | aux_j]

    @pl.when(c == 0)
    def _():                                   # init accumulator with the conv bias
        auxij_ref[0] = contrib + bij_ref[...]

    @pl.when(c != 0)
    def _():
        auxij_ref[0] = auxij_ref[0] + contrib

    @pl.when(c == pl.num_programs(1) - 1)
    def _():                                   # one combined per-column log_softmax,
        auxij_ref[0] = _log_softmax(auxij_ref[0], axis=0)   # one 128-lane-dense store


# -----------------------------------------------------------------------------
# Wrapper
# -----------------------------------------------------------------------------
def model_forward(x_nchw, params, *, rows_per_step=16):
    """Forward pass of `Model` (eval-mode BN) as one fused Pallas TPU kernel.

    x_nchw: (N, 569, 64, 64) in float32 or bfloat16 (bf16 halves the dominant
    HBM read of this DMA-bound kernel).
    """
    N, Cin, H, W = x_nchw.shape
    assert Cin == INPUT_CHANNELS
    # TODO(synk): training-mode BatchNorm (batch statistics / running-stat
    # updates) and spatial sizes other than 64x64 are not implemented; the
    # (64,1) grouped conv of the reference module implies 64x64 eval maps.
    assert H == KH and W == KH, "this implementation assumes H == W == 64"
    th = rows_per_step
    assert H % th == 0 and (th * W) % 128 == 0
    tc = th * W
    HW = H * W
    n_chunks = H // th

    f32, bf16 = jnp.float32, jnp.bfloat16

    # --- fold eval-mode BN (bnInp, bn1) into convInp: exact ------------------
    s_in = params["bnInp_gamma"] / jnp.sqrt(params["bnInp_var"] + BN_EPS)
    t_in = params["bnInp_beta"] - params["bnInp_mean"] * s_in
    s1 = params["bn1_gamma"] / jnp.sqrt(params["bn1_var"] + BN_EPS)
    t1 = params["bn1_beta"] - params["bn1_mean"] * s1

    w_inp = params["convInp_w"].astype(f32)                        # (128, 569)
    w1 = (s1[:, None] * w_inp) * s_in[None, :]
    b1 = s1 * (w_inp @ t_in + params["convInp_b"]) + t1

    # --- merge conv_dist + conv_aux0 into one (115, 128) matmul --------------
    w_da = jnp.concatenate([params["conv_dist_w"], params["conv_aux0_w"]],
                           axis=0).astype(f32)
    b_da = jnp.concatenate([params["conv_dist_b"], params["conv_aux0_b"]],
                           axis=0).astype(f32)

    w1_bf = w1.astype(bf16)
    b1_col = b1.reshape(CHANNELS, 1).astype(f32)
    bda_col = b_da.reshape(DA_CHANNELS, 1)
    k_ij = params["conv_aux_ij_w"].astype(f32)                     # (83, 64)
    bij_col = params["conv_aux_ij_b"].reshape(AUX_CHANNELS, 1).astype(f32)

    # Channels-first flat view: pure (free) reshape; caller's dtype is kept so
    # a bf16 producer feeds bf16 straight into the kernel DMA.
    x_cf = x_nchw.reshape(N, Cin, HW)

    const = lambda a: pl.BlockSpec(a.shape, lambda n, c: (0,) * a.ndim)

    dist_cf, aux_ij = pl.pallas_call(
        _fused_kernel,
        out_shape=(jax.ShapeDtypeStruct((N, OUTPUT_BINS, HW), f32),
                   jax.ShapeDtypeStruct((N, AUX_CHANNELS, 2 * KH), f32)),
        grid=(N, n_chunks),
        in_specs=[pl.BlockSpec((1, Cin, tc), lambda n, c: (n, 0, c)),
                  const(w1_bf), const(b1_col), const(w_da), const(bda_col),
                  const(k_ij), const(bij_col)],
        out_specs=[pl.BlockSpec((1, OUTPUT_BINS, tc), lambda n, c: (n, 0, c)),
                   pl.BlockSpec((1, AUX_CHANNELS, 2 * KH), lambda n, c: (n, 0, 0))],
        compiler_params=pltpu.CompilerParams(
            dimension_semantics=("parallel", "arbitrary"),
            vmem_limit_bytes=48 * 1024 * 1024),
    )(x_cf, w1_bf, b1_col, w_da, bda_col, k_ij, bij_col)

    dist_out = dist_cf.reshape(N, OUTPUT_BINS, H, W)       # already NCHW
    aux_i = aux_ij[:, :, None, :KH]                        # (N, 83, 1, H)
    aux_j = aux_ij[:, :, None, KH:]                        # (N, 83, 1, W)
    return (dist_out,
            aux_i[:, :9], aux_j[:, :9],
            aux_i[:, 9:9 + 37], aux_j[:, 9:9 + 37],
            aux_i[:, 9 + 37:9 + 2 * 37], aux_j[:, 9 + 37:9 + 2 * 37])


# -----------------------------------------------------------------------------
# Deterministic parameter init (synthetic — no checkpoint). PyTorch layouts.
# -----------------------------------------------------------------------------
def init_params(key):
    ks = jax.random.split(key, 16)
    f32 = jnp.float32
    n = lambda k, shape, s: (s * jax.random.normal(k, shape)).astype(f32)
    return dict(
        bnInp_gamma=1.0 + n(ks[0], (INPUT_CHANNELS,), 0.1),
        bnInp_beta=n(ks[1], (INPUT_CHANNELS,), 0.1),
        bnInp_mean=n(ks[2], (INPUT_CHANNELS,), 0.1),
        bnInp_var=(0.5 + jax.random.uniform(ks[3], (INPUT_CHANNELS,))).astype(f32),
        convInp_w=n(ks[4], (CHANNELS, INPUT_CHANNELS), 0.05),   # (out, in)
        convInp_b=n(ks[5], (CHANNELS,), 0.05),
        bn1_gamma=1.0 + n(ks[6], (CHANNELS,), 0.1),
        bn1_beta=n(ks[7], (CHANNELS,), 0.1),
        bn1_mean=n(ks[8], (CHANNELS,), 0.1),
        bn1_var=(0.5 + jax.random.uniform(ks[9], (CHANNELS,))).astype(f32),
        conv_dist_w=n(ks[10], (OUTPUT_BINS, CHANNELS), 0.05),
        conv_dist_b=n(ks[11], (OUTPUT_BINS,), 0.05),
        conv_aux0_w=n(ks[12], (AUX_CHANNELS, CHANNELS), 0.05),
        conv_aux0_b=n(ks[13], (AUX_CHANNELS,), 0.05),
        conv_aux_ij_w=n(ks[14], (AUX_CHANNELS, KH), 0.05),      # depthwise K[c, h]
        conv_aux_ij_b=n(ks[15], (AUX_CHANNELS,), 0.05),
    )


# -----------------------------------------------------------------------------
# Pure-JAX f32 reference (same eval-mode BN semantics) for correctness check.
# -----------------------------------------------------------------------------
def reference_forward(x, params):
    f32 = jnp.float32
    x = x.astype(f32)                                            # (N, Cin, H, W)
    s_in = params["bnInp_gamma"] / jnp.sqrt(params["bnInp_var"] + BN_EPS)
    t_in = params["bnInp_beta"] - params["bnInp_mean"] * s_in
    s1 = params["bn1_gamma"] / jnp.sqrt(params["bn1_var"] + BN_EPS)
    t1 = params["bn1_beta"] - params["bn1_mean"] * s1

    xb = x * s_in[None, :, None, None] + t_in[None, :, None, None]
    h = (jnp.einsum("oc,nchw->nohw", params["convInp_w"], xb)
         + params["convInp_b"][None, :, None, None])
    h = jnp.maximum(h * s1[None, :, None, None] + t1[None, :, None, None], 0.0)

    dist = (jnp.einsum("oc,nchw->nohw", params["conv_dist_w"], h)
            + params["conv_dist_b"][None, :, None, None])
    dist_out = _log_softmax(dist, axis=1)

    aux = (jnp.einsum("oc,nchw->nohw", params["conv_aux0_w"], h)
           + params["conv_aux0_b"][None, :, None, None])
    k = params["conv_aux_ij_w"]                                  # (83, 64)
    b = params["conv_aux_ij_b"]
    aux_j = jnp.einsum("nchw,ch->ncw", aux, k) + b[None, :, None]    # (N, 83, W)
    aux_i = jnp.einsum("nchw,cw->nch", aux, k) + b[None, :, None]    # (N, 83, H)
    aux_i = _log_softmax(aux_i, axis=1)[:, :, None, :]
    aux_j = _log_softmax(aux_j, axis=1)[:, :, None, :]
    return (dist_out,
            aux_i[:, :9], aux_j[:, :9],
            aux_i[:, 9:46], aux_j[:, 9:46],
            aux_i[:, 46:83], aux_j[:, 46:83])


if __name__ == "__main__":
    key = jax.random.PRNGKey(0)
    k_param, k_x = jax.random.split(key)
    params = init_params(k_param)

    N, H, W = 2, 64, 64   # the (64,1) grouped conv implies 64x64 spatial maps
    # Producer-emitted bf16 activations halve the dominant HBM read of the
    # DMA-bound kernel; model_forward also accepts f32 input unchanged.
    x = jax.random.normal(k_x, (N, INPUT_CHANNELS, H, W), dtype=jnp.bfloat16)

    fwd = jax.jit(functools.partial(model_forward, rows_per_step=16))
    outs = jax.block_until_ready(fwd(x, params))

    refs = jax.block_until_ready(reference_forward(x, params))
    for o, r in zip(outs, refs):
        assert o.shape == r.shape and o.dtype == r.dtype
        np.testing.assert_allclose(np.asarray(o), np.asarray(r), atol=3e-2, rtol=3e-2)

    print("KERNEL_OK")
</pallas_src>

<mosaic_0001>
module attributes {stable_mosaic.version = 11 : i64} {
  func.func @_fused_kernel(%arg0: i32, %arg1: i32, %arg2: memref<1x569x1024xbf16, #tpu.memory_space<vmem>>, %arg3: memref<128x569xbf16, #tpu.memory_space<vmem>>, %arg4: memref<128x1xf32, #tpu.memory_space<vmem>>, %arg5: memref<115x128xf32, #tpu.memory_space<vmem>>, %arg6: memref<115x1xf32, #tpu.memory_space<vmem>>, %arg7: memref<83x64xf32, #tpu.memory_space<vmem>>, %arg8: memref<83x1xf32, #tpu.memory_space<vmem>>, %arg9: memref<1x32x1024xf32, #tpu.memory_space<vmem>>, %arg10: memref<1x83x128xf32, #tpu.memory_space<vmem>>) attributes {dimension_semantics = [#tpu.dimension_semantics<parallel>, #tpu.dimension_semantics<arbitrary>], iteration_bounds = array<i64: 2, 4>, scalar_prefetch = 0 : i64, scratch_operands = 0 : i64, tpu.core_type = #tpu.core_type<tc>, window_params = [{transform_indices = @transform_0, window_bounds = array<i64: 1, 569, 1024>}, {pipeline_mode = #tpu.pipeline_mode<synchronous>, transform_indices = @transform_1, window_bounds = array<i64: 128, 569>}, {pipeline_mode = #tpu.pipeline_mode<synchronous>, transform_indices = @transform_2, window_bounds = array<i64: 128, 1>}, {pipeline_mode = #tpu.pipeline_mode<synchronous>, transform_indices = @transform_3, window_bounds = array<i64: 115, 128>}, {pipeline_mode = #tpu.pipeline_mode<synchronous>, transform_indices = @transform_4, window_bounds = array<i64: 115, 1>}, {pipeline_mode = #tpu.pipeline_mode<synchronous>, transform_indices = @transform_5, window_bounds = array<i64: 83, 64>}, {pipeline_mode = #tpu.pipeline_mode<synchronous>, transform_indices = @transform_6, window_bounds = array<i64: 83, 1>}, {transform_indices = @transform_7, window_bounds = array<i64: 1, 32, 1024>}, {transform_indices = @transform_8, window_bounds = array<i64: 1, 83, 128>}]} {
    %c0 = arith.constant 0 : index
    %c0_0 = arith.constant 0 : index
    %c0_1 = arith.constant 0 : index
    %0 = vector.load %arg2[%c0, %c0_0, %c0_1] : memref<1x569x1024xbf16, #tpu.memory_space<vmem>>, vector<1x569x1024xbf16>
    %1 = vector.shape_cast %0 : vector<1x569x1024xbf16> to vector<569x1024xbf16>
    %c0_2 = arith.constant 0 : index
    %c0_3 = arith.constant 0 : index
    %2 = vector.load %arg3[%c0_2, %c0_3] : memref<128x569xbf16, #tpu.memory_space<vmem>>, vector<128x569xbf16>
    %cst = arith.constant dense<0.000000e+00> : vector<128x1024xf32>
    %3 = tpu.matmul %2, %1, %cst {dimension_numbers = #tpu.dot_dimension_numbers<[1], [0], [0], [1], [0, 0, 1, 1], [], []>} : vector<128x569xbf16>, vector<569x1024xbf16>, vector<128x1024xf32> -> vector<128x1024xf32>
    %c0_4 = arith.constant 0 : index
    %c0_5 = arith.constant 0 : index
    %4 = vector.load %arg4[%c0_4, %c0_5] : memref<128x1xf32, #tpu.memory_space<vmem>>, vector<128x1xf32>
    %5 = vector.broadcast %4 : vector<128x1xf32> to vector<128x1024xf32>
    %6 = arith.addf %3, %5 : vector<128x1024xf32>
    %cst_6 = arith.constant 0.000000e+00 : f32
    %7 = vector.broadcast %cst_6 : f32 to vector<128x1024xf32>
    %8 = arith.maximumf %6, %7 : vector<128x1024xf32>
    %c0_7 = arith.constant 0 : index
    %c0_8 = arith.constant 0 : index
    %9 = vector.load %arg5[%c0_7, %c0_8] : memref<115x128xf32, #tpu.memory_space<vmem>>, vector<115x128xf32>
    %cst_9 = arith.constant dense<0.000000e+00> : vector<115x1024xf32>
    %10 = tpu.matmul %9, %8, %cst_9 {dimension_numbers = #tpu.dot_dimension_numbers<[1], [0], [0], [1], [0, 0, 1, 1], [], []>} : vector<115x128xf32>, vector<128x1024xf32>, vector<115x1024xf32> -> vector<115x1024xf32>
    %c0_10 = arith.constant 0 : index
    %c0_11 = arith.constant 0 : index
    %11 = vector.load %arg6[%c0_10, %c0_11] : memref<115x1xf32, #tpu.memory_space<vmem>>, vector<115x1xf32>
    %12 = vector.broadcast %11 : vector<115x1xf32> to vector<115x1024xf32>
    %13 = arith.addf %10, %12 : vector<115x1024xf32>
    %14 = vector.extract_strided_slice %13 {offsets = [0, 0], sizes = [32, 1024], strides = [1, 1]} : vector<115x1024xf32> to vector<32x1024xf32>
    %cst_12 = arith.constant dense<0xFF800000> : vector<1024xf32>
    %15 = vector.multi_reduction <maximumf>, %14, %cst_12 [0] : vector<32x1024xf32> to vector<1024xf32>
    %16 = vector.shape_cast %15 : vector<1024xf32> to vector<1x1024xf32>
    %17 = vector.broadcast %16 : vector<1x1024xf32> to vector<32x1024xf32>
    %18 = arith.subf %14, %17 : vector<32x1024xf32>
    %19 = math.exp %18 : vector<32x1024xf32>
    %cst_13 = arith.constant dense<0.000000e+00> : vector<1024xf32>
    %20 = vector.multi_reduction <add>, %19, %cst_13 [0] : vector<32x1024xf32> to vector<1024xf32>
    %21 = vector.shape_cast %20 : vector<1024xf32> to vector<1x1024xf32>
    %22 = math.log %21 : vector<1x1024xf32>
    %23 = vector.broadcast %22 : vector<1x1024xf32> to vector<32x1024xf32>
    %24 = arith.subf %18, %23 : vector<32x1024xf32>
    %c0_14 = arith.constant 0 : index
    %c0_15 = arith.constant 0 : index
    %c0_16 = arith.constant 0 : index
    %25 = vector.load %arg9[%c0_14, %c0_15, %c0_16] : memref<1x32x1024xf32, #tpu.memory_space<vmem>>, vector<1x32x1024xf32>
    %26 = vector.shape_cast %25 : vector<1x32x1024xf32> to vector<32x1024xf32>
    %27 = vector.shape_cast %24 : vector<32x1024xf32> to vector<1x32x1024xf32>
    tpu.vector_store %arg9[%c0_14, %c0_15, %c0_16], %27 {strides = array<i32>} : memref<1x32x1024xf32, #tpu.memory_space<vmem>>, vector<1x32x1024xf32>,
    %28 = vector.extract_strided_slice %13 {offsets = [32, 0], sizes = [83, 1024], strides = [1, 1]} : vector<115x1024xf32> to vector<83x1024xf32>
    %c0_17 = arith.constant 0 : index
    %c0_18 = arith.constant 0 : index
    %29 = vector.load %arg7[%c0_17, %c0_18] : memref<83x64xf32, #tpu.memory_space<vmem>>, vector<83x64xf32>
    %30 = tpu.iota {dimensions = array<i32: 0>} : vector<1024x64xi32>
    %31 = tpu.iota {dimensions = array<i32: 1>} : vector<1024x64xi32>
    %c6_i32 = arith.constant 6 : i32
    %32 = vector.broadcast %c6_i32 : i32 to vector<1024x64xi32>
    %33 = arith.shrsi %30, %32 : vector<1024x64xi32>
    %c16_i32 = arith.constant 16 : i32
    %34 = arith.muli %arg1, %c16_i32 : i32
    %35 = vector.broadcast %34 : i32 to vector<1024x64xi32>
    %36 = arith.addi %33, %35 : vector<1024x64xi32>
    %37 = arith.cmpi eq, %36, %31 : vector<1024x64xi32>
    %cst_19 = arith.constant 1.000000e+00 : f32
    %cst_20 = arith.constant 0.000000e+00 : f32
    %38 = vector.broadcast %cst_19 : f32 to vector<1024x64xf32>
    %39 = vector.broadcast %cst_20 : f32 to vector<1024x64xf32>
    %40 = arith.select %37, %38, %39 : vector<1024x64xi1>, vector<1024x64xf32>
    %c63_i32 = arith.constant 63 : i32
    %41 = vector.broadcast %c63_i32 : i32 to vector<1024x64xi32>
    %42 = arith.andi %30, %41 : vector<1024x64xi32>
    %43 = arith.cmpi eq, %42, %31 : vector<1024x64xi32>
    %cst_21 = arith.constant 1.000000e+00 : f32
    %cst_22 = arith.constant 0.000000e+00 : f32
    %44 = vector.broadcast %cst_21 : f32 to vector<1024x64xf32>
    %45 = vector.broadcast %cst_22 : f32 to vector<1024x64xf32>
    %46 = arith.select %43, %44, %45 : vector<1024x64xi1>, vector<1024x64xf32>
    %47 = tpu.iota {dimensions = array<i32: 0>} : vector<64x1024xi32>
    %48 = tpu.iota {dimensions = array<i32: 1>} : vector<64x1024xi32>
    %c6_i32_23 = arith.constant 6 : i32
    %49 = vector.broadcast %c6_i32_23 : i32 to vector<64x1024xi32>
    %50 = arith.shrsi %48, %49 : vector<64x1024xi32>
    %c16_i32_24 = arith.constant 16 : i32
    %51 = arith.muli %arg1, %c16_i32_24 : i32
    %52 = vector.broadcast %51 : i32 to vector<64x1024xi32>
    %53 = arith.addi %50, %52 : vector<64x1024xi32>
    %54 = arith.cmpi eq, %47, %53 : vector<64x1024xi32>
    %cst_25 = arith.constant 1.000000e+00 : f32
    %cst_26 = arith.constant 0.000000e+00 : f32
    %55 = vector.broadcast %cst_25 : f32 to vector<64x1024xf32>
    %56 = vector.broadcast %cst_26 : f32 to vector<64x1024xf32>
    %57 = arith.select %54, %55, %56 : vector<64x1024xi1>, vector<64x1024xf32>
    %c63_i32_27 = arith.constant 63 : i32
    %58 = vector.broadcast %c63_i32_27 : i32 to vector<64x1024xi32>
    %59 = arith.andi %48, %58 : vector<64x1024xi32>
    %60 = arith.cmpi eq, %47, %59 : vector<64x1024xi32>
    %cst_28 = arith.constant 1.000000e+00 : f32
    %cst_29 = arith.constant 0.000000e+00 : f32
    %61 = vector.broadcast %cst_28 : f32 to vector<64x1024xf32>
    %62 = vector.broadcast %cst_29 : f32 to vector<64x1024xf32>
    %63 = arith.select %60, %61, %62 : vector<64x1024xi1>, vector<64x1024xf32>
    %cst_30 = arith.constant dense<0.000000e+00> : vector<83x1024xf32>
    %64 = tpu.matmul %29, %63, %cst_30 {dimension_numbers = #tpu.dot_dimension_numbers<[1], [0], [0], [1], [0, 0, 1, 1], [], []>} : vector<83x64xf32>, vector<64x1024xf32>, vector<83x1024xf32> -> vector<83x1024xf32>
    %cst_31 = arith.constant dense<0.000000e+00> : vector<83x1024xf32>
    %65 = tpu.matmul %29, %57, %cst_31 {dimension_numbers = #tpu.dot_dimension_numbers<[1], [0], [0], [1], [0, 0, 1, 1], [], []>} : vector<83x64xf32>, vector<64x1024xf32>, vector<83x1024xf32> -> vector<83x1024xf32>
    %66 = arith.mulf %28, %64 : vector<83x1024xf32>
    %cst_32 = arith.constant dense<0.000000e+00> : vector<83x64xf32>
    %67 = tpu.matmul %66, %40, %cst_32 {dimension_numbers = #tpu.dot_dimension_numbers<[1], [0], [0], [1], [0, 0, 1, 1], [], []>} : vector<83x1024xf32>, vector<1024x64xf32>, vector<83x64xf32> -> vector<83x64xf32>
    %68 = arith.mulf %28, %65 : vector<83x1024xf32>
    %cst_33 = arith.constant dense<0.000000e+00> : vector<83x64xf32>
    %69 = tpu.matmul %68, %46, %cst_33 {dimension_numbers = #tpu.dot_dimension_numbers<[1], [0], [0], [1], [0, 0, 1, 1], [], []>} : vector<83x1024xf32>, vector<1024x64xf32>, vector<83x64xf32> -> vector<83x64xf32>
    %70 = tpu.concatenate %67, %69 in 1 : vector<83x64xf32>, vector<83x64xf32> -> vector<83x128xf32>
    %c0_i32 = arith.constant 0 : i32
    %71 = arith.cmpi eq, %arg1, %c0_i32 : i32
    %72 = arith.extui %71 : i1 to i32
    %c0_i32_34 = arith.constant 0 : i32
    %73 = arith.cmpi ne, %72, %c0_i32_34 : i32
    scf.if %73 {
      %c0_38 = arith.constant 0 : index
      %c0_39 = arith.constant 0 : index
      %80 = vector.load %arg8[%c0_38, %c0_39] : memref<83x1xf32, #tpu.memory_space<vmem>>, vector<83x1xf32>
      %81 = vector.broadcast %80 : vector<83x1xf32> to vector<83x128xf32>
      %82 = arith.addf %70, %81 : vector<83x128xf32>
      %c0_40 = arith.constant 0 : index
      %c0_41 = arith.constant 0 : index
      %c0_42 = arith.constant 0 : index
      %83 = vector.load %arg10[%c0_40, %c0_41, %c0_42] : memref<1x83x128xf32, #tpu.memory_space<vmem>>, vector<1x83x128xf32>
      %84 = vector.shape_cast %83 : vector<1x83x128xf32> to vector<83x128xf32>
      %85 = vector.shape_cast %82 : vector<83x128xf32> to vector<1x83x128xf32>
      tpu.vector_store %arg10[%c0_40, %c0_41, %c0_42], %85 {strides = array<i32>} : memref<1x83x128xf32, #tpu.memory_space<vmem>>, vector<1x83x128xf32>,
    } else {
    }
    %c0_i32_35 = arith.constant 0 : i32
    %74 = arith.cmpi ne, %arg1, %c0_i32_35 : i32
    %75 = arith.extui %74 : i1 to i32
    %c0_i32_36 = arith.constant 0 : i32
    %76 = arith.cmpi ne, %75, %c0_i32_36 : i32
    scf.if %76 {
      %c0_38 = arith.constant 0 : index
      %c0_39 = arith.constant 0 : index
      %c0_40 = arith.constant 0 : index
      %80 = vector.load %arg10[%c0_38, %c0_39, %c0_40] : memref<1x83x128xf32, #tpu.memory_space<vmem>>, vector<1x83x128xf32>
      %81 = vector.shape_cast %80 : vector<1x83x128xf32> to vector<83x128xf32>
      %82 = arith.addf %81, %70 : vector<83x128xf32>
      %c0_41 = arith.constant 0 : index
      %c0_42 = arith.constant 0 : index
      %c0_43 = arith.constant 0 : index
      %83 = vector.load %arg10[%c0_41, %c0_42, %c0_43] : memref<1x83x128xf32, #tpu.memory_space<vmem>>, vector<1x83x128xf32>
      %84 = vector.shape_cast %83 : vector<1x83x128xf32> to vector<83x128xf32>
      %85 = vector.shape_cast %82 : vector<83x128xf32> to vector<1x83x128xf32>
      tpu.vector_store %arg10[%c0_41, %c0_42, %c0_43], %85 {strides = array<i32>} : memref<1x83x128xf32, #tpu.memory_space<vmem>>, vector<1x83x128xf32>,
    } else {
    }
    %c3_i32 = arith.constant 3 : i32
    %77 = arith.cmpi eq, %arg1, %c3_i32 : i32
    %78 = arith.extui %77 : i1 to i32
    %c0_i32_37 = arith.constant 0 : i32
    %79 = arith.cmpi ne, %78, %c0_i32_37 : i32
    scf.if %79 {
      %c0_38 = arith.constant 0 : index
      %c0_39 = arith.constant 0 : index
      %c0_40 = arith.constant 0 : index
      %80 = vector.load %arg10[%c0_38, %c0_39, %c0_40] : memref<1x83x128xf32, #tpu.memory_space<vmem>>, vector<1x83x128xf32>
      %81 = vector.shape_cast %80 : vector<1x83x128xf32> to vector<83x128xf32>
      %cst_41 = arith.constant dense<0xFF800000> : vector<128xf32>
      %82 = vector.multi_reduction <maximumf>, %81, %cst_41 [0] : vector<83x128xf32> to vector<128xf32>
      %83 = vector.shape_cast %82 : vector<128xf32> to vector<1x128xf32>
      %84 = vector.broadcast %83 : vector<1x128xf32> to vector<83x128xf32>
      %85 = arith.subf %81, %84 : vector<83x128xf32>
      %86 = math.exp %85 : vector<83x128xf32>
      %cst_42 = arith.constant dense<0.000000e+00> : vector<128xf32>
      %87 = vector.multi_reduction <add>, %86, %cst_42 [0] : vector<83x128xf32> to vector<128xf32>
      %88 = vector.shape_cast %87 : vector<128xf32> to vector<1x128xf32>
      %89 = math.log %88 : vector<1x128xf32>
      %90 = vector.broadcast %89 : vector<1x128xf32> to vector<83x128xf32>
      %91 = arith.subf %85, %90 : vector<83x128xf32>
      %c0_43 = arith.constant 0 : index
      %c0_44 = arith.constant 0 : index
      %c0_45 = arith.constant 0 : index
      %92 = vector.load %arg10[%c0_43, %c0_44, %c0_45] : memref<1x83x128xf32, #tpu.memory_space<vmem>>, vector<1x83x128xf32>
      %93 = vector.shape_cast %92 : vector<1x83x128xf32> to vector<83x128xf32>
      %94 = vector.shape_cast %91 : vector<83x128xf32> to vector<1x83x128xf32>
      tpu.vector_store %arg10[%c0_43, %c0_44, %c0_45], %94 {strides = array<i32>} : memref<1x83x128xf32, #tpu.memory_space<vmem>>, vector<1x83x128xf32>,
    } else {
    }
    return
  }
  func.func @transform_0(%arg0: i32, %arg1: i32) -> (i32, i32, i32) {
    %c0_i32 = arith.constant 0 : i32
    %c0_i32_0 = arith.constant 0 : i32
    return %arg0, %c0_i32, %arg1 : i32, i32, i32
  }
  func.func @transform_1(%arg0: i32, %arg1: i32) -> (i32, i32) {
    %c0_i32 = arith.constant 0 : i32
    %c0_i32_0 = arith.constant 0 : i32
    %c0_i32_1 = arith.constant 0 : i32
    return %c0_i32, %c0_i32_0 : i32, i32
  }
  func.func @transform_2(%arg0: i32, %arg1: i32) -> (i32, i32) {
    %c0_i32 = arith.constant 0 : i32
    %c0_i32_0 = arith.constant 0 : i32
    %c0_i32_1 = arith.constant 0 : i32
    return %c0_i32, %c0_i32_0 : i32, i32
  }
  func.func @transform_3(%arg0: i32, %arg1: i32) -> (i32, i32) {
    %c0_i32 = arith.constant 0 : i32
    %c0_i32_0 = arith.constant 0 : i32
    %c0_i32_1 = arith.constant 0 : i32
    return %c0_i32, %c0_i32_0 : i32, i32
  }
  func.func @transform_4(%arg0: i32, %arg1: i32) -> (i32, i32) {
    %c0_i32 = arith.constant 0 : i32
    %c0_i32_0 = arith.constant 0 : i32
    %c0_i32_1 = arith.constant 0 : i32
    return %c0_i32, %c0_i32_0 : i32, i32
  }
  func.func @transform_5(%arg0: i32, %arg1: i32) -> (i32, i32) {
    %c0_i32 = arith.constant 0 : i32
    %c0_i32_0 = arith.constant 0 : i32
    %c0_i32_1 = arith.constant 0 : i32
    return %c0_i32, %c0_i32_0 : i32, i32
  }
  func.func @transform_6(%arg0: i32, %arg1: i32) -> (i32, i32) {
    %c0_i32 = arith.constant 0 : i32
    %c0_i32_0 = arith.constant 0 : i32
    %c0_i32_1 = arith.constant 0 : i32
    return %c0_i32, %c0_i32_0 : i32, i32
  }
  func.func @transform_7(%arg0: i32, %arg1: i32) -> (i32, i32, i32) {
    %c0_i32 = arith.constant 0 : i32
    %c0_i32_0 = arith.constant 0 : i32
    return %arg0, %c0_i32, %arg1 : i32, i32, i32
  }
  func.func @transform_8(%arg0: i32, %arg1: i32) -> (i32, i32, i32) {
    %c0_i32 = arith.constant 0 : i32
    %c0_i32_0 = arith.constant 0 : i32
    %c0_i32_1 = arith.constant 0 : i32
    return %arg0, %c0_i32, %c0_i32_0 : i32, i32, i32
  }
}

</mosaic_0001>

<llo_original>
// kernel: model_forward.1
$region0: #{model_forward.1}
  #allocation0 [shape = 'u32[]', space=smem, size = 0x4, offset = 0x4, fixed_abs, tag = 'smem constant byte address 0x4 - core index']
  #allocation1 [shape = 'u32[72,128]{1,0:T(1,128)}', space=vmem, size = 0x9000, scoped, tag = 'internal scratch']
  %s0 = inlined_call_operand.vmem [shape: bf16[2,569,4096], index: 0, kind: input, shape index: {}]
  %s1 = inlined_call_operand.vmem [shape: bf16[128,569], index: 1, kind: input, shape index: {}]
  %s2 = inlined_call_operand.vmem [shape: f32[128,1], index: 2, kind: input, shape index: {}]
  %s3 = inlined_call_operand.vmem [shape: f32[115,128], index: 3, kind: input, shape index: {}]
  %s4 = inlined_call_operand.vmem [shape: f32[115,1], index: 4, kind: input, shape index: {}]
  %s5 = inlined_call_operand.vmem [shape: f32[83,64], index: 5, kind: input, shape index: {}]
  %s6 = inlined_call_operand.vmem [shape: f32[83,1], index: 6, kind: input, shape index: {}]
  %s7 = inlined_call_operand.vmem [shape: f32[2,32,4096], index: 7, kind: output, shape index: {0}]
  %s8 = inlined_call_operand.vmem [shape: f32[2,83,128], index: 8, kind: output, shape index: {1}]
  %9 = xla_tuple %s7, %s8
  %s10 = sld [smem:[#allocation0]]
  $region123: #{model_forward.1} parent=0
    _
  %s12 = ssub.s32 1, %s10
  %s13 = scalar_select 0, %s12, %s10
  $region1: #{model_forward.1} parent=0
    #allocation2 [shape = 'u8[2359296]{0}', space=vmem, size = 0x240000, scoped, tag = 'input window, operand 0']
    #allocation3 [shape = 'u8[262144]{0}', space=vmem, size = 0x40000, scoped, tag = 'output window, operand 0']
    loop: start=0, step=1, limit=10
    $region2: #{model_forward.1} parent=1 // loop_pre_header
      _
    $region3: #{model_forward.1} parent=1 // loop_header
      %s15 = sphi 0, %s19
      %p16 = scmp.ge.s32.totalorder %s15, 10
      %s22 = sphi 0, %s34
      %s23 = sphi 0, %s30
      %s24 = sphi 0, %s22
      %s25 = sphi 0, %s23
      %s26 = sphi 0, %s24
      %s27 = sphi 0, %s25
      %s39 = sphi 0, %s41
      %s42 = sphi 0, %s39
      %s43 = sphi 0, %s42
      %s59 = sphi 0, %s43
      %s63 = sphi 0, %s63
      %s65 = sphi 0, %s63
      %s66 = sphi 0, %s65
      %s80 = sphi 0, %s66
      %s84 = sphi 0, %s84
      %s86 = sphi 0, %s84
      %s87 = sphi 0, %s86
      %s101 = sphi 0, %s87
      %s105 = sphi 0, %s105
      %s107 = sphi 0, %s105
      %s108 = sphi 0, %s107
      %s122 = sphi 0, %s108
      %s126 = sphi 0, %s126
      %s128 = sphi 0, %s126
      %s129 = sphi 0, %s128
      %s143 = sphi 0, %s129
      %s147 = sphi 0, %s147
      %s149 = sphi 0, %s147
      %s150 = sphi 0, %s149
      %s164 = sphi 0, %s150
      %s168 = sphi 0, %s168
      %s170 = sphi 0, %s168
      %s171 = sphi 0, %s170
      %s185 = sphi 0, %s171
      %s193 = sphi 0, %s195
      %s196 = sphi 0, %s193
      %s197 = sphi 0, %s196
      %s213 = sphi 0, %s197
      %s219 = sphi 0, %s221
      %s222 = sphi 0, %s219
      %s223 = sphi 0, %s222
      %s239 = sphi 0, %s223
    $region4: #{model_forward.1} parent=1 // loop_header_branch
      %18 = sbr.rel (%p16) target = $region8
    $region5: #{model_forward.1} parent=1 // loop_body
      %s20 = ssub.s32 %s15, 1
      %s21 = ssub.s32 %s15, 2
      %s28 = sadd.s32 1, %s23
      %p29 = scmp.ge.s32.totalorder %s28, 4
      %s30 = scalar_select %p29, 0, %s28
      %s31 = sadd.s32 1, %s22
      %s32 = scalar_select %p29, %s31, %s22
      %p33 = scmp.ge.s32.totalorder %s32, 2
      %s34 = scalar_select %p33, 0, %s32
      %s35 = ssub.s32 %s22, %s34
      %s36 = ssub.s32 %s23, %s30
      %s37 = sor.u32 %s35, %s36
      %p38 = scmp.eq.s32.totalorder %s37, 0
      %s40 = sadd.s32 %s39, 1
      %s41 = scalar_select %p38, %s39, %s40
      %p44 = pneg %p38
      %p45 = scmp.eq.s32.totalorder %s15, 7
      %p46 = por %p44, %p45
      %p47 = scmp.ne.s32.totalorder %s39, %s42
      %p48 = scmp.eq.s32.totalorder %s15, 0
      %p49 = por %p47, %p48
      %p50 = scmp.ne.s32.totalorder %s39, %s42
      %p51 = scmp.eq.s32.totalorder %s20, 7
      %p52 = por %p50, %p51
      %p53 = scmp.ne.s32.totalorder %s42, %s43
      %p54 = scmp.eq.s32.totalorder %s20, 0
      %p55 = por %p53, %p54
      %p56 = scmp.ne.s32.totalorder %s42, %s43
      %p57 = scmp.eq.s32.totalorder %s21, 7
      %p58 = por %p56, %p57
      %p60 = scmp.ne.s32.totalorder %s43, %s59
      %p61 = scmp.eq.s32.totalorder %s21, 0
      %p62 = por %p60, %p61
      %s64 = sadd.s32 %s63, 1
      %p67 = scmp.eq.s32.totalorder %s15, 7
      %p68 = scmp.ne.s32.totalorder %s63, %s65
      %p69 = scmp.eq.s32.totalorder %s15, 0
      %p70 = por %p68, %p69
      %p71 = scmp.ne.s32.totalorder %s63, %s65
      %p72 = scmp.eq.s32.totalorder %s20, 7
      %p73 = por %p71, %p72
      %p74 = scmp.ne.s32.totalorder %s65, %s66
      %p75 = scmp.eq.s32.totalorder %s20, 0
      %p76 = por %p74, %p75
      %p77 = scmp.ne.s32.totalorder %s65, %s66
      %p78 = scmp.eq.s32.totalorder %s21, 7
      %p79 = por %p77, %p78
      %p81 = scmp.ne.s32.totalorder %s66, %s80
      %p82 = scmp.eq.s32.totalorder %s21, 0
      %p83 = por %p81, %p82
      %s85 = sadd.s32 %s84, 1
      %p88 = scmp.eq.s32.totalorder %s15, 7
      %p89 = scmp.ne.s32.totalorder %s84, %s86
      %p90 = scmp.eq.s32.totalorder %s15, 0
      %p91 = por %p89, %p90
      %p92 = scmp.ne.s32.totalorder %s84, %s86
      %p93 = scmp.eq.s32.totalorder %s20, 7
      %p94 = por %p92, %p93
      %p95 = scmp.ne.s32.totalorder %s86, %s87
      %p96 = scmp.eq.s32.totalorder %s20, 0
      %p97 = por %p95, %p96
      %p98 = scmp.ne.s32.totalorder %s86, %s87
      %p99 = scmp.eq.s32.totalorder %s21, 7
      %p100 = por %p98, %p99
      %p102 = scmp.ne.s32.totalorder %s87, %s101
      %p103 = scmp.eq.s32.totalorder %s21, 0
      %p104 = por %p102, %p103
      %s106 = sadd.s32 %s105, 1
      %p109 = scmp.eq.s32.totalorder %s15, 7
      %p110 = scmp.ne.s32.totalorder %s105, %s107
      %p111 = scmp.eq.s32.totalorder %s15, 0
      %p112 = por %p110, %p111
      %p113 = scmp.ne.s32.totalorder %s105, %s107
      %p114 = scmp.eq.s32.totalorder %s20, 7
      %p115 = por %p113, %p114
      %p116 = scmp.ne.s32.totalorder %s107, %s108
      %p117 = scmp.eq.s32.totalorder %s20, 0
      %p118 = por %p116, %p117
      %p119 = scmp.ne.s32.totalorder %s107, %s108
      %p120 = scmp.eq.s32.totalorder %s21, 7
      %p121 = por %p119, %p120
      %p123 = scmp.ne.s32.totalorder %s108, %s122
      %p124 = scmp.eq.s32.totalorder %s21, 0
      %p125 = por %p123, %p124
      %s127 = sadd.s32 %s126, 1
      %p130 = scmp.eq.s32.totalorder %s15, 7
      %p131 = scmp.ne.s32.totalorder %s126, %s128
      %p132 = scmp.eq.s32.totalorder %s15, 0
      %p133 = por %p131, %p132
      %p134 = scmp.ne.s32.totalorder %s126, %s128
      %p135 = scmp.eq.s32.totalorder %s20, 7
      %p136 = por %p134, %p135
      %p137 = scmp.ne.s32.totalorder %s128, %s129
      %p138 = scmp.eq.s32.totalorder %s20, 0
      %p139 = por %p137, %p138
      %p140 = scmp.ne.s32.totalorder %s128, %s129
      %p141 = scmp.eq.s32.totalorder %s21, 7
      %p142 = por %p140, %p141
      %p144 = scmp.ne.s32.totalorder %s129, %s143
      %p145 = scmp.eq.s32.totalorder %s21, 0
      %p146 = por %p144, %p145
      %s148 = sadd.s32 %s147, 1
      %p151 = scmp.eq.s32.totalorder %s15, 7
      %p152 = scmp.ne.s32.totalorder %s147, %s149
      %p153 = scmp.eq.s32.totalorder %s15, 0
      %p154 = por %p152, %p153
      %p155 = scmp.ne.s32.totalorder %s147, %s149
      %p156 = scmp.eq.s32.totalorder %s20, 7
      %p157 = por %p155, %p156
      %p158 = scmp.ne.s32.totalorder %s149, %s150
      %p159 = scmp.eq.s32.totalorder %s20, 0
      %p160 = por %p158, %p159
      %p161 = scmp.ne.s32.totalorder %s149, %s150
      %p162 = scmp.eq.s32.totalorder %s21, 7
      %p163 = por %p161, %p162
      %p165 = scmp.ne.s32.totalorder %s150, %s164
      %p166 = scmp.eq.s32.totalorder %s21, 0
      %p167 = por %p165, %p166
      %s169 = sadd.s32 %s168, 1
      %p172 = scmp.eq.s32.totalorder %s15, 7
      %p173 = scmp.ne.s32.totalorder %s168, %s170
      %p174 = scmp.eq.s32.totalorder %s15, 0
      %p175 = por %p173, %p174
      %p176 = scmp.ne.s32.totalorder %s168, %s170
      %p177 = scmp.eq.s32.totalorder %s20, 7
      %p178 = por %p176, %p177
      %p179 = scmp.ne.s32.totalorder %s170, %s171
      %p180 = scmp.eq.s32.totalorder %s20, 0
      %p181 = por %p179, %p180
      %p182 = scmp.ne.s32.totalorder %s170, %s171
      %p183 = scmp.eq.s32.totalorder %s21, 7
      %p184 = por %p182, %p183
      %p186 = scmp.ne.s32.totalorder %s171, %s185
      %p187 = scmp.eq.s32.totalorder %s21, 0
      %p188 = por %p186, %p187
      %s189 = ssub.s32 %s22, %s34
      %s190 = ssub.s32 %s23, %s30
      %s191 = sor.u32 %s189, %s190
      %p192 = scmp.eq.s32.totalorder %s191, 0
      %s194 = sadd.s32 %s193, 1
      %s195 = scalar_select %p192, %s193, %s194
      %p198 = pneg %p192
      %p199 = scmp.eq.s32.totalorder %s15, 7
      %p200 = por %p198, %p199
      %p201 = scmp.ne.s32.totalorder %s193, %s196
      %p202 = scmp.eq.s32.totalorder %s15, 0
      %p203 = por %p201, %p202
      %p204 = scmp.ne.s32.totalorder %s193, %s196
      %p205 = scmp.eq.s32.totalorder %s20, 7
      %p206 = por %p204, %p205
      %p207 = scmp.ne.s32.totalorder %s196, %s197
      %p208 = scmp.eq.s32.totalorder %s20, 0
      %p209 = por %p207, %p208
      %p210 = scmp.ne.s32.totalorder %s196, %s197
      %p211 = scmp.eq.s32.totalorder %s21, 7
      %p212 = por %p210, %p211
      %p214 = scmp.ne.s32.totalorder %s197, %s213
      %p215 = scmp.eq.s32.totalorder %s21, 0
      %p216 = por %p214, %p215
      %s217 = ssub.s32 %s22, %s34
      %p218 = scmp.eq.s32.totalorder %s217, 0
      %s220 = sadd.s32 %s219, 1
      %s221 = scalar_select %p218, %s219, %s220
      %p224 = pneg %p218
      %p225 = scmp.eq.s32.totalorder %s15, 7
      %p226 = por %p224, %p225
      %p227 = scmp.ne.s32.totalorder %s219, %s222
      %p228 = scmp.eq.s32.totalorder %s15, 0
      %p229 = por %p227, %p228
      %p230 = scmp.ne.s32.totalorder %s219, %s222
      %p231 = scmp.eq.s32.totalorder %s20, 7
      %p232 = por %p230, %p231
      %p233 = scmp.ne.s32.totalorder %s222, %s223
      %p234 = scmp.eq.s32.totalorder %s20, 0
      %p235 = por %p233, %p234
      %p236 = scmp.ne.s32.totalorder %s222, %s223
      %p237 = scmp.eq.s32.totalorder %s21, 7
      %p238 = por %p236, %p237
      %p240 = scmp.ne.s32.totalorder %s223, %s239
      %p241 = scmp.eq.s32.totalorder %s21, 0
      %p242 = por %p240, %p241
      %p243 = scmp.le.s32.totalorder 1, %s15
      %p244 = scmp.lt.s32.totalorder %s15, 9
      %p245 = pnand %p243, %p244
      %p246 = pneg %p245
      // Predicated region
      $region9: #{model_forward.1} parent=5 // pred_check
        _
      $region10: #{model_forward.1} parent=5 // pred_check_branch
        %248 = sbr.rel (%p245) target = $region12
      $region11: #{model_forward.1} parent=5 // pred_region
        %s249 = ssub.s32 %s15, 1
        // Predicated region
        $region13: #{model_forward.1} parent=11 // pred_check
          %p250 = pneg %p76
        $region14: #{model_forward.1} parent=11 // pred_check_branch
          %252 = sbr.rel (%p250) target = $region16
        $region15: #{model_forward.1} parent=11 // pred_region
          _
        $region16: #{model_forward.1} parent=11 // pred_fallthru
          _
        // Predicated region
        $region17: #{model_forward.1} parent=11 // pred_check
          %p253 = pneg %p97
        $region18: #{model_forward.1} parent=11 // pred_check_branch
          %255 = sbr.rel (%p253) target = $region20
        $region19: #{model_forward.1} parent=11 // pred_region
          _
        $region20: #{model_forward.1} parent=11 // pred_fallthru
          _
        // Predicated region
        $region21: #{model_forward.1} parent=11 // pred_check
          %p256 = pneg %p118
        $region22: #{model_forward.1} parent=11 // pred_check_branch
          %258 = sbr.rel (%p256) target = $region24
        $region23: #{model_forward.1} parent=11 // pred_region
          _
        $region24: #{model_forward.1} parent=11 // pred_fallthru
          _
        // Predicated region
        $region25: #{model_forward.1} parent=11 // pred_check
          %p259 = pneg %p139
        $region26: #{model_forward.1} parent=11 // pred_check_branch
          %261 = sbr.rel (%p259) target = $region28
        $region27: #{model_forward.1} parent=11 // pred_region
          _
        $region28: #{model_forward.1} parent=11 // pred_fallthru
          _
        // Predicated region
        $region29: #{model_forward.1} parent=11 // pred_check
          %p262 = pneg %p160
        $region30: #{model_forward.1} parent=11 // pred_check_branch
          %264 = sbr.rel (%p262) target = $region32
        $region31: #{model_forward.1} parent=11 // pred_region
          _
        $region32: #{model_forward.1} parent=11 // pred_fallthru
          _
        // Predicated region
        $region33: #{model_forward.1} parent=11 // pred_check
          %p265 = pneg %p181
        $region34: #{model_forward.1} parent=11 // pred_check_branch
          %267 = sbr.rel (%p265) target = $region36
        $region35: #{model_forward.1} parent=11 // pred_region
          _
        $region36: #{model_forward.1} parent=11 // pred_fallthru
          _
      $region12: #{model_forward.1} parent=5 // pred_fallthru
        _
      %p268 = scmp.lt.s32.totalorder %s15, 8
      // Predicated region
      $region37: #{model_forward.1} parent=5 // pred_check
        %p269 = pneg %p268
      $region38: #{model_forward.1} parent=5 // pred_check_branch
        %271 = sbr.rel (%p269) target = $region40
      $region39: #{model_forward.1} parent=5 // pred_region
        // Predicated region
        $region41: #{model_forward.1} parent=39 // pred_check
          %p272 = pneg %p49
        $region42: #{model_forward.1} parent=39 // pred_check_branch
          %274 = sbr.rel (%p272) target = $region44
        $region43: #{model_forward.1} parent=39 // pred_region
          %s275 = sand.u32 %s39, 1
          %s276 = sand.u32 %s39, 1
          %s277 = smul.addr %s276, 2304
          %s278 = scalar_lea.vmem [#allocation2], %s277
          %s279 = smul.u32 8, %s23
          %s280 = smul.addr %s22, 2304
          %s281 = sadd.s32 %s279, %s280
          %s282 = smul.addr %s281, 4
          %s283 = scalar_lea.vmem %s0, %s282
          // Predicated region
          $region45: #{model_forward.1} parent=43 // pred_check
            _
          $region46: #{model_forward.1} parent=43 // pred_check_branch
            %285 = sbr.rel (0) target = $region48
          $region47: #{model_forward.1} parent=43 // pred_region
            // Predicated region
            $region49: #{model_forward.1} parent=47 // pred_check
              _
            $region50: #{model_forward.1} parent=47 // pred_check_branch
              %287 = sbr.rel (0) target = $region52
            $region51: #{model_forward.1} parent=47 // pred_region
              loop: start=0, step=1, limit=1
              $region53: #{model_forward.1} parent=51 // loop_pre_header
                _
              $region54: #{model_forward.1} parent=51 // loop_header
                %s289 = sphi 0, %s293
                %p290 = scmp.ge.s32.totalorder %s289, 1
                %s294 = sphi %s283, %s283
                %s295 = sphi %s278, %s278
              $region55: #{model_forward.1} parent=51 // loop_header_branch
                %292 = sbr.rel (%p290) target = $region59
              $region56: #{model_forward.1} parent=51 // loop_body
                %v296 = vld [vmem:[%s294] sm:$0xff]
                %297 = vst [vmem:[%s295] sm:$0xff] %v296
                %v298 = vld [vmem:[%s294 + $0x8] sm:$0xff]
                %299 = vst [vmem:[%s295 + $0x8] sm:$0xff] %v298
                %v300 = vld [vmem:[%s294 + $0x10] sm:$0xff]
                %301 = vst [vmem:[%s295 + $0x10] sm:$0xff] %v300
                %v302 = vld [vmem:[%s294 + $0x18] sm:$0xff]
                %303 = vst [vmem:[%s295 + $0x18] sm:$0xff] %v302
                %v304 = vld [vmem:[%s294 + $0x80] sm:$0xff]
                %305 = vst [vmem:[%s295 + $0x20] sm:$0xff] %v304
                %v306 = vld [vmem:[%s294 + $0x88] sm:$0xff]
                %307 = vst [vmem:[%s295 + $0x28] sm:$0xff] %v306
                %v308 = vld [vmem:[%s294 + $0x90] sm:$0xff]
                %309 = vst [vmem:[%s295 + $0x30] sm:$0xff] %v308
                %v310 = vld [vmem:[%s294 + $0x98] sm:$0xff]
                %311 = vst [vmem:[%s295 + $0x38] sm:$0xff] %v310
                %v312 = vld [vmem:[%s294 + $0x100] sm:$0xff]
                %313 = vst [vmem:[%s295 + $0x40] sm:$0xff] %v312
                %v314 = vld [vmem:[%s294 + $0x108] sm:$0xff]
                %315 = vst [vmem:[%s295 + $0x48] sm:$0xff] %v314
                %v316 = vld [vmem:[%s294 + $0x110] sm:$0xff]
                %317 = vst [vmem:[%s295 + $0x50] sm:$0xff] %v316
                %v318 = vld [vmem:[%s294 + $0x118] sm:$0xff]
                %319 = vst [vmem:[%s295 + $0x58] sm:$0xff] %v318
                %v320 = vld [vmem:[%s294 + $0x180] sm:$0xff]
                %321 = vst [vmem:[%s295 + $0x60] sm:$0xff] %v320
                %v322 = vld [vmem:[%s294 + $0x188] sm:$0xff]
                %323 = vst [vmem:[%s295 + $0x68] sm:$0xff] %v322
                %v324 = vld [vmem:[%s294 + $0x190] sm:$0xff]
                %325 = vst [vmem:[%s295 + $0x70] sm:$0xff] %v324
                %v326 = vld [vmem:[%s294 + $0x198] sm:$0xff]
                %327 = vst [vmem:[%s295 + $0x78] sm:$0xff] %v326
                %v328 = vld [vmem:[%s294 + $0x200] sm:$0xff]
                %329 = vst [vmem:[%s295 + $0x80] sm:$0xff] %v328
                %v330 = vld [vmem:[%s294 + $0x208] sm:$0xff]
                %331 = vst [vmem:[%s295 + $0x88] sm:$0xff] %v330
                %v332 = vld [vmem:[%s294 + $0x210] sm:$0xff]
                %333 = vst [vmem:[%s295 + $0x90] sm:$0xff] %v332
                %v334 = vld [vmem:[%s294 + $0x218] sm:$0xff]
                %335 = vst [vmem:[%s295 + $0x98] sm:$0xff] %v334
                %v336 = vld [vmem:[%s294 + $0x280] sm:$0xff]
                %337 = vst [vmem:[%s295 + $0xa0] sm:$0xff] %v336
                %v338 = vld [vmem:[%s294 + $0x288] sm:$0xff]
                %339 = vst [vmem:[%s295 + $0xa8] sm:$0xff] %v338
                %v340 = vld [vmem:[%s294 + $0x290] sm:$0xff]
                %341 = vst [vmem:[%s295 + $0xb0] sm:$0xff] %v340
                %v342 = vld [vmem:[%s294 + $0x298] sm:$0xff]
                %343 = vst [vmem:[%s295 + $0xb8] sm:$0xff] %v342
                %v344 = vld [vmem:[%s294 + $0x300] sm:$0xff]
                %345 = vst [vmem:[%s295 + $0xc0] sm:$0xff] %v344
                %v346 = vld [vmem:[%s294 + $0x308] sm:$0xff]
                %347 = vst [vmem:[%s295 + $0xc8] sm:$0xff] %v346
                %v348 = vld [vmem:[%s294 + $0x310] sm:$0xff]
                %349 = vst [vmem:[%s295 + $0xd0] sm:$0xff] %v348
                %v350 = vld [vmem:[%s294 + $0x318] sm:$0xff]
                %351 = vst [vmem:[%s295 + $0xd8] sm:$0xff] %v350
                %v352 = vld [vmem:[%s294 + $0x380] sm:$0xff]
                %353 = vst [vmem:[%s295 + $0xe0] sm:$0xff] %v352
                %v354 = vld [vmem:[%s294 + $0x388] sm:$0xff]
                %355 = vst [vmem:[%s295 + $0xe8] sm:$0xff] %v354
                %v356 = vld [vmem:[%s294 + $0x390] sm:$0xff]
                %357 = vst [vmem:[%s295 + $0xf0] sm:$0xff] %v356
                %v358 = vld [vmem:[%s294 + $0x398] sm:$0xff]
                %359 = vst [vmem:[%s295 + $0xf8] sm:$0xff] %v358
                %v360 = vld [vmem:[%s294 + $0x400] sm:$0xff]
                %361 = vst [vmem:[%s295 + $0x100] sm:$0xff] %v360
                %v362 = vld [vmem:[%s294 + $0x408] sm:$0xff]
                %363 = vst [vmem:[%s295 + $0x108] sm:$0xff] %v362
                %v364 = vld [vmem:[%s294 + $0x410] sm:$0xff]
                %365 = vst [vmem:[%s295 + $0x110] sm:$0xff] %v364
                %v366 = vld [vmem:[%s294 + $0x418] sm:$0xff]
                %367 = vst [vmem:[%s295 + $0x118] sm:$0xff] %v366
                %v368 = vld [vmem:[%s294 + $0x480] sm:$0xff]
                %369 = vst [vmem:[%s295 + $0x120] sm:$0xff] %v368
                %v370 = vld [vmem:[%s294 + $0x488] sm:$0xff]
                %371 = vst [vmem:[%s295 + $0x128] sm:$0xff] %v370
                %v372 = vld [vmem:[%s294 + $0x490] sm:$0xff]
                %373 = vst [vmem:[%s295 + $0x130] sm:$0xff] %v372
                %v374 = vld [vmem:[%s294 + $0x498] sm:$0xff]
                %375 = vst [vmem:[%s295 + $0x138] sm:$0xff] %v374
                %v376 = vld [vmem:[%s294 + $0x500] sm:$0xff]
                %377 = vst [vmem:[%s295 + $0x140] sm:$0xff] %v376
                %v378 = vld [vmem:[%s294 + $0x508] sm:$0xff]
                %379 = vst [vmem:[%s295 + $0x148] sm:$0xff] %v378
                %v380 = vld [vmem:[%s294 + $0x510] sm:$0xff]
                %381 = vst [vmem:[%s295 + $0x150] sm:$0xff] %v380
                %v382 = vld [vmem:[%s294 + $0x518] sm:$0xff]
                %383 = vst [vmem:[%s295 + $0x158] sm:$0xff] %v382
                %v384 = vld [vmem:[%s294 + $0x580] sm:$0xff]
                %385 = vst [vmem:[%s295 + $0x160] sm:$0xff] %v384
                %v386 = vld [vmem:[%s294 + $0x588] sm:$0xff]
                %387 = vst [vmem:[%s295 + $0x168] sm:$0xff] %v386
                %v388 = vld [vmem:[%s294 + $0x590] sm:$0xff]
                %389 = vst [vmem:[%s295 + $0x170] sm:$0xff] %v388
                %v390 = vld [vmem:[%s294 + $0x598] sm:$0xff]
                %391 = vst [vmem:[%s295 + $0x178] sm:$0xff] %v390
                %v392 = vld [vmem:[%s294 + $0x600] sm:$0xff]
                %393 = vst [vmem:[%s295 + $0x180] sm:$0xff] %v392
                %v394 = vld [vmem:[%s294 + $0x608] sm:$0xff]
                %395 = vst [vmem:[%s295 + $0x188] sm:$0xff] %v394
                %v396 = vld [vmem:[%s294 + $0x610] sm:$0xff]
                %397 = vst [vmem:[%s295 + $0x190] sm:$0xff] %v396
                %v398 = vld [vmem:[%s294 + $0x618] sm:$0xff]
                %399 = vst [vmem:[%s295 + $0x198] sm:$0xff] %v398
                %v400 = vld [vmem:[%s294 + $0x680] sm:$0xff]
                %401 = vst [vmem:[%s295 + $0x1a0] sm:$0xff] %v400
                %v402 = vld [vmem:[%s294 + $0x688] sm:$0xff]
                %403 = vst [vmem:[%s295 + $0x1a8] sm:$0xff] %v402
                %v404 = vld [vmem:[%s294 + $0x690] sm:$0xff]
                %405 = vst [vmem:[%s295 + $0x1b0] sm:$0xff] %v404
                %v406 = vld [vmem:[%s294 + $0x698] sm:$0xff]
                %407 = vst [vmem:[%s295 + $0x1b8] sm:$0xff] %v406
                %v408 = vld [vmem:[%s294 + $0x700] sm:$0xff]
                %409 = vst [vmem:[%s295 + $0x1c0] sm:$0xff] %v408
                %v410 = vld [vmem:[%s294 + $0x708] sm:$0xff]
                %411 = vst [vmem:[%s295 + $0x1c8] sm:$0xff] %v410
                %v412 = vld [vmem:[%s294 + $0x710] sm:$0xff]
                %413 = vst [vmem:[%s295 + $0x1d0] sm:$0xff] %v412
                %v414 = vld [vmem:[%s294 + $0x718] sm:$0xff]
                %415 = vst [vmem:[%s295 + $0x1d8] sm:$0xff] %v414
                %v416 = vld [vmem:[%s294 + $0x780] sm:$0xff]
                %417 = vst [vmem:[%s295 + $0x1e0] sm:$0xff] %v416
                %v418 = vld [vmem:[%s294 + $0x788] sm:$0xff]
                %419 = vst [vmem:[%s295 + $0x1e8] sm:$0xff] %v418
                %v420 = vld [vmem:[%s294 + $0x790] sm:$0xff]
                %421 = vst [vmem:[%s295 + $0x1f0] sm:$0xff] %v420
                %v422 = vld [vmem:[%s294 + $0x798] sm:$0xff]
                %423 = vst [vmem:[%s295 + $0x1f8] sm:$0xff] %v422
                %v424 = vld [vmem:[%s294 + $0x800] sm:$0xff]
                %425 = vst [vmem:[%s295 + $0x200] sm:$0xff] %v424
                %v426 = vld [vmem:[%s294 + $0x808] sm:$0xff]
                %427 = vst [vmem:[%s295 + $0x208] sm:$0xff] %v426
                %v428 = vld [vmem:[%s294 + $0x810] sm:$0xff]
                %429 = vst [vmem:[%s295 + $0x210] sm:$0xff] %v428
                %v430 = vld [vmem:[%s294 + $0x818] sm:$0xff]
                %431 = vst [vmem:[%s295 + $0x218] sm:$0xff] %v430
                %v432 = vld [vmem:[%s294 + $0x880] sm:$0xff]
                %433 = vst [vmem:[%s295 + $0x220] sm:$0xff] %v432
                %v434 = vld [vmem:[%s294 + $0x888] sm:$0xff]
                %435 = vst [vmem:[%s295 + $0x228] sm:$0xff] %v434
                %v436 = vld [vmem:[%s294 + $0x890] sm:$0xff]
                %437 = vst [vmem:[%s295 + $0x230] sm:$0xff] %v436
                %v438 = vld [vmem:[%s294 + $0x898] sm:$0xff]
                %439 = vst [vmem:[%s295 + $0x238] sm:$0xff] %v438
                %v440 = vld [vmem:[%s294 + $0x900] sm:$0xff]
                %441 = vst [vmem:[%s295 + $0x240] sm:$0xff] %v440
                %v442 = vld [vmem:[%s294 + $0x908] sm:$0xff]
                %443 = vst [vmem:[%s295 + $0x248] sm:$0xff] %v442
                %v444 = vld [vmem:[%s294 + $0x910] sm:$0xff]
                %445 = vst [vmem:[%s295 + $0x250] sm:$0xff] %v444
                %v446 = vld [vmem:[%s294 + $0x918] sm:$0xff]
                %447 = vst [vmem:[%s295 + $0x258] sm:$0xff] %v446
                %v448 = vld [vmem:[%s294 + $0x980] sm:$0xff]
                %449 = vst [vmem:[%s295 + $0x260] sm:$0xff] %v448
                %v450 = vld [vmem:[%s294 + $0x988] sm:$0xff]
                %451 = vst [vmem:[%s295 + $0x268] sm:$0xff] %v450
                %v452 = vld [vmem:[%s294 + $0x990] sm:$0xff]
                %453 = vst [vmem:[%s295 + $0x270] sm:$0xff] %v452
                %v454 = vld [vmem:[%s294 + $0x998] sm:$0xff]
                %455 = vst [vmem:[%s295 + $0x278] sm:$0xff] %v454
                %v456 = vld [vmem:[%s294 + $0xa00] sm:$0xff]
                %457 = vst [vmem:[%s295 + $0x280] sm:$0xff] %v456
                %v458 = vld [vmem:[%s294 + $0xa08] sm:$0xff]
                %459 = vst [vmem:[%s295 + $0x288] sm:$0xff] %v458
                %v460 = vld [vmem:[%s294 + $0xa10] sm:$0xff]
                %461 = vst [vmem:[%s295 + $0x290] sm:$0xff] %v460
                %v462 = vld [vmem:[%s294 + $0xa18] sm:$0xff]
                %463 = vst [vmem:[%s295 + $0x298] sm:$0xff] %v462
                %v464 = vld [vmem:[%s294 + $0xa80] sm:$0xff]
                %465 = vst [vmem:[%s295 + $0x2a0] sm:$0xff] %v464
                %v466 = vld [vmem:[%s294 + $0xa88] sm:$0xff]
                %467 = vst [vmem:[%s295 + $0x2a8] sm:$0xff] %v466
                %v468 = vld [vmem:[%s294 + $0xa90] sm:$0xff]
                %469 = vst [vmem:[%s295 + $0x2b0] sm:$0xff] %v468
                %v470 = vld [vmem:[%s294 + $0xa98] sm:$0xff]
                %471 = vst [vmem:[%s295 + $0x2b8] sm:$0xff] %v470
                %v472 = vld [vmem:[%s294 + $0xb00] sm:$0xff]
                %473 = vst [vmem:[%s295 + $0x2c0] sm:$0xff] %v472
                %v474 = vld [vmem:[%s294 + $0xb08] sm:$0xff]
                %475 = vst [vmem:[%s295 + $0x2c8] sm:$0xff] %v474
                %v476 = vld [vmem:[%s294 + $0xb10] sm:$0xff]
                %477 = vst [vmem:[%s295 + $0x2d0] sm:$0xff] %v476
                %v478 = vld [vmem:[%s294 + $0xb18] sm:$0xff]
                %479 = vst [vmem:[%s295 + $0x2d8] sm:$0xff] %v478
                %v480 = vld [vmem:[%s294 + $0xb80] sm:$0xff]
                %481 = vst [vmem:[%s295 + $0x2e0] sm:$0xff] %v480
                %v482 = vld [vmem:[%s294 + $0xb88] sm:$0xff]
                %483 = vst [vmem:[%s295 + $0x2e8] sm:$0xff] %v482
                %v484 = vld [vmem:[%s294 + $0xb90] sm:$0xff]
                %485 = vst [vmem:[%s295 + $0x2f0] sm:$0xff] %v484
                %v486 = vld [vmem:[%s294 + $0xb98] sm:$0xff]
                %487 = vst [vmem:[%s295 + $0x2f8] sm:$0xff] %v486
                %v488 = vld [vmem:[%s294 + $0xc00] sm:$0xff]
                %489 = vst [vmem:[%s295 + $0x300] sm:$0xff] %v488
                %v490 = vld [vmem:[%s294 + $0xc08] sm:$0xff]
                %491 = vst [vmem:[%s295 + $0x308] sm:$0xff] %v490
                %v492 = vld [vmem:[%s294 + $0xc10] sm:$0xff]
                %493 = vst [vmem:[%s295 + $0x310] sm:$0xff] %v492
                %v494 = vld [vmem:[%s294 + $0xc18] sm:$0xff]
                %495 = vst [vmem:[%s295 + $0x318] sm:$0xff] %v494
                %v496 = vld [vmem:[%s294 + $0xc80] sm:$0xff]
                %497 = vst [vmem:[%s295 + $0x320] sm:$0xff] %v496
                %v498 = vld [vmem:[%s294 + $0xc88] sm:$0xff]
                %499 = vst [vmem:[%s295 + $0x328] sm:$0xff] %v498
                %v500 = vld [vmem:[%s294 + $0xc90] sm:$0xff]
                %501 = vst [vmem:[%s295 + $0x330] sm:$0xff] %v500
                %v502 = vld [vmem:[%s294 + $0xc98] sm:$0xff]
                %503 = vst [vmem:[%s295 + $0x338] sm:$0xff] %v502
                %v504 = vld [vmem:[%s294 + $0xd00] sm:$0xff]
                %505 = vst [vmem:[%s295 + $0x340] sm:$0xff] %v504
                %v506 = vld [vmem:[%s294 + $0xd08] sm:$0xff]
                %507 = vst [vmem:[%s295 + $0x348] sm:$0xff] %v506
                %v508 = vld [vmem:[%s294 + $0xd10] sm:$0xff]
                %509 = vst [vmem:[%s295 + $0x350] sm:$0xff] %v508
                %v510 = vld [vmem:[%s294 + $0xd18] sm:$0xff]
                %511 = vst [vmem:[%s295 + $0x358] sm:$0xff] %v510
                %v512 = vld [vmem:[%s294 + $0xd80] sm:$0xff]
                %513 = vst [vmem:[%s295 + $0x360] sm:$0xff] %v512
                %v514 = vld [vmem:[%s294 + $0xd88] sm:$0xff]
                %515 = vst [vmem:[%s295 + $0x368] sm:$0xff] %v514
                %v516 = vld [vmem:[%s294 + $0xd90] sm:$0xff]
                %517 = vst [vmem:[%s295 + $0x370] sm:$0xff] %v516
                %v518 = vld [vmem:[%s294 + $0xd98] sm:$0xff]
                %519 = vst [vmem:[%s295 + $0x378] sm:$0xff] %v518
                %v520 = vld [vmem:[%s294 + $0xe00] sm:$0xff]
                %521 = vst [vmem:[%s295 + $0x380] sm:$0xff] %v520
                %v522 = vld [vmem:[%s294 + $0xe08] sm:$0xff]
                %523 = vst [vmem:[%s295 + $0x388] sm:$0xff] %v522
                %v524 = vld [vmem:[%s294 + $0xe10] sm:$0xff]
                %525 = vst [vmem:[%s295 + $0x390] sm:$0xff] %v524
                %v526 = vld [vmem:[%s294 + $0xe18] sm:$0xff]
                %527 = vst [vmem:[%s295 + $0x398] sm:$0xff] %v526
                %v528 = vld [vmem:[%s294 + $0xe80] sm:$0xff]
                %529 = vst [vmem:[%s295 + $0x3a0] sm:$0xff] %v528
                %v530 = vld [vmem:[%s294 + $0xe88] sm:$0xff]
                %531 = vst [vmem:[%s295 + $0x3a8] sm:$0xff] %v530
                %v532 = vld [vmem:[%s294 + $0xe90] sm:$0xff]
                %533 = vst [vmem:[%s295 + $0x3b0] sm:$0xff] %v532
                %v534 = vld [vmem:[%s294 + $0xe98] sm:$0xff]
                %535 = vst [vmem:[%s295 + $0x3b8] sm:$0xff] %v534
                %v536 = vld [vmem:[%s294 + $0xf00] sm:$0xff]
                %537 = vst [vmem:[%s295 + $0x3c0] sm:$0xff] %v536
                %v538 = vld [vmem:[%s294 + $0xf08] sm:$0xff]
                %539 = vst [vmem:[%s295 + $0x3c8] sm:$0xff] %v538
                %v540 = vld [vmem:[%s294 + $0xf10] sm:$0xff]
                %541 = vst [vmem:[%s295 + $0x3d0] sm:$0xff] %v540
                %v542 = vld [vmem:[%s294 + $0xf18] sm:$0xff]
                %543 = vst [vmem:[%s295 + $0x3d8] sm:$0xff] %v542
                %v544 = vld [vmem:[%s294 + $0xf80] sm:$0xff]
                %545 = vst [vmem:[%s295 + $0x3e0] sm:$0xff] %v544
                %v546 = vld [vmem:[%s294 + $0xf88] sm:$0xff]
                %547 = vst [vmem:[%s295 + $0x3e8] sm:$0xff] %v546
                %v548 = vld [vmem:[%s294 + $0xf90] sm:$0xff]
                %549 = vst [vmem:[%s295 + $0x3f0] sm:$0xff] %v548
                %v550 = vld [vmem:[%s294 + $0xf98] sm:$0xff]
                %551 = vst [vmem:[%s295 + $0x3f8] sm:$0xff] %v550
                %v552 = vld [vmem:[%s294 + $0x1000] sm:$0xff]
                %553 = vst [vmem:[%s295 + $0x400] sm:$0xff] %v552
                %v554 = vld [vmem:[%s294 + $0x1008] sm:$0xff]
                %555 = vst [vmem:[%s295 + $0x408] sm:$0xff] %v554
                %v556 = vld [vmem:[%s294 + $0x1010] sm:$0xff]
                %557 = vst [vmem:[%s295 + $0x410] sm:$0xff] %v556
                %v558 = vld [vmem:[%s294 + $0x1018] sm:$0xff]
                %559 = vst [vmem:[%s295 + $0x418] sm:$0xff] %v558
                %v560 = vld [vmem:[%s294 + $0x1080] sm:$0xff]
                %561 = vst [vmem:[%s295 + $0x420] sm:$0xff] %v560
                %v562 = vld [vmem:[%s294 + $0x1088] sm:$0xff]
                %563 = vst [vmem:[%s295 + $0x428] sm:$0xff] %v562
                %v564 = vld [vmem:[%s294 + $0x1090] sm:$0xff]
                %565 = vst [vmem:[%s295 + $0x430] sm:$0xff] %v564
                %v566 = vld [vmem:[%s294 + $0x1098] sm:$0xff]
                %567 = vst [vmem:[%s295 + $0x438] sm:$0xff] %v566
                %v568 = vld [vmem:[%s294 + $0x1100] sm:$0xff]
                %569 = vst [vmem:[%s295 + $0x440] sm:$0xff] %v568
                %v570 = vld [vmem:[%s294 + $0x1108] sm:$0xff]
                %571 = vst [vmem:[%s295 + $0x448] sm:$0xff] %v570
                %v572 = vld [vmem:[%s294 + $0x1110] sm:$0xff]
                %573 = vst [vmem:[%s295 + $0x450] sm:$0xff] %v572
                %v574 = vld [vmem:[%s294 + $0x1118] sm:$0xff]
                %575 = vst [vmem:[%s295 + $0x458] sm:$0xff] %v574
                %v576 = vld [vmem:[%s294 + $0x1180] sm:$0xff]
                %577 = vst [vmem:[%s295 + $0x460] sm:$0xff] %v576
                %v578 = vld [vmem:[%s294 + $0x1188] sm:$0xff]
                %579 = vst [vmem:[%s295 + $0x468] sm:$0xff] %v578
                %v580 = vld [vmem:[%s294 + $0x1190] sm:$0xff]
                %581 = vst [vmem:[%s295 + $0x470] sm:$0xff] %v580
                %v582 = vld [vmem:[%s294 + $0x1198] sm:$0xff]
                %583 = vst [vmem:[%s295 + $0x478] sm:$0xff] %v582
                %v584 = vld [vmem:[%s294 + $0x1200] sm:$0xff]
                %585 = vst [vmem:[%s295 + $0x480] sm:$0xff] %v584
                %v586 = vld [vmem:[%s294 + $0x1208] sm:$0xff]
                %587 = vst [vmem:[%s295 + $0x488] sm:$0xff] %v586
                %v588 = vld [vmem:[%s294 + $0x1210] sm:$0xff]
                %589 = vst [vmem:[%s295 + $0x490] sm:$0xff] %v588
                %v590 = vld [vmem:[%s294 + $0x1218] sm:$0xff]
                %591 = vst [vmem:[%s295 + $0x498] sm:$0xff] %v590
                %v592 = vld [vmem:[%s294 + $0x1280] sm:$0xff]
                %593 = vst [vmem:[%s295 + $0x4a0] sm:$0xff] %v592
                %v594 = vld [vmem:[%s294 + $0x1288] sm:$0xff]
                %595 = vst [vmem:[%s295 + $0x4a8] sm:$0xff] %v594
                %v596 = vld [vmem:[%s294 + $0x1290] sm:$0xff]
                %597 = vst [vmem:[%s295 + $0x4b0] sm:$0xff] %v596
                %v598 = vld [vmem:[%s294 + $0x1298] sm:$0xff]
                %599 = vst [vmem:[%s295 + $0x4b8] sm:$0xff] %v598
                %v600 = vld [vmem:[%s294 + $0x1300] sm:$0xff]
                %601 = vst [vmem:[%s295 + $0x4c0] sm:$0xff] %v600
                %v602 = vld [vmem:[%s294 + $0x1308] sm:$0xff]
                %603 = vst [vmem:[%s295 + $0x4c8] sm:$0xff] %v602
                %v604 = vld [vmem:[%s294 + $0x1310] sm:$0xff]
                %605 = vst [vmem:[%s295 + $0x4d0] sm:$0xff] %v604
                %v606 = vld [vmem:[%s294 + $0x1318] sm:$0xff]
                %607 = vst [vmem:[%s295 + $0x4d8] sm:$0xff] %v606
                %v608 = vld [vmem:[%s294 + $0x1380] sm:$0xff]
                %609 = vst [vmem:[%s295 + $0x4e0] sm:$0xff] %v608
                %v610 = vld [vmem:[%s294 + $0x1388] sm:$0xff]
                %611 = vst [vmem:[%s295 + $0x4e8] sm:$0xff] %v610
                %v612 = vld [vmem:[%s294 + $0x1390] sm:$0xff]
                %613 = vst [vmem:[%s295 + $0x4f0] sm:$0xff] %v612
                %v614 = vld [vmem:[%s294 + $0x1398] sm:$0xff]
                %615 = vst [vmem:[%s295 + $0x4f8] sm:$0xff] %v614
                %v616 = vld [vmem:[%s294 + $0x1400] sm:$0xff]
                %617 = vst [vmem:[%s295 + $0x500] sm:$0xff] %v616
                %v618 = vld [vmem:[%s294 + $0x1408] sm:$0xff]
                %619 = vst [vmem:[%s295 + $0x508] sm:$0xff] %v618
                %v620 = vld [vmem:[%s294 + $0x1410] sm:$0xff]
                %621 = vst [vmem:[%s295 + $0x510] sm:$0xff] %v620
                %v622 = vld [vmem:[%s294 + $0x1418] sm:$0xff]
                %623 = vst [vmem:[%s295 + $0x518] sm:$0xff] %v622
                %v624 = vld [vmem:[%s294 + $0x1480] sm:$0xff]
                %625 = vst [vmem:[%s295 + $0x520] sm:$0xff] %v624
                %v626 = vld [vmem:[%s294 + $0x1488] sm:$0xff]
                %627 = vst [vmem:[%s295 + $0x528] sm:$0xff] %v626
                %v628 = vld [vmem:[%s294 + $0x1490] sm:$0xff]
                %629 = vst [vmem:[%s295 + $0x530] sm:$0xff] %v628
                %v630 = vld [vmem:[%s294 + $0x1498] sm:$0xff]
                %631 = vst [vmem:[%s295 + $0x538] sm:$0xff] %v630
                %v632 = vld [vmem:[%s294 + $0x1500] sm:$0xff]
                %633 = vst [vmem:[%s295 + $0x540] sm:$0xff] %v632
                %v634 = vld [vmem:[%s294 + $0x1508] sm:$0xff]
                %635 = vst [vmem:[%s295 + $0x548] sm:$0xff] %v634
                %v636 = vld [vmem:[%s294 + $0x1510] sm:$0xff]
                %637 = vst [vmem:[%s295 + $0x550] sm:$0xff] %v636
                %v638 = vld [vmem:[%s294 + $0x1518] sm:$0xff]
                %639 = vst [vmem:[%s295 + $0x558] sm:$0xff] %v638
                %v640 = vld [vmem:[%s294 + $0x1580] sm:$0xff]
                %641 = vst [vmem:[%s295 + $0x560] sm:$0xff] %v640
                %v642 = vld [vmem:[%s294 + $0x1588] sm:$0xff]
                %643 = vst [vmem:[%s295 + $0x568] sm:$0xff] %v642
                %v644 = vld [vmem:[%s294 + $0x1590] sm:$0xff]
                %645 = vst [vmem:[%s295 + $0x570] sm:$0xff] %v644
                %v646 = vld [vmem:[%s294 + $0x1598] sm:$0xff]
                %647 = vst [vmem:[%s295 + $0x578] sm:$0xff] %v646
                %v648 = vld [vmem:[%s294 + $0x1600] sm:$0xff]
                %649 = vst [vmem:[%s295 + $0x580] sm:$0xff] %v648
                %v650 = vld [vmem:[%s294 + $0x1608] sm:$0xff]
                %651 = vst [vmem:[%s295 + $0x588] sm:$0xff] %v650
                %v652 = vld [vmem:[%s294 + $0x1610] sm:$0xff]
                %653 = vst [vmem:[%s295 + $0x590] sm:$0xff] %v652
                %v654 = vld [vmem:[%s294 + $0x1618] sm:$0xff]
                %655 = vst [vmem:[%s295 + $0x598] sm:$0xff] %v654
                %v656 = vld [vmem:[%s294 + $0x1680] sm:$0xff]
                %657 = vst [vmem:[%s295 + $0x5a0] sm:$0xff] %v656
                %v658 = vld [vmem:[%s294 + $0x1688] sm:$0xff]
                %659 = vst [vmem:[%s295 + $0x5a8] sm:$0xff] %v658
                %v660 = vld [vmem:[%s294 + $0x1690] sm:$0xff]
                %661 = vst [vmem:[%s295 + $0x5b0] sm:$0xff] %v660
                %v662 = vld [vmem:[%s294 + $0x1698] sm:$0xff]
                %663 = vst [vmem:[%s295 + $0x5b8] sm:$0xff] %v662
                %v664 = vld [vmem:[%s294 + $0x1700] sm:$0xff]
                %665 = vst [vmem:[%s295 + $0x5c0] sm:$0xff] %v664
                %v666 = vld [vmem:[%s294 + $0x1708] sm:$0xff]
                %667 = vst [vmem:[%s295 + $0x5c8] sm:$0xff] %v666
                %v668 = vld [vmem:[%s294 + $0x1710] sm:$0xff]
                %669 = vst [vmem:[%s295 + $0x5d0] sm:$0xff] %v668
                %v670 = vld [vmem:[%s294 + $0x1718] sm:$0xff]
                %671 = vst [vmem:[%s295 + $0x5d8] sm:$0xff] %v670
                %v672 = vld [vmem:[%s294 + $0x1780] sm:$0xff]
                %673 = vst [vmem:[%s295 + $0x5e0] sm:$0xff] %v672
                %v674 = vld [vmem:[%s294 + $0x1788] sm:$0xff]
                %675 = vst [vmem:[%s295 + $0x5e8] sm:$0xff] %v674
                %v676 = vld [vmem:[%s294 + $0x1790] sm:$0xff]
                %677 = vst [vmem:[%s295 + $0x5f0] sm:$0xff] %v676
                %v678 = vld [vmem:[%s294 + $0x1798] sm:$0xff]
                %679 = vst [vmem:[%s295 + $0x5f8] sm:$0xff] %v678
                %v680 = vld [vmem:[%s294 + $0x1800] sm:$0xff]
                %681 = vst [vmem:[%s295 + $0x600] sm:$0xff] %v680
                %v682 = vld [vmem:[%s294 + $0x1808] sm:$0xff]
                %683 = vst [vmem:[%s295 + $0x608] sm:$0xff] %v682
                %v684 = vld [vmem:[%s294 + $0x1810] sm:$0xff]
                %685 = vst [vmem:[%s295 + $0x610] sm:$0xff] %v684
                %v686 = vld [vmem:[%s294 + $0x1818] sm:$0xff]
                %687 = vst [vmem:[%s295 + $0x618] sm:$0xff] %v686
                %v688 = vld [vmem:[%s294 + $0x1880] sm:$0xff]
                %689 = vst [vmem:[%s295 + $0x620] sm:$0xff] %v688
                %v690 = vld [vmem:[%s294 + $0x1888] sm:$0xff]
                %691 = vst [vmem:[%s295 + $0x628] sm:$0xff] %v690
                %v692 = vld [vmem:[%s294 + $0x1890] sm:$0xff]
                %693 = vst [vmem:[%s295 + $0x630] sm:$0xff] %v692
                %v694 = vld [vmem:[%s294 + $0x1898] sm:$0xff]
                %695 = vst [vmem:[%s295 + $0x638] sm:$0xff] %v694
                %v696 = vld [vmem:[%s294 + $0x1900] sm:$0xff]
                %697 = vst [vmem:[%s295 + $0x640] sm:$0xff] %v696
                %v698 = vld [vmem:[%s294 + $0x1908] sm:$0xff]
                %699 = vst [vmem:[%s295 + $0x648] sm:$0xff] %v698
                %v700 = vld [vmem:[%s294 + $0x1910] sm:$0xff]
                %701 = vst [vmem:[%s295 + $0x650] sm:$0xff] %v700
                %v702 = vld [vmem:[%s294 + $0x1918] sm:$0xff]
                %703 = vst [vmem:[%s295 + $0x658] sm:$0xff] %v702
                %v704 = vld [vmem:[%s294 + $0x1980] sm:$0xff]
                %705 = vst [vmem:[%s295 + $0x660] sm:$0xff] %v704
                %v706 = vld [vmem:[%s294 + $0x1988] sm:$0xff]
                %707 = vst [vmem:[%s295 + $0x668] sm:$0xff] %v706
                %v708 = vld [vmem:[%s294 + $0x1990] sm:$0xff]
                %709 = vst [vmem:[%s295 + $0x670] sm:$0xff] %v708
                %v710 = vld [vmem:[%s294 + $0x1998] sm:$0xff]
                %711 = vst [vmem:[%s295 + $0x678] sm:$0xff] %v710
                %v712 = vld [vmem:[%s294 + $0x1a00] sm:$0xff]
                %713 = vst [vmem:[%s295 + $0x680] sm:$0xff] %v712
                %v714 = vld [vmem:[%s294 + $0x1a08] sm:$0xff]
                %715 = vst [vmem:[%s295 + $0x688] sm:$0xff] %v714
                %v716 = vld [vmem:[%s294 + $0x1a10] sm:$0xff]
                %717 = vst [vmem:[%s295 + $0x690] sm:$0xff] %v716
                %v718 = vld [vmem:[%s294 + $0x1a18] sm:$0xff]
                %719 = vst [vmem:[%s295 + $0x698] sm:$0xff] %v718
                %v720 = vld [vmem:[%s294 + $0x1a80] sm:$0xff]
                %721 = vst [vmem:[%s295 + $0x6a0] sm:$0xff] %v720
                %v722 = vld [vmem:[%s294 + $0x1a88] sm:$0xff]
                %723 = vst [vmem:[%s295 + $0x6a8] sm:$0xff] %v722
                %v724 = vld [vmem:[%s294 + $0x1a90] sm:$0xff]
                %725 = vst [vmem:[%s295 + $0x6b0] sm:$0xff] %v724
                %v726 = vld [vmem:[%s294 + $0x1a98] sm:$0xff]
                %727 = vst [vmem:[%s295 + $0x6b8] sm:$0xff] %v726
                %v728 = vld [vmem:[%s294 + $0x1b00] sm:$0xff]
                %729 = vst [vmem:[%s295 + $0x6c0] sm:$0xff] %v728
                %v730 = vld [vmem:[%s294 + $0x1b08] sm:$0xff]
                %731 = vst [vmem:[%s295 + $0x6c8] sm:$0xff] %v730
                %v732 = vld [vmem:[%s294 + $0x1b10] sm:$0xff]
                %733 = vst [vmem:[%s295 + $0x6d0] sm:$0xff] %v732
                %v734 = vld [vmem:[%s294 + $0x1b18] sm:$0xff]
                %735 = vst [vmem:[%s295 + $0x6d8] sm:$0xff] %v734
                %v736 = vld [vmem:[%s294 + $0x1b80] sm:$0xff]
                %737 = vst [vmem:[%s295 + $0x6e0] sm:$0xff] %v736
                %v738 = vld [vmem:[%s294 + $0x1b88] sm:$0xff]
                %739 = vst [vmem:[%s295 + $0x6e8] sm:$0xff] %v738
                %v740 = vld [vmem:[%s294 + $0x1b90] sm:$0xff]
                %741 = vst [vmem:[%s295 + $0x6f0] sm:$0xff] %v740
                %v742 = vld [vmem:[%s294 + $0x1b98] sm:$0xff]
                %743 = vst [vmem:[%s295 + $0x6f8] sm:$0xff] %v742
                %v744 = vld [vmem:[%s294 + $0x1c00] sm:$0xff]
                %745 = vst [vmem:[%s295 + $0x700] sm:$0xff] %v744
                %v746 = vld [vmem:[%s294 + $0x1c08] sm:$0xff]
                %747 = vst [vmem:[%s295 + $0x708] sm:$0xff] %v746
                %v748 = vld [vmem:[%s294 + $0x1c10] sm:$0xff]
                %749 = vst [vmem:[%s295 + $0x710] sm:$0xff] %v748
                %v750 = vld [vmem:[%s294 + $0x1c18] sm:$0xff]
                %751 = vst [vmem:[%s295 + $0x718] sm:$0xff] %v750
                %v752 = vld [vmem:[%s294 + $0x1c80] sm:$0xff]
                %753 = vst [vmem:[%s295 + $0x720] sm:$0xff] %v752
                %v754 = vld [vmem:[%s294 + $0x1c88] sm:$0xff]
                %755 = vst [vmem:[%s295 + $0x728] sm:$0xff] %v754
                %v756 = vld [vmem:[%s294 + $0x1c90] sm:$0xff]
                %757 = vst [vmem:[%s295 + $0x730] sm:$0xff] %v756
                %v758 = vld [vmem:[%s294 + $0x1c98] sm:$0xff]
                %759 = vst [vmem:[%s295 + $0x738] sm:$0xff] %v758
                %v760 = vld [vmem:[%s294 + $0x1d00] sm:$0xff]
                %761 = vst [vmem:[%s295 + $0x740] sm:$0xff] %v760
                %v762 = vld [vmem:[%s294 + $0x1d08] sm:$0xff]
                %763 = vst [vmem:[%s295 + $0x748] sm:$0xff] %v762
                %v764 = vld [vmem:[%s294 + $0x1d10] sm:$0xff]
                %765 = vst [vmem:[%s295 + $0x750] sm:$0xff] %v764
                %v766 = vld [vmem:[%s294 + $0x1d18] sm:$0xff]
                %767 = vst [vmem:[%s295 + $0x758] sm:$0xff] %v766
                %v768 = vld [vmem:[%s294 + $0x1d80] sm:$0xff]
                %769 = vst [vmem:[%s295 + $0x760] sm:$0xff] %v768
                %v770 = vld [vmem:[%s294 + $0x1d88] sm:$0xff]
                %771 = vst [vmem:[%s295 + $0x768] sm:$0xff] %v770
                %v772 = vld [vmem:[%s294 + $0x1d90] sm:$0xff]
                %773 = vst [vmem:[%s295 + $0x770] sm:$0xff] %v772
                %v774 = vld [vmem:[%s294 + $0x1d98] sm:$0xff]
                %775 = vst [vmem:[%s295 + $0x778] sm:$0xff] %v774
                %v776 = vld [vmem:[%s294 + $0x1e00] sm:$0xff]
                %777 = vst [vmem:[%s295 + $0x780] sm:$0xff] %v776
                %v778 = vld [vmem:[%s294 + $0x1e08] sm:$0xff]
                %779 = vst [vmem:[%s295 + $0x788] sm:$0xff] %v778
                %v780 = vld [vmem:[%s294 + $0x1e10] sm:$0xff]
                %781 = vst [vmem:[%s295 + $0x790] sm:$0xff] %v780
                %v782 = vld [vmem:[%s294 + $0x1e18] sm:$0xff]
                %783 = vst [vmem:[%s295 + $0x798] sm:$0xff] %v782
                %v784 = vld [vmem:[%s294 + $0x1e80] sm:$0xff]
                %785 = vst [vmem:[%s295 + $0x7a0] sm:$0xff] %v784
                %v786 = vld [vmem:[%s294 + $0x1e88] sm:$0xff]
                %787 = vst [vmem:[%s295 + $0x7a8] sm:$0xff] %v786
                %v788 = vld [vmem:[%s294 + $0x1e90] sm:$0xff]
                %789 = vst [vmem:[%s295 + $0x7b0] sm:$0xff] %v788
                %v790 = vld [vmem:[%s294 + $0x1e98] sm:$0xff]
                %791 = vst [vmem:[%s295 + $0x7b8] sm:$0xff] %v790
                %v792 = vld [vmem:[%s294 + $0x1f00] sm:$0xff]
                %793 = vst [vmem:[%s295 + $0x7c0] sm:$0xff] %v792
                %v794 = vld [vmem:[%s294 + $0x1f08] sm:$0xff]
                %795 = vst [vmem:[%s295 + $0x7c8] sm:$0xff] %v794
                %v796 = vld [vmem:[%s294 + $0x1f10] sm:$0xff]
                %797 = vst [vmem:[%s295 + $0x7d0] sm:$0xff] %v796
                %v798 = vld [vmem:[%s294 + $0x1f18] sm:$0xff]
                %799 = vst [vmem:[%s295 + $0x7d8] sm:$0xff] %v798
                %v800 = vld [vmem:[%s294 + $0x1f80] sm:$0xff]
                %801 = vst [vmem:[%s295 + $0x7e0] sm:$0xff] %v800
                %v802 = vld [vmem:[%s294 + $0x1f88] sm:$0xff]
                %803 = vst [vmem:[%s295 + $0x7e8] sm:$0xff] %v802
                %v804 = vld [vmem:[%s294 + $0x1f90] sm:$0xff]
                %805 = vst [vmem:[%s295 + $0x7f0] sm:$0xff] %v804
                %v806 = vld [vmem:[%s294 + $0x1f98] sm:$0xff]
                %807 = vst [vmem:[%s295 + $0x7f8] sm:$0xff] %v806
                %v808 = vld [vmem:[%s294 + $0x2000] sm:$0xff]
                %809 = vst [vmem:[%s295 + $0x800] sm:$0xff] %v808
                %v810 = vld [vmem:[%s294 + $0x2008] sm:$0xff]
                %811 = vst [vmem:[%s295 + $0x808] sm:$0xff] %v810
                %v812 = vld [vmem:[%s294 + $0x2010] sm:$0xff]
                %813 = vst [vmem:[%s295 + $0x810] sm:$0xff] %v812
                %v814 = vld [vmem:[%s294 + $0x2018] sm:$0xff]
                %815 = vst [vmem:[%s295 + $0x818] sm:$0xff] %v814
                %v816 = vld [vmem:[%s294 + $0x2080] sm:$0xff]
                %817 = vst [vmem:[%s295 + $0x820] sm:$0xff] %v816
                %v818 = vld [vmem:[%s294 + $0x2088] sm:$0xff]
                %819 = vst [vmem:[%s295 + $0x828] sm:$0xff] %v818
                %v820 = vld [vmem:[%s294 + $0x2090] sm:$0xff]
                %821 = vst [vmem:[%s295 + $0x830] sm:$0xff] %v820
                %v822 = vld [vmem:[%s294 + $0x2098] sm:$0xff]
                %823 = vst [vmem:[%s295 + $0x838] sm:$0xff] %v822
                %v824 = vld [vmem:[%s294 + $0x2100] sm:$0xff]
                %825 = vst [vmem:[%s295 + $0x840] sm:$0xff] %v824
                %v826 = vld [vmem:[%s294 + $0x2108] sm:$0xff]
                %827 = vst [vmem:[%s295 + $0x848] sm:$0xff] %v826
                %v828 = vld [vmem:[%s294 + $0x2110] sm:$0xff]
                %829 = vst [vmem:[%s295 + $0x850] sm:$0xff] %v828
                %v830 = vld [vmem:[%s294 + $0x2118] sm:$0xff]
                %831 = vst [vmem:[%s295 + $0x858] sm:$0xff] %v830
                %v832 = vld [vmem:[%s294 + $0x2180] sm:$0xff]
                %833 = vst [vmem:[%s295 + $0x860] sm:$0xff] %v832
                %v834 = vld [vmem:[%s294 + $0x2188] sm:$0xff]
                %835 = vst [vmem:[%s295 + $0x868] sm:$0xff] %v834
                %v836 = vld [vmem:[%s294 + $0x2190] sm:$0xff]
                %837 = vst [vmem:[%s295 + $0x870] sm:$0xff] %v836
                %v838 = vld [vmem:[%s294 + $0x2198] sm:$0xff]
                %839 = vst [vmem:[%s295 + $0x878] sm:$0xff] %v838
                %v840 = vld [vmem:[%s294 + $0x2200] sm:$0xff]
                %841 = vst [vmem:[%s295 + $0x880] sm:$0xff] %v840
                %v842 = vld [vmem:[%s294 + $0x2208] sm:$0xff]
                %843 = vst [vmem:[%s295 + $0x888] sm:$0xff] %v842
                %v844 = vld [vmem:[%s294 + $0x2210] sm:$0xff]
                %845 = vst [vmem:[%s295 + $0x890] sm:$0xff] %v844
                %v846 = vld [vmem:[%s294 + $0x2218] sm:$0xff]
                %847 = vst [vmem:[%s295 + $0x898] sm:$0xff] %v846
                %v848 = vld [vmem:[%s294 + $0x2280] sm:$0xff]
                %849 = vst [vmem:[%s295 + $0x8a0] sm:$0xff] %v848
                %v850 = vld [vmem:[%s294 + $0x2288] sm:$0xff]
                %851 = vst [vmem:[%s295 + $0x8a8] sm:$0xff] %v850
                %v852 = vld [vmem:[%s294 + $0x2290] sm:$0xff]
                %853 = vst [vmem:[%s295 + $0x8b0] sm:$0xff] %v852
                %v854 = vld [vmem:[%s294 + $0x2298] sm:$0xff]
                %855 = vst [vmem:[%s295 + $0x8b8] sm:$0xff] %v854
                %v856 = vld [vmem:[%s294 + $0x2300] sm:$0xff]
                %857 = vst [vmem:[%s295 + $0x8c0] sm:$0xff] %v856
                %v858 = vld [vmem:[%s294 + $0x2308] sm:$0xff]
                %859 = vst [vmem:[%s295 + $0x8c8] sm:$0xff] %v858
                %v860 = vld [vmem:[%s294 + $0x2310] sm:$0xff]
                %861 = vst [vmem:[%s295 + $0x8d0] sm:$0xff] %v860
                %v862 = vld [vmem:[%s294 + $0x2318] sm:$0xff]
                %863 = vst [vmem:[%s295 + $0x8d8] sm:$0xff] %v862
                %v864 = vld [vmem:[%s294 + $0x2380] sm:$0xff]
                %865 = vst [vmem:[%s295 + $0x8e0] sm:$0xff] %v864
                %v866 = vld [vmem:[%s294 + $0x2388] sm:$0xff]
                %867 = vst [vmem:[%s295 + $0x8e8] sm:$0xff] %v866
                %v868 = vld [vmem:[%s294 + $0x2390] sm:$0xff]
                %869 = vst [vmem:[%s295 + $0x8f0] sm:$0xff] %v868
                %v870 = vld [vmem:[%s294 + $0x2398] sm:$0xff]
                %871 = vst [vmem:[%s295 + $0x8f8] sm:$0xff] %v870
              $region57: #{model_forward.1} parent=51 // loop_footer
                %s293 = sadd.s32 1, %s289
              $region58: #{model_forward.1} parent=51 // loop_footer_branch
                %288 = sbr.rel target = $region54
              $region59: #{model_forward.1} parent=51 // loop_exit
                _
            $region52: #{model_forward.1} parent=47 // pred_fallthru
              _
            // Predicated region
            $region60: #{model_forward.1} parent=47 // pred_check
              _
            $region61: #{model_forward.1} parent=47 // pred_check_branch
              %873 = sbr.rel target = $region63
            $region62: #{model_forward.1} parent=47 // pred_region
              _
            $region63: #{model_forward.1} parent=47 // pred_fallthru
              _
          $region48: #{model_forward.1} parent=43 // pred_fallthru
            _
          %874 = vnop
        $region44: #{model_forward.1} parent=39 // pred_fallthru
          _
      $region40: #{model_forward.1} parent=5 // pred_fallthru
        _
      %p875 = scmp.le.s32.totalorder 1, %s15
      %p876 = scmp.lt.s32.totalorder %s15, 9
      %p877 = pnand %p875, %p876
      %p878 = pneg %p877
      // Predicated region
      $region64: #{model_forward.1} parent=5 // pred_check
        _
      $region65: #{model_forward.1} parent=5 // pred_check_branch
        %880 = sbr.rel (%p877) target = $region67
      $region66: #{model_forward.1} parent=5 // pred_region
        %s881 = ssub.s32 %s15, 1
        %s882 = sand.u32 %s42, 1
        %s883 = sand.u32 %s42, 1
        %s884 = smul.addr %s883, 2304
        %s885 = scalar_lea.vmem [#allocation2], %s884
        // Predicated region
        $region68: #{model_forward.1} parent=66 // pred_check
          %p886 = pneg %p55
        $region69: #{model_forward.1} parent=66 // pred_check_branch
          %888 = sbr.rel (%p886) target = $region71
        $region70: #{model_forward.1} parent=66 // pred_region
          _
        $region71: #{model_forward.1} parent=66 // pred_fallthru
          _
        %s889 = sand.u32 %s42, 1
        %s890 = sand.u32 %s42, 1
        %s891 = smul.addr %s890, 2304
        %s892 = scalar_lea.vmem [#allocation2], %s891
        %p893 = pneg %p55
        %p894 = pneg %p52
        %p895 = pneg %p76
        %p896 = pneg %p73
        %p897 = pneg %p97
        %p898 = pneg %p94
        %p899 = pneg %p118
        %p900 = pneg %p115
        %p901 = pneg %p139
        %p902 = pneg %p136
        %p903 = pneg %p160
        %p904 = pneg %p157
        %p905 = pneg %p181
        %p906 = pneg %p178
        %p907 = pneg %p209
        %p908 = pneg %p206
        %s909 = sand.u32 %s196, 1
        %s910 = sand.u32 %s196, 1
        %s911 = smul.addr %s910, 256
        %s912 = scalar_lea.vmem [#allocation3], %s911
        %p913 = pneg %p235
        %p914 = pneg %p232
        %p915 = scmp.lt.s32.totalorder %s24, 1
        %s916 = scalar_select %p915, %s24, 1
        %s917 = smul.addr %s916, 11
        %s918 = smul.addr %s917, 8
        %s919 = scalar_lea.vmem %s8, %s918
        %s920 = smul.u32 8, %s25
        %s921 = smul.u32 8, %s25
        %p922 = scmp.lt.s32.totalorder %s24, 1
        %s923 = scalar_select %p922, %s24, 1
        %s924 = smul.addr %s923, 11
        %s925 = smul.addr %s924, 8
        %s926 = scalar_lea.vmem %s8, %s925
        %v928 = vld [vmem:[%s885] sm:$0xff]
        %v929 = vld [vmem:[%s885 + $0x8] sm:$0xff]
        %v930 = vld [vmem:[%s885 + $0x10] sm:$0xff]
        %v931 = vld [vmem:[%s885 + $0x18] sm:$0xff]
        %v932 = vld [vmem:[%s885 + $0x20] sm:$0xff]
        %v933 = vld [vmem:[%s885 + $0x28] sm:$0xff]
        %v934 = vld [vmem:[%s885 + $0x30] sm:$0xff]
        %v935 = vld [vmem:[%s885 + $0x38] sm:$0xff]
        %v936 = vld [vmem:[%s885 + $0x40] sm:$0xff]
        %v937 = vld [vmem:[%s885 + $0x48] sm:$0xff]
        %v938 = vld [vmem:[%s885 + $0x50] sm:$0xff]
        %v939 = vld [vmem:[%s885 + $0x58] sm:$0xff]
        %v940 = vld [vmem:[%s885 + $0x60] sm:$0xff]
        %v941 = vld [vmem:[%s885 + $0x68] sm:$0xff]
        %v942 = vld [vmem:[%s885 + $0x70] sm:$0xff]
        %v943 = vld [vmem:[%s885 + $0x78] sm:$0xff]
        %v944 = vld [vmem:[%s885 + $0x80] sm:$0xff]
        %v945 = vld [vmem:[%s885 + $0x88] sm:$0xff]
        %v946 = vld [vmem:[%s885 + $0x90] sm:$0xff]
        %v947 = vld [vmem:[%s885 + $0x98] sm:$0xff]
        %v948 = vld [vmem:[%s885 + $0xa0] sm:$0xff]
        %v949 = vld [vmem:[%s885 + $0xa8] sm:$0xff]
        %v950 = vld [vmem:[%s885 + $0xb0] sm:$0xff]
        %v951 = vld [vmem:[%s885 + $0xb8] sm:$0xff]
        %v952 = vld [vmem:[%s885 + $0xc0] sm:$0xff]
        %v953 = vld [vmem:[%s885 + $0xc8] sm:$0xff]
        %v954 = vld [vmem:[%s885 + $0xd0] sm:$0xff]
        %v955 = vld [vmem:[%s885 + $0xd8] sm:$0xff]
        %v956 = vld [vmem:[%s885 + $0xe0] sm:$0xff]
        %v957 = vld [vmem:[%s885 + $0xe8] sm:$0xff]
        %v958 = vld [vmem:[%s885 + $0xf0] sm:$0xff]
        %v959 = vld [vmem:[%s885 + $0xf8] sm:$0xff]
        %v960 = vld [vmem:[%s885 + $0x100] sm:$0xff]
        %v961 = vld [vmem:[%s885 + $0x108] sm:$0xff]
        %v962 = vld [vmem:[%s885 + $0x110] sm:$0xff]
        %v963 = vld [vmem:[%s885 + $0x118] sm:$0xff]
        %v964 = vld [vmem:[%s885 + $0x120] sm:$0xff]
        %v965 = vld [vmem:[%s885 + $0x128] sm:$0xff]
        %v966 = vld [vmem:[%s885 + $0x130] sm:$0xff]
        %v967 = vld [vmem:[%s885 + $0x138] sm:$0xff]
        %v968 = vld [vmem:[%s885 + $0x140] sm:$0xff]
        %v969 = vld [vmem:[%s885 + $0x148] sm:$0xff]
        %v970 = vld [vmem:[%s885 + $0x150] sm:$0xff]
        %v971 = vld [vmem:[%s885 + $0x158] sm:$0xff]
        %v972 = vld [vmem:[%s885 + $0x160] sm:$0xff]
        %v973 = vld [vmem:[%s885 + $0x168] sm:$0xff]
        %v974 = vld [vmem:[%s885 + $0x170] sm:$0xff]
        %v975 = vld [vmem:[%s885 + $0x178] sm:$0xff]
        %v976 = vld [vmem:[%s885 + $0x180] sm:$0xff]
        %v977 = vld [vmem:[%s885 + $0x188] sm:$0xff]
        %v978 = vld [vmem:[%s885 + $0x190] sm:$0xff]
        %v979 = vld [vmem:[%s885 + $0x198] sm:$0xff]
        %v980 = vld [vmem:[%s885 + $0x1a0] sm:$0xff]
        %v981 = vld [vmem:[%s885 + $0x1a8] sm:$0xff]
        %v982 = vld [vmem:[%s885 + $0x1b0] sm:$0xff]
        %v983 = vld [vmem:[%s885 + $0x1b8] sm:$0xff]
        %v984 = vld [vmem:[%s885 + $0x1c0] sm:$0xff]
        %v985 = vld [vmem:[%s885 + $0x1c8] sm:$0xff]
        %v986 = vld [vmem:[%s885 + $0x1d0] sm:$0xff]
        %v987 = vld [vmem:[%s885 + $0x1d8] sm:$0xff]
        %v988 = vld [vmem:[%s885 + $0x1e0] sm:$0xff]
        %v989 = vld [vmem:[%s885 + $0x1e8] sm:$0xff]
        %v990 = vld [vmem:[%s885 + $0x1f0] sm:$0xff]
        %v991 = vld [vmem:[%s885 + $0x1f8] sm:$0xff]
        %v992 = vld [vmem:[%s885 + $0x200] sm:$0xff]
        %v993 = vld [vmem:[%s885 + $0x208] sm:$0xff]
        %v994 = vld [vmem:[%s885 + $0x210] sm:$0xff]
        %v995 = vld [vmem:[%s885 + $0x218] sm:$0xff]
        %v996 = vld [vmem:[%s885 + $0x220] sm:$0xff]
        %v997 = vld [vmem:[%s885 + $0x228] sm:$0xff]
        %v998 = vld [vmem:[%s885 + $0x230] sm:$0xff]
        %v999 = vld [vmem:[%s885 + $0x238] sm:$0xff]
        %v1000 = vld [vmem:[%s885 + $0x240] sm:$0xff]
        %v1001 = vld [vmem:[%s885 + $0x248] sm:$0xff]
        %v1002 = vld [vmem:[%s885 + $0x250] sm:$0xff]
        %v1003 = vld [vmem:[%s885 + $0x258] sm:$0xff]
        %v1004 = vld [vmem:[%s885 + $0x260] sm:$0xff]
        %v1005 = vld [vmem:[%s885 + $0x268] sm:$0xff]
        %v1006 = vld [vmem:[%s885 + $0x270] sm:$0xff]
        %v1007 = vld [vmem:[%s885 + $0x278] sm:$0xff]
        %v1008 = vld [vmem:[%s885 + $0x280] sm:$0xff]
        %v1009 = vld [vmem:[%s885 + $0x288] sm:$0xff]
        %v1010 = vld [vmem:[%s885 + $0x290] sm:$0xff]
        %v1011 = vld [vmem:[%s885 + $0x298] sm:$0xff]
        %v1012 = vld [vmem:[%s885 + $0x2a0] sm:$0xff]
        %v1013 = vld [vmem:[%s885 + $0x2a8] sm:$0xff]
        %v1014 = vld [vmem:[%s885 + $0x2b0] sm:$0xff]
        %v1015 = vld [vmem:[%s885 + $0x2b8] sm:$0xff]
        %v1016 = vld [vmem:[%s885 + $0x2c0] sm:$0xff]
        %v1017 = vld [vmem:[%s885 + $0x2c8] sm:$0xff]
        %v1018 = vld [vmem:[%s885 + $0x2d0] sm:$0xff]
        %v1019 = vld [vmem:[%s885 + $0x2d8] sm:$0xff]
        %v1020 = vld [vmem:[%s885 + $0x2e0] sm:$0xff]
        %v1021 = vld [vmem:[%s885 + $0x2e8] sm:$0xff]
        %v1022 = vld [vmem:[%s885 + $0x2f0] sm:$0xff]
        %v1023 = vld [vmem:[%s885 + $0x2f8] sm:$0xff]
        %v1024 = vld [vmem:[%s885 + $0x300] sm:$0xff]
        %v1025 = vld [vmem:[%s885 + $0x308] sm:$0xff]
        %v1026 = vld [vmem:[%s885 + $0x310] sm:$0xff]
        %v1027 = vld [vmem:[%s885 + $0x318] sm:$0xff]
        %v1028 = vld [vmem:[%s885 + $0x320] sm:$0xff]
        %v1029 = vld [vmem:[%s885 + $0x328] sm:$0xff]
        %v1030 = vld [vmem:[%s885 + $0x330] sm:$0xff]
        %v1031 = vld [vmem:[%s885 + $0x338] sm:$0xff]
        %v1032 = vld [vmem:[%s885 + $0x340] sm:$0xff]
        %v1033 = vld [vmem:[%s885 + $0x348] sm:$0xff]
        %v1034 = vld [vmem:[%s885 + $0x350] sm:$0xff]
        %v1035 = vld [vmem:[%s885 + $0x358] sm:$0xff]
        %v1036 = vld [vmem:[%s885 + $0x360] sm:$0xff]
        %v1037 = vld [vmem:[%s885 + $0x368] sm:$0xff]
        %v1038 = vld [vmem:[%s885 + $0x370] sm:$0xff]
        %v1039 = vld [vmem:[%s885 + $0x378] sm:$0xff]
        %v1040 = vld [vmem:[%s885 + $0x380] sm:$0xff]
        %v1041 = vld [vmem:[%s885 + $0x388] sm:$0xff]
        %v1042 = vld [vmem:[%s885 + $0x390] sm:$0xff]
        %v1043 = vld [vmem:[%s885 + $0x398] sm:$0xff]
        %v1044 = vld [vmem:[%s885 + $0x3a0] sm:$0xff]
        %v1045 = vld [vmem:[%s885 + $0x3a8] sm:$0xff]
        %v1046 = vld [vmem:[%s885 + $0x3b0] sm:$0xff]
        %v1047 = vld [vmem:[%s885 + $0x3b8] sm:$0xff]
        %v1048 = vld [vmem:[%s885 + $0x3c0] sm:$0xff]
        %v1049 = vld [vmem:[%s885 + $0x3c8] sm:$0xff]
        %v1050 = vld [vmem:[%s885 + $0x3d0] sm:$0xff]
        %v1051 = vld [vmem:[%s885 + $0x3d8] sm:$0xff]
        %v1052 = vld [vmem:[%s885 + $0x3e0] sm:$0xff]
        %v1053 = vld [vmem:[%s885 + $0x3e8] sm:$0xff]
        %v1054 = vld [vmem:[%s885 + $0x3f0] sm:$0xff]
        %v1055 = vld [vmem:[%s885 + $0x3f8] sm:$0xff]
        %v1056 = vld [vmem:[%s885 + $0x400] sm:$0xff]
        %v1057 = vld [vmem:[%s885 + $0x408] sm:$0xff]
        %v1058 = vld [vmem:[%s885 + $0x410] sm:$0xff]
        %v1059 = vld [vmem:[%s885 + $0x418] sm:$0xff]
        %v1060 = vld [vmem:[%s885 + $0x420] sm:$0xff]
        %v1061 = vld [vmem:[%s885 + $0x428] sm:$0xff]
        %v1062 = vld [vmem:[%s885 + $0x430] sm:$0xff]
        %v1063 = vld [vmem:[%s885 + $0x438] sm:$0xff]
        %v1064 = vld [vmem:[%s885 + $0x440] sm:$0xff]
        %v1065 = vld [vmem:[%s885 + $0x448] sm:$0xff]
        %v1066 = vld [vmem:[%s885 + $0x450] sm:$0xff]
        %v1067 = vld [vmem:[%s885 + $0x458] sm:$0xff]
        %v1068 = vld [vmem:[%s885 + $0x460] sm:$0xff]
        %v1069 = vld [vmem:[%s885 + $0x468] sm:$0xff]
        %v1070 = vld [vmem:[%s885 + $0x470] sm:$0xff]
        %v1071 = vld [vmem:[%s885 + $0x478] sm:$0xff]
        %v1072 = vld [vmem:[%s885 + $0x480] sm:$0xff]
        %v1073 = vld [vmem:[%s885 + $0x488] sm:$0xff]
        %v1074 = vld [vmem:[%s885 + $0x490] sm:$0xff]
        %v1075 = vld [vmem:[%s885 + $0x498] sm:$0xff]
        %v1076 = vld [vmem:[%s885 + $0x4a0] sm:$0xff]
        %v1077 = vld [vmem:[%s885 + $0x4a8] sm:$0xff]
        %v1078 = vld [vmem:[%s885 + $0x4b0] sm:$0xff]
        %v1079 = vld [vmem:[%s885 + $0x4b8] sm:$0xff]
        %v1080 = vld [vmem:[%s885 + $0x4c0] sm:$0xff]
        %v1081 = vld [vmem:[%s885 + $0x4c8] sm:$0xff]
        %v1082 = vld [vmem:[%s885 + $0x4d0] sm:$0xff]
        %v1083 = vld [vmem:[%s885 + $0x4d8] sm:$0xff]
        %v1084 = vld [vmem:[%s885 + $0x4e0] sm:$0xff]
        %v1085 = vld [vmem:[%s885 + $0x4e8] sm:$0xff]
        %v1086 = vld [vmem:[%s885 + $0x4f0] sm:$0xff]
        %v1087 = vld [vmem:[%s885 + $0x4f8] sm:$0xff]
        %v1088 = vld [vmem:[%s885 + $0x500] sm:$0xff]
        %v1089 = vld [vmem:[%s885 + $0x508] sm:$0xff]
        %v1090 = vld [vmem:[%s885 + $0x510] sm:$0xff]
        %v1091 = vld [vmem:[%s885 + $0x518] sm:$0xff]
        %v1092 = vld [vmem:[%s885 + $0x520] sm:$0xff]
        %v1093 = vld [vmem:[%s885 + $0x528] sm:$0xff]
        %v1094 = vld [vmem:[%s885 + $0x530] sm:$0xff]
        %v1095 = vld [vmem:[%s885 + $0x538] sm:$0xff]
        %v1096 = vld [vmem:[%s885 + $0x540] sm:$0xff]
        %v1097 = vld [vmem:[%s885 + $0x548] sm:$0xff]
        %v1098 = vld [vmem:[%s885 + $0x550] sm:$0xff]
        %v1099 = vld [vmem:[%s885 + $0x558] sm:$0xff]
        %v1100 = vld [vmem:[%s885 + $0x560] sm:$0xff]
        %v1101 = vld [vmem:[%s885 + $0x568] sm:$0xff]
        %v1102 = vld [vmem:[%s885 + $0x570] sm:$0xff]
        %v1103 = vld [vmem:[%s885 + $0x578] sm:$0xff]
        %v1104 = vld [vmem:[%s885 + $0x580] sm:$0xff]
        %v1105 = vld [vmem:[%s885 + $0x588] sm:$0xff]
        %v1106 = vld [vmem:[%s885 + $0x590] sm:$0xff]
        %v1107 = vld [vmem:[%s885 + $0x598] sm:$0xff]
        %v1108 = vld [vmem:[%s885 + $0x5a0] sm:$0xff]
        %v1109 = vld [vmem:[%s885 + $0x5a8] sm:$0xff]
        %v1110 = vld [vmem:[%s885 + $0x5b0] sm:$0xff]
        %v1111 = vld [vmem:[%s885 + $0x5b8] sm:$0xff]
        %v1112 = vld [vmem:[%s885 + $0x5c0] sm:$0xff]
        %v1113 = vld [vmem:[%s885 + $0x5c8] sm:$0xff]
        %v1114 = vld [vmem:[%s885 + $0x5d0] sm:$0xff]
        %v1115 = vld [vmem:[%s885 + $0x5d8] sm:$0xff]
        %v1116 = vld [vmem:[%s885 + $0x5e0] sm:$0xff]
        %v1117 = vld [vmem:[%s885 + $0x5e8] sm:$0xff]
        %v1118 = vld [vmem:[%s885 + $0x5f0] sm:$0xff]
        %v1119 = vld [vmem:[%s885 + $0x5f8] sm:$0xff]
        %v1120 = vld [vmem:[%s885 + $0x600] sm:$0xff]
        %v1121 = vld [vmem:[%s885 + $0x608] sm:$0xff]
        %v1122 = vld [vmem:[%s885 + $0x610] sm:$0xff]
        %v1123 = vld [vmem:[%s885 + $0x618] sm:$0xff]
        %v1124 = vld [vmem:[%s885 + $0x620] sm:$0xff]
        %v1125 = vld [vmem:[%s885 + $0x628] sm:$0xff]
        %v1126 = vld [vmem:[%s885 + $0x630] sm:$0xff]
        %v1127 = vld [vmem:[%s885 + $0x638] sm:$0xff]
        %v1128 = vld [vmem:[%s885 + $0x640] sm:$0xff]
        %v1129 = vld [vmem:[%s885 + $0x648] sm:$0xff]
        %v1130 = vld [vmem:[%s885 + $0x650] sm:$0xff]
        %v1131 = vld [vmem:[%s885 + $0x658] sm:$0xff]
        %v1132 = vld [vmem:[%s885 + $0x660] sm:$0xff]
        %v1133 = vld [vmem:[%s885 + $0x668] sm:$0xff]
        %v1134 = vld [vmem:[%s885 + $0x670] sm:$0xff]
        %v1135 = vld [vmem:[%s885 + $0x678] sm:$0xff]
        %v1136 = vld [vmem:[%s885 + $0x680] sm:$0xff]
        %v1137 = vld [vmem:[%s885 + $0x688] sm:$0xff]
        %v1138 = vld [vmem:[%s885 + $0x690] sm:$0xff]
        %v1139 = vld [vmem:[%s885 + $0x698] sm:$0xff]
        %v1140 = vld [vmem:[%s885 + $0x6a0] sm:$0xff]
        %v1141 = vld [vmem:[%s885 + $0x6a8] sm:$0xff]
        %v1142 = vld [vmem:[%s885 + $0x6b0] sm:$0xff]
        %v1143 = vld [vmem:[%s885 + $0x6b8] sm:$0xff]
        %v1144 = vld [vmem:[%s885 + $0x6c0] sm:$0xff]
        %v1145 = vld [vmem:[%s885 + $0x6c8] sm:$0xff]
        %v1146 = vld [vmem:[%s885 + $0x6d0] sm:$0xff]
        %v1147 = vld [vmem:[%s885 + $0x6d8] sm:$0xff]
        %v1148 = vld [vmem:[%s885 + $0x6e0] sm:$0xff]
        %v1149 = vld [vmem:[%s885 + $0x6e8] sm:$0xff]
        %v1150 = vld [vmem:[%s885 + $0x6f0] sm:$0xff]
        %v1151 = vld [vmem:[%s885 + $0x6f8] sm:$0xff]
        %v1152 = vld [vmem:[%s885 + $0x700] sm:$0xff]
        %v1153 = vld [vmem:[%s885 + $0x708] sm:$0xff]
        %v1154 = vld [vmem:[%s885 + $0x710] sm:$0xff]
        %v1155 = vld [vmem:[%s885 + $0x718] sm:$0xff]
        %v1156 = vld [vmem:[%s885 + $0x720] sm:$0xff]
        %v1157 = vld [vmem:[%s885 + $0x728] sm:$0xff]
        %v1158 = vld [vmem:[%s885 + $0x730] sm:$0xff]
        %v1159 = vld [vmem:[%s885 + $0x738] sm:$0xff]
        %v1160 = vld [vmem:[%s885 + $0x740] sm:$0xff]
        %v1161 = vld [vmem:[%s885 + $0x748] sm:$0xff]
        %v1162 = vld [vmem:[%s885 + $0x750] sm:$0xff]
        %v1163 = vld [vmem:[%s885 + $0x758] sm:$0xff]
        %v1164 = vld [vmem:[%s885 + $0x760] sm:$0xff]
        %v1165 = vld [vmem:[%s885 + $0x768] sm:$0xff]
        %v1166 = vld [vmem:[%s885 + $0x770] sm:$0xff]
        %v1167 = vld [vmem:[%s885 + $0x778] sm:$0xff]
        %v1168 = vld [vmem:[%s885 + $0x780] sm:$0xff]
        %v1169 = vld [vmem:[%s885 + $0x788] sm:$0xff]
        %v1170 = vld [vmem:[%s885 + $0x790] sm:$0xff]
        %v1171 = vld [vmem:[%s885 + $0x798] sm:$0xff]
        %v1172 = vld [vmem:[%s885 + $0x7a0] sm:$0xff]
        %v1173 = vld [vmem:[%s885 + $0x7a8] sm:$0xff]
        %v1174 = vld [vmem:[%s885 + $0x7b0] sm:$0xff]
        %v1175 = vld [vmem:[%s885 + $0x7b8] sm:$0xff]
        %v1176 = vld [vmem:[%s885 + $0x7c0] sm:$0xff]
        %v1177 = vld [vmem:[%s885 + $0x7c8] sm:$0xff]
        %v1178 = vld [vmem:[%s885 + $0x7d0] sm:$0xff]
        %v1179 = vld [vmem:[%s885 + $0x7d8] sm:$0xff]
        %v1180 = vld [vmem:[%s885 + $0x7e0] sm:$0xff]
        %v1181 = vld [vmem:[%s885 + $0x7e8] sm:$0xff]
        %v1182 = vld [vmem:[%s885 + $0x7f0] sm:$0xff]
        %v1183 = vld [vmem:[%s885 + $0x7f8] sm:$0xff]
        %v1184 = vld [vmem:[%s885 + $0x800] sm:$0xff]
        %v1185 = vld [vmem:[%s885 + $0x808] sm:$0xff]
        %v1186 = vld [vmem:[%s885 + $0x810] sm:$0xff]
        %v1187 = vld [vmem:[%s885 + $0x818] sm:$0xff]
        %v1188 = vld [vmem:[%s885 + $0x820] sm:$0xff]
        %v1189 = vld [vmem:[%s885 + $0x828] sm:$0xff]
        %v1190 = vld [vmem:[%s885 + $0x830] sm:$0xff]
        %v1191 = vld [vmem:[%s885 + $0x838] sm:$0xff]
        %v1192 = vld [vmem:[%s885 + $0x840] sm:$0xff]
        %v1193 = vld [vmem:[%s885 + $0x848] sm:$0xff]
        %v1194 = vld [vmem:[%s885 + $0x850] sm:$0xff]
        %v1195 = vld [vmem:[%s885 + $0x858] sm:$0xff]
        %v1196 = vld [vmem:[%s885 + $0x860] sm:$0xff]
        %v1197 = vld [vmem:[%s885 + $0x868] sm:$0xff]
        %v1198 = vld [vmem:[%s885 + $0x870] sm:$0xff]
        %v1199 = vld [vmem:[%s885 + $0x878] sm:$0xff]
        %v1200 = vld [vmem:[%s885 + $0x880] sm:$0xff]
        %v1201 = vld [vmem:[%s885 + $0x888] sm:$0xff]
        %v1202 = vld [vmem:[%s885 + $0x890] sm:$0xff]
        %v1203 = vld [vmem:[%s885 + $0x898] sm:$0xff]
        %v1204 = vld [vmem:[%s885 + $0x8a0] sm:$0xff]
        %v1205 = vld [vmem:[%s885 + $0x8a8] sm:$0xff]
        %v1206 = vld [vmem:[%s885 + $0x8b0] sm:$0xff]
        %v1207 = vld [vmem:[%s885 + $0x8b8] sm:$0xff]
        %v1208 = vld [vmem:[%s885 + $0x8c0] sm:$0xff]
        %v1209 = vld [vmem:[%s885 + $0x8c8] sm:$0xff]
        %v1210 = vld [vmem:[%s885 + $0x8d0] sm:$0xff]
        %v1211 = vld [vmem:[%s885 + $0x8d8] sm:$0xff]
        %v1212 = vld [vmem:[%s885 + $0x8e0] sm:$0x11]
        %v1213 = vld [vmem:[%s885 + $0x8e8] sm:$0x11]
        %v1214 = vld [vmem:[%s885 + $0x8f0] sm:$0x11]
        %v1215 = vld [vmem:[%s885 + $0x8f8] sm:$0x11]
        %v1216 = vld [vmem:[%s1] sm:$0xff]
        %v1217 = vld [vmem:[%s1 + $0x8] sm:$0xff]
        %v1218 = vld [vmem:[%s1 + $0x10] sm:$0xf]
        %v1219 = vld [vmem:[%s1 + $0x14] sm:$0xff]
        %v1220 = vld [vmem:[%s1 + $0x1c] sm:$0xff]
        %v1221 = vld [vmem:[%s1 + $0x24] sm:$0xf]
        %v1222 = vld [vmem:[%s1 + $0x28] sm:$0xff]
        %v1223 = vld [vmem:[%s1 + $0x30] sm:$0xff]
        %v1224 = vld [vmem:[%s1 + $0x38] sm:$0xf]
        %v1225 = vld [vmem:[%s1 + $0x3c] sm:$0xff]
        %v1226 = vld [vmem:[%s1 + $0x44] sm:$0xff]
        %v1227 = vld [vmem:[%s1 + $0x4c] sm:$0xf]
        %v1228 = vld [vmem:[%s1 + $0x50] sm:$0xff]
        %v1229 = vld [vmem:[%s1 + $0x58] sm:$0xff]
        %v1230 = vld [vmem:[%s1 + $0x60] sm:$0xf]
        %v1231 = vld [vmem:[%s1 + $0x64] sm:$0xff]
        %v1232 = vld [vmem:[%s1 + $0x6c] sm:$0xff]
        %v1233 = vld [vmem:[%s1 + $0x74] sm:$0xf]
        %v1234 = vld [vmem:[%s1 + $0x78] sm:$0xff]
        %v1235 = vld [vmem:[%s1 + $0x80] sm:$0xff]
        %v1236 = vld [vmem:[%s1 + $0x88] sm:$0xf]
        %v1237 = vld [vmem:[%s1 + $0x8c] sm:$0xff]
        %v1238 = vld [vmem:[%s1 + $0x94] sm:$0xff]
        %v1239 = vld [vmem:[%s1 + $0x9c] sm:$0xf]
        %v1240 = vld [vmem:[%s1 + $0xa0] sm:$0xff]
        %v1241 = vld [vmem:[%s1 + $0xa8] sm:$0xff]
        %v1242 = vld [vmem:[%s1 + $0xb0] sm:$0xf]
        %v1243 = vld [vmem:[%s1 + $0xb4] sm:$0xff]
        %v1244 = vld [vmem:[%s1 + $0xbc] sm:$0xff]
        %v1245 = vld [vmem:[%s1 + $0xc4] sm:$0xf]
        %v1246 = vld [vmem:[%s1 + $0xc8] sm:$0xff]
        %v1247 = vld [vmem:[%s1 + $0xd0] sm:$0xff]
        %v1248 = vld [vmem:[%s1 + $0xd8] sm:$0xf]
        %v1249 = vld [vmem:[%s1 + $0xdc] sm:$0xff]
        %v1250 = vld [vmem:[%s1 + $0xe4] sm:$0xff]
        %v1251 = vld [vmem:[%s1 + $0xec] sm:$0xf]
        %v1252 = vld [vmem:[%s1 + $0xf0] sm:$0xff]
        %v1253 = vld [vmem:[%s1 + $0xf8] sm:$0xff]
        %v1254 = vld [vmem:[%s1 + $0x100] sm:$0xf]
        %v1255 = vld [vmem:[%s1 + $0x104] sm:$0xff]
        %v1256 = vld [vmem:[%s1 + $0x10c] sm:$0xff]
        %v1257 = vld [vmem:[%s1 + $0x114] sm:$0xf]
        %v1258 = vld [vmem:[%s1 + $0x118] sm:$0xff]
        %v1259 = vld [vmem:[%s1 + $0x120] sm:$0xff]
        %v1260 = vld [vmem:[%s1 + $0x128] sm:$0xf]
        %v1261 = vld [vmem:[%s1 + $0x12c] sm:$0xff]
        %v1262 = vld [vmem:[%s1 + $0x134] sm:$0xff]
        %v1263 = vld [vmem:[%s1 + $0x13c] sm:$0xf]
        %v1264 = vld [vmem:[%s2] sm:$0xff]
        %v1265 = vld [vmem:[%s2 + $0x8] sm:$0xff]
        %v1266 = vld [vmem:[%s2 + $0x10] sm:$0xff]
        %v1267 = vld [vmem:[%s2 + $0x18] sm:$0xff]
        %v1268 = vld [vmem:[%s2 + $0x20] sm:$0xff]
        %v1269 = vld [vmem:[%s2 + $0x28] sm:$0xff]
        %v1270 = vld [vmem:[%s2 + $0x30] sm:$0xff]
        %v1271 = vld [vmem:[%s2 + $0x38] sm:$0xff]
        %v1272 = vld [vmem:[%s2 + $0x40] sm:$0xff]
        %v1273 = vld [vmem:[%s2 + $0x48] sm:$0xff]
        %v1274 = vld [vmem:[%s2 + $0x50] sm:$0xff]
        %v1275 = vld [vmem:[%s2 + $0x58] sm:$0xff]
        %v1276 = vld [vmem:[%s2 + $0x60] sm:$0xff]
        %v1277 = vld [vmem:[%s2 + $0x68] sm:$0xff]
        %v1278 = vld [vmem:[%s2 + $0x70] sm:$0xff]
        %v1279 = vld [vmem:[%s2 + $0x78] sm:$0xff]
        %1281 = vset.pattern.permute.xlu0 0
        %1282 = vperm.xlu0 %1281, %v1264
        %v1283 = vpop.permute.xlu0 %1282
        %1286 = vset.pattern.permute.xlu0 0
        %1287 = vperm.xlu0 %1286, %v1265
        %v1288 = vpop.permute.xlu0 %1287
        %1291 = vset.pattern.permute.xlu0 0
        %1292 = vperm.xlu0 %1291, %v1266
        %v1293 = vpop.permute.xlu0 %1292
        %1296 = vset.pattern.permute.xlu0 0
        %1297 = vperm.xlu0 %1296, %v1267
        %v1298 = vpop.permute.xlu0 %1297
        %1301 = vset.pattern.permute.xlu0 0
        %1302 = vperm.xlu0 %1301, %v1268
        %v1303 = vpop.permute.xlu0 %1302
        %1306 = vset.pattern.permute.xlu0 0
        %1307 = vperm.xlu0 %1306, %v1269
        %v1308 = vpop.permute.xlu0 %1307
        %1311 = vset.pattern.permute.xlu0 0
        %1312 = vperm.xlu0 %1311, %v1270
        %v1313 = vpop.permute.xlu0 %1312
        %1316 = vset.pattern.permute.xlu0 0
        %1317 = vperm.xlu0 %1316, %v1271
        %v1318 = vpop.permute.xlu0 %1317
        %1321 = vset.pattern.permute.xlu0 0
        %1322 = vperm.xlu0 %1321, %v1272
        %v1323 = vpop.permute.xlu0 %1322
        %1326 = vset.pattern.permute.xlu0 0
        %1327 = vperm.xlu0 %1326, %v1273
        %v1328 = vpop.permute.xlu0 %1327
        %1331 = vset.pattern.permute.xlu0 0
        %1332 = vperm.xlu0 %1331, %v1274
        %v1333 = vpop.permute.xlu0 %1332
        %1336 = vset.pattern.permute.xlu0 0
        %1337 = vperm.xlu0 %1336, %v1275
        %v1338 = vpop.permute.xlu0 %1337
        %1341 = vset.pattern.permute.xlu0 0
        %1342 = vperm.xlu0 %1341, %v1276
        %v1343 = vpop.permute.xlu0 %1342
        %1346 = vset.pattern.permute.xlu0 0
        %1347 = vperm.xlu0 %1346, %v1277
        %v1348 = vpop.permute.xlu0 %1347
        %1351 = vset.pattern.permute.xlu0 0
        %1352 = vperm.xlu0 %1351, %v1278
        %v1353 = vpop.permute.xlu0 %1352
        %1356 = vset.pattern.permute.xlu0 0
        %1357 = vperm.xlu0 %1356, %v1279
        %v1358 = vpop.permute.xlu0 %1357
        %v1408 = vunpack.c.l.b16 %v1216
        %v1409 = vunpack.c.h.b16 %v1216
        %v1410 = vunpack.c.l.b16 %v1217
        %v1411 = vunpack.c.h.b16 %v1217
        %v1412 = vunpack.c.l.b16 %v1218
        %v1413 = vunpack.c.l.b16 %v1219
        %v1414 = vunpack.c.h.b16 %v1219
        %v1415 = vunpack.c.l.b16 %v1220
        %v1416 = vunpack.c.h.b16 %v1220
        %v1417 = vunpack.c.l.b16 %v1221
        %v1418 = vunpack.c.l.b16 %v1222
        %v1419 = vunpack.c.h.b16 %v1222
        %v1420 = vunpack.c.l.b16 %v1223
        %v1421 = vunpack.c.h.b16 %v1223
        %v1422 = vunpack.c.l.b16 %v1224
        %v1423 = vunpack.c.l.b16 %v1225
        %v1424 = vunpack.c.h.b16 %v1225
        %v1425 = vunpack.c.l.b16 %v1226
        %v1426 = vunpack.c.h.b16 %v1226
        %v1427 = vunpack.c.l.b16 %v1227
        %v1428 = vunpack.c.l.b16 %v1228
        %v1429 = vunpack.c.h.b16 %v1228
        %v1430 = vunpack.c.l.b16 %v1229
        %v1431 = vunpack.c.h.b16 %v1229
        %v1432 = vunpack.c.l.b16 %v1230
        %v1433 = vunpack.c.l.b16 %v1231
        %v1434 = vunpack.c.h.b16 %v1231
        %v1435 = vunpack.c.l.b16 %v1232
        %v1436 = vunpack.c.h.b16 %v1232
        %v1437 = vunpack.c.l.b16 %v1233
        %v1438 = vunpack.c.l.b16 %v1234
        %v1439 = vunpack.c.h.b16 %v1234
        %v1440 = vunpack.c.l.b16 %v1235
        %v1441 = vunpack.c.h.b16 %v1235
        %v1442 = vunpack.c.l.b16 %v1236
        %v1443 = vunpack.c.l.b16 %v1237
        %v1444 = vunpack.c.h.b16 %v1237
        %v1445 = vunpack.c.l.b16 %v1238
        %v1446 = vunpack.c.h.b16 %v1238
        %v1447 = vunpack.c.l.b16 %v1239
        %v1448 = vunpack.c.l.b16 %v1240
        %v1449 = vunpack.c.h.b16 %v1240
        %v1450 = vunpack.c.l.b16 %v1241
        %v1451 = vunpack.c.h.b16 %v1241
        %v1452 = vunpack.c.l.b16 %v1242
        %v1453 = vunpack.c.l.b16 %v1243
        %v1454 = vunpack.c.h.b16 %v1243
        %v1455 = vunpack.c.l.b16 %v1244
        %v1456 = vunpack.c.h.b16 %v1244
        %v1457 = vunpack.c.l.b16 %v1245
        %v1458 = vunpack.c.l.b16 %v1246
        %v1459 = vunpack.c.h.b16 %v1246
        %v1460 = vunpack.c.l.b16 %v1247
        %v1461 = vunpack.c.h.b16 %v1247
        %v1462 = vunpack.c.l.b16 %v1248
        %v1463 = vunpack.c.l.b16 %v1249
        %v1464 = vunpack.c.h.b16 %v1249
        %v1465 = vunpack.c.l.b16 %v1250
        %v1466 = vunpack.c.h.b16 %v1250
        %v1467 = vunpack.c.l.b16 %v1251
        %v1468 = vunpack.c.l.b16 %v1252
        %v1469 = vunpack.c.h.b16 %v1252
        %v1470 = vunpack.c.l.b16 %v1253
        %v1471 = vunpack.c.h.b16 %v1253
        %v1472 = vunpack.c.l.b16 %v1254
        %v1473 = vunpack.c.l.b16 %v1255
        %v1474 = vunpack.c.h.b16 %v1255
        %v1475 = vunpack.c.l.b16 %v1256
        %v1476 = vunpack.c.h.b16 %v1256
        %v1477 = vunpack.c.l.b16 %v1257
        %v1478 = vunpack.c.l.b16 %v1258
        %v1479 = vunpack.c.h.b16 %v1258
        %v1480 = vunpack.c.l.b16 %v1259
        %v1481 = vunpack.c.h.b16 %v1259
        %v1482 = vunpack.c.l.b16 %v1260
        %v1483 = vunpack.c.l.b16 %v1261
        %v1484 = vunpack.c.h.b16 %v1261
        %v1485 = vunpack.c.l.b16 %v1262
        %v1486 = vunpack.c.h.b16 %v1262
        %v1487 = vunpack.c.l.b16 %v1263
        %v1488 = vpack.c.b16 %v1413, %v1408
        %v1489 = vpack.c.b16 %v1414, %v1409
        %v1490 = vpack.c.b16 %v1415, %v1410
        %v1491 = vpack.c.b16 %v1416, %v1411
        %v1492 = vpack.c.b16 %v1417, %v1412
        %v1493 = vpack.c.b16 %v1423, %v1418
        %v1494 = vpack.c.b16 %v1424, %v1419
        %v1495 = vpack.c.b16 %v1425, %v1420
        %v1496 = vpack.c.b16 %v1426, %v1421
        %v1497 = vpack.c.b16 %v1427, %v1422
        %v1498 = vpack.c.b16 %v1433, %v1428
        %v1499 = vpack.c.b16 %v1434, %v1429
        %v1500 = vpack.c.b16 %v1435, %v1430
        %v1501 = vpack.c.b16 %v1436, %v1431
        %v1502 = vpack.c.b16 %v1437, %v1432
        %v1503 = vpack.c.b16 %v1443, %v1438
        %v1504 = vpack.c.b16 %v1444, %v1439
        %v1505 = vpack.c.b16 %v1445, %v1440
        %v1506 = vpack.c.b16 %v1446, %v1441
        %v1507 = vpack.c.b16 %v1447, %v1442
        %v1508 = vpack.c.b16 %v1453, %v1448
        %v1509 = vpack.c.b16 %v1454, %v1449
        %v1510 = vpack.c.b16 %v1455, %v1450
        %v1511 = vpack.c.b16 %v1456, %v1451
        %v1512 = vpack.c.b16 %v1457, %v1452
        %v1513 = vpack.c.b16 %v1463, %v1458
        %v1514 = vpack.c.b16 %v1464, %v1459
        %v1515 = vpack.c.b16 %v1465, %v1460
        %v1516 = vpack.c.b16 %v1466, %v1461
        %v1517 = vpack.c.b16 %v1467, %v1462
        %v1518 = vpack.c.b16 %v1473, %v1468
        %v1519 = vpack.c.b16 %v1474, %v1469
        %v1520 = vpack.c.b16 %v1475, %v1470
        %v1521 = vpack.c.b16 %v1476, %v1471
        %v1522 = vpack.c.b16 %v1477, %v1472
        %v1523 = vpack.c.b16 %v1483, %v1478
        %v1524 = vpack.c.b16 %v1484, %v1479
        %v1525 = vpack.c.b16 %v1485, %v1480
        %v1526 = vpack.c.b16 %v1486, %v1481
        %v1527 = vpack.c.b16 %v1487, %v1482
        %v1848 = vunpack.c.l.b16 %v928
        %v1849 = vunpack.c.h.b16 %v928
        %v1850 = vunpack.c.l.b16 %v929
        %v1851 = vunpack.c.h.b16 %v929
        %v1852 = vunpack.c.l.b16 %v930
        %v1853 = vunpack.c.h.b16 %v930
        %v1854 = vunpack.c.l.b16 %v931
        %v1855 = vunpack.c.h.b16 %v931
        %v1856 = vunpack.c.l.b16 %v932
        %v1857 = vunpack.c.h.b16 %v932
        %v1858 = vunpack.c.l.b16 %v933
        %v1859 = vunpack.c.h.b16 %v933
        %v1860 = vunpack.c.l.b16 %v934
        %v1861 = vunpack.c.h.b16 %v934
        %v1862 = vunpack.c.l.b16 %v935
        %v1863 = vunpack.c.h.b16 %v935
        %v1864 = vunpack.c.l.b16 %v936
        %v1865 = vunpack.c.h.b16 %v936
        %v1866 = vunpack.c.l.b16 %v937
        %v1867 = vunpack.c.h.b16 %v937
        %v1868 = vunpack.c.l.b16 %v938
        %v1869 = vunpack.c.h.b16 %v938
        %v1870 = vunpack.c.l.b16 %v939
        %v1871 = vunpack.c.h.b16 %v939
        %v1872 = vunpack.c.l.b16 %v940
        %v1873 = vunpack.c.h.b16 %v940
        %v1874 = vunpack.c.l.b16 %v941
        %v1875 = vunpack.c.h.b16 %v941
        %v1876 = vunpack.c.l.b16 %v942
        %v1877 = vunpack.c.h.b16 %v942
        %v1878 = vunpack.c.l.b16 %v943
        %v1879 = vunpack.c.h.b16 %v943
        %v1880 = vunpack.c.l.b16 %v944
        %v1881 = vunpack.c.h.b16 %v944
        %v1882 = vunpack.c.l.b16 %v945
        %v1883 = vunpack.c.h.b16 %v945
        %v1884 = vunpack.c.l.b16 %v946
        %v1885 = vunpack.c.h.b16 %v946
        %v1886 = vunpack.c.l.b16 %v947
        %v1887 = vunpack.c.h.b16 %v947
        %v1888 = vunpack.c.l.b16 %v948
        %v1889 = vunpack.c.h.b16 %v948
        %v1890 = vunpack.c.l.b16 %v949
        %v1891 = vunpack.c.h.b16 %v949
        %v1892 = vunpack.c.l.b16 %v950
        %v1893 = vunpack.c.h.b16 %v950
        %v1894 = vunpack.c.l.b16 %v951
        %v1895 = vunpack.c.h.b16 %v951
        %v1896 = vunpack.c.l.b16 %v952
        %v1897 = vunpack.c.h.b16 %v952
        %v1898 = vunpack.c.l.b16 %v953
        %v1899 = vunpack.c.h.b16 %v953
        %v1900 = vunpack.c.l.b16 %v954
        %v1901 = vunpack.c.h.b16 %v954
        %v1902 = vunpack.c.l.b16 %v955
        %v1903 = vunpack.c.h.b16 %v955
        %v1904 = vunpack.c.l.b16 %v956
        %v1905 = vunpack.c.h.b16 %v956
        %v1906 = vunpack.c.l.b16 %v957
        %v1907 = vunpack.c.h.b16 %v957
        %v1908 = vunpack.c.l.b16 %v958
        %v1909 = vunpack.c.h.b16 %v958
        %v1910 = vunpack.c.l.b16 %v959
        %v1911 = vunpack.c.h.b16 %v959
        %v1912 = vunpack.c.l.b16 %v960
        %v1913 = vunpack.c.h.b16 %v960
        %v1914 = vunpack.c.l.b16 %v961
        %v1915 = vunpack.c.h.b16 %v961
        %v1916 = vunpack.c.l.b16 %v962
        %v1917 = vunpack.c.h.b16 %v962
        %v1918 = vunpack.c.l.b16 %v963
        %v1919 = vunpack.c.h.b16 %v963
        %v1920 = vunpack.c.l.b16 %v964
        %v1921 = vunpack.c.h.b16 %v964
        %v1922 = vunpack.c.l.b16 %v965
        %v1923 = vunpack.c.h.b16 %v965
        %v1924 = vunpack.c.l.b16 %v966
        %v1925 = vunpack.c.h.b16 %v966
        %v1926 = vunpack.c.l.b16 %v967
        %v1927 = vunpack.c.h.b16 %v967
        %v1928 = vunpack.c.l.b16 %v968
        %v1929 = vunpack.c.h.b16 %v968
        %v1930 = vunpack.c.l.b16 %v969
        %v1931 = vunpack.c.h.b16 %v969
        %v1932 = vunpack.c.l.b16 %v970
        %v1933 = vunpack.c.h.b16 %v970
        %v1934 = vunpack.c.l.b16 %v971
        %v1935 = vunpack.c.h.b16 %v971
        %v1936 = vunpack.c.l.b16 %v972
        %v1937 = vunpack.c.h.b16 %v972
        %v1938 = vunpack.c.l.b16 %v973
        %v1939 = vunpack.c.h.b16 %v973
        %v1940 = vunpack.c.l.b16 %v974
        %v1941 = vunpack.c.h.b16 %v974
        %v1942 = vunpack.c.l.b16 %v975
        %v1943 = vunpack.c.h.b16 %v975
        %v1944 = vunpack.c.l.b16 %v976
        %v1945 = vunpack.c.h.b16 %v976
        %v1946 = vunpack.c.l.b16 %v977
        %v1947 = vunpack.c.h.b16 %v977
        %v1948 = vunpack.c.l.b16 %v978
        %v1949 = vunpack.c.h.b16 %v978
        %v1950 = vunpack.c.l.b16 %v979
        %v1951 = vunpack.c.h.b16 %v979
        %v1952 = vunpack.c.l.b16 %v980
        %v1953 = vunpack.c.h.b16 %v980
        %v1954 = vunpack.c.l.b16 %v981
        %v1955 = vunpack.c.h.b16 %v981
        %v1956 = vunpack.c.l.b16 %v982
        %v1957 = vunpack.c.h.b16 %v982
        %v1958 = vunpack.c.l.b16 %v983
        %v1959 = vunpack.c.h.b16 %v983
        %v1960 = vunpack.c.l.b16 %v984
        %v1961 = vunpack.c.h.b16 %v984
        %v1962 = vunpack.c.l.b16 %v985
        %v1963 = vunpack.c.h.b16 %v985
        %v1964 = vunpack.c.l.b16 %v986
        %v1965 = vunpack.c.h.b16 %v986
        %v1966 = vunpack.c.l.b16 %v987
        %v1967 = vunpack.c.h.b16 %v987
        %v1968 = vunpack.c.l.b16 %v988
        %v1969 = vunpack.c.h.b16 %v988
        %v1970 = vunpack.c.l.b16 %v989
        %v1971 = vunpack.c.h.b16 %v989
        %v1972 = vunpack.c.l.b16 %v990
        %v1973 = vunpack.c.h.b16 %v990
        %v1974 = vunpack.c.l.b16 %v991
        %v1975 = vunpack.c.h.b16 %v991
        %v1976 = vunpack.c.l.b16 %v992
        %v1977 = vunpack.c.h.b16 %v992
        %v1978 = vunpack.c.l.b16 %v993
        %v1979 = vunpack.c.h.b16 %v993
        %v1980 = vunpack.c.l.b16 %v994
        %v1981 = vunpack.c.h.b16 %v994
        %v1982 = vunpack.c.l.b16 %v995
        %v1983 = vunpack.c.h.b16 %v995
        %v1984 = vunpack.c.l.b16 %v996
        %v1985 = vunpack.c.h.b16 %v996
        %v1986 = vunpack.c.l.b16 %v997
        %v1987 = vunpack.c.h.b16 %v997
        %v1988 = vunpack.c.l.b16 %v998
        %v1989 = vunpack.c.h.b16 %v998
        %v1990 = vunpack.c.l.b16 %v999
        %v1991 = vunpack.c.h.b16 %v999
        %v1992 = vunpack.c.l.b16 %v1000
        %v1993 = vunpack.c.h.b16 %v1000
        %v1994 = vunpack.c.l.b16 %v1001
        %v1995 = vunpack.c.h.b16 %v1001
        %v1996 = vunpack.c.l.b16 %v1002
        %v1997 = vunpack.c.h.b16 %v1002
        %v1998 = vunpack.c.l.b16 %v1003
        %v1999 = vunpack.c.h.b16 %v1003
        %v2000 = vunpack.c.l.b16 %v1004
        %v2001 = vunpack.c.h.b16 %v1004
        %v2002 = vunpack.c.l.b16 %v1005
        %v2003 = vunpack.c.h.b16 %v1005
        %v2004 = vunpack.c.l.b16 %v1006
        %v2005 = vunpack.c.h.b16 %v1006
        %v2006 = vunpack.c.l.b16 %v1007
        %v2007 = vunpack.c.h.b16 %v1007
        %v2008 = vunpack.c.l.b16 %v1008
        %v2009 = vunpack.c.h.b16 %v1008
        %v2010 = vunpack.c.l.b16 %v1009
        %v2011 = vunpack.c.h.b16 %v1009
        %v2012 = vunpack.c.l.b16 %v1010
        %v2013 = vunpack.c.h.b16 %v1010
        %v2014 = vunpack.c.l.b16 %v1011
        %v2015 = vunpack.c.h.b16 %v1011
        %v2016 = vunpack.c.l.b16 %v1012
        %v2017 = vunpack.c.h.b16 %v1012
        %v2018 = vunpack.c.l.b16 %v1013
        %v2019 = vunpack.c.h.b16 %v1013
        %v2020 = vunpack.c.l.b16 %v1014
        %v2021 = vunpack.c.h.b16 %v1014
        %v2022 = vunpack.c.l.b16 %v1015
        %v2023 = vunpack.c.h.b16 %v1015
        %v2024 = vunpack.c.l.b16 %v1016
        %v2025 = vunpack.c.h.b16 %v1016
        %v2026 = vunpack.c.l.b16 %v1017
        %v2027 = vunpack.c.h.b16 %v1017
        %v2028 = vunpack.c.l.b16 %v1018
        %v2029 = vunpack.c.h.b16 %v1018
        %v2030 = vunpack.c.l.b16 %v1019
        %v2031 = vunpack.c.h.b16 %v1019
        %v2032 = vunpack.c.l.b16 %v1020
        %v2033 = vunpack.c.h.b16 %v1020
        %v2034 = vunpack.c.l.b16 %v1021
        %v2035 = vunpack.c.h.b16 %v1021
        %v2036 = vunpack.c.l.b16 %v1022
        %v2037 = vunpack.c.h.b16 %v1022
        %v2038 = vunpack.c.l.b16 %v1023
        %v2039 = vunpack.c.h.b16 %v1023
        %v2040 = vunpack.c.l.b16 %v1024
        %v2041 = vunpack.c.h.b16 %v1024
        %v2042 = vunpack.c.l.b16 %v1025
        %v2043 = vunpack.c.h.b16 %v1025
        %v2044 = vunpack.c.l.b16 %v1026
        %v2045 = vunpack.c.h.b16 %v1026
        %v2046 = vunpack.c.l.b16 %v1027
        %v2047 = vunpack.c.h.b16 %v1027
        %v2048 = vunpack.c.l.b16 %v1028
        %v2049 = vunpack.c.h.b16 %v1028
        %v2050 = vunpack.c.l.b16 %v1029
        %v2051 = vunpack.c.h.b16 %v1029
        %v2052 = vunpack.c.l.b16 %v1030
        %v2053 = vunpack.c.h.b16 %v1030
        %v2054 = vunpack.c.l.b16 %v1031
        %v2055 = vunpack.c.h.b16 %v1031
        %v2056 = vunpack.c.l.b16 %v1032
        %v2057 = vunpack.c.h.b16 %v1032
        %v2058 = vunpack.c.l.b16 %v1033
        %v2059 = vunpack.c.h.b16 %v1033
        %v2060 = vunpack.c.l.b16 %v1034
        %v2061 = vunpack.c.h.b16 %v1034
        %v2062 = vunpack.c.l.b16 %v1035
        %v2063 = vunpack.c.h.b16 %v1035
        %v2064 = vunpack.c.l.b16 %v1036
        %v2065 = vunpack.c.h.b16 %v1036
        %v2066 = vunpack.c.l.b16 %v1037
        %v2067 = vunpack.c.h.b16 %v1037
        %v2068 = vunpack.c.l.b16 %v1038
        %v2069 = vunpack.c.h.b16 %v1038
        %v2070 = vunpack.c.l.b16 %v1039
        %v2071 = vunpack.c.h.b16 %v1039
        %v2072 = vunpack.c.l.b16 %v1040
        %v2073 = vunpack.c.h.b16 %v1040
        %v2074 = vunpack.c.l.b16 %v1041
        %v2075 = vunpack.c.h.b16 %v1041
        %v2076 = vunpack.c.l.b16 %v1042
        %v2077 = vunpack.c.h.b16 %v1042
        %v2078 = vunpack.c.l.b16 %v1043
        %v2079 = vunpack.c.h.b16 %v1043
        %v2080 = vunpack.c.l.b16 %v1044
        %v2081 = vunpack.c.h.b16 %v1044
        %v2082 = vunpack.c.l.b16 %v1045
        %v2083 = vunpack.c.h.b16 %v1045
        %v2084 = vunpack.c.l.b16 %v1046
        %v2085 = vunpack.c.h.b16 %v1046
        %v2086 = vunpack.c.l.b16 %v1047
        %v2087 = vunpack.c.h.b16 %v1047
        %v2088 = vunpack.c.l.b16 %v1048
        %v2089 = vunpack.c.h.b16 %v1048
        %v2090 = vunpack.c.l.b16 %v1049
        %v2091 = vunpack.c.h.b16 %v1049
        %v2092 = vunpack.c.l.b16 %v1050
        %v2093 = vunpack.c.h.b16 %v1050
        %v2094 = vunpack.c.l.b16 %v1051
        %v2095 = vunpack.c.h.b16 %v1051
        %v2096 = vunpack.c.l.b16 %v1052
        %v2097 = vunpack.c.h.b16 %v1052
        %v2098 = vunpack.c.l.b16 %v1053
        %v2099 = vunpack.c.h.b16 %v1053
        %v2100 = vunpack.c.l.b16 %v1054
        %v2101 = vunpack.c.h.b16 %v1054
        %v2102 = vunpack.c.l.b16 %v1055
        %v2103 = vunpack.c.h.b16 %v1055
        %v2104 = vunpack.c.l.b16 %v1056
        %v2105 = vunpack.c.h.b16 %v1056
        %v2106 = vunpack.c.l.b16 %v1057
        %v2107 = vunpack.c.h.b16 %v1057
        %v2108 = vunpack.c.l.b16 %v1058
        %v2109 = vunpack.c.h.b16 %v1058
        %v2110 = vunpack.c.l.b16 %v1059
        %v2111 = vunpack.c.h.b16 %v1059
        %v2112 = vunpack.c.l.b16 %v1060
        %v2113 = vunpack.c.h.b16 %v1060
        %v2114 = vunpack.c.l.b16 %v1061
        %v2115 = vunpack.c.h.b16 %v1061
        %v2116 = vunpack.c.l.b16 %v1062
        %v2117 = vunpack.c.h.b16 %v1062
        %v2118 = vunpack.c.l.b16 %v1063
        %v2119 = vunpack.c.h.b16 %v1063
        %v2120 = vunpack.c.l.b16 %v1064
        %v2121 = vunpack.c.h.b16 %v1064
        %v2122 = vunpack.c.l.b16 %v1065
        %v2123 = vunpack.c.h.b16 %v1065
        %v2124 = vunpack.c.l.b16 %v1066
        %v2125 = vunpack.c.h.b16 %v1066
        %v2126 = vunpack.c.l.b16 %v1067
        %v2127 = vunpack.c.h.b16 %v1067
        %v2128 = vunpack.c.l.b16 %v1068
        %v2129 = vunpack.c.h.b16 %v1068
        %v2130 = vunpack.c.l.b16 %v1069
        %v2131 = vunpack.c.h.b16 %v1069
        %v2132 = vunpack.c.l.b16 %v1070
        %v2133 = vunpack.c.h.b16 %v1070
        %v2134 = vunpack.c.l.b16 %v1071
        %v2135 = vunpack.c.h.b16 %v1071
        %v2136 = vunpack.c.l.b16 %v1072
        %v2137 = vunpack.c.h.b16 %v1072
        %v2138 = vunpack.c.l.b16 %v1073
        %v2139 = vunpack.c.h.b16 %v1073
        %v2140 = vunpack.c.l.b16 %v1074
        %v2141 = vunpack.c.h.b16 %v1074
        %v2142 = vunpack.c.l.b16 %v1075
        %v2143 = vunpack.c.h.b16 %v1075
        %v2144 = vunpack.c.l.b16 %v1076
        %v2145 = vunpack.c.h.b16 %v1076
        %v2146 = vunpack.c.l.b16 %v1077
        %v2147 = vunpack.c.h.b16 %v1077
        %v2148 = vunpack.c.l.b16 %v1078
        %v2149 = vunpack.c.h.b16 %v1078
        %v2150 = vunpack.c.l.b16 %v1079
        %v2151 = vunpack.c.h.b16 %v1079
        %v2152 = vunpack.c.l.b16 %v1080
        %v2153 = vunpack.c.h.b16 %v1080
        %v2154 = vunpack.c.l.b16 %v1081
        %v2155 = vunpack.c.h.b16 %v1081
        %v2156 = vunpack.c.l.b16 %v1082
        %v2157 = vunpack.c.h.b16 %v1082
        %v2158 = vunpack.c.l.b16 %v1083
        %v2159 = vunpack.c.h.b16 %v1083
        %v2160 = vunpack.c.l.b16 %v1084
        %v2161 = vunpack.c.h.b16 %v1084
        %v2162 = vunpack.c.l.b16 %v1085
        %v2163 = vunpack.c.h.b16 %v1085
        %v2164 = vunpack.c.l.b16 %v1086
        %v2165 = vunpack.c.h.b16 %v1086
        %v2166 = vunpack.c.l.b16 %v1087
        %v2167 = vunpack.c.h.b16 %v1087
        %v2168 = vunpack.c.l.b16 %v1088
        %v2169 = vunpack.c.h.b16 %v1088
        %v2170 = vunpack.c.l.b16 %v1089
        %v2171 = vunpack.c.h.b16 %v1089
        %v2172 = vunpack.c.l.b16 %v1090
        %v2173 = vunpack.c.h.b16 %v1090
        %v2174 = vunpack.c.l.b16 %v1091
        %v2175 = vunpack.c.h.b16 %v1091
        %v2176 = vunpack.c.l.b16 %v1092
        %v2177 = vunpack.c.h.b16 %v1092
        %v2178 = vunpack.c.l.b16 %v1093
        %v2179 = vunpack.c.h.b16 %v1093
        %v2180 = vunpack.c.l.b16 %v1094
        %v2181 = vunpack.c.h.b16 %v1094
        %v2182 = vunpack.c.l.b16 %v1095
        %v2183 = vunpack.c.h.b16 %v1095
        %v2184 = vunpack.c.l.b16 %v1096
        %v2185 = vunpack.c.h.b16 %v1096
        %v2186 = vunpack.c.l.b16 %v1097
        %v2187 = vunpack.c.h.b16 %v1097
        %v2188 = vunpack.c.l.b16 %v1098
        %v2189 = vunpack.c.h.b16 %v1098
        %v2190 = vunpack.c.l.b16 %v1099
        %v2191 = vunpack.c.h.b16 %v1099
        %v2192 = vunpack.c.l.b16 %v1100
        %v2193 = vunpack.c.h.b16 %v1100
        %v2194 = vunpack.c.l.b16 %v1101
        %v2195 = vunpack.c.h.b16 %v1101
        %v2196 = vunpack.c.l.b16 %v1102
        %v2197 = vunpack.c.h.b16 %v1102
        %v2198 = vunpack.c.l.b16 %v1103
        %v2199 = vunpack.c.h.b16 %v1103
        %v2200 = vunpack.c.l.b16 %v1104
        %v2201 = vunpack.c.h.b16 %v1104
        %v2202 = vunpack.c.l.b16 %v1105
        %v2203 = vunpack.c.h.b16 %v1105
        %v2204 = vunpack.c.l.b16 %v1106
        %v2205 = vunpack.c.h.b16 %v1106
        %v2206 = vunpack.c.l.b16 %v1107
        %v2207 = vunpack.c.h.b16 %v1107
        %v2208 = vunpack.c.l.b16 %v1108
        %v2209 = vunpack.c.h.b16 %v1108
        %v2210 = vunpack.c.l.b16 %v1109
        %v2211 = vunpack.c.h.b16 %v1109
        %v2212 = vunpack.c.l.b16 %v1110
        %v2213 = vunpack.c.h.b16 %v1110
        %v2214 = vunpack.c.l.b16 %v1111
        %v2215 = vunpack.c.h.b16 %v1111
        %v2216 = vunpack.c.l.b16 %v1112
        %v2217 = vunpack.c.h.b16 %v1112
        %v2218 = vunpack.c.l.b16 %v1113
        %v2219 = vunpack.c.h.b16 %v1113
        %v2220 = vunpack.c.l.b16 %v1114
        %v2221 = vunpack.c.h.b16 %v1114
        %v2222 = vunpack.c.l.b16 %v1115
        %v2223 = vunpack.c.h.b16 %v1115
        %v2224 = vunpack.c.l.b16 %v1116
        %v2225 = vunpack.c.h.b16 %v1116
        %v2226 = vunpack.c.l.b16 %v1117
        %v2227 = vunpack.c.h.b16 %v1117
        %v2228 = vunpack.c.l.b16 %v1118
        %v2229 = vunpack.c.h.b16 %v1118
        %v2230 = vunpack.c.l.b16 %v1119
        %v2231 = vunpack.c.h.b16 %v1119
        %v2232 = vunpack.c.l.b16 %v1120
        %v2233 = vunpack.c.h.b16 %v1120
        %v2234 = vunpack.c.l.b16 %v1121
        %v2235 = vunpack.c.h.b16 %v1121
        %v2236 = vunpack.c.l.b16 %v1122
        %v2237 = vunpack.c.h.b16 %v1122
        %v2238 = vunpack.c.l.b16 %v1123
        %v2239 = vunpack.c.h.b16 %v1123
        %v2240 = vunpack.c.l.b16 %v1124
        %v2241 = vunpack.c.h.b16 %v1124
        %v2242 = vunpack.c.l.b16 %v1125
        %v2243 = vunpack.c.h.b16 %v1125
        %v2244 = vunpack.c.l.b16 %v1126
        %v2245 = vunpack.c.h.b16 %v1126
        %v2246 = vunpack.c.l.b16 %v1127
        %v2247 = vunpack.c.h.b16 %v1127
        %v2248 = vunpack.c.l.b16 %v1128
        %v2249 = vunpack.c.h.b16 %v1128
        %v2250 = vunpack.c.l.b16 %v1129
        %v2251 = vunpack.c.h.b16 %v1129
        %v2252 = vunpack.c.l.b16 %v1130
        %v2253 = vunpack.c.h.b16 %v1130
        %v2254 = vunpack.c.l.b16 %v1131
        %v2255 = vunpack.c.h.b16 %v1131
        %v2256 = vunpack.c.l.b16 %v1132
        %v2257 = vunpack.c.h.b16 %v1132
        %v2258 = vunpack.c.l.b16 %v1133
        %v2259 = vunpack.c.h.b16 %v1133
        %v2260 = vunpack.c.l.b16 %v1134
        %v2261 = vunpack.c.h.b16 %v1134
        %v2262 = vunpack.c.l.b16 %v1135
        %v2263 = vunpack.c.h.b16 %v1135
        %v2264 = vunpack.c.l.b16 %v1136
        %v2265 = vunpack.c.h.b16 %v1136
        %v2266 = vunpack.c.l.b16 %v1137
        %v2267 = vunpack.c.h.b16 %v1137
        %v2268 = vunpack.c.l.b16 %v1138
        %v2269 = vunpack.c.h.b16 %v1138
        %v2270 = vunpack.c.l.b16 %v1139
        %v2271 = vunpack.c.h.b16 %v1139
        %v2272 = vunpack.c.l.b16 %v1140
        %v2273 = vunpack.c.h.b16 %v1140
        %v2274 = vunpack.c.l.b16 %v1141
        %v2275 = vunpack.c.h.b16 %v1141
        %v2276 = vunpack.c.l.b16 %v1142
        %v2277 = vunpack.c.h.b16 %v1142
        %v2278 = vunpack.c.l.b16 %v1143
        %v2279 = vunpack.c.h.b16 %v1143
        %v2280 = vunpack.c.l.b16 %v1144
        %v2281 = vunpack.c.h.b16 %v1144
        %v2282 = vunpack.c.l.b16 %v1145
        %v2283 = vunpack.c.h.b16 %v1145
        %v2284 = vunpack.c.l.b16 %v1146
        %v2285 = vunpack.c.h.b16 %v1146
        %v2286 = vunpack.c.l.b16 %v1147
        %v2287 = vunpack.c.h.b16 %v1147
        %v2288 = vunpack.c.l.b16 %v1148
        %v2289 = vunpack.c.h.b16 %v1148
        %v2290 = vunpack.c.l.b16 %v1149
        %v2291 = vunpack.c.h.b16 %v1149
        %v2292 = vunpack.c.l.b16 %v1150
        %v2293 = vunpack.c.h.b16 %v1150
        %v2294 = vunpack.c.l.b16 %v1151
        %v2295 = vunpack.c.h.b16 %v1151
        %v2296 = vunpack.c.l.b16 %v1152
        %v2297 = vunpack.c.h.b16 %v1152
        %v2298 = vunpack.c.l.b16 %v1153
        %v2299 = vunpack.c.h.b16 %v1153
        %v2300 = vunpack.c.l.b16 %v1154
        %v2301 = vunpack.c.h.b16 %v1154
        %v2302 = vunpack.c.l.b16 %v1155
        %v2303 = vunpack.c.h.b16 %v1155
        %v2304 = vunpack.c.l.b16 %v1156
        %v2305 = vunpack.c.h.b16 %v1156
        %v2306 = vunpack.c.l.b16 %v1157
        %v2307 = vunpack.c.h.b16 %v1157
        %v2308 = vunpack.c.l.b16 %v1158
        %v2309 = vunpack.c.h.b16 %v1158
        %v2310 = vunpack.c.l.b16 %v1159
        %v2311 = vunpack.c.h.b16 %v1159
        %v2312 = vunpack.c.l.b16 %v1160
        %v2313 = vunpack.c.h.b16 %v1160
        %v2314 = vunpack.c.l.b16 %v1161
        %v2315 = vunpack.c.h.b16 %v1161
        %v2316 = vunpack.c.l.b16 %v1162
        %v2317 = vunpack.c.h.b16 %v1162
        %v2318 = vunpack.c.l.b16 %v1163
        %v2319 = vunpack.c.h.b16 %v1163
        %v2320 = vunpack.c.l.b16 %v1164
        %v2321 = vunpack.c.h.b16 %v1164
        %v2322 = vunpack.c.l.b16 %v1165
        %v2323 = vunpack.c.h.b16 %v1165
        %v2324 = vunpack.c.l.b16 %v1166
        %v2325 = vunpack.c.h.b16 %v1166
        %v2326 = vunpack.c.l.b16 %v1167
        %v2327 = vunpack.c.h.b16 %v1167
        %v2328 = vunpack.c.l.b16 %v1168
        %v2329 = vunpack.c.h.b16 %v1168
        %v2330 = vunpack.c.l.b16 %v1169
        %v2331 = vunpack.c.h.b16 %v1169
        %v2332 = vunpack.c.l.b16 %v1170
        %v2333 = vunpack.c.h.b16 %v1170
        %v2334 = vunpack.c.l.b16 %v1171
        %v2335 = vunpack.c.h.b16 %v1171
        %v2336 = vunpack.c.l.b16 %v1172
        %v2337 = vunpack.c.h.b16 %v1172
        %v2338 = vunpack.c.l.b16 %v1173
        %v2339 = vunpack.c.h.b16 %v1173
        %v2340 = vunpack.c.l.b16 %v1174
        %v2341 = vunpack.c.h.b16 %v1174
        %v2342 = vunpack.c.l.b16 %v1175
        %v2343 = vunpack.c.h.b16 %v1175
        %v2344 = vunpack.c.l.b16 %v1176
        %v2345 = vunpack.c.h.b16 %v1176
        %v2346 = vunpack.c.l.b16 %v1177
        %v2347 = vunpack.c.h.b16 %v1177
        %v2348 = vunpack.c.l.b16 %v1178
        %v2349 = vunpack.c.h.b16 %v1178
        %v2350 = vunpack.c.l.b16 %v1179
        %v2351 = vunpack.c.h.b16 %v1179
        %v2352 = vunpack.c.l.b16 %v1180
        %v2353 = vunpack.c.h.b16 %v1180
        %v2354 = vunpack.c.l.b16 %v1181
        %v2355 = vunpack.c.h.b16 %v1181
        %v2356 = vunpack.c.l.b16 %v1182
        %v2357 = vunpack.c.h.b16 %v1182
        %v2358 = vunpack.c.l.b16 %v1183
        %v2359 = vunpack.c.h.b16 %v1183
        %v2360 = vunpack.c.l.b16 %v1184
        %v2361 = vunpack.c.h.b16 %v1184
        %v2362 = vunpack.c.l.b16 %v1185
        %v2363 = vunpack.c.h.b16 %v1185
        %v2364 = vunpack.c.l.b16 %v1186
        %v2365 = vunpack.c.h.b16 %v1186
        %v2366 = vunpack.c.l.b16 %v1187
        %v2367 = vunpack.c.h.b16 %v1187
        %v2368 = vunpack.c.l.b16 %v1188
        %v2369 = vunpack.c.h.b16 %v1188
        %v2370 = vunpack.c.l.b16 %v1189
        %v2371 = vunpack.c.h.b16 %v1189
        %v2372 = vunpack.c.l.b16 %v1190
        %v2373 = vunpack.c.h.b16 %v1190
        %v2374 = vunpack.c.l.b16 %v1191
        %v2375 = vunpack.c.h.b16 %v1191
        %v2376 = vunpack.c.l.b16 %v1192
        %v2377 = vunpack.c.h.b16 %v1192
        %v2378 = vunpack.c.l.b16 %v1193
        %v2379 = vunpack.c.h.b16 %v1193
        %v2380 = vunpack.c.l.b16 %v1194
        %v2381 = vunpack.c.h.b16 %v1194
        %v2382 = vunpack.c.l.b16 %v1195
        %v2383 = vunpack.c.h.b16 %v1195
        %v2384 = vunpack.c.l.b16 %v1196
        %v2385 = vunpack.c.h.b16 %v1196
        %v2386 = vunpack.c.l.b16 %v1197
        %v2387 = vunpack.c.h.b16 %v1197
        %v2388 = vunpack.c.l.b16 %v1198
        %v2389 = vunpack.c.h.b16 %v1198
        %v2390 = vunpack.c.l.b16 %v1199
        %v2391 = vunpack.c.h.b16 %v1199
        %v2392 = vunpack.c.l.b16 %v1200
        %v2393 = vunpack.c.h.b16 %v1200
        %v2394 = vunpack.c.l.b16 %v1201
        %v2395 = vunpack.c.h.b16 %v1201
        %v2396 = vunpack.c.l.b16 %v1202
        %v2397 = vunpack.c.h.b16 %v1202
        %v2398 = vunpack.c.l.b16 %v1203
        %v2399 = vunpack.c.h.b16 %v1203
        %v2400 = vunpack.c.l.b16 %v1204
        %v2401 = vunpack.c.h.b16 %v1204
        %v2402 = vunpack.c.l.b16 %v1205
        %v2403 = vunpack.c.h.b16 %v1205
        %v2404 = vunpack.c.l.b16 %v1206
        %v2405 = vunpack.c.h.b16 %v1206
        %v2406 = vunpack.c.l.b16 %v1207
        %v2407 = vunpack.c.h.b16 %v1207
        %v2408 = vunpack.c.l.b16 %v1208
        %v2409 = vunpack.c.h.b16 %v1208
        %v2410 = vunpack.c.l.b16 %v1209
        %v2411 = vunpack.c.h.b16 %v1209
        %v2412 = vunpack.c.l.b16 %v1210
        %v2413 = vunpack.c.h.b16 %v1210
        %v2414 = vunpack.c.l.b16 %v1211
        %v2415 = vunpack.c.h.b16 %v1211
        %v2416 = vunpack.c.l.b16 %v1212
        %v2417 = vunpack.c.h.b16 %v1212
        %v2418 = vunpack.c.l.b16 %v1213
        %v2419 = vunpack.c.h.b16 %v1213
        %v2420 = vunpack.c.l.b16 %v1214
        %v2421 = vunpack.c.h.b16 %v1214
        %v2422 = vunpack.c.l.b16 %v1215
        %v2423 = vunpack.c.h.b16 %v1215
        %v2424 = vpack.c.b16 %v1856, %v1848
        %v2425 = vpack.c.b16 %v1857, %v1849
        %v2426 = vpack.c.b16 %v1858, %v1850
        %v2427 = vpack.c.b16 %v1859, %v1851
        %v2428 = vpack.c.b16 %v1860, %v1852
        %v2429 = vpack.c.b16 %v1861, %v1853
        %v2430 = vpack.c.b16 %v1862, %v1854
        %v2431 = vpack.c.b16 %v1863, %v1855
        %v2432 = vpack.c.b16 %v1872, %v1864
        %v2433 = vpack.c.b16 %v1873, %v1865
        %v2434 = vpack.c.b16 %v1874, %v1866
        %v2435 = vpack.c.b16 %v1875, %v1867
        %v2436 = vpack.c.b16 %v1876, %v1868
        %v2437 = vpack.c.b16 %v1877, %v1869
        %v2438 = vpack.c.b16 %v1878, %v1870
        %v2439 = vpack.c.b16 %v1879, %v1871
        %v2440 = vpack.c.b16 %v1888, %v1880
        %v2441 = vpack.c.b16 %v1889, %v1881
        %v2442 = vpack.c.b16 %v1890, %v1882
        %v2443 = vpack.c.b16 %v1891, %v1883
        %v2444 = vpack.c.b16 %v1892, %v1884
        %v2445 = vpack.c.b16 %v1893, %v1885
        %v2446 = vpack.c.b16 %v1894, %v1886
        %v2447 = vpack.c.b16 %v1895, %v1887
        %v2448 = vpack.c.b16 %v1904, %v1896
        %v2449 = vpack.c.b16 %v1905, %v1897
        %v2450 = vpack.c.b16 %v1906, %v1898
        %v2451 = vpack.c.b16 %v1907, %v1899
        %v2452 = vpack.c.b16 %v1908, %v1900
        %v2453 = vpack.c.b16 %v1909, %v1901
        %v2454 = vpack.c.b16 %v1910, %v1902
        %v2455 = vpack.c.b16 %v1911, %v1903
        %v2456 = vpack.c.b16 %v1920, %v1912
        %v2457 = vpack.c.b16 %v1921, %v1913
        %v2458 = vpack.c.b16 %v1922, %v1914
        %v2459 = vpack.c.b16 %v1923, %v1915
        %v2460 = vpack.c.b16 %v1924, %v1916
        %v2461 = vpack.c.b16 %v1925, %v1917
        %v2462 = vpack.c.b16 %v1926, %v1918
        %v2463 = vpack.c.b16 %v1927, %v1919
        %v2464 = vpack.c.b16 %v1936, %v1928
        %v2465 = vpack.c.b16 %v1937, %v1929
        %v2466 = vpack.c.b16 %v1938, %v1930
        %v2467 = vpack.c.b16 %v1939, %v1931
        %v2468 = vpack.c.b16 %v1940, %v1932
        %v2469 = vpack.c.b16 %v1941, %v1933
        %v2470 = vpack.c.b16 %v1942, %v1934
        %v2471 = vpack.c.b16 %v1943, %v1935
        %v2472 = vpack.c.b16 %v1952, %v1944
        %v2473 = vpack.c.b16 %v1953, %v1945
        %v2474 = vpack.c.b16 %v1954, %v1946
        %v2475 = vpack.c.b16 %v1955, %v1947
        %v2476 = vpack.c.b16 %v1956, %v1948
        %v2477 = vpack.c.b16 %v1957, %v1949
        %v2478 = vpack.c.b16 %v1958, %v1950
        %v2479 = vpack.c.b16 %v1959, %v1951
        %v2480 = vpack.c.b16 %v1968, %v1960
        %v2481 = vpack.c.b16 %v1969, %v1961
        %v2482 = vpack.c.b16 %v1970, %v1962
        %v2483 = vpack.c.b16 %v1971, %v1963
        %v2484 = vpack.c.b16 %v1972, %v1964
        %v2485 = vpack.c.b16 %v1973, %v1965
        %v2486 = vpack.c.b16 %v1974, %v1966
        %v2487 = vpack.c.b16 %v1975, %v1967
        %v2488 = vpack.c.b16 %v1984, %v1976
        %v2489 = vpack.c.b16 %v1985, %v1977
        %v2490 = vpack.c.b16 %v1986, %v1978
        %v2491 = vpack.c.b16 %v1987, %v1979
        %v2492 = vpack.c.b16 %v1988, %v1980
        %v2493 = vpack.c.b16 %v1989, %v1981
        %v2494 = vpack.c.b16 %v1990, %v1982
        %v2495 = vpack.c.b16 %v1991, %v1983
        %v2496 = vpack.c.b16 %v2000, %v1992
        %v2497 = vpack.c.b16 %v2001, %v1993
        %v2498 = vpack.c.b16 %v2002, %v1994
        %v2499 = vpack.c.b16 %v2003, %v1995
        %v2500 = vpack.c.b16 %v2004, %v1996
        %v2501 = vpack.c.b16 %v2005, %v1997
        %v2502 = vpack.c.b16 %v2006, %v1998
        %v2503 = vpack.c.b16 %v2007, %v1999
        %v2504 = vpack.c.b16 %v2016, %v2008
        %v2505 = vpack.c.b16 %v2017, %v2009
        %v2506 = vpack.c.b16 %v2018, %v2010
        %v2507 = vpack.c.b16 %v2019, %v2011
        %v2508 = vpack.c.b16 %v2020, %v2012
        %v2509 = vpack.c.b16 %v2021, %v2013
        %v2510 = vpack.c.b16 %v2022, %v2014
        %v2511 = vpack.c.b16 %v2023, %v2015
        %v2512 = vpack.c.b16 %v2032, %v2024
        %v2513 = vpack.c.b16 %v2033, %v2025
        %v2514 = vpack.c.b16 %v2034, %v2026
        %v2515 = vpack.c.b16 %v2035, %v2027
        %v2516 = vpack.c.b16 %v2036, %v2028
        %v2517 = vpack.c.b16 %v2037, %v2029
        %v2518 = vpack.c.b16 %v2038, %v2030
        %v2519 = vpack.c.b16 %v2039, %v2031
        %v2520 = vpack.c.b16 %v2048, %v2040
        %v2521 = vpack.c.b16 %v2049, %v2041
        %v2522 = vpack.c.b16 %v2050, %v2042
        %v2523 = vpack.c.b16 %v2051, %v2043
        %v2524 = vpack.c.b16 %v2052, %v2044
        %v2525 = vpack.c.b16 %v2053, %v2045
        %v2526 = vpack.c.b16 %v2054, %v2046
        %v2527 = vpack.c.b16 %v2055, %v2047
        %v2528 = vpack.c.b16 %v2064, %v2056
        %v2529 = vpack.c.b16 %v2065, %v2057
        %v2530 = vpack.c.b16 %v2066, %v2058
        %v2531 = vpack.c.b16 %v2067, %v2059
        %v2532 = vpack.c.b16 %v2068, %v2060
        %v2533 = vpack.c.b16 %v2069, %v2061
        %v2534 = vpack.c.b16 %v2070, %v2062
        %v2535 = vpack.c.b16 %v2071, %v2063
        %v2536 = vpack.c.b16 %v2080, %v2072
        %v2537 = vpack.c.b16 %v2081, %v2073
        %v2538 = vpack.c.b16 %v2082, %v2074
        %v2539 = vpack.c.b16 %v2083, %v2075
        %v2540 = vpack.c.b16 %v2084, %v2076
        %v2541 = vpack.c.b16 %v2085, %v2077
        %v2542 = vpack.c.b16 %v2086, %v2078
        %v2543 = vpack.c.b16 %v2087, %v2079
        %v2544 = vpack.c.b16 %v2096, %v2088
        %v2545 = vpack.c.b16 %v2097, %v2089
        %v2546 = vpack.c.b16 %v2098, %v2090
        %v2547 = vpack.c.b16 %v2099, %v2091
        %v2548 = vpack.c.b16 %v2100, %v2092
        %v2549 = vpack.c.b16 %v2101, %v2093
        %v2550 = vpack.c.b16 %v2102, %v2094
        %v2551 = vpack.c.b16 %v2103, %v2095
        %v2552 = vpack.c.b16 %v2112, %v2104
        %v2553 = vpack.c.b16 %v2113, %v2105
        %v2554 = vpack.c.b16 %v2114, %v2106
        %v2555 = vpack.c.b16 %v2115, %v2107
        %v2556 = vpack.c.b16 %v2116, %v2108
        %v2557 = vpack.c.b16 %v2117, %v2109
        %v2558 = vpack.c.b16 %v2118, %v2110
        %v2559 = vpack.c.b16 %v2119, %v2111
        %v2560 = vpack.c.b16 %v2128, %v2120
        %v2561 = vpack.c.b16 %v2129, %v2121
        %v2562 = vpack.c.b16 %v2130, %v2122
        %v2563 = vpack.c.b16 %v2131, %v2123
        %v2564 = vpack.c.b16 %v2132, %v2124
        %v2565 = vpack.c.b16 %v2133, %v2125
        %v2566 = vpack.c.b16 %v2134, %v2126
        %v2567 = vpack.c.b16 %v2135, %v2127
        %v2568 = vpack.c.b16 %v2144, %v2136
        %v2569 = vpack.c.b16 %v2145, %v2137
        %v2570 = vpack.c.b16 %v2146, %v2138
        %v2571 = vpack.c.b16 %v2147, %v2139
        %v2572 = vpack.c.b16 %v2148, %v2140
        %v2573 = vpack.c.b16 %v2149, %v2141
        %v2574 = vpack.c.b16 %v2150, %v2142
        %v2575 = vpack.c.b16 %v2151, %v2143
        %v2576 = vpack.c.b16 %v2160, %v2152
        %v2577 = vpack.c.b16 %v2161, %v2153
        %v2578 = vpack.c.b16 %v2162, %v2154
        %v2579 = vpack.c.b16 %v2163, %v2155
        %v2580 = vpack.c.b16 %v2164, %v2156
        %v2581 = vpack.c.b16 %v2165, %v2157
        %v2582 = vpack.c.b16 %v2166, %v2158
        %v2583 = vpack.c.b16 %v2167, %v2159
        %v2584 = vpack.c.b16 %v2176, %v2168
        %v2585 = vpack.c.b16 %v2177, %v2169
        %v2586 = vpack.c.b16 %v2178, %v2170
        %v2587 = vpack.c.b16 %v2179, %v2171
        %v2588 = vpack.c.b16 %v2180, %v2172
        %v2589 = vpack.c.b16 %v2181, %v2173
        %v2590 = vpack.c.b16 %v2182, %v2174
        %v2591 = vpack.c.b16 %v2183, %v2175
        %v2592 = vpack.c.b16 %v2192, %v2184
        %v2593 = vpack.c.b16 %v2193, %v2185
        %v2594 = vpack.c.b16 %v2194, %v2186
        %v2595 = vpack.c.b16 %v2195, %v2187
        %v2596 = vpack.c.b16 %v2196, %v2188
        %v2597 = vpack.c.b16 %v2197, %v2189
        %v2598 = vpack.c.b16 %v2198, %v2190
        %v2599 = vpack.c.b16 %v2199, %v2191
        %v2600 = vpack.c.b16 %v2208, %v2200
        %v2601 = vpack.c.b16 %v2209, %v2201
        %v2602 = vpack.c.b16 %v2210, %v2202
        %v2603 = vpack.c.b16 %v2211, %v2203
        %v2604 = vpack.c.b16 %v2212, %v2204
        %v2605 = vpack.c.b16 %v2213, %v2205
        %v2606 = vpack.c.b16 %v2214, %v2206
        %v2607 = vpack.c.b16 %v2215, %v2207
        %v2608 = vpack.c.b16 %v2224, %v2216
        %v2609 = vpack.c.b16 %v2225, %v2217
        %v2610 = vpack.c.b16 %v2226, %v2218
        %v2611 = vpack.c.b16 %v2227, %v2219
        %v2612 = vpack.c.b16 %v2228, %v2220
        %v2613 = vpack.c.b16 %v2229, %v2221
        %v2614 = vpack.c.b16 %v2230, %v2222
        %v2615 = vpack.c.b16 %v2231, %v2223
        %v2616 = vpack.c.b16 %v2240, %v2232
        %v2617 = vpack.c.b16 %v2241, %v2233
        %v2618 = vpack.c.b16 %v2242, %v2234
        %v2619 = vpack.c.b16 %v2243, %v2235
        %v2620 = vpack.c.b16 %v2244, %v2236
        %v2621 = vpack.c.b16 %v2245, %v2237
        %v2622 = vpack.c.b16 %v2246, %v2238
        %v2623 = vpack.c.b16 %v2247, %v2239
        %v2624 = vpack.c.b16 %v2256, %v2248
        %v2625 = vpack.c.b16 %v2257, %v2249
        %v2626 = vpack.c.b16 %v2258, %v2250
        %v2627 = vpack.c.b16 %v2259, %v2251
        %v2628 = vpack.c.b16 %v2260, %v2252
        %v2629 = vpack.c.b16 %v2261, %v2253
        %v2630 = vpack.c.b16 %v2262, %v2254
        %v2631 = vpack.c.b16 %v2263, %v2255
        %v2632 = vpack.c.b16 %v2272, %v2264
        %v2633 = vpack.c.b16 %v2273, %v2265
        %v2634 = vpack.c.b16 %v2274, %v2266
        %v2635 = vpack.c.b16 %v2275, %v2267
        %v2636 = vpack.c.b16 %v2276, %v2268
        %v2637 = vpack.c.b16 %v2277, %v2269
        %v2638 = vpack.c.b16 %v2278, %v2270
        %v2639 = vpack.c.b16 %v2279, %v2271
        %v2640 = vpack.c.b16 %v2288, %v2280
        %v2641 = vpack.c.b16 %v2289, %v2281
        %v2642 = vpack.c.b16 %v2290, %v2282
        %v2643 = vpack.c.b16 %v2291, %v2283
        %v2644 = vpack.c.b16 %v2292, %v2284
        %v2645 = vpack.c.b16 %v2293, %v2285
        %v2646 = vpack.c.b16 %v2294, %v2286
        %v2647 = vpack.c.b16 %v2295, %v2287
        %v2648 = vpack.c.b16 %v2304, %v2296
        %v2649 = vpack.c.b16 %v2305, %v2297
        %v2650 = vpack.c.b16 %v2306, %v2298
        %v2651 = vpack.c.b16 %v2307, %v2299
        %v2652 = vpack.c.b16 %v2308, %v2300
        %v2653 = vpack.c.b16 %v2309, %v2301
        %v2654 = vpack.c.b16 %v2310, %v2302
        %v2655 = vpack.c.b16 %v2311, %v2303
        %v2656 = vpack.c.b16 %v2320, %v2312
        %v2657 = vpack.c.b16 %v2321, %v2313
        %v2658 = vpack.c.b16 %v2322, %v2314
        %v2659 = vpack.c.b16 %v2323, %v2315
        %v2660 = vpack.c.b16 %v2324, %v2316
        %v2661 = vpack.c.b16 %v2325, %v2317
        %v2662 = vpack.c.b16 %v2326, %v2318
        %v2663 = vpack.c.b16 %v2327, %v2319
        %v2664 = vpack.c.b16 %v2336, %v2328
        %v2665 = vpack.c.b16 %v2337, %v2329
        %v2666 = vpack.c.b16 %v2338, %v2330
        %v2667 = vpack.c.b16 %v2339, %v2331
        %v2668 = vpack.c.b16 %v2340, %v2332
        %v2669 = vpack.c.b16 %v2341, %v2333
        %v2670 = vpack.c.b16 %v2342, %v2334
        %v2671 = vpack.c.b16 %v2343, %v2335
        %v2672 = vpack.c.b16 %v2352, %v2344
        %v2673 = vpack.c.b16 %v2353, %v2345
        %v2674 = vpack.c.b16 %v2354, %v2346
        %v2675 = vpack.c.b16 %v2355, %v2347
        %v2676 = vpack.c.b16 %v2356, %v2348
        %v2677 = vpack.c.b16 %v2357, %v2349
        %v2678 = vpack.c.b16 %v2358, %v2350
        %v2679 = vpack.c.b16 %v2359, %v2351
        %v2680 = vpack.c.b16 %v2368, %v2360
        %v2681 = vpack.c.b16 %v2369, %v2361
        %v2682 = vpack.c.b16 %v2370, %v2362
        %v2683 = vpack.c.b16 %v2371, %v2363
        %v2684 = vpack.c.b16 %v2372, %v2364
        %v2685 = vpack.c.b16 %v2373, %v2365
        %v2686 = vpack.c.b16 %v2374, %v2366
        %v2687 = vpack.c.b16 %v2375, %v2367
        %v2688 = vpack.c.b16 %v2384, %v2376
        %v2689 = vpack.c.b16 %v2385, %v2377
        %v2690 = vpack.c.b16 %v2386, %v2378
        %v2691 = vpack.c.b16 %v2387, %v2379
        %v2692 = vpack.c.b16 %v2388, %v2380
        %v2693 = vpack.c.b16 %v2389, %v2381
        %v2694 = vpack.c.b16 %v2390, %v2382
        %v2695 = vpack.c.b16 %v2391, %v2383
        %v2696 = vpack.c.b16 %v2400, %v2392
        %v2697 = vpack.c.b16 %v2401, %v2393
        %v2698 = vpack.c.b16 %v2402, %v2394
        %v2699 = vpack.c.b16 %v2403, %v2395
        %v2700 = vpack.c.b16 %v2404, %v2396
        %v2701 = vpack.c.b16 %v2405, %v2397
        %v2702 = vpack.c.b16 %v2406, %v2398
        %v2703 = vpack.c.b16 %v2407, %v2399
        %v2704 = vpack.c.b16 %v2416, %v2408
        %v2705 = vpack.c.b16 %v2417, %v2409
        %v2706 = vpack.c.b16 %v2418, %v2410
        %v2707 = vpack.c.b16 %v2419, %v2411
        %v2708 = vpack.c.b16 %v2420, %v2412
        %v2709 = vpack.c.b16 %v2421, %v2413
        %v2710 = vpack.c.b16 %v2422, %v2414
        %v2711 = vpack.c.b16 %v2423, %v2415
        %vm2992 = vcmask 465920
        %v2994 = vsel %vm2992, %v1492, 0
        %v2997 = vsel %vm2992, %v1497, 0
        %v3000 = vsel %vm2992, %v1502, 0
        %v3003 = vsel %vm2992, %v1507, 0
        %v3006 = vsel %vm2992, %v1512, 0
        %v3009 = vsel %vm2992, %v1517, 0
        %v3012 = vsel %vm2992, %v1522, 0
        %v3015 = vsel %vm2992, %v1527, 0
        %vm3017 = vcmask 1043456
        %vm3018 = vcmask 1044480
        %v3019 = vsel %vm3017, 4294967295, 65535
        %v3020 = vsel %vm3018, %v3019, 0
        %v3022 = vand.u32 %v2704, %v3020
        %v3025 = vand.u32 %v2705, %v3020
        %v3028 = vand.u32 %v2706, %v3020
        %v3031 = vand.u32 %v2707, %v3020
        %v3034 = vand.u32 %v2708, %v3020
        %v3037 = vand.u32 %v2709, %v3020
        %v3040 = vand.u32 %v2710, %v3020
        %v3043 = vand.u32 %v2711, %v3020
        %3045 = vmatpush.bf16.msra.mxu0 %v2480
        %3046 = vmatpush.bf16.msra.mxu0 %v2472
        %3047 = vmatpush.bf16.msra.mxu0 %v2464
        %3048 = vmatpush.bf16.msra.mxu0 %v2456
        %3049 = vmatpush.bf16.msra.mxu0 %v2448
        %3050 = vmatpush.bf16.msra.mxu0 %v2440
        %3051 = vmatpush.bf16.msra.mxu0 %v2432
        %3052 = vmatpush.bf16.msra.mxu0 %v2424
        %3053 = vmatmul.bf16.gmra.mxu0 %v1488
        %v3054 = vpop.f32.mrf.mxu0
        %v3055 = vadd.f32 %v1283, %v3054
        %v3056 = vpop.f32.mrf.mxu0
        %v3057 = vadd.f32 %v1288, %v3056
        %3058 = vmatmul.bf16.gmra.mxu0 %v1493
        %v3059 = vpop.f32.mrf.mxu0
        %v3060 = vadd.f32 %v1293, %v3059
        %v3061 = vpop.f32.mrf.mxu0
        %v3062 = vadd.f32 %v1298, %v3061
        %3063 = vmatmul.bf16.gmra.mxu0 %v1498
        %v3064 = vpop.f32.mrf.mxu0
        %v3065 = vadd.f32 %v1303, %v3064
        %v3066 = vpop.f32.mrf.mxu0
        %v3067 = vadd.f32 %v1308, %v3066
        %3068 = vmatmul.bf16.gmra.mxu0 %v1503
        %v3069 = vpop.f32.mrf.mxu0
        %v3070 = vadd.f32 %v1313, %v3069
        %v3071 = vpop.f32.mrf.mxu0
        %v3072 = vadd.f32 %v1318, %v3071
        %3073 = vmatmul.bf16.gmra.mxu0 %v1508
        %v3074 = vpop.f32.mrf.mxu0
        %v3075 = vadd.f32 %v1323, %v3074
        %v3076 = vpop.f32.mrf.mxu0
        %v3077 = vadd.f32 %v1328, %v3076
        %3078 = vmatmul.bf16.gmra.mxu0 %v1513
        %v3079 = vpop.f32.mrf.mxu0
        %v3080 = vadd.f32 %v1333, %v3079
        %v3081 = vpop.f32.mrf.mxu0
        %v3082 = vadd.f32 %v1338, %v3081
        %3083 = vmatmul.bf16.gmra.mxu0 %v1518
        %v3084 = vpop.f32.mrf.mxu0
        %v3085 = vadd.f32 %v1343, %v3084
        %v3086 = vpop.f32.mrf.mxu0
        %v3087 = vadd.f32 %v1348, %v3086
        %3088 = vmatmul.bf16.gmra.mxu0 %v1523
        %v3089 = vpop.f32.mrf.mxu0
        %v3090 = vadd.f32 %v1353, %v3089
        %v3091 = vpop.f32.mrf.mxu0
        %v3092 = vadd.f32 %v1358, %v3091
        %3093 = vdwg.mxu0
        %3094 = vmatpush.bf16.msra.mxu0 %v2544
        %3095 = vmatpush.bf16.msra.mxu0 %v2536
        %3096 = vmatpush.bf16.msra.mxu0 %v2528
        %3097 = vmatpush.bf16.msra.mxu0 %v2520
        %3098 = vmatpush.bf16.msra.mxu0 %v2512
        %3099 = vmatpush.bf16.msra.mxu0 %v2504
        %3100 = vmatpush.bf16.msra.mxu0 %v2496
        %3101 = vmatpush.bf16.msra.mxu0 %v2488
        %3102 = vmatmul.bf16.gmra.mxu0 %v1489
        %v3103 = vpop.f32.mrf.mxu0
        %v3104 = vadd.f32 %v3055, %v3103
        %v3105 = vpop.f32.mrf.mxu0
        %v3106 = vadd.f32 %v3057, %v3105
        %3107 = vmatmul.bf16.gmra.mxu0 %v1494
        %v3108 = vpop.f32.mrf.mxu0
        %v3109 = vadd.f32 %v3060, %v3108
        %v3110 = vpop.f32.mrf.mxu0
        %v3111 = vadd.f32 %v3062, %v3110
        %3112 = vmatmul.bf16.gmra.mxu0 %v1499
        %v3113 = vpop.f32.mrf.mxu0
        %v3114 = vadd.f32 %v3065, %v3113
        %v3115 = vpop.f32.mrf.mxu0
        %v3116 = vadd.f32 %v3067, %v3115
        %3117 = vmatmul.bf16.gmra.mxu0 %v1504
        %v3118 = vpop.f32.mrf.mxu0
        %v3119 = vadd.f32 %v3070, %v3118
        %v3120 = vpop.f32.mrf.mxu0
        %v3121 = vadd.f32 %v3072, %v3120
        %3122 = vmatmul.bf16.gmra.mxu0 %v1509
        %v3123 = vpop.f32.mrf.mxu0
        %v3124 = vadd.f32 %v3075, %v3123
        %v3125 = vpop.f32.mrf.mxu0
        %v3126 = vadd.f32 %v3077, %v3125
        %3127 = vmatmul.bf16.gmra.mxu0 %v1514
        %v3128 = vpop.f32.mrf.mxu0
        %v3129 = vadd.f32 %v3080, %v3128
        %v3130 = vpop.f32.mrf.mxu0
        %v3131 = vadd.f32 %v3082, %v3130
        %3132 = vmatmul.bf16.gmra.mxu0 %v1519
        %v3133 = vpop.f32.mrf.mxu0
        %v3134 = vadd.f32 %v3085, %v3133
        %v3135 = vpop.f32.mrf.mxu0
        %v3136 = vadd.f32 %v3087, %v3135
        %3137 = vmatmul.bf16.gmra.mxu0 %v1524
        %v3138 = vpop.f32.mrf.mxu0
        %v3139 = vadd.f32 %v3090, %v3138
        %v3140 = vpop.f32.mrf.mxu0
        %v3141 = vadd.f32 %v3092, %v3140
        %3142 = vdwg.mxu0
        %3143 = vmatpush.bf16.msra.mxu0 %v2608
        %3144 = vmatpush.bf16.msra.mxu0 %v2600
        %3145 = vmatpush.bf16.msra.mxu0 %v2592
        %3146 = vmatpush.bf16.msra.mxu0 %v2584
        %3147 = vmatpush.bf16.msra.mxu0 %v2576
        %3148 = vmatpush.bf16.msra.mxu0 %v2568
        %3149 = vmatpush.bf16.msra.mxu0 %v2560
        %3150 = vmatpush.bf16.msra.mxu0 %v2552
        %3151 = vmatmul.bf16.gmra.mxu0 %v1490
        %v3152 = vpop.f32.mrf.mxu0
        %v3153 = vadd.f32 %v3104, %v3152
        %v3154 = vpop.f32.mrf.mxu0
        %v3155 = vadd.f32 %v3106, %v3154
        %3156 = vmatmul.bf16.gmra.mxu0 %v1495
        %v3157 = vpop.f32.mrf.mxu0
        %v3158 = vadd.f32 %v3109, %v3157
        %v3159 = vpop.f32.mrf.mxu0
        %v3160 = vadd.f32 %v3111, %v3159
        %3161 = vmatmul.bf16.gmra.mxu0 %v1500
        %v3162 = vpop.f32.mrf.mxu0
        %v3163 = vadd.f32 %v3114, %v3162
        %v3164 = vpop.f32.mrf.mxu0
        %v3165 = vadd.f32 %v3116, %v3164
        %3166 = vmatmul.bf16.gmra.mxu0 %v1505
        %v3167 = vpop.f32.mrf.mxu0
        %v3168 = vadd.f32 %v3119, %v3167
        %v3169 = vpop.f32.mrf.mxu0
        %v3170 = vadd.f32 %v3121, %v3169
        %3171 = vmatmul.bf16.gmra.mxu0 %v1510
        %v3172 = vpop.f32.mrf.mxu0
        %v3173 = vadd.f32 %v3124, %v3172
        %v3174 = vpop.f32.mrf.mxu0
        %v3175 = vadd.f32 %v3126, %v3174
        %3176 = vmatmul.bf16.gmra.mxu0 %v1515
        %v3177 = vpop.f32.mrf.mxu0
        %v3178 = vadd.f32 %v3129, %v3177
        %v3179 = vpop.f32.mrf.mxu0
        %v3180 = vadd.f32 %v3131, %v3179
        %3181 = vmatmul.bf16.gmra.mxu0 %v1520
        %v3182 = vpop.f32.mrf.mxu0
        %v3183 = vadd.f32 %v3134, %v3182
        %v3184 = vpop.f32.mrf.mxu0
        %v3185 = vadd.f32 %v3136, %v3184
        %3186 = vmatmul.bf16.gmra.mxu0 %v1525
        %v3187 = vpop.f32.mrf.mxu0
        %v3188 = vadd.f32 %v3139, %v3187
        %v3189 = vpop.f32.mrf.mxu0
        %v3190 = vadd.f32 %v3141, %v3189
        %3191 = vdwg.mxu0
        %3192 = vmatpush.bf16.msra.mxu0 %v2672
        %3193 = vmatpush.bf16.msra.mxu0 %v2664
        %3194 = vmatpush.bf16.msra.mxu0 %v2656
        %3195 = vmatpush.bf16.msra.mxu0 %v2648
        %3196 = vmatpush.bf16.msra.mxu0 %v2640
        %3197 = vmatpush.bf16.msra.mxu0 %v2632
        %3198 = vmatpush.bf16.msra.mxu0 %v2624
        %3199 = vmatpush.bf16.msra.mxu0 %v2616
        %3200 = vmatmul.bf16.gmra.mxu0 %v1491
        %v3201 = vpop.f32.mrf.mxu0
        %v3202 = vadd.f32 %v3153, %v3201
        %v3203 = vpop.f32.mrf.mxu0
        %v3204 = vadd.f32 %v3155, %v3203
        %3205 = vmatmul.bf16.gmra.mxu0 %v1496
        %v3206 = vpop.f32.mrf.mxu0
        %v3207 = vadd.f32 %v3158, %v3206
        %v3208 = vpop.f32.mrf.mxu0
        %v3209 = vadd.f32 %v3160, %v3208
        %3210 = vmatmul.bf16.gmra.mxu0 %v1501
        %v3211 = vpop.f32.mrf.mxu0
        %v3212 = vadd.f32 %v3163, %v3211
        %v3213 = vpop.f32.mrf.mxu0
        %v3214 = vadd.f32 %v3165, %v3213
        %3215 = vmatmul.bf16.gmra.mxu0 %v1506
        %v3216 = vpop.f32.mrf.mxu0
        %v3217 = vadd.f32 %v3168, %v3216
        %v3218 = vpop.f32.mrf.mxu0
        %v3219 = vadd.f32 %v3170, %v3218
        %3220 = vmatmul.bf16.gmra.mxu0 %v1511
        %v3221 = vpop.f32.mrf.mxu0
        %v3222 = vadd.f32 %v3173, %v3221
        %v3223 = vpop.f32.mrf.mxu0
        %v3224 = vadd.f32 %v3175, %v3223
        %3225 = vmatmul.bf16.gmra.mxu0 %v1516
        %v3226 = vpop.f32.mrf.mxu0
        %v3227 = vadd.f32 %v3178, %v3226
        %v3228 = vpop.f32.mrf.mxu0
        %v3229 = vadd.f32 %v3180, %v3228
        %3230 = vmatmul.bf16.gmra.mxu0 %v1521
        %v3231 = vpop.f32.mrf.mxu0
        %v3232 = vadd.f32 %v3183, %v3231
        %v3233 = vpop.f32.mrf.mxu0
        %v3234 = vadd.f32 %v3185, %v3233
        %3235 = vmatmul.bf16.gmra.mxu0 %v1526
        %v3236 = vpop.f32.mrf.mxu0
        %v3237 = vadd.f32 %v3188, %v3236
        %v3238 = vpop.f32.mrf.mxu0
        %v3239 = vadd.f32 %v3190, %v3238
        %3240 = vdwg.mxu0
        %3241 = vmatpush.bf16.msra.mxu0 0
        %3242 = vmatpush.bf16.msra.mxu0 0
        %3243 = vmatpush.bf16.msra.mxu0 0
        %3244 = vmatpush.bf16.msra.mxu0 0
        %3245 = vmatpush.bf16.msra.mxu0 %v3022
        %3246 = vmatpush.bf16.msra.mxu0 %v2696
        %3247 = vmatpush.bf16.msra.mxu0 %v2688
        %3248 = vmatpush.bf16.msra.mxu0 %v2680
        %3249 = vmatmul.bf16.gmra.mxu0 %v2994
        %v3250 = vpop.f32.mrf.mxu0
        %v3251 = vadd.f32 %v3202, %v3250
        %v3252 = vpop.f32.mrf.mxu0
        %v3253 = vadd.f32 %v3204, %v3252
        %3254 = vmatmul.bf16.gmra.mxu0 %v2997
        %v3255 = vpop.f32.mrf.mxu0
        %v3256 = vadd.f32 %v3207, %v3255
        %v3257 = vpop.f32.mrf.mxu0
        %v3258 = vadd.f32 %v3209, %v3257
        %3259 = vmatmul.bf16.gmra.mxu0 %v3000
        %v3260 = vpop.f32.mrf.mxu0
        %v3261 = vadd.f32 %v3212, %v3260
        %v3262 = vpop.f32.mrf.mxu0
        %v3263 = vadd.f32 %v3214, %v3262
        %3264 = vmatmul.bf16.gmra.mxu0 %v3003
        %v3265 = vpop.f32.mrf.mxu0
        %v3266 = vadd.f32 %v3217, %v3265
        %v3267 = vpop.f32.mrf.mxu0
        %v3268 = vadd.f32 %v3219, %v3267
        %3269 = vmatmul.bf16.gmra.mxu0 %v3006
        %v3270 = vpop.f32.mrf.mxu0
        %v3271 = vadd.f32 %v3222, %v3270
        %v3272 = vpop.f32.mrf.mxu0
        %v3273 = vadd.f32 %v3224, %v3272
        %3274 = vmatmul.bf16.gmra.mxu0 %v3009
        %v3275 = vpop.f32.mrf.mxu0
        %v3276 = vadd.f32 %v3227, %v3275
        %v3277 = vpop.f32.mrf.mxu0
        %v3278 = vadd.f32 %v3229, %v3277
        %3279 = vmatmul.bf16.gmra.mxu0 %v3012
        %v3280 = vpop.f32.mrf.mxu0
        %v3281 = vadd.f32 %v3232, %v3280
        %v3282 = vpop.f32.mrf.mxu0
        %v3283 = vadd.f32 %v3234, %v3282
        %3284 = vmatmul.bf16.gmra.mxu0 %v3015
        %v3285 = vpop.f32.mrf.mxu0
        %v3286 = vadd.f32 %v3237, %v3285
        %v3287 = vpop.f32.mrf.mxu0
        %v3288 = vadd.f32 %v3239, %v3287
        %3289 = vdwg.mxu0
        %3290 = vmatpush.bf16.msra.mxu0 %v2481
        %3291 = vmatpush.bf16.msra.mxu0 %v2473
        %3292 = vmatpush.bf16.msra.mxu0 %v2465
        %3293 = vmatpush.bf16.msra.mxu0 %v2457
        %3294 = vmatpush.bf16.msra.mxu0 %v2449
        %3295 = vmatpush.bf16.msra.mxu0 %v2441
        %3296 = vmatpush.bf16.msra.mxu0 %v2433
        %3297 = vmatpush.bf16.msra.mxu0 %v2425
        %3298 = vmatmul.bf16.gmra.mxu0 %v1488
        %v3299 = vpop.f32.mrf.mxu0
        %v3300 = vadd.f32 %v1283, %v3299
        %v3301 = vpop.f32.mrf.mxu0
        %v3302 = vadd.f32 %v1288, %v3301
        %3303 = vmatmul.bf16.gmra.mxu0 %v1493
        %v3304 = vpop.f32.mrf.mxu0
        %v3305 = vadd.f32 %v1293, %v3304
        %v3306 = vpop.f32.mrf.mxu0
        %v3307 = vadd.f32 %v1298, %v3306
        %3308 = vmatmul.bf16.gmra.mxu0 %v1498
        %v3309 = vpop.f32.mrf.mxu0
        %v3310 = vadd.f32 %v1303, %v3309
        %v3311 = vpop.f32.mrf.mxu0
        %v3312 = vadd.f32 %v1308, %v3311
        %3313 = vmatmul.bf16.gmra.mxu0 %v1503
        %v3314 = vpop.f32.mrf.mxu0
        %v3315 = vadd.f32 %v1313, %v3314
        %v3316 = vpop.f32.mrf.mxu0
        %v3317 = vadd.f32 %v1318, %v3316
        %3318 = vmatmul.bf16.gmra.mxu0 %v1508
        %v3319 = vpop.f32.mrf.mxu0
        %v3320 = vadd.f32 %v1323, %v3319
        %v3321 = vpop.f32.mrf.mxu0
        %v3322 = vadd.f32 %v1328, %v3321
        %3323 = vmatmul.bf16.gmra.mxu0 %v1513
        %v3324 = vpop.f32.mrf.mxu0
        %v3325 = vadd.f32 %v1333, %v3324
        %v3326 = vpop.f32.mrf.mxu0
        %v3327 = vadd.f32 %v1338, %v3326
        %3328 = vmatmul.bf16.gmra.mxu0 %v1518
        %v3329 = vpop.f32.mrf.mxu0
        %v3330 = vadd.f32 %v1343, %v3329
        %v3331 = vpop.f32.mrf.mxu0
        %v3332 = vadd.f32 %v1348, %v3331
        %3333 = vmatmul.bf16.gmra.mxu0 %v1523
        %v3334 = vpop.f32.mrf.mxu0
        %v3335 = vadd.f32 %v1353, %v3334
        %v3336 = vpop.f32.mrf.mxu0
        %v3337 = vadd.f32 %v1358, %v3336
        %3338 = vdwg.mxu0
        %3339 = vmatpush.bf16.msra.mxu0 %v2545
        %3340 = vmatpush.bf16.msra.mxu0 %v2537
        %3341 = vmatpush.bf16.msra.mxu0 %v2529
        %3342 = vmatpush.bf16.msra.mxu0 %v2521
        %3343 = vmatpush.bf16.msra.mxu0 %v2513
        %3344 = vmatpush.bf16.msra.mxu0 %v2505
        %3345 = vmatpush.bf16.msra.mxu0 %v2497
        %3346 = vmatpush.bf16.msra.mxu0 %v2489
        %3347 = vmatmul.bf16.gmra.mxu0 %v1489
        %v3348 = vpop.f32.mrf.mxu0
        %v3349 = vadd.f32 %v3300, %v3348
        %v3350 = vpop.f32.mrf.mxu0
        %v3351 = vadd.f32 %v3302, %v3350
        %3352 = vmatmul.bf16.gmra.mxu0 %v1494
        %v3353 = vpop.f32.mrf.mxu0
        %v3354 = vadd.f32 %v3305, %v3353
        %v3355 = vpop.f32.mrf.mxu0
        %v3356 = vadd.f32 %v3307, %v3355
        %3357 = vmatmul.bf16.gmra.mxu0 %v1499
        %v3358 = vpop.f32.mrf.mxu0
        %v3359 = vadd.f32 %v3310, %v3358
        %v3360 = vpop.f32.mrf.mxu0
        %v3361 = vadd.f32 %v3312, %v3360
        %3362 = vmatmul.bf16.gmra.mxu0 %v1504
        %v3363 = vpop.f32.mrf.mxu0
        %v3364 = vadd.f32 %v3315, %v3363
        %v3365 = vpop.f32.mrf.mxu0
        %v3366 = vadd.f32 %v3317, %v3365
        %3367 = vmatmul.bf16.gmra.mxu0 %v1509
        %v3368 = vpop.f32.mrf.mxu0
        %v3369 = vadd.f32 %v3320, %v3368
        %v3370 = vpop.f32.mrf.mxu0
        %v3371 = vadd.f32 %v3322, %v3370
        %3372 = vmatmul.bf16.gmra.mxu0 %v1514
        %v3373 = vpop.f32.mrf.mxu0
        %v3374 = vadd.f32 %v3325, %v3373
        %v3375 = vpop.f32.mrf.mxu0
        %v3376 = vadd.f32 %v3327, %v3375
        %3377 = vmatmul.bf16.gmra.mxu0 %v1519
        %v3378 = vpop.f32.mrf.mxu0
        %v3379 = vadd.f32 %v3330, %v3378
        %v3380 = vpop.f32.mrf.mxu0
        %v3381 = vadd.f32 %v3332, %v3380
        %3382 = vmatmul.bf16.gmra.mxu0 %v1524
        %v3383 = vpop.f32.mrf.mxu0
        %v3384 = vadd.f32 %v3335, %v3383
        %v3385 = vpop.f32.mrf.mxu0
        %v3386 = vadd.f32 %v3337, %v3385
        %3387 = vdwg.mxu0
        %3388 = vmatpush.bf16.msra.mxu0 %v2609
        %3389 = vmatpush.bf16.msra.mxu0 %v2601
        %3390 = vmatpush.bf16.msra.mxu0 %v2593
        %3391 = vmatpush.bf16.msra.mxu0 %v2585
        %3392 = vmatpush.bf16.msra.mxu0 %v2577
        %3393 = vmatpush.bf16.msra.mxu0 %v2569
        %3394 = vmatpush.bf16.msra.mxu0 %v2561
        %3395 = vmatpush.bf16.msra.mxu0 %v2553
        %3396 = vmatmul.bf16.gmra.mxu0 %v1490
        %v3397 = vpop.f32.mrf.mxu0
        %v3398 = vadd.f32 %v3349, %v3397
        %v3399 = vpop.f32.mrf.mxu0
        %v3400 = vadd.f32 %v3351, %v3399
        %3401 = vmatmul.bf16.gmra.mxu0 %v1495
        %v3402 = vpop.f32.mrf.mxu0
        %v3403 = vadd.f32 %v3354, %v3402
        %v3404 = vpop.f32.mrf.mxu0
        %v3405 = vadd.f32 %v3356, %v3404
        %3406 = vmatmul.bf16.gmra.mxu0 %v1500
        %v3407 = vpop.f32.mrf.mxu0
        %v3408 = vadd.f32 %v3359, %v3407
        %v3409 = vpop.f32.mrf.mxu0
        %v3410 = vadd.f32 %v3361, %v3409
        %3411 = vmatmul.bf16.gmra.mxu0 %v1505
        %v3412 = vpop.f32.mrf.mxu0
        %v3413 = vadd.f32 %v3364, %v3412
        %v3414 = vpop.f32.mrf.mxu0
        %v3415 = vadd.f32 %v3366, %v3414
        %3416 = vmatmul.bf16.gmra.mxu0 %v1510
        %v3417 = vpop.f32.mrf.mxu0
        %v3418 = vadd.f32 %v3369, %v3417
        %v3419 = vpop.f32.mrf.mxu0
        %v3420 = vadd.f32 %v3371, %v3419
        %3421 = vmatmul.bf16.gmra.mxu0 %v1515
        %v3422 = vpop.f32.mrf.mxu0
        %v3423 = vadd.f32 %v3374, %v3422
        %v3424 = vpop.f32.mrf.mxu0
        %v3425 = vadd.f32 %v3376, %v3424
        %3426 = vmatmul.bf16.gmra.mxu0 %v1520
        %v3427 = vpop.f32.mrf.mxu0
        %v3428 = vadd.f32 %v3379, %v3427
        %v3429 = vpop.f32.mrf.mxu0
        %v3430 = vadd.f32 %v3381, %v3429
        %3431 = vmatmul.bf16.gmra.mxu0 %v1525
        %v3432 = vpop.f32.mrf.mxu0
        %v3433 = vadd.f32 %v3384, %v3432
        %v3434 = vpop.f32.mrf.mxu0
        %v3435 = vadd.f32 %v3386, %v3434
        %3436 = vdwg.mxu0
        %3437 = vmatpush.bf16.msra.mxu0 %v2673
        %3438 = vmatpush.bf16.msra.mxu0 %v2665
        %3439 = vmatpush.bf16.msra.mxu0 %v2657
        %3440 = vmatpush.bf16.msra.mxu0 %v2649
        %3441 = vmatpush.bf16.msra.mxu0 %v2641
        %3442 = vmatpush.bf16.msra.mxu0 %v2633
        %3443 = vmatpush.bf16.msra.mxu0 %v2625
        %3444 = vmatpush.bf16.msra.mxu0 %v2617
        %3445 = vmatmul.bf16.gmra.mxu0 %v1491
        %v3446 = vpop.f32.mrf.mxu0
        %v3447 = vadd.f32 %v3398, %v3446
        %v3448 = vpop.f32.mrf.mxu0
        %v3449 = vadd.f32 %v3400, %v3448
        %3450 = vmatmul.bf16.gmra.mxu0 %v1496
        %v3451 = vpop.f32.mrf.mxu0
        %v3452 = vadd.f32 %v3403, %v3451
        %v3453 = vpop.f32.mrf.mxu0
        %v3454 = vadd.f32 %v3405, %v3453
        %3455 = vmatmul.bf16.gmra.mxu0 %v1501
        %v3456 = vpop.f32.mrf.mxu0
        %v3457 = vadd.f32 %v3408, %v3456
        %v3458 = vpop.f32.mrf.mxu0
        %v3459 = vadd.f32 %v3410, %v3458
        %3460 = vmatmul.bf16.gmra.mxu0 %v1506
        %v3461 = vpop.f32.mrf.mxu0
        %v3462 = vadd.f32 %v3413, %v3461
        %v3463 = vpop.f32.mrf.mxu0
        %v3464 = vadd.f32 %v3415, %v3463
        %3465 = vmatmul.bf16.gmra.mxu0 %v1511
        %v3466 = vpop.f32.mrf.mxu0
        %v3467 = vadd.f32 %v3418, %v3466
        %v3468 = vpop.f32.mrf.mxu0
        %v3469 = vadd.f32 %v3420, %v3468
        %3470 = vmatmul.bf16.gmra.mxu0 %v1516
        %v3471 = vpop.f32.mrf.mxu0
        %v3472 = vadd.f32 %v3423, %v3471
        %v3473 = vpop.f32.mrf.mxu0
        %v3474 = vadd.f32 %v3425, %v3473
        %3475 = vmatmul.bf16.gmra.mxu0 %v1521
        %v3476 = vpop.f32.mrf.mxu0
        %v3477 = vadd.f32 %v3428, %v3476
        %v3478 = vpop.f32.mrf.mxu0
        %v3479 = vadd.f32 %v3430, %v3478
        %3480 = vmatmul.bf16.gmra.mxu0 %v1526
        %v3481 = vpop.f32.mrf.mxu0
        %v3482 = vadd.f32 %v3433, %v3481
        %v3483 = vpop.f32.mrf.mxu0
        %v3484 = vadd.f32 %v3435, %v3483
        %3485 = vdwg.mxu0
        %3486 = vmatpush.bf16.msra.mxu0 0
        %3487 = vmatpush.bf16.msra.mxu0 0
        %3488 = vmatpush.bf16.msra.mxu0 0
        %3489 = vmatpush.bf16.msra.mxu0 0
        %3490 = vmatpush.bf16.msra.mxu0 %v3025
        %3491 = vmatpush.bf16.msra.mxu0 %v2697
        %3492 = vmatpush.bf16.msra.mxu0 %v2689
        %3493 = vmatpush.bf16.msra.mxu0 %v2681
        %3494 = vmatmul.bf16.gmra.mxu0 %v2994
        %v3495 = vpop.f32.mrf.mxu0
        %v3496 = vadd.f32 %v3447, %v3495
        %v3497 = vpop.f32.mrf.mxu0
        %v3498 = vadd.f32 %v3449, %v3497
        %3499 = vmatmul.bf16.gmra.mxu0 %v2997
        %v3500 = vpop.f32.mrf.mxu0
        %v3501 = vadd.f32 %v3452, %v3500
        %v3502 = vpop.f32.mrf.mxu0
        %v3503 = vadd.f32 %v3454, %v3502
        %3504 = vmatmul.bf16.gmra.mxu0 %v3000
        %v3505 = vpop.f32.mrf.mxu0
        %v3506 = vadd.f32 %v3457, %v3505
        %v3507 = vpop.f32.mrf.mxu0
        %v3508 = vadd.f32 %v3459, %v3507
        %3509 = vmatmul.bf16.gmra.mxu0 %v3003
        %v3510 = vpop.f32.mrf.mxu0
        %v3511 = vadd.f32 %v3462, %v3510
        %v3512 = vpop.f32.mrf.mxu0
        %v3513 = vadd.f32 %v3464, %v3512
        %3514 = vmatmul.bf16.gmra.mxu0 %v3006
        %v3515 = vpop.f32.mrf.mxu0
        %v3516 = vadd.f32 %v3467, %v3515
        %v3517 = vpop.f32.mrf.mxu0
        %v3518 = vadd.f32 %v3469, %v3517
        %3519 = vmatmul.bf16.gmra.mxu0 %v3009
        %v3520 = vpop.f32.mrf.mxu0
        %v3521 = vadd.f32 %v3472, %v3520
        %v3522 = vpop.f32.mrf.mxu0
        %v3523 = vadd.f32 %v3474, %v3522
        %3524 = vmatmul.bf16.gmra.mxu0 %v3012
        %v3525 = vpop.f32.mrf.mxu0
        %v3526 = vadd.f32 %v3477, %v3525
        %v3527 = vpop.f32.mrf.mxu0
        %v3528 = vadd.f32 %v3479, %v3527
        %3529 = vmatmul.bf16.gmra.mxu0 %v3015
        %v3530 = vpop.f32.mrf.mxu0
        %v3531 = vadd.f32 %v3482, %v3530
        %v3532 = vpop.f32.mrf.mxu0
        %v3533 = vadd.f32 %v3484, %v3532
        %3534 = vdwg.mxu0
        %3535 = vmatpush.bf16.msra.mxu0 %v2482
        %3536 = vmatpush.bf16.msra.mxu0 %v2474
        %3537 = vmatpush.bf16.msra.mxu0 %v2466
        %3538 = vmatpush.bf16.msra.mxu0 %v2458
        %3539 = vmatpush.bf16.msra.mxu0 %v2450
        %3540 = vmatpush.bf16.msra.mxu0 %v2442
        %3541 = vmatpush.bf16.msra.mxu0 %v2434
        %3542 = vmatpush.bf16.msra.mxu0 %v2426
        %3543 = vmatmul.bf16.gmra.mxu0 %v1488
        %v3544 = vpop.f32.mrf.mxu0
        %v3545 = vadd.f32 %v1283, %v3544
        %v3546 = vpop.f32.mrf.mxu0
        %v3547 = vadd.f32 %v1288, %v3546
        %3548 = vmatmul.bf16.gmra.mxu0 %v1493
        %v3549 = vpop.f32.mrf.mxu0
        %v3550 = vadd.f32 %v1293, %v3549
        %v3551 = vpop.f32.mrf.mxu0
        %v3552 = vadd.f32 %v1298, %v3551
        %3553 = vmatmul.bf16.gmra.mxu0 %v1498
        %v3554 = vpop.f32.mrf.mxu0
        %v3555 = vadd.f32 %v1303, %v3554
        %v3556 = vpop.f32.mrf.mxu0
        %v3557 = vadd.f32 %v1308, %v3556
        %3558 = vmatmul.bf16.gmra.mxu0 %v1503
        %v3559 = vpop.f32.mrf.mxu0
        %v3560 = vadd.f32 %v1313, %v3559
        %v3561 = vpop.f32.mrf.mxu0
        %v3562 = vadd.f32 %v1318, %v3561
        %3563 = vmatmul.bf16.gmra.mxu0 %v1508
        %v3564 = vpop.f32.mrf.mxu0
        %v3565 = vadd.f32 %v1323, %v3564
        %v3566 = vpop.f32.mrf.mxu0
        %v3567 = vadd.f32 %v1328, %v3566
        %3568 = vmatmul.bf16.gmra.mxu0 %v1513
        %v3569 = vpop.f32.mrf.mxu0
        %v3570 = vadd.f32 %v1333, %v3569
        %v3571 = vpop.f32.mrf.mxu0
        %v3572 = vadd.f32 %v1338, %v3571
        %3573 = vmatmul.bf16.gmra.mxu0 %v1518
        %v3574 = vpop.f32.mrf.mxu0
        %v3575 = vadd.f32 %v1343, %v3574
        %v3576 = vpop.f32.mrf.mxu0
        %v3577 = vadd.f32 %v1348, %v3576
        %3578 = vmatmul.bf16.gmra.mxu0 %v1523
        %v3579 = vpop.f32.mrf.mxu0
        %v3580 = vadd.f32 %v1353, %v3579
        %v3581 = vpop.f32.mrf.mxu0
        %v3582 = vadd.f32 %v1358, %v3581
        %3583 = vdwg.mxu0
        %3584 = vmatpush.bf16.msra.mxu0 %v2546
        %3585 = vmatpush.bf16.msra.mxu0 %v2538
        %3586 = vmatpush.bf16.msra.mxu0 %v2530
        %3587 = vmatpush.bf16.msra.mxu0 %v2522
        %3588 = vmatpush.bf16.msra.mxu0 %v2514
        %3589 = vmatpush.bf16.msra.mxu0 %v2506
        %3590 = vmatpush.bf16.msra.mxu0 %v2498
        %3591 = vmatpush.bf16.msra.mxu0 %v2490
        %3592 = vmatmul.bf16.gmra.mxu0 %v1489
        %v3593 = vpop.f32.mrf.mxu0
        %v3594 = vadd.f32 %v3545, %v3593
        %v3595 = vpop.f32.mrf.mxu0
        %v3596 = vadd.f32 %v3547, %v3595
        %3597 = vmatmul.bf16.gmra.mxu0 %v1494
        %v3598 = vpop.f32.mrf.mxu0
        %v3599 = vadd.f32 %v3550, %v3598
        %v3600 = vpop.f32.mrf.mxu0
        %v3601 = vadd.f32 %v3552, %v3600
        %3602 = vmatmul.bf16.gmra.mxu0 %v1499
        %v3603 = vpop.f32.mrf.mxu0
        %v3604 = vadd.f32 %v3555, %v3603
        %v3605 = vpop.f32.mrf.mxu0
        %v3606 = vadd.f32 %v3557, %v3605
        %3607 = vmatmul.bf16.gmra.mxu0 %v1504
        %v3608 = vpop.f32.mrf.mxu0
        %v3609 = vadd.f32 %v3560, %v3608
        %v3610 = vpop.f32.mrf.mxu0
        %v3611 = vadd.f32 %v3562, %v3610
        %3612 = vmatmul.bf16.gmra.mxu0 %v1509
        %v3613 = vpop.f32.mrf.mxu0
        %v3614 = vadd.f32 %v3565, %v3613
        %v3615 = vpop.f32.mrf.mxu0
        %v3616 = vadd.f32 %v3567, %v3615
        %3617 = vmatmul.bf16.gmra.mxu0 %v1514
        %v3618 = vpop.f32.mrf.mxu0
        %v3619 = vadd.f32 %v3570, %v3618
        %v3620 = vpop.f32.mrf.mxu0
        %v3621 = vadd.f32 %v3572, %v3620
        %3622 = vmatmul.bf16.gmra.mxu0 %v1519
        %v3623 = vpop.f32.mrf.mxu0
        %v3624 = vadd.f32 %v3575, %v3623
        %v3625 = vpop.f32.mrf.mxu0
        %v3626 = vadd.f32 %v3577, %v3625
        %3627 = vmatmul.bf16.gmra.mxu0 %v1524
        %v3628 = vpop.f32.mrf.mxu0
        %v3629 = vadd.f32 %v3580, %v3628
        %v3630 = vpop.f32.mrf.mxu0
        %v3631 = vadd.f32 %v3582, %v3630
        %3632 = vdwg.mxu0
        %3633 = vmatpush.bf16.msra.mxu0 %v2610
        %3634 = vmatpush.bf16.msra.mxu0 %v2602
        %3635 = vmatpush.bf16.msra.mxu0 %v2594
        %3636 = vmatpush.bf16.msra.mxu0 %v2586
        %3637 = vmatpush.bf16.msra.mxu0 %v2578
        %3638 = vmatpush.bf16.msra.mxu0 %v2570
        %3639 = vmatpush.bf16.msra.mxu0 %v2562
        %3640 = vmatpush.bf16.msra.mxu0 %v2554
        %3641 = vmatmul.bf16.gmra.mxu0 %v1490
        %v3642 = vpop.f32.mrf.mxu0
        %v3643 = vadd.f32 %v3594, %v3642
        %v3644 = vpop.f32.mrf.mxu0
        %v3645 = vadd.f32 %v3596, %v3644
        %3646 = vmatmul.bf16.gmra.mxu0 %v1495
        %v3647 = vpop.f32.mrf.mxu0
        %v3648 = vadd.f32 %v3599, %v3647
        %v3649 = vpop.f32.mrf.mxu0
        %v3650 = vadd.f32 %v3601, %v3649
        %3651 = vmatmul.bf16.gmra.mxu0 %v1500
        %v3652 = vpop.f32.mrf.mxu0
        %v3653 = vadd.f32 %v3604, %v3652
        %v3654 = vpop.f32.mrf.mxu0
        %v3655 = vadd.f32 %v3606, %v3654
        %3656 = vmatmul.bf16.gmra.mxu0 %v1505
        %v3657 = vpop.f32.mrf.mxu0
        %v3658 = vadd.f32 %v3609, %v3657
        %v3659 = vpop.f32.mrf.mxu0
        %v3660 = vadd.f32 %v3611, %v3659
        %3661 = vmatmul.bf16.gmra.mxu0 %v1510
        %v3662 = vpop.f32.mrf.mxu0
        %v3663 = vadd.f32 %v3614, %v3662
        %v3664 = vpop.f32.mrf.mxu0
        %v3665 = vadd.f32 %v3616, %v3664
        %3666 = vmatmul.bf16.gmra.mxu0 %v1515
        %v3667 = vpop.f32.mrf.mxu0
        %v3668 = vadd.f32 %v3619, %v3667
        %v3669 = vpop.f32.mrf.mxu0
        %v3670 = vadd.f32 %v3621, %v3669
        %3671 = vmatmul.bf16.gmra.mxu0 %v1520
        %v3672 = vpop.f32.mrf.mxu0
        %v3673 = vadd.f32 %v3624, %v3672
        %v3674 = vpop.f32.mrf.mxu0
        %v3675 = vadd.f32 %v3626, %v3674
        %3676 = vmatmul.bf16.gmra.mxu0 %v1525
        %v3677 = vpop.f32.mrf.mxu0
        %v3678 = vadd.f32 %v3629, %v3677
        %v3679 = vpop.f32.mrf.mxu0
        %v3680 = vadd.f32 %v3631, %v3679
        %3681 = vdwg.mxu0
        %3682 = vmatpush.bf16.msra.mxu0 %v2674
        %3683 = vmatpush.bf16.msra.mxu0 %v2666
        %3684 = vmatpush.bf16.msra.mxu0 %v2658
        %3685 = vmatpush.bf16.msra.mxu0 %v2650
        %3686 = vmatpush.bf16.msra.mxu0 %v2642
        %3687 = vmatpush.bf16.msra.mxu0 %v2634
        %3688 = vmatpush.bf16.msra.mxu0 %v2626
        %3689 = vmatpush.bf16.msra.mxu0 %v2618
        %3690 = vmatmul.bf16.gmra.mxu0 %v1491
        %v3691 = vpop.f32.mrf.mxu0
        %v3692 = vadd.f32 %v3643, %v3691
        %v3693 = vpop.f32.mrf.mxu0
        %v3694 = vadd.f32 %v3645, %v3693
        %3695 = vmatmul.bf16.gmra.mxu0 %v1496
        %v3696 = vpop.f32.mrf.mxu0
        %v3697 = vadd.f32 %v3648, %v3696
        %v3698 = vpop.f32.mrf.mxu0
        %v3699 = vadd.f32 %v3650, %v3698
        %3700 = vmatmul.bf16.gmra.mxu0 %v1501
        %v3701 = vpop.f32.mrf.mxu0
        %v3702 = vadd.f32 %v3653, %v3701
        %v3703 = vpop.f32.mrf.mxu0
        %v3704 = vadd.f32 %v3655, %v3703
        %3705 = vmatmul.bf16.gmra.mxu0 %v1506
        %v3706 = vpop.f32.mrf.mxu0
        %v3707 = vadd.f32 %v3658, %v3706
        %v3708 = vpop.f32.mrf.mxu0
        %v3709 = vadd.f32 %v3660, %v3708
        %3710 = vmatmul.bf16.gmra.mxu0 %v1511
        %v3711 = vpop.f32.mrf.mxu0
        %v3712 = vadd.f32 %v3663, %v3711
        %v3713 = vpop.f32.mrf.mxu0
        %v3714 = vadd.f32 %v3665, %v3713
        %3715 = vmatmul.bf16.gmra.mxu0 %v1516
        %v3716 = vpop.f32.mrf.mxu0
        %v3717 = vadd.f32 %v3668, %v3716
        %v3718 = vpop.f32.mrf.mxu0
        %v3719 = vadd.f32 %v3670, %v3718
        %3720 = vmatmul.bf16.gmra.mxu0 %v1521
        %v3721 = vpop.f32.mrf.mxu0
        %v3722 = vadd.f32 %v3673, %v3721
        %v3723 = vpop.f32.mrf.mxu0
        %v3724 = vadd.f32 %v3675, %v3723
        %3725 = vmatmul.bf16.gmra.mxu0 %v1526
        %v3726 = vpop.f32.mrf.mxu0
        %v3727 = vadd.f32 %v3678, %v3726
        %v3728 = vpop.f32.mrf.mxu0
        %v3729 = vadd.f32 %v3680, %v3728
        %3730 = vdwg.mxu0
        %3731 = vmatpush.bf16.msra.mxu0 0
        %3732 = vmatpush.bf16.msra.mxu0 0
        %3733 = vmatpush.bf16.msra.mxu0 0
        %3734 = vmatpush.bf16.msra.mxu0 0
        %3735 = vmatpush.bf16.msra.mxu0 %v3028
        %3736 = vmatpush.bf16.msra.mxu0 %v2698
        %3737 = vmatpush.bf16.msra.mxu0 %v2690
        %3738 = vmatpush.bf16.msra.mxu0 %v2682
        %3739 = vmatmul.bf16.gmra.mxu0 %v2994
        %v3740 = vpop.f32.mrf.mxu0
        %v3741 = vadd.f32 %v3692, %v3740
        %v3742 = vpop.f32.mrf.mxu0
        %v3743 = vadd.f32 %v3694, %v3742
        %3744 = vmatmul.bf16.gmra.mxu0 %v2997
        %v3745 = vpop.f32.mrf.mxu0
        %v3746 = vadd.f32 %v3697, %v3745
        %v3747 = vpop.f32.mrf.mxu0
        %v3748 = vadd.f32 %v3699, %v3747
        %3749 = vmatmul.bf16.gmra.mxu0 %v3000
        %v3750 = vpop.f32.mrf.mxu0
        %v3751 = vadd.f32 %v3702, %v3750
        %v3752 = vpop.f32.mrf.mxu0
        %v3753 = vadd.f32 %v3704, %v3752
        %3754 = vmatmul.bf16.gmra.mxu0 %v3003
        %v3755 = vpop.f32.mrf.mxu0
        %v3756 = vadd.f32 %v3707, %v3755
        %v3757 = vpop.f32.mrf.mxu0
        %v3758 = vadd.f32 %v3709, %v3757
        %3759 = vmatmul.bf16.gmra.mxu0 %v3006
        %v3760 = vpop.f32.mrf.mxu0
        %v3761 = vadd.f32 %v3712, %v3760
        %v3762 = vpop.f32.mrf.mxu0
        %v3763 = vadd.f32 %v3714, %v3762
        %3764 = vmatmul.bf16.gmra.mxu0 %v3009
        %v3765 = vpop.f32.mrf.mxu0
        %v3766 = vadd.f32 %v3717, %v3765
        %v3767 = vpop.f32.mrf.mxu0
        %v3768 = vadd.f32 %v3719, %v3767
        %3769 = vmatmul.bf16.gmra.mxu0 %v3012
        %v3770 = vpop.f32.mrf.mxu0
        %v3771 = vadd.f32 %v3722, %v3770
        %v3772 = vpop.f32.mrf.mxu0
        %v3773 = vadd.f32 %v3724, %v3772
        %3774 = vmatmul.bf16.gmra.mxu0 %v3015
        %v3775 = vpop.f32.mrf.mxu0
        %v3776 = vadd.f32 %v3727, %v3775
        %v3777 = vpop.f32.mrf.mxu0
        %v3778 = vadd.f32 %v3729, %v3777
        %3779 = vdwg.mxu0
        %3780 = vmatpush.bf16.msra.mxu0 %v2483
        %3781 = vmatpush.bf16.msra.mxu0 %v2475
        %3782 = vmatpush.bf16.msra.mxu0 %v2467
        %3783 = vmatpush.bf16.msra.mxu0 %v2459
        %3784 = vmatpush.bf16.msra.mxu0 %v2451
        %3785 = vmatpush.bf16.msra.mxu0 %v2443
        %3786 = vmatpush.bf16.msra.mxu0 %v2435
        %3787 = vmatpush.bf16.msra.mxu0 %v2427
        %3788 = vmatmul.bf16.gmra.mxu0 %v1488
        %v3789 = vpop.f32.mrf.mxu0
        %v3790 = vadd.f32 %v1283, %v3789
        %v3791 = vpop.f32.mrf.mxu0
        %v3792 = vadd.f32 %v1288, %v3791
        %3793 = vmatmul.bf16.gmra.mxu0 %v1493
        %v3794 = vpop.f32.mrf.mxu0
        %v3795 = vadd.f32 %v1293, %v3794
        %v3796 = vpop.f32.mrf.mxu0
        %v3797 = vadd.f32 %v1298, %v3796
        %3798 = vmatmul.bf16.gmra.mxu0 %v1498
        %v3799 = vpop.f32.mrf.mxu0
        %v3800 = vadd.f32 %v1303, %v3799
        %v3801 = vpop.f32.mrf.mxu0
        %v3802 = vadd.f32 %v1308, %v3801
        %3803 = vmatmul.bf16.gmra.mxu0 %v1503
        %v3804 = vpop.f32.mrf.mxu0
        %v3805 = vadd.f32 %v1313, %v3804
        %v3806 = vpop.f32.mrf.mxu0
        %v3807 = vadd.f32 %v1318, %v3806
        %3808 = vmatmul.bf16.gmra.mxu0 %v1508
        %v3809 = vpop.f32.mrf.mxu0
        %v3810 = vadd.f32 %v1323, %v3809
        %v3811 = vpop.f32.mrf.mxu0
        %v3812 = vadd.f32 %v1328, %v3811
        %3813 = vmatmul.bf16.gmra.mxu0 %v1513
        %v3814 = vpop.f32.mrf.mxu0
        %v3815 = vadd.f32 %v1333, %v3814
        %v3816 = vpop.f32.mrf.mxu0
        %v3817 = vadd.f32 %v1338, %v3816
        %3818 = vmatmul.bf16.gmra.mxu0 %v1518
        %v3819 = vpop.f32.mrf.mxu0
        %v3820 = vadd.f32 %v1343, %v3819
        %v3821 = vpop.f32.mrf.mxu0
        %v3822 = vadd.f32 %v1348, %v3821
        %3823 = vmatmul.bf16.gmra.mxu0 %v1523
        %v3824 = vpop.f32.mrf.mxu0
        %v3825 = vadd.f32 %v1353, %v3824
        %v3826 = vpop.f32.mrf.mxu0
        %v3827 = vadd.f32 %v1358, %v3826
        %3828 = vdwg.mxu0
        %3829 = vmatpush.bf16.msra.mxu0 %v2547
        %3830 = vmatpush.bf16.msra.mxu0 %v2539
        %3831 = vmatpush.bf16.msra.mxu0 %v2531
        %3832 = vmatpush.bf16.msra.mxu0 %v2523
        %3833 = vmatpush.bf16.msra.mxu0 %v2515
        %3834 = vmatpush.bf16.msra.mxu0 %v2507
        %3835 = vmatpush.bf16.msra.mxu0 %v2499
        %3836 = vmatpush.bf16.msra.mxu0 %v2491
        %3837 = vmatmul.bf16.gmra.mxu0 %v1489
        %v3838 = vpop.f32.mrf.mxu0
        %v3839 = vadd.f32 %v3790, %v3838
        %v3840 = vpop.f32.mrf.mxu0
        %v3841 = vadd.f32 %v3792, %v3840
        %3842 = vmatmul.bf16.gmra.mxu0 %v1494
        %v3843 = vpop.f32.mrf.mxu0
        %v3844 = vadd.f32 %v3795, %v3843
        %v3845 = vpop.f32.mrf.mxu0
        %v3846 = vadd.f32 %v3797, %v3845
        %3847 = vmatmul.bf16.gmra.mxu0 %v1499
        %v3848 = vpop.f32.mrf.mxu0
        %v3849 = vadd.f32 %v3800, %v3848
        %v3850 = vpop.f32.mrf.mxu0
        %v3851 = vadd.f32 %v3802, %v3850
        %3852 = vmatmul.bf16.gmra.mxu0 %v1504
        %v3853 = vpop.f32.mrf.mxu0
        %v3854 = vadd.f32 %v3805, %v3853
        %v3855 = vpop.f32.mrf.mxu0
        %v3856 = vadd.f32 %v3807, %v3855
        %3857 = vmatmul.bf16.gmra.mxu0 %v1509
        %v3858 = vpop.f32.mrf.mxu0
        %v3859 = vadd.f32 %v3810, %v3858
        %v3860 = vpop.f32.mrf.mxu0
        %v3861 = vadd.f32 %v3812, %v3860
        %3862 = vmatmul.bf16.gmra.mxu0 %v1514
        %v3863 = vpop.f32.mrf.mxu0
        %v3864 = vadd.f32 %v3815, %v3863
        %v3865 = vpop.f32.mrf.mxu0
        %v3866 = vadd.f32 %v3817, %v3865
        %3867 = vmatmul.bf16.gmra.mxu0 %v1519
        %v3868 = vpop.f32.mrf.mxu0
        %v3869 = vadd.f32 %v3820, %v3868
        %v3870 = vpop.f32.mrf.mxu0
        %v3871 = vadd.f32 %v3822, %v3870
        %3872 = vmatmul.bf16.gmra.mxu0 %v1524
        %v3873 = vpop.f32.mrf.mxu0
        %v3874 = vadd.f32 %v3825, %v3873
        %v3875 = vpop.f32.mrf.mxu0
        %v3876 = vadd.f32 %v3827, %v3875
        %3877 = vdwg.mxu0
        %3878 = vmatpush.bf16.msra.mxu0 %v2611
        %3879 = vmatpush.bf16.msra.mxu0 %v2603
        %3880 = vmatpush.bf16.msra.mxu0 %v2595
        %3881 = vmatpush.bf16.msra.mxu0 %v2587
        %3882 = vmatpush.bf16.msra.mxu0 %v2579
        %3883 = vmatpush.bf16.msra.mxu0 %v2571
        %3884 = vmatpush.bf16.msra.mxu0 %v2563
        %3885 = vmatpush.bf16.msra.mxu0 %v2555
        %3886 = vmatmul.bf16.gmra.mxu0 %v1490
        %v3887 = vpop.f32.mrf.mxu0
        %v3888 = vadd.f32 %v3839, %v3887
        %v3889 = vpop.f32.mrf.mxu0
        %v3890 = vadd.f32 %v3841, %v3889
        %3891 = vmatmul.bf16.gmra.mxu0 %v1495
        %v3892 = vpop.f32.mrf.mxu0
        %v3893 = vadd.f32 %v3844, %v3892
        %v3894 = vpop.f32.mrf.mxu0
        %v3895 = vadd.f32 %v3846, %v3894
        %3896 = vmatmul.bf16.gmra.mxu0 %v1500
        %v3897 = vpop.f32.mrf.mxu0
        %v3898 = vadd.f32 %v3849, %v3897
        %v3899 = vpop.f32.mrf.mxu0
        %v3900 = vadd.f32 %v3851, %v3899
        %3901 = vmatmul.bf16.gmra.mxu0 %v1505
        %v3902 = vpop.f32.mrf.mxu0
        %v3903 = vadd.f32 %v3854, %v3902
        %v3904 = vpop.f32.mrf.mxu0
        %v3905 = vadd.f32 %v3856, %v3904
        %3906 = vmatmul.bf16.gmra.mxu0 %v1510
        %v3907 = vpop.f32.mrf.mxu0
        %v3908 = vadd.f32 %v3859, %v3907
        %v3909 = vpop.f32.mrf.mxu0
        %v3910 = vadd.f32 %v3861, %v3909
        %3911 = vmatmul.bf16.gmra.mxu0 %v1515
        %v3912 = vpop.f32.mrf.mxu0
        %v3913 = vadd.f32 %v3864, %v3912
        %v3914 = vpop.f32.mrf.mxu0
        %v3915 = vadd.f32 %v3866, %v3914
        %3916 = vmatmul.bf16.gmra.mxu0 %v1520
        %v3917 = vpop.f32.mrf.mxu0
        %v3918 = vadd.f32 %v3869, %v3917
        %v3919 = vpop.f32.mrf.mxu0
        %v3920 = vadd.f32 %v3871, %v3919
        %3921 = vmatmul.bf16.gmra.mxu0 %v1525
        %v3922 = vpop.f32.mrf.mxu0
        %v3923 = vadd.f32 %v3874, %v3922
        %v3924 = vpop.f32.mrf.mxu0
        %v3925 = vadd.f32 %v3876, %v3924
        %3926 = vdwg.mxu0
        %3927 = vmatpush.bf16.msra.mxu0 %v2675
        %3928 = vmatpush.bf16.msra.mxu0 %v2667
        %3929 = vmatpush.bf16.msra.mxu0 %v2659
        %3930 = vmatpush.bf16.msra.mxu0 %v2651
        %3931 = vmatpush.bf16.msra.mxu0 %v2643
        %3932 = vmatpush.bf16.msra.mxu0 %v2635
        %3933 = vmatpush.bf16.msra.mxu0 %v2627
        %3934 = vmatpush.bf16.msra.mxu0 %v2619
        %3935 = vmatmul.bf16.gmra.mxu0 %v1491
        %v3936 = vpop.f32.mrf.mxu0
        %v3937 = vadd.f32 %v3888, %v3936
        %v3938 = vpop.f32.mrf.mxu0
        %v3939 = vadd.f32 %v3890, %v3938
        %3940 = vmatmul.bf16.gmra.mxu0 %v1496
        %v3941 = vpop.f32.mrf.mxu0
        %v3942 = vadd.f32 %v3893, %v3941
        %v3943 = vpop.f32.mrf.mxu0
        %v3944 = vadd.f32 %v3895, %v3943
        %3945 = vmatmul.bf16.gmra.mxu0 %v1501
        %v3946 = vpop.f32.mrf.mxu0
        %v3947 = vadd.f32 %v3898, %v3946
        %v3948 = vpop.f32.mrf.mxu0
        %v3949 = vadd.f32 %v3900, %v3948
        %3950 = vmatmul.bf16.gmra.mxu0 %v1506
        %v3951 = vpop.f32.mrf.mxu0
        %v3952 = vadd.f32 %v3903, %v3951
        %v3953 = vpop.f32.mrf.mxu0
        %v3954 = vadd.f32 %v3905, %v3953
        %3955 = vmatmul.bf16.gmra.mxu0 %v1511
        %v3956 = vpop.f32.mrf.mxu0
        %v3957 = vadd.f32 %v3908, %v3956
        %v3958 = vpop.f32.mrf.mxu0
        %v3959 = vadd.f32 %v3910, %v3958
        %3960 = vmatmul.bf16.gmra.mxu0 %v1516
        %v3961 = vpop.f32.mrf.mxu0
        %v3962 = vadd.f32 %v3913, %v3961
        %v3963 = vpop.f32.mrf.mxu0
        %v3964 = vadd.f32 %v3915, %v3963
        %3965 = vmatmul.bf16.gmra.mxu0 %v1521
        %v3966 = vpop.f32.mrf.mxu0
        %v3967 = vadd.f32 %v3918, %v3966
        %v3968 = vpop.f32.mrf.mxu0
        %v3969 = vadd.f32 %v3920, %v3968
        %3970 = vmatmul.bf16.gmra.mxu0 %v1526
        %v3971 = vpop.f32.mrf.mxu0
        %v3972 = vadd.f32 %v3923, %v3971
        %v3973 = vpop.f32.mrf.mxu0
        %v3974 = vadd.f32 %v3925, %v3973
        %3975 = vdwg.mxu0
        %3976 = vmatpush.bf16.msra.mxu0 0
        %3977 = vmatpush.bf16.msra.mxu0 0
        %3978 = vmatpush.bf16.msra.mxu0 0
        %3979 = vmatpush.bf16.msra.mxu0 0
        %3980 = vmatpush.bf16.msra.mxu0 %v3031
        %3981 = vmatpush.bf16.msra.mxu0 %v2699
        %3982 = vmatpush.bf16.msra.mxu0 %v2691
        %3983 = vmatpush.bf16.msra.mxu0 %v2683
        %3984 = vmatmul.bf16.gmra.mxu0 %v2994
        %v3985 = vpop.f32.mrf.mxu0
        %v3986 = vadd.f32 %v3937, %v3985
        %v3987 = vpop.f32.mrf.mxu0
        %v3988 = vadd.f32 %v3939, %v3987
        %3989 = vmatmul.bf16.gmra.mxu0 %v2997
        %v3990 = vpop.f32.mrf.mxu0
        %v3991 = vadd.f32 %v3942, %v3990
        %v3992 = vpop.f32.mrf.mxu0
        %v3993 = vadd.f32 %v3944, %v3992
        %3994 = vmatmul.bf16.gmra.mxu0 %v3000
        %v3995 = vpop.f32.mrf.mxu0
        %v3996 = vadd.f32 %v3947, %v3995
        %v3997 = vpop.f32.mrf.mxu0
        %v3998 = vadd.f32 %v3949, %v3997
        %3999 = vmatmul.bf16.gmra.mxu0 %v3003
        %v4000 = vpop.f32.mrf.mxu0
        %v4001 = vadd.f32 %v3952, %v4000
        %v4002 = vpop.f32.mrf.mxu0
        %v4003 = vadd.f32 %v3954, %v4002
        %4004 = vmatmul.bf16.gmra.mxu0 %v3006
        %v4005 = vpop.f32.mrf.mxu0
        %v4006 = vadd.f32 %v3957, %v4005
        %v4007 = vpop.f32.mrf.mxu0
        %v4008 = vadd.f32 %v3959, %v4007
        %4009 = vmatmul.bf16.gmra.mxu0 %v3009
        %v4010 = vpop.f32.mrf.mxu0
        %v4011 = vadd.f32 %v3962, %v4010
        %v4012 = vpop.f32.mrf.mxu0
        %v4013 = vadd.f32 %v3964, %v4012
        %4014 = vmatmul.bf16.gmra.mxu0 %v3012
        %v4015 = vpop.f32.mrf.mxu0
        %v4016 = vadd.f32 %v3967, %v4015
        %v4017 = vpop.f32.mrf.mxu0
        %v4018 = vadd.f32 %v3969, %v4017
        %4019 = vmatmul.bf16.gmra.mxu0 %v3015
        %v4020 = vpop.f32.mrf.mxu0
        %v4021 = vadd.f32 %v3972, %v4020
        %v4022 = vpop.f32.mrf.mxu0
        %v4023 = vadd.f32 %v3974, %v4022
        %4024 = vdwg.mxu0
        %4025 = vmatpush.bf16.msra.mxu0 %v2484
        %4026 = vmatpush.bf16.msra.mxu0 %v2476
        %4027 = vmatpush.bf16.msra.mxu0 %v2468
        %4028 = vmatpush.bf16.msra.mxu0 %v2460
        %4029 = vmatpush.bf16.msra.mxu0 %v2452
        %4030 = vmatpush.bf16.msra.mxu0 %v2444
        %4031 = vmatpush.bf16.msra.mxu0 %v2436
        %4032 = vmatpush.bf16.msra.mxu0 %v2428
        %4033 = vmatmul.bf16.gmra.mxu0 %v1488
        %v4034 = vpop.f32.mrf.mxu0
        %v4035 = vadd.f32 %v1283, %v4034
        %v4036 = vpop.f32.mrf.mxu0
        %v4037 = vadd.f32 %v1288, %v4036
        %4038 = vmatmul.bf16.gmra.mxu0 %v1493
        %v4039 = vpop.f32.mrf.mxu0
        %v4040 = vadd.f32 %v1293, %v4039
        %v4041 = vpop.f32.mrf.mxu0
        %v4042 = vadd.f32 %v1298, %v4041
        %4043 = vmatmul.bf16.gmra.mxu0 %v1498
        %v4044 = vpop.f32.mrf.mxu0
        %v4045 = vadd.f32 %v1303, %v4044
        %v4046 = vpop.f32.mrf.mxu0
        %v4047 = vadd.f32 %v1308, %v4046
        %4048 = vmatmul.bf16.gmra.mxu0 %v1503
        %v4049 = vpop.f32.mrf.mxu0
        %v4050 = vadd.f32 %v1313, %v4049
        %v4051 = vpop.f32.mrf.mxu0
        %v4052 = vadd.f32 %v1318, %v4051
        %4053 = vmatmul.bf16.gmra.mxu0 %v1508
        %v4054 = vpop.f32.mrf.mxu0
        %v4055 = vadd.f32 %v1323, %v4054
        %v4056 = vpop.f32.mrf.mxu0
        %v4057 = vadd.f32 %v1328, %v4056
        %4058 = vmatmul.bf16.gmra.mxu0 %v1513
        %v4059 = vpop.f32.mrf.mxu0
        %v4060 = vadd.f32 %v1333, %v4059
        %v4061 = vpop.f32.mrf.mxu0
        %v4062 = vadd.f32 %v1338, %v4061
        %4063 = vmatmul.bf16.gmra.mxu0 %v1518
        %v4064 = vpop.f32.mrf.mxu0
        %v4065 = vadd.f32 %v1343, %v4064
        %v4066 = vpop.f32.mrf.mxu0
        %v4067 = vadd.f32 %v1348, %v4066
        %4068 = vmatmul.bf16.gmra.mxu0 %v1523
        %v4069 = vpop.f32.mrf.mxu0
        %v4070 = vadd.f32 %v1353, %v4069
        %v4071 = vpop.f32.mrf.mxu0
        %v4072 = vadd.f32 %v1358, %v4071
        %4073 = vdwg.mxu0
        %4074 = vmatpush.bf16.msra.mxu0 %v2548
        %4075 = vmatpush.bf16.msra.mxu0 %v2540
        %4076 = vmatpush.bf16.msra.mxu0 %v2532
        %4077 = vmatpush.bf16.msra.mxu0 %v2524
        %4078 = vmatpush.bf16.msra.mxu0 %v2516
        %4079 = vmatpush.bf16.msra.mxu0 %v2508
        %4080 = vmatpush.bf16.msra.mxu0 %v2500
        %4081 = vmatpush.bf16.msra.mxu0 %v2492
        %4082 = vmatmul.bf16.gmra.mxu0 %v1489
        %v4083 = vpop.f32.mrf.mxu0
        %v4084 = vadd.f32 %v4035, %v4083
        %v4085 = vpop.f32.mrf.mxu0
        %v4086 = vadd.f32 %v4037, %v4085
        %4087 = vmatmul.bf16.gmra.mxu0 %v1494
        %v4088 = vpop.f32.mrf.mxu0
        %v4089 = vadd.f32 %v4040, %v4088
        %v4090 = vpop.f32.mrf.mxu0
        %v4091 = vadd.f32 %v4042, %v4090
        %4092 = vmatmul.bf16.gmra.mxu0 %v1499
        %v4093 = vpop.f32.mrf.mxu0
        %v4094 = vadd.f32 %v4045, %v4093
        %v4095 = vpop.f32.mrf.mxu0
        %v4096 = vadd.f32 %v4047, %v4095
        %4097 = vmatmul.bf16.gmra.mxu0 %v1504
        %v4098 = vpop.f32.mrf.mxu0
        %v4099 = vadd.f32 %v4050, %v4098
        %v4100 = vpop.f32.mrf.mxu0
        %v4101 = vadd.f32 %v4052, %v4100
        %4102 = vmatmul.bf16.gmra.mxu0 %v1509
        %v4103 = vpop.f32.mrf.mxu0
        %v4104 = vadd.f32 %v4055, %v4103
        %v4105 = vpop.f32.mrf.mxu0
        %v4106 = vadd.f32 %v4057, %v4105
        %4107 = vmatmul.bf16.gmra.mxu0 %v1514
        %v4108 = vpop.f32.mrf.mxu0
        %v4109 = vadd.f32 %v4060, %v4108
        %v4110 = vpop.f32.mrf.mxu0
        %v4111 = vadd.f32 %v4062, %v4110
        %4112 = vmatmul.bf16.gmra.mxu0 %v1519
        %v4113 = vpop.f32.mrf.mxu0
        %v4114 = vadd.f32 %v4065, %v4113
        %v4115 = vpop.f32.mrf.mxu0
        %v4116 = vadd.f32 %v4067, %v4115
        %4117 = vmatmul.bf16.gmra.mxu0 %v1524
        %v4118 = vpop.f32.mrf.mxu0
        %v4119 = vadd.f32 %v4070, %v4118
        %v4120 = vpop.f32.mrf.mxu0
        %v4121 = vadd.f32 %v4072, %v4120
        %4122 = vdwg.mxu0
        %4123 = vmatpush.bf16.msra.mxu0 %v2612
        %4124 = vmatpush.bf16.msra.mxu0 %v2604
        %4125 = vmatpush.bf16.msra.mxu0 %v2596
        %4126 = vmatpush.bf16.msra.mxu0 %v2588
        %4127 = vmatpush.bf16.msra.mxu0 %v2580
        %4128 = vmatpush.bf16.msra.mxu0 %v2572
        %4129 = vmatpush.bf16.msra.mxu0 %v2564
        %4130 = vmatpush.bf16.msra.mxu0 %v2556
        %4131 = vmatmul.bf16.gmra.mxu0 %v1490
        %v4132 = vpop.f32.mrf.mxu0
        %v4133 = vadd.f32 %v4084, %v4132
        %v4134 = vpop.f32.mrf.mxu0
        %v4135 = vadd.f32 %v4086, %v4134
        %4136 = vmatmul.bf16.gmra.mxu0 %v1495
        %v4137 = vpop.f32.mrf.mxu0
        %v4138 = vadd.f32 %v4089, %v4137
        %v4139 = vpop.f32.mrf.mxu0
        %v4140 = vadd.f32 %v4091, %v4139
        %4141 = vmatmul.bf16.gmra.mxu0 %v1500
        %v4142 = vpop.f32.mrf.mxu0
        %v4143 = vadd.f32 %v4094, %v4142
        %v4144 = vpop.f32.mrf.mxu0
        %v4145 = vadd.f32 %v4096, %v4144
        %4146 = vmatmul.bf16.gmra.mxu0 %v1505
        %v4147 = vpop.f32.mrf.mxu0
        %v4148 = vadd.f32 %v4099, %v4147
        %v4149 = vpop.f32.mrf.mxu0
        %v4150 = vadd.f32 %v4101, %v4149
        %4151 = vmatmul.bf16.gmra.mxu0 %v1510
        %v4152 = vpop.f32.mrf.mxu0
        %v4153 = vadd.f32 %v4104, %v4152
        %v4154 = vpop.f32.mrf.mxu0
        %v4155 = vadd.f32 %v4106, %v4154
        %4156 = vmatmul.bf16.gmra.mxu0 %v1515
        %v4157 = vpop.f32.mrf.mxu0
        %v4158 = vadd.f32 %v4109, %v4157
        %v4159 = vpop.f32.mrf.mxu0
        %v4160 = vadd.f32 %v4111, %v4159
        %4161 = vmatmul.bf16.gmra.mxu0 %v1520
        %v4162 = vpop.f32.mrf.mxu0
        %v4163 = vadd.f32 %v4114, %v4162
        %v4164 = vpop.f32.mrf.mxu0
        %v4165 = vadd.f32 %v4116, %v4164
        %4166 = vmatmul.bf16.gmra.mxu0 %v1525
        %v4167 = vpop.f32.mrf.mxu0
        %v4168 = vadd.f32 %v4119, %v4167
        %v4169 = vpop.f32.mrf.mxu0
        %v4170 = vadd.f32 %v4121, %v4169
        %4171 = vdwg.mxu0
        %4172 = vmatpush.bf16.msra.mxu0 %v2676
        %4173 = vmatpush.bf16.msra.mxu0 %v2668
        %4174 = vmatpush.bf16.msra.mxu0 %v2660
        %4175 = vmatpush.bf16.msra.mxu0 %v2652
        %4176 = vmatpush.bf16.msra.mxu0 %v2644
        %4177 = vmatpush.bf16.msra.mxu0 %v2636
        %4178 = vmatpush.bf16.msra.mxu0 %v2628
        %4179 = vmatpush.bf16.msra.mxu0 %v2620
        %4180 = vmatmul.bf16.gmra.mxu0 %v1491
        %v4181 = vpop.f32.mrf.mxu0
        %v4182 = vadd.f32 %v4133, %v4181
        %v4183 = vpop.f32.mrf.mxu0
        %v4184 = vadd.f32 %v4135, %v4183
        %4185 = vmatmul.bf16.gmra.mxu0 %v1496
        %v4186 = vpop.f32.mrf.mxu0
        %v4187 = vadd.f32 %v4138, %v4186
        %v4188 = vpop.f32.mrf.mxu0
        %v4189 = vadd.f32 %v4140, %v4188
        %4190 = vmatmul.bf16.gmra.mxu0 %v1501
        %v4191 = vpop.f32.mrf.mxu0
        %v4192 = vadd.f32 %v4143, %v4191
        %v4193 = vpop.f32.mrf.mxu0
        %v4194 = vadd.f32 %v4145, %v4193
        %4195 = vmatmul.bf16.gmra.mxu0 %v1506
        %v4196 = vpop.f32.mrf.mxu0
        %v4197 = vadd.f32 %v4148, %v4196
        %v4198 = vpop.f32.mrf.mxu0
        %v4199 = vadd.f32 %v4150, %v4198
        %4200 = vmatmul.bf16.gmra.mxu0 %v1511
        %v4201 = vpop.f32.mrf.mxu0
        %v4202 = vadd.f32 %v4153, %v4201
        %v4203 = vpop.f32.mrf.mxu0
        %v4204 = vadd.f32 %v4155, %v4203
        %4205 = vmatmul.bf16.gmra.mxu0 %v1516
        %v4206 = vpop.f32.mrf.mxu0
        %v4207 = vadd.f32 %v4158, %v4206
        %v4208 = vpop.f32.mrf.mxu0
        %v4209 = vadd.f32 %v4160, %v4208
        %4210 = vmatmul.bf16.gmra.mxu0 %v1521
        %v4211 = vpop.f32.mrf.mxu0
        %v4212 = vadd.f32 %v4163, %v4211
        %v4213 = vpop.f32.mrf.mxu0
        %v4214 = vadd.f32 %v4165, %v4213
        %4215 = vmatmul.bf16.gmra.mxu0 %v1526
        %v4216 = vpop.f32.mrf.mxu0
        %v4217 = vadd.f32 %v4168, %v4216
        %v4218 = vpop.f32.mrf.mxu0
        %v4219 = vadd.f32 %v4170, %v4218
        %4220 = vdwg.mxu0
        %4221 = vmatpush.bf16.msra.mxu0 0
        %4222 = vmatpush.bf16.msra.mxu0 0
        %4223 = vmatpush.bf16.msra.mxu0 0
        %4224 = vmatpush.bf16.msra.mxu0 0
        %4225 = vmatpush.bf16.msra.mxu0 %v3034
        %4226 = vmatpush.bf16.msra.mxu0 %v2700
        %4227 = vmatpush.bf16.msra.mxu0 %v2692
        %4228 = vmatpush.bf16.msra.mxu0 %v2684
        %4229 = vmatmul.bf16.gmra.mxu0 %v2994
        %v4230 = vpop.f32.mrf.mxu0
        %v4231 = vadd.f32 %v4182, %v4230
        %v4232 = vpop.f32.mrf.mxu0
        %v4233 = vadd.f32 %v4184, %v4232
        %4234 = vmatmul.bf16.gmra.mxu0 %v2997
        %v4235 = vpop.f32.mrf.mxu0
        %v4236 = vadd.f32 %v4187, %v4235
        %v4237 = vpop.f32.mrf.mxu0
        %v4238 = vadd.f32 %v4189, %v4237
        %4239 = vmatmul.bf16.gmra.mxu0 %v3000
        %v4240 = vpop.f32.mrf.mxu0
        %v4241 = vadd.f32 %v4192, %v4240
        %v4242 = vpop.f32.mrf.mxu0
        %v4243 = vadd.f32 %v4194, %v4242
        %4244 = vmatmul.bf16.gmra.mxu0 %v3003
        %v4245 = vpop.f32.mrf.mxu0
        %v4246 = vadd.f32 %v4197, %v4245
        %v4247 = vpop.f32.mrf.mxu0
        %v4248 = vadd.f32 %v4199, %v4247
        %4249 = vmatmul.bf16.gmra.mxu0 %v3006
        %v4250 = vpop.f32.mrf.mxu0
        %v4251 = vadd.f32 %v4202, %v4250
        %v4252 = vpop.f32.mrf.mxu0
        %v4253 = vadd.f32 %v4204, %v4252
        %4254 = vmatmul.bf16.gmra.mxu0 %v3009
        %v4255 = vpop.f32.mrf.mxu0
        %v4256 = vadd.f32 %v4207, %v4255
        %v4257 = vpop.f32.mrf.mxu0
        %v4258 = vadd.f32 %v4209, %v4257
        %4259 = vmatmul.bf16.gmra.mxu0 %v3012
        %v4260 = vpop.f32.mrf.mxu0
        %v4261 = vadd.f32 %v4212, %v4260
        %v4262 = vpop.f32.mrf.mxu0
        %v4263 = vadd.f32 %v4214, %v4262
        %4264 = vmatmul.bf16.gmra.mxu0 %v3015
        %v4265 = vpop.f32.mrf.mxu0
        %v4266 = vadd.f32 %v4217, %v4265
        %v4267 = vpop.f32.mrf.mxu0
        %v4268 = vadd.f32 %v4219, %v4267
        %4269 = vdwg.mxu0
        %4270 = vmatpush.bf16.msra.mxu0 %v2485
        %4271 = vmatpush.bf16.msra.mxu0 %v2477
        %4272 = vmatpush.bf16.msra.mxu0 %v2469
        %4273 = vmatpush.bf16.msra.mxu0 %v2461
        %4274 = vmatpush.bf16.msra.mxu0 %v2453
        %4275 = vmatpush.bf16.msra.mxu0 %v2445
        %4276 = vmatpush.bf16.msra.mxu0 %v2437
        %4277 = vmatpush.bf16.msra.mxu0 %v2429
        %4278 = vmatmul.bf16.gmra.mxu0 %v1488
        %v4279 = vpop.f32.mrf.mxu0
        %v4280 = vadd.f32 %v1283, %v4279
        %v4281 = vpop.f32.mrf.mxu0
        %v4282 = vadd.f32 %v1288, %v4281
        %4283 = vmatmul.bf16.gmra.mxu0 %v1493
        %v4284 = vpop.f32.mrf.mxu0
        %v4285 = vadd.f32 %v1293, %v4284
        %v4286 = vpop.f32.mrf.mxu0
        %v4287 = vadd.f32 %v1298, %v4286
        %4288 = vmatmul.bf16.gmra.mxu0 %v1498
        %v4289 = vpop.f32.mrf.mxu0
        %v4290 = vadd.f32 %v1303, %v4289
        %v4291 = vpop.f32.mrf.mxu0
        %v4292 = vadd.f32 %v1308, %v4291
        %4293 = vmatmul.bf16.gmra.mxu0 %v1503
        %v4294 = vpop.f32.mrf.mxu0
        %v4295 = vadd.f32 %v1313, %v4294
        %v4296 = vpop.f32.mrf.mxu0
        %v4297 = vadd.f32 %v1318, %v4296
        %4298 = vmatmul.bf16.gmra.mxu0 %v1508
        %v4299 = vpop.f32.mrf.mxu0
        %v4300 = vadd.f32 %v1323, %v4299
        %v4301 = vpop.f32.mrf.mxu0
        %v4302 = vadd.f32 %v1328, %v4301
        %4303 = vmatmul.bf16.gmra.mxu0 %v1513
        %v4304 = vpop.f32.mrf.mxu0
        %v4305 = vadd.f32 %v1333, %v4304
        %v4306 = vpop.f32.mrf.mxu0
        %v4307 = vadd.f32 %v1338, %v4306
        %4308 = vmatmul.bf16.gmra.mxu0 %v1518
        %v4309 = vpop.f32.mrf.mxu0
        %v4310 = vadd.f32 %v1343, %v4309
        %v4311 = vpop.f32.mrf.mxu0
        %v4312 = vadd.f32 %v1348, %v4311
        %4313 = vmatmul.bf16.gmra.mxu0 %v1523
        %v4314 = vpop.f32.mrf.mxu0
        %v4315 = vadd.f32 %v1353, %v4314
        %v4316 = vpop.f32.mrf.mxu0
        %v4317 = vadd.f32 %v1358, %v4316
        %4318 = vdwg.mxu0
        %4319 = vmatpush.bf16.msra.mxu0 %v2549
        %4320 = vmatpush.bf16.msra.mxu0 %v2541
        %4321 = vmatpush.bf16.msra.mxu0 %v2533
        %4322 = vmatpush.bf16.msra.mxu0 %v2525
        %4323 = vmatpush.bf16.msra.mxu0 %v2517
        %4324 = vmatpush.bf16.msra.mxu0 %v2509
        %4325 = vmatpush.bf16.msra.mxu0 %v2501
        %4326 = vmatpush.bf16.msra.mxu0 %v2493
        %4327 = vmatmul.bf16.gmra.mxu0 %v1489
        %v4328 = vpop.f32.mrf.mxu0
        %v4329 = vadd.f32 %v4280, %v4328
        %v4330 = vpop.f32.mrf.mxu0
        %v4331 = vadd.f32 %v4282, %v4330
        %4332 = vmatmul.bf16.gmra.mxu0 %v1494
        %v4333 = vpop.f32.mrf.mxu0
        %v4334 = vadd.f32 %v4285, %v4333
        %v4335 = vpop.f32.mrf.mxu0
        %v4336 = vadd.f32 %v4287, %v4335
        %4337 = vmatmul.bf16.gmra.mxu0 %v1499
        %v4338 = vpop.f32.mrf.mxu0
        %v4339 = vadd.f32 %v4290, %v4338
        %v4340 = vpop.f32.mrf.mxu0
        %v4341 = vadd.f32 %v4292, %v4340
        %4342 = vmatmul.bf16.gmra.mxu0 %v1504
        %v4343 = vpop.f32.mrf.mxu0
        %v4344 = vadd.f32 %v4295, %v4343
        %v4345 = vpop.f32.mrf.mxu0
        %v4346 = vadd.f32 %v4297, %v4345
        %4347 = vmatmul.bf16.gmra.mxu0 %v1509
        %v4348 = vpop.f32.mrf.mxu0
        %v4349 = vadd.f32 %v4300, %v4348
        %v4350 = vpop.f32.mrf.mxu0
        %v4351 = vadd.f32 %v4302, %v4350
        %4352 = vmatmul.bf16.gmra.mxu0 %v1514
        %v4353 = vpop.f32.mrf.mxu0
        %v4354 = vadd.f32 %v4305, %v4353
        %v4355 = vpop.f32.mrf.mxu0
        %v4356 = vadd.f32 %v4307, %v4355
        %4357 = vmatmul.bf16.gmra.mxu0 %v1519
        %v4358 = vpop.f32.mrf.mxu0
        %v4359 = vadd.f32 %v4310, %v4358
        %v4360 = vpop.f32.mrf.mxu0
        %v4361 = vadd.f32 %v4312, %v4360
        %4362 = vmatmul.bf16.gmra.mxu0 %v1524
        %v4363 = vpop.f32.mrf.mxu0
        %v4364 = vadd.f32 %v4315, %v4363
        %v4365 = vpop.f32.mrf.mxu0
        %v4366 = vadd.f32 %v4317, %v4365
        %4367 = vdwg.mxu0
        %4368 = vmatpush.bf16.msra.mxu0 %v2613
        %4369 = vmatpush.bf16.msra.mxu0 %v2605
        %4370 = vmatpush.bf16.msra.mxu0 %v2597
        %4371 = vmatpush.bf16.msra.mxu0 %v2589
        %4372 = vmatpush.bf16.msra.mxu0 %v2581
        %4373 = vmatpush.bf16.msra.mxu0 %v2573
        %4374 = vmatpush.bf16.msra.mxu0 %v2565
        %4375 = vmatpush.bf16.msra.mxu0 %v2557
        %4376 = vmatmul.bf16.gmra.mxu0 %v1490
        %v4377 = vpop.f32.mrf.mxu0
        %v4378 = vadd.f32 %v4329, %v4377
        %v4379 = vpop.f32.mrf.mxu0
        %v4380 = vadd.f32 %v4331, %v4379
        %4381 = vmatmul.bf16.gmra.mxu0 %v1495
        %v4382 = vpop.f32.mrf.mxu0
        %v4383 = vadd.f32 %v4334, %v4382
        %v4384 = vpop.f32.mrf.mxu0
        %v4385 = vadd.f32 %v4336, %v4384
        %4386 = vmatmul.bf16.gmra.mxu0 %v1500
        %v4387 = vpop.f32.mrf.mxu0
        %v4388 = vadd.f32 %v4339, %v4387
        %v4389 = vpop.f32.mrf.mxu0
        %v4390 = vadd.f32 %v4341, %v4389
        %4391 = vmatmul.bf16.gmra.mxu0 %v1505
        %v4392 = vpop.f32.mrf.mxu0
        %v4393 = vadd.f32 %v4344, %v4392
        %v4394 = vpop.f32.mrf.mxu0
        %v4395 = vadd.f32 %v4346, %v4394
        %4396 = vmatmul.bf16.gmra.mxu0 %v1510
        %v4397 = vpop.f32.mrf.mxu0
        %v4398 = vadd.f32 %v4349, %v4397
        %v4399 = vpop.f32.mrf.mxu0
        %v4400 = vadd.f32 %v4351, %v4399
        %4401 = vmatmul.bf16.gmra.mxu0 %v1515
        %v4402 = vpop.f32.mrf.mxu0
        %v4403 = vadd.f32 %v4354, %v4402
        %v4404 = vpop.f32.mrf.mxu0
        %v4405 = vadd.f32 %v4356, %v4404
        %4406 = vmatmul.bf16.gmra.mxu0 %v1520
        %v4407 = vpop.f32.mrf.mxu0
        %v4408 = vadd.f32 %v4359, %v4407
        %v4409 = vpop.f32.mrf.mxu0
        %v4410 = vadd.f32 %v4361, %v4409
        %4411 = vmatmul.bf16.gmra.mxu0 %v1525
        %v4412 = vpop.f32.mrf.mxu0
        %v4413 = vadd.f32 %v4364, %v4412
        %v4414 = vpop.f32.mrf.mxu0
        %v4415 = vadd.f32 %v4366, %v4414
        %4416 = vdwg.mxu0
        %4417 = vmatpush.bf16.msra.mxu0 %v2677
        %4418 = vmatpush.bf16.msra.mxu0 %v2669
        %4419 = vmatpush.bf16.msra.mxu0 %v2661
        %4420 = vmatpush.bf16.msra.mxu0 %v2653
        %4421 = vmatpush.bf16.msra.mxu0 %v2645
        %4422 = vmatpush.bf16.msra.mxu0 %v2637
        %4423 = vmatpush.bf16.msra.mxu0 %v2629
        %4424 = vmatpush.bf16.msra.mxu0 %v2621
        %4425 = vmatmul.bf16.gmra.mxu0 %v1491
        %v4426 = vpop.f32.mrf.mxu0
        %v4427 = vadd.f32 %v4378, %v4426
        %v4428 = vpop.f32.mrf.mxu0
        %v4429 = vadd.f32 %v4380, %v4428
        %4430 = vmatmul.bf16.gmra.mxu0 %v1496
        %v4431 = vpop.f32.mrf.mxu0
        %v4432 = vadd.f32 %v4383, %v4431
        %v4433 = vpop.f32.mrf.mxu0
        %v4434 = vadd.f32 %v4385, %v4433
        %4435 = vmatmul.bf16.gmra.mxu0 %v1501
        %v4436 = vpop.f32.mrf.mxu0
        %v4437 = vadd.f32 %v4388, %v4436
        %v4438 = vpop.f32.mrf.mxu0
        %v4439 = vadd.f32 %v4390, %v4438
        %4440 = vmatmul.bf16.gmra.mxu0 %v1506
        %v4441 = vpop.f32.mrf.mxu0
        %v4442 = vadd.f32 %v4393, %v4441
        %v4443 = vpop.f32.mrf.mxu0
        %v4444 = vadd.f32 %v4395, %v4443
        %4445 = vmatmul.bf16.gmra.mxu0 %v1511
        %v4446 = vpop.f32.mrf.mxu0
        %v4447 = vadd.f32 %v4398, %v4446
        %v4448 = vpop.f32.mrf.mxu0
        %v4449 = vadd.f32 %v4400, %v4448
        %4450 = vmatmul.bf16.gmra.mxu0 %v1516
        %v4451 = vpop.f32.mrf.mxu0
        %v4452 = vadd.f32 %v4403, %v4451
        %v4453 = vpop.f32.mrf.mxu0
        %v4454 = vadd.f32 %v4405, %v4453
        %4455 = vmatmul.bf16.gmra.mxu0 %v1521
        %v4456 = vpop.f32.mrf.mxu0
        %v4457 = vadd.f32 %v4408, %v4456
        %v4458 = vpop.f32.mrf.mxu0
        %v4459 = vadd.f32 %v4410, %v4458
        %4460 = vmatmul.bf16.gmra.mxu0 %v1526
        %v4461 = vpop.f32.mrf.mxu0
        %v4462 = vadd.f32 %v4413, %v4461
        %v4463 = vpop.f32.mrf.mxu0
        %v4464 = vadd.f32 %v4415, %v4463
        %4465 = vdwg.mxu0
        %4466 = vmatpush.bf16.msra.mxu0 0
        %4467 = vmatpush.bf16.msra.mxu0 0
        %4468 = vmatpush.bf16.msra.mxu0 0
        %4469 = vmatpush.bf16.msra.mxu0 0
        %4470 = vmatpush.bf16.msra.mxu0 %v3037
        %4471 = vmatpush.bf16.msra.mxu0 %v2701
        %4472 = vmatpush.bf16.msra.mxu0 %v2693
        %4473 = vmatpush.bf16.msra.mxu0 %v2685
        %4474 = vmatmul.bf16.gmra.mxu0 %v2994
        %v4475 = vpop.f32.mrf.mxu0
        %v4476 = vadd.f32 %v4427, %v4475
        %v4477 = vpop.f32.mrf.mxu0
        %v4478 = vadd.f32 %v4429, %v4477
        %4479 = vmatmul.bf16.gmra.mxu0 %v2997
        %v4480 = vpop.f32.mrf.mxu0
        %v4481 = vadd.f32 %v4432, %v4480
        %v4482 = vpop.f32.mrf.mxu0
        %v4483 = vadd.f32 %v4434, %v4482
        %4484 = vmatmul.bf16.gmra.mxu0 %v3000
        %v4485 = vpop.f32.mrf.mxu0
        %v4486 = vadd.f32 %v4437, %v4485
        %v4487 = vpop.f32.mrf.mxu0
        %v4488 = vadd.f32 %v4439, %v4487
        %4489 = vmatmul.bf16.gmra.mxu0 %v3003
        %v4490 = vpop.f32.mrf.mxu0
        %v4491 = vadd.f32 %v4442, %v4490
        %v4492 = vpop.f32.mrf.mxu0
        %v4493 = vadd.f32 %v4444, %v4492
        %4494 = vmatmul.bf16.gmra.mxu0 %v3006
        %v4495 = vpop.f32.mrf.mxu0
        %v4496 = vadd.f32 %v4447, %v4495
        %v4497 = vpop.f32.mrf.mxu0
        %v4498 = vadd.f32 %v4449, %v4497
        %4499 = vmatmul.bf16.gmra.mxu0 %v3009
        %v4500 = vpop.f32.mrf.mxu0
        %v4501 = vadd.f32 %v4452, %v4500
        %v4502 = vpop.f32.mrf.mxu0
        %v4503 = vadd.f32 %v4454, %v4502
        %4504 = vmatmul.bf16.gmra.mxu0 %v3012
        %v4505 = vpop.f32.mrf.mxu0
        %v4506 = vadd.f32 %v4457, %v4505
        %v4507 = vpop.f32.mrf.mxu0
        %v4508 = vadd.f32 %v4459, %v4507
        %4509 = vmatmul.bf16.gmra.mxu0 %v3015
        %v4510 = vpop.f32.mrf.mxu0
        %v4511 = vadd.f32 %v4462, %v4510
        %v4512 = vpop.f32.mrf.mxu0
        %v4513 = vadd.f32 %v4464, %v4512
        %4514 = vdwg.mxu0
        %4515 = vmatpush.bf16.msra.mxu0 %v2486
        %4516 = vmatpush.bf16.msra.mxu0 %v2478
        %4517 = vmatpush.bf16.msra.mxu0 %v2470
        %4518 = vmatpush.bf16.msra.mxu0 %v2462
        %4519 = vmatpush.bf16.msra.mxu0 %v2454
        %4520 = vmatpush.bf16.msra.mxu0 %v2446
        %4521 = vmatpush.bf16.msra.mxu0 %v2438
        %4522 = vmatpush.bf16.msra.mxu0 %v2430
        %4523 = vmatmul.bf16.gmra.mxu0 %v1488
        %v4524 = vpop.f32.mrf.mxu0
        %v4525 = vadd.f32 %v1283, %v4524
        %v4526 = vpop.f32.mrf.mxu0
        %v4527 = vadd.f32 %v1288, %v4526
        %4528 = vmatmul.bf16.gmra.mxu0 %v1493
        %v4529 = vpop.f32.mrf.mxu0
        %v4530 = vadd.f32 %v1293, %v4529
        %v4531 = vpop.f32.mrf.mxu0
        %v4532 = vadd.f32 %v1298, %v4531
        %4533 = vmatmul.bf16.gmra.mxu0 %v1498
        %v4534 = vpop.f32.mrf.mxu0
        %v4535 = vadd.f32 %v1303, %v4534
        %v4536 = vpop.f32.mrf.mxu0
        %v4537 = vadd.f32 %v1308, %v4536
        %4538 = vmatmul.bf16.gmra.mxu0 %v1503
        %v4539 = vpop.f32.mrf.mxu0
        %v4540 = vadd.f32 %v1313, %v4539
        %v4541 = vpop.f32.mrf.mxu0
        %v4542 = vadd.f32 %v1318, %v4541
        %4543 = vmatmul.bf16.gmra.mxu0 %v1508
        %v4544 = vpop.f32.mrf.mxu0
        %v4545 = vadd.f32 %v1323, %v4544
        %v4546 = vpop.f32.mrf.mxu0
        %v4547 = vadd.f32 %v1328, %v4546
        %4548 = vmatmul.bf16.gmra.mxu0 %v1513
        %v4549 = vpop.f32.mrf.mxu0
        %v4550 = vadd.f32 %v1333, %v4549
        %v4551 = vpop.f32.mrf.mxu0
        %v4552 = vadd.f32 %v1338, %v4551
        %4553 = vmatmul.bf16.gmra.mxu0 %v1518
        %v4554 = vpop.f32.mrf.mxu0
        %v4555 = vadd.f32 %v1343, %v4554
        %v4556 = vpop.f32.mrf.mxu0
        %v4557 = vadd.f32 %v1348, %v4556
        %4558 = vmatmul.bf16.gmra.mxu0 %v1523
        %v4559 = vpop.f32.mrf.mxu0
        %v4560 = vadd.f32 %v1353, %v4559
        %v4561 = vpop.f32.mrf.mxu0
        %v4562 = vadd.f32 %v1358, %v4561
        %4563 = vdwg.mxu0
        %4564 = vmatpush.bf16.msra.mxu0 %v2550
        %4565 = vmatpush.bf16.msra.mxu0 %v2542
        %4566 = vmatpush.bf16.msra.mxu0 %v2534
        %4567 = vmatpush.bf16.msra.mxu0 %v2526
        %4568 = vmatpush.bf16.msra.mxu0 %v2518
        %4569 = vmatpush.bf16.msra.mxu0 %v2510
        %4570 = vmatpush.bf16.msra.mxu0 %v2502
        %4571 = vmatpush.bf16.msra.mxu0 %v2494
        %4572 = vmatmul.bf16.gmra.mxu0 %v1489
        %v4573 = vpop.f32.mrf.mxu0
        %v4574 = vadd.f32 %v4525, %v4573
        %v4575 = vpop.f32.mrf.mxu0
        %v4576 = vadd.f32 %v4527, %v4575
        %4577 = vmatmul.bf16.gmra.mxu0 %v1494
        %v4578 = vpop.f32.mrf.mxu0
        %v4579 = vadd.f32 %v4530, %v4578
        %v4580 = vpop.f32.mrf.mxu0
        %v4581 = vadd.f32 %v4532, %v4580
        %4582 = vmatmul.bf16.gmra.mxu0 %v1499
        %v4583 = vpop.f32.mrf.mxu0
        %v4584 = vadd.f32 %v4535, %v4583
        %v4585 = vpop.f32.mrf.mxu0
        %v4586 = vadd.f32 %v4537, %v4585
        %4587 = vmatmul.bf16.gmra.mxu0 %v1504
        %v4588 = vpop.f32.mrf.mxu0
        %v4589 = vadd.f32 %v4540, %v4588
        %v4590 = vpop.f32.mrf.mxu0
        %v4591 = vadd.f32 %v4542, %v4590
        %4592 = vmatmul.bf16.gmra.mxu0 %v1509
        %v4593 = vpop.f32.mrf.mxu0
        %v4594 = vadd.f32 %v4545, %v4593
        %v4595 = vpop.f32.mrf.mxu0
        %v4596 = vadd.f32 %v4547, %v4595
        %4597 = vmatmul.bf16.gmra.mxu0 %v1514
        %v4598 = vpop.f32.mrf.mxu0
        %v4599 = vadd.f32 %v4550, %v4598
        %v4600 = vpop.f32.mrf.mxu0
        %v4601 = vadd.f32 %v4552, %v4600
        %4602 = vmatmul.bf16.gmra.mxu0 %v1519
        %v4603 = vpop.f32.mrf.mxu0
        %v4604 = vadd.f32 %v4555, %v4603
        %v4605 = vpop.f32.mrf.mxu0
        %v4606 = vadd.f32 %v4557, %v4605
        %4607 = vmatmul.bf16.gmra.mxu0 %v1524
        %v4608 = vpop.f32.mrf.mxu0
        %v4609 = vadd.f32 %v4560, %v4608
        %v4610 = vpop.f32.mrf.mxu0
        %v4611 = vadd.f32 %v4562, %v4610
        %4612 = vdwg.mxu0
        %4613 = vmatpush.bf16.msra.mxu0 %v2614
        %4614 = vmatpush.bf16.msra.mxu0 %v2606
        %4615 = vmatpush.bf16.msra.mxu0 %v2598
        %4616 = vmatpush.bf16.msra.mxu0 %v2590
        %4617 = vmatpush.bf16.msra.mxu0 %v2582
        %4618 = vmatpush.bf16.msra.mxu0 %v2574
        %4619 = vmatpush.bf16.msra.mxu0 %v2566
        %4620 = vmatpush.bf16.msra.mxu0 %v2558
        %4621 = vmatmul.bf16.gmra.mxu0 %v1490
        %v4622 = vpop.f32.mrf.mxu0
        %v4623 = vadd.f32 %v4574, %v4622
        %v4624 = vpop.f32.mrf.mxu0
        %v4625 = vadd.f32 %v4576, %v4624
        %4626 = vmatmul.bf16.gmra.mxu0 %v1495
        %v4627 = vpop.f32.mrf.mxu0
        %v4628 = vadd.f32 %v4579, %v4627
        %v4629 = vpop.f32.mrf.mxu0
        %v4630 = vadd.f32 %v4581, %v4629
        %4631 = vmatmul.bf16.gmra.mxu0 %v1500
        %v4632 = vpop.f32.mrf.mxu0
        %v4633 = vadd.f32 %v4584, %v4632
        %v4634 = vpop.f32.mrf.mxu0
        %v4635 = vadd.f32 %v4586, %v4634
        %4636 = vmatmul.bf16.gmra.mxu0 %v1505
        %v4637 = vpop.f32.mrf.mxu0
        %v4638 = vadd.f32 %v4589, %v4637
        %v4639 = vpop.f32.mrf.mxu0
        %v4640 = vadd.f32 %v4591, %v4639
        %4641 = vmatmul.bf16.gmra.mxu0 %v1510
        %v4642 = vpop.f32.mrf.mxu0
        %v4643 = vadd.f32 %v4594, %v4642
        %v4644 = vpop.f32.mrf.mxu0
        %v4645 = vadd.f32 %v4596, %v4644
        %4646 = vmatmul.bf16.gmra.mxu0 %v1515
        %v4647 = vpop.f32.mrf.mxu0
        %v4648 = vadd.f32 %v4599, %v4647
        %v4649 = vpop.f32.mrf.mxu0
        %v4650 = vadd.f32 %v4601, %v4649
        %4651 = vmatmul.bf16.gmra.mxu0 %v1520
        %v4652 = vpop.f32.mrf.mxu0
        %v4653 = vadd.f32 %v4604, %v4652
        %v4654 = vpop.f32.mrf.mxu0
        %v4655 = vadd.f32 %v4606, %v4654
        %4656 = vmatmul.bf16.gmra.mxu0 %v1525
        %v4657 = vpop.f32.mrf.mxu0
        %v4658 = vadd.f32 %v4609, %v4657
        %v4659 = vpop.f32.mrf.mxu0
        %v4660 = vadd.f32 %v4611, %v4659
        %4661 = vdwg.mxu0
        %4662 = vmatpush.bf16.msra.mxu0 %v2678
        %4663 = vmatpush.bf16.msra.mxu0 %v2670
        %4664 = vmatpush.bf16.msra.mxu0 %v2662
        %4665 = vmatpush.bf16.msra.mxu0 %v2654
        %4666 = vmatpush.bf16.msra.mxu0 %v2646
        %4667 = vmatpush.bf16.msra.mxu0 %v2638
        %4668 = vmatpush.bf16.msra.mxu0 %v2630
        %4669 = vmatpush.bf16.msra.mxu0 %v2622
        %4670 = vmatmul.bf16.gmra.mxu0 %v1491
        %v4671 = vpop.f32.mrf.mxu0
        %v4672 = vadd.f32 %v4623, %v4671
        %v4673 = vpop.f32.mrf.mxu0
        %v4674 = vadd.f32 %v4625, %v4673
        %4675 = vmatmul.bf16.gmra.mxu0 %v1496
        %v4676 = vpop.f32.mrf.mxu0
        %v4677 = vadd.f32 %v4628, %v4676
        %v4678 = vpop.f32.mrf.mxu0
        %v4679 = vadd.f32 %v4630, %v4678
        %4680 = vmatmul.bf16.gmra.mxu0 %v1501
        %v4681 = vpop.f32.mrf.mxu0
        %v4682 = vadd.f32 %v4633, %v4681
        %v4683 = vpop.f32.mrf.mxu0
        %v4684 = vadd.f32 %v4635, %v4683
        %4685 = vmatmul.bf16.gmra.mxu0 %v1506
        %v4686 = vpop.f32.mrf.mxu0
        %v4687 = vadd.f32 %v4638, %v4686
        %v4688 = vpop.f32.mrf.mxu0
        %v4689 = vadd.f32 %v4640, %v4688
        %4690 = vmatmul.bf16.gmra.mxu0 %v1511
        %v4691 = vpop.f32.mrf.mxu0
        %v4692 = vadd.f32 %v4643, %v4691
        %v4693 = vpop.f32.mrf.mxu0
        %v4694 = vadd.f32 %v4645, %v4693
        %4695 = vmatmul.bf16.gmra.mxu0 %v1516
        %v4696 = vpop.f32.mrf.mxu0
        %v4697 = vadd.f32 %v4648, %v4696
        %v4698 = vpop.f32.mrf.mxu0
        %v4699 = vadd.f32 %v4650, %v4698
        %4700 = vmatmul.bf16.gmra.mxu0 %v1521
        %v4701 = vpop.f32.mrf.mxu0
        %v4702 = vadd.f32 %v4653, %v4701
        %v4703 = vpop.f32.mrf.mxu0
        %v4704 = vadd.f32 %v4655, %v4703
        %4705 = vmatmul.bf16.gmra.mxu0 %v1526
        %v4706 = vpop.f32.mrf.mxu0
        %v4707 = vadd.f32 %v4658, %v4706
        %v4708 = vpop.f32.mrf.mxu0
        %v4709 = vadd.f32 %v4660, %v4708
        %4710 = vdwg.mxu0
        %4711 = vmatpush.bf16.msra.mxu0 0
        %4712 = vmatpush.bf16.msra.mxu0 0
        %4713 = vmatpush.bf16.msra.mxu0 0
        %4714 = vmatpush.bf16.msra.mxu0 0
        %4715 = vmatpush.bf16.msra.mxu0 %v3040
        %4716 = vmatpush.bf16.msra.mxu0 %v2702
        %4717 = vmatpush.bf16.msra.mxu0 %v2694
        %4718 = vmatpush.bf16.msra.mxu0 %v2686
        %4719 = vmatmul.bf16.gmra.mxu0 %v2994
        %v4720 = vpop.f32.mrf.mxu0
        %v4721 = vadd.f32 %v4672, %v4720
        %v4722 = vpop.f32.mrf.mxu0
        %v4723 = vadd.f32 %v4674, %v4722
        %4724 = vmatmul.bf16.gmra.mxu0 %v2997
        %v4725 = vpop.f32.mrf.mxu0
        %v4726 = vadd.f32 %v4677, %v4725
        %v4727 = vpop.f32.mrf.mxu0
        %v4728 = vadd.f32 %v4679, %v4727
        %4729 = vmatmul.bf16.gmra.mxu0 %v3000
        %v4730 = vpop.f32.mrf.mxu0
        %v4731 = vadd.f32 %v4682, %v4730
        %v4732 = vpop.f32.mrf.mxu0
        %v4733 = vadd.f32 %v4684, %v4732
        %4734 = vmatmul.bf16.gmra.mxu0 %v3003
        %v4735 = vpop.f32.mrf.mxu0
        %v4736 = vadd.f32 %v4687, %v4735
        %v4737 = vpop.f32.mrf.mxu0
        %v4738 = vadd.f32 %v4689, %v4737
        %4739 = vmatmul.bf16.gmra.mxu0 %v3006
        %v4740 = vpop.f32.mrf.mxu0
        %v4741 = vadd.f32 %v4692, %v4740
        %v4742 = vpop.f32.mrf.mxu0
        %v4743 = vadd.f32 %v4694, %v4742
        %4744 = vmatmul.bf16.gmra.mxu0 %v3009
        %v4745 = vpop.f32.mrf.mxu0
        %v4746 = vadd.f32 %v4697, %v4745
        %v4747 = vpop.f32.mrf.mxu0
        %v4748 = vadd.f32 %v4699, %v4747
        %4749 = vmatmul.bf16.gmra.mxu0 %v3012
        %v4750 = vpop.f32.mrf.mxu0
        %v4751 = vadd.f32 %v4702, %v4750
        %v4752 = vpop.f32.mrf.mxu0
        %v4753 = vadd.f32 %v4704, %v4752
        %4754 = vmatmul.bf16.gmra.mxu0 %v3015
        %v4755 = vpop.f32.mrf.mxu0
        %v4756 = vadd.f32 %v4707, %v4755
        %v4757 = vpop.f32.mrf.mxu0
        %v4758 = vadd.f32 %v4709, %v4757
        %4759 = vdwg.mxu0
        %4760 = vmatpush.bf16.msra.mxu0 %v2487
        %4761 = vmatpush.bf16.msra.mxu0 %v2479
        %4762 = vmatpush.bf16.msra.mxu0 %v2471
        %4763 = vmatpush.bf16.msra.mxu0 %v2463
        %4764 = vmatpush.bf16.msra.mxu0 %v2455
        %4765 = vmatpush.bf16.msra.mxu0 %v2447
        %4766 = vmatpush.bf16.msra.mxu0 %v2439
        %4767 = vmatpush.bf16.msra.mxu0 %v2431
        %4768 = vmatmul.bf16.gmra.mxu0 %v1488
        %v4769 = vpop.f32.mrf.mxu0
        %v4770 = vadd.f32 %v1283, %v4769
        %v4771 = vpop.f32.mrf.mxu0
        %v4772 = vadd.f32 %v1288, %v4771
        %4773 = vmatmul.bf16.gmra.mxu0 %v1493
        %v4774 = vpop.f32.mrf.mxu0
        %v4775 = vadd.f32 %v1293, %v4774
        %v4776 = vpop.f32.mrf.mxu0
        %v4777 = vadd.f32 %v1298, %v4776
        %4778 = vmatmul.bf16.gmra.mxu0 %v1498
        %v4779 = vpop.f32.mrf.mxu0
        %v4780 = vadd.f32 %v1303, %v4779
        %v4781 = vpop.f32.mrf.mxu0
        %v4782 = vadd.f32 %v1308, %v4781
        %4783 = vmatmul.bf16.gmra.mxu0 %v1503
        %v4784 = vpop.f32.mrf.mxu0
        %v4785 = vadd.f32 %v1313, %v4784
        %v4786 = vpop.f32.mrf.mxu0
        %v4787 = vadd.f32 %v1318, %v4786
        %4788 = vmatmul.bf16.gmra.mxu0 %v1508
        %v4789 = vpop.f32.mrf.mxu0
        %v4790 = vadd.f32 %v1323, %v4789
        %v4791 = vpop.f32.mrf.mxu0
        %v4792 = vadd.f32 %v1328, %v4791
        %4793 = vmatmul.bf16.gmra.mxu0 %v1513
        %v4794 = vpop.f32.mrf.mxu0
        %v4795 = vadd.f32 %v1333, %v4794
        %v4796 = vpop.f32.mrf.mxu0
        %v4797 = vadd.f32 %v1338, %v4796
        %4798 = vmatmul.bf16.gmra.mxu0 %v1518
        %v4799 = vpop.f32.mrf.mxu0
        %v4800 = vadd.f32 %v1343, %v4799
        %v4801 = vpop.f32.mrf.mxu0
        %v4802 = vadd.f32 %v1348, %v4801
        %4803 = vmatmul.bf16.gmra.mxu0 %v1523
        %v4804 = vpop.f32.mrf.mxu0
        %v4805 = vadd.f32 %v1353, %v4804
        %v4806 = vpop.f32.mrf.mxu0
        %v4807 = vadd.f32 %v1358, %v4806
        %4808 = vdwg.mxu0
        %4809 = vmatpush.bf16.msra.mxu0 %v2551
        %4810 = vmatpush.bf16.msra.mxu0 %v2543
        %4811 = vmatpush.bf16.msra.mxu0 %v2535
        %4812 = vmatpush.bf16.msra.mxu0 %v2527
        %4813 = vmatpush.bf16.msra.mxu0 %v2519
        %4814 = vmatpush.bf16.msra.mxu0 %v2511
        %4815 = vmatpush.bf16.msra.mxu0 %v2503
        %4816 = vmatpush.bf16.msra.mxu0 %v2495
        %4817 = vmatmul.bf16.gmra.mxu0 %v1489
        %v4818 = vpop.f32.mrf.mxu0
        %v4819 = vadd.f32 %v4770, %v4818
        %v4820 = vpop.f32.mrf.mxu0
        %v4821 = vadd.f32 %v4772, %v4820
        %4822 = vmatmul.bf16.gmra.mxu0 %v1494
        %v4823 = vpop.f32.mrf.mxu0
        %v4824 = vadd.f32 %v4775, %v4823
        %v4825 = vpop.f32.mrf.mxu0
        %v4826 = vadd.f32 %v4777, %v4825
        %4827 = vmatmul.bf16.gmra.mxu0 %v1499
        %v4828 = vpop.f32.mrf.mxu0
        %v4829 = vadd.f32 %v4780, %v4828
        %v4830 = vpop.f32.mrf.mxu0
        %v4831 = vadd.f32 %v4782, %v4830
        %4832 = vmatmul.bf16.gmra.mxu0 %v1504
        %v4833 = vpop.f32.mrf.mxu0
        %v4834 = vadd.f32 %v4785, %v4833
        %v4835 = vpop.f32.mrf.mxu0
        %v4836 = vadd.f32 %v4787, %v4835
        %4837 = vmatmul.bf16.gmra.mxu0 %v1509
        %v4838 = vpop.f32.mrf.mxu0
        %v4839 = vadd.f32 %v4790, %v4838
        %v4840 = vpop.f32.mrf.mxu0
        %v4841 = vadd.f32 %v4792, %v4840
        %4842 = vmatmul.bf16.gmra.mxu0 %v1514
        %v4843 = vpop.f32.mrf.mxu0
        %v4844 = vadd.f32 %v4795, %v4843
        %v4845 = vpop.f32.mrf.mxu0
        %v4846 = vadd.f32 %v4797, %v4845
        %4847 = vmatmul.bf16.gmra.mxu0 %v1519
        %v4848 = vpop.f32.mrf.mxu0
        %v4849 = vadd.f32 %v4800, %v4848
        %v4850 = vpop.f32.mrf.mxu0
        %v4851 = vadd.f32 %v4802, %v4850
        %4852 = vmatmul.bf16.gmra.mxu0 %v1524
        %v4853 = vpop.f32.mrf.mxu0
        %v4854 = vadd.f32 %v4805, %v4853
        %v4855 = vpop.f32.mrf.mxu0
        %v4856 = vadd.f32 %v4807, %v4855
        %4857 = vdwg.mxu0
        %4858 = vmatpush.bf16.msra.mxu0 %v2615
        %4859 = vmatpush.bf16.msra.mxu0 %v2607
        %4860 = vmatpush.bf16.msra.mxu0 %v2599
        %4861 = vmatpush.bf16.msra.mxu0 %v2591
        %4862 = vmatpush.bf16.msra.mxu0 %v2583
        %4863 = vmatpush.bf16.msra.mxu0 %v2575
        %4864 = vmatpush.bf16.msra.mxu0 %v2567
        %4865 = vmatpush.bf16.msra.mxu0 %v2559
        %4866 = vmatmul.bf16.gmra.mxu0 %v1490
        %v4867 = vpop.f32.mrf.mxu0
        %v4868 = vadd.f32 %v4819, %v4867
        %v4869 = vpop.f32.mrf.mxu0
        %v4870 = vadd.f32 %v4821, %v4869
        %4871 = vmatmul.bf16.gmra.mxu0 %v1495
        %v4872 = vpop.f32.mrf.mxu0
        %v4873 = vadd.f32 %v4824, %v4872
        %v4874 = vpop.f32.mrf.mxu0
        %v4875 = vadd.f32 %v4826, %v4874
        %4876 = vmatmul.bf16.gmra.mxu0 %v1500
        %v4877 = vpop.f32.mrf.mxu0
        %v4878 = vadd.f32 %v4829, %v4877
        %v4879 = vpop.f32.mrf.mxu0
        %v4880 = vadd.f32 %v4831, %v4879
        %4881 = vmatmul.bf16.gmra.mxu0 %v1505
        %v4882 = vpop.f32.mrf.mxu0
        %v4883 = vadd.f32 %v4834, %v4882
        %v4884 = vpop.f32.mrf.mxu0
        %v4885 = vadd.f32 %v4836, %v4884
        %4886 = vmatmul.bf16.gmra.mxu0 %v1510
        %v4887 = vpop.f32.mrf.mxu0
        %v4888 = vadd.f32 %v4839, %v4887
        %v4889 = vpop.f32.mrf.mxu0
        %v4890 = vadd.f32 %v4841, %v4889
        %4891 = vmatmul.bf16.gmra.mxu0 %v1515
        %v4892 = vpop.f32.mrf.mxu0
        %v4893 = vadd.f32 %v4844, %v4892
        %v4894 = vpop.f32.mrf.mxu0
        %v4895 = vadd.f32 %v4846, %v4894
        %4896 = vmatmul.bf16.gmra.mxu0 %v1520
        %v4897 = vpop.f32.mrf.mxu0
        %v4898 = vadd.f32 %v4849, %v4897
        %v4899 = vpop.f32.mrf.mxu0
        %v4900 = vadd.f32 %v4851, %v4899
        %4901 = vmatmul.bf16.gmra.mxu0 %v1525
        %v4902 = vpop.f32.mrf.mxu0
        %v4903 = vadd.f32 %v4854, %v4902
        %v4904 = vpop.f32.mrf.mxu0
        %v4905 = vadd.f32 %v4856, %v4904
        %4906 = vdwg.mxu0
        %4907 = vmatpush.bf16.msra.mxu0 %v2679
        %4908 = vmatpush.bf16.msra.mxu0 %v2671
        %4909 = vmatpush.bf16.msra.mxu0 %v2663
        %4910 = vmatpush.bf16.msra.mxu0 %v2655
        %4911 = vmatpush.bf16.msra.mxu0 %v2647
        %4912 = vmatpush.bf16.msra.mxu0 %v2639
        %4913 = vmatpush.bf16.msra.mxu0 %v2631
        %4914 = vmatpush.bf16.msra.mxu0 %v2623
        %4915 = vmatmul.bf16.gmra.mxu0 %v1491
        %v4916 = vpop.f32.mrf.mxu0
        %v4917 = vadd.f32 %v4868, %v4916
        %v4918 = vpop.f32.mrf.mxu0
        %v4919 = vadd.f32 %v4870, %v4918
        %4920 = vmatmul.bf16.gmra.mxu0 %v1496
        %v4921 = vpop.f32.mrf.mxu0
        %v4922 = vadd.f32 %v4873, %v4921
        %v4923 = vpop.f32.mrf.mxu0
        %v4924 = vadd.f32 %v4875, %v4923
        %4925 = vmatmul.bf16.gmra.mxu0 %v1501
        %v4926 = vpop.f32.mrf.mxu0
        %v4927 = vadd.f32 %v4878, %v4926
        %v4928 = vpop.f32.mrf.mxu0
        %v4929 = vadd.f32 %v4880, %v4928
        %4930 = vmatmul.bf16.gmra.mxu0 %v1506
        %v4931 = vpop.f32.mrf.mxu0
        %v4932 = vadd.f32 %v4883, %v4931
        %v4933 = vpop.f32.mrf.mxu0
        %v4934 = vadd.f32 %v4885, %v4933
        %4935 = vmatmul.bf16.gmra.mxu0 %v1511
        %v4936 = vpop.f32.mrf.mxu0
        %v4937 = vadd.f32 %v4888, %v4936
        %v4938 = vpop.f32.mrf.mxu0
        %v4939 = vadd.f32 %v4890, %v4938
        %4940 = vmatmul.bf16.gmra.mxu0 %v1516
        %v4941 = vpop.f32.mrf.mxu0
        %v4942 = vadd.f32 %v4893, %v4941
        %v4943 = vpop.f32.mrf.mxu0
        %v4944 = vadd.f32 %v4895, %v4943
        %4945 = vmatmul.bf16.gmra.mxu0 %v1521
        %v4946 = vpop.f32.mrf.mxu0
        %v4947 = vadd.f32 %v4898, %v4946
        %v4948 = vpop.f32.mrf.mxu0
        %v4949 = vadd.f32 %v4900, %v4948
        %4950 = vmatmul.bf16.gmra.mxu0 %v1526
        %v4951 = vpop.f32.mrf.mxu0
        %v4952 = vadd.f32 %v4903, %v4951
        %v4953 = vpop.f32.mrf.mxu0
        %v4954 = vadd.f32 %v4905, %v4953
        %4955 = vdwg.mxu0
        %4956 = vmatpush.bf16.msra.mxu0 0
        %4957 = vmatpush.bf16.msra.mxu0 0
        %4958 = vmatpush.bf16.msra.mxu0 0
        %4959 = vmatpush.bf16.msra.mxu0 0
        %4960 = vmatpush.bf16.msra.mxu0 %v3043
        %4961 = vmatpush.bf16.msra.mxu0 %v2703
        %4962 = vmatpush.bf16.msra.mxu0 %v2695
        %4963 = vmatpush.bf16.msra.mxu0 %v2687
        %4964 = vmatmul.bf16.gmra.mxu0 %v2994
        %v4965 = vpop.f32.mrf.mxu0
        %v4966 = vadd.f32 %v4917, %v4965
        %v4967 = vpop.f32.mrf.mxu0
        %v4968 = vadd.f32 %v4919, %v4967
        %4969 = vmatmul.bf16.gmra.mxu0 %v2997
        %v4970 = vpop.f32.mrf.mxu0
        %v4971 = vadd.f32 %v4922, %v4970
        %v4972 = vpop.f32.mrf.mxu0
        %v4973 = vadd.f32 %v4924, %v4972
        %4974 = vmatmul.bf16.gmra.mxu0 %v3000
        %v4975 = vpop.f32.mrf.mxu0
        %v4976 = vadd.f32 %v4927, %v4975
        %v4977 = vpop.f32.mrf.mxu0
        %v4978 = vadd.f32 %v4929, %v4977
        %4979 = vmatmul.bf16.gmra.mxu0 %v3003
        %v4980 = vpop.f32.mrf.mxu0
        %v4981 = vadd.f32 %v4932, %v4980
        %v4982 = vpop.f32.mrf.mxu0
        %v4983 = vadd.f32 %v4934, %v4982
        %4984 = vmatmul.bf16.gmra.mxu0 %v3006
        %v4985 = vpop.f32.mrf.mxu0
        %v4986 = vadd.f32 %v4937, %v4985
        %v4987 = vpop.f32.mrf.mxu0
        %v4988 = vadd.f32 %v4939, %v4987
        %4989 = vmatmul.bf16.gmra.mxu0 %v3009
        %v4990 = vpop.f32.mrf.mxu0
        %v4991 = vadd.f32 %v4942, %v4990
        %v4992 = vpop.f32.mrf.mxu0
        %v4993 = vadd.f32 %v4944, %v4992
        %4994 = vmatmul.bf16.gmra.mxu0 %v3012
        %v4995 = vpop.f32.mrf.mxu0
        %v4996 = vadd.f32 %v4947, %v4995
        %v4997 = vpop.f32.mrf.mxu0
        %v4998 = vadd.f32 %v4949, %v4997
        %4999 = vmatmul.bf16.gmra.mxu0 %v3015
        %v5000 = vpop.f32.mrf.mxu0
        %v5001 = vadd.f32 %v4952, %v5000
        %v5002 = vpop.f32.mrf.mxu0
        %v5003 = vadd.f32 %v4954, %v5002
        %5004 = vdwg.mxu0
        %v5005 = vmax.f32 %v3251, 0.0
        %v5006 = vmax.f32 %v3496, 0.0
        %v5007 = vmax.f32 %v3741, 0.0
        %v5008 = vmax.f32 %v3986, 0.0
        %v5009 = vmax.f32 %v4231, 0.0
        %v5010 = vmax.f32 %v4476, 0.0
        %v5011 = vmax.f32 %v4721, 0.0
        %v5012 = vmax.f32 %v4966, 0.0
        %v5013 = vmax.f32 %v3253, 0.0
        %v5014 = vmax.f32 %v3498, 0.0
        %v5015 = vmax.f32 %v3743, 0.0
        %v5016 = vmax.f32 %v3988, 0.0
        %v5017 = vmax.f32 %v4233, 0.0
        %v5018 = vmax.f32 %v4478, 0.0
        %v5019 = vmax.f32 %v4723, 0.0
        %v5020 = vmax.f32 %v4968, 0.0
        %v5021 = vmax.f32 %v3256, 0.0
        %v5022 = vmax.f32 %v3501, 0.0
        %v5023 = vmax.f32 %v3746, 0.0
        %v5024 = vmax.f32 %v3991, 0.0
        %v5025 = vmax.f32 %v4236, 0.0
        %v5026 = vmax.f32 %v4481, 0.0
        %v5027 = vmax.f32 %v4726, 0.0
        %v5028 = vmax.f32 %v4971, 0.0
        %v5029 = vmax.f32 %v3258, 0.0
        %v5030 = vmax.f32 %v3503, 0.0
        %v5031 = vmax.f32 %v3748, 0.0
        %v5032 = vmax.f32 %v3993, 0.0
        %v5033 = vmax.f32 %v4238, 0.0
        %v5034 = vmax.f32 %v4483, 0.0
        %v5035 = vmax.f32 %v4728, 0.0
        %v5036 = vmax.f32 %v4973, 0.0
        %v5037 = vmax.f32 %v3261, 0.0
        %v5038 = vmax.f32 %v3506, 0.0
        %v5039 = vmax.f32 %v3751, 0.0
        %v5040 = vmax.f32 %v3996, 0.0
        %v5041 = vmax.f32 %v4241, 0.0
        %v5042 = vmax.f32 %v4486, 0.0
        %v5043 = vmax.f32 %v4731, 0.0
        %v5044 = vmax.f32 %v4976, 0.0
        %v5045 = vmax.f32 %v3263, 0.0
        %v5046 = vmax.f32 %v3508, 0.0
        %v5047 = vmax.f32 %v3753, 0.0
        %v5048 = vmax.f32 %v3998, 0.0
        %v5049 = vmax.f32 %v4243, 0.0
        %v5050 = vmax.f32 %v4488, 0.0
        %v5051 = vmax.f32 %v4733, 0.0
        %v5052 = vmax.f32 %v4978, 0.0
        %v5053 = vmax.f32 %v3266, 0.0
        %v5054 = vmax.f32 %v3511, 0.0
        %v5055 = vmax.f32 %v3756, 0.0
        %v5056 = vmax.f32 %v4001, 0.0
        %v5057 = vmax.f32 %v4246, 0.0
        %v5058 = vmax.f32 %v4491, 0.0
        %v5059 = vmax.f32 %v4736, 0.0
        %v5060 = vmax.f32 %v4981, 0.0
        %v5061 = vmax.f32 %v3268, 0.0
        %v5062 = vmax.f32 %v3513, 0.0
        %v5063 = vmax.f32 %v3758, 0.0
        %v5064 = vmax.f32 %v4003, 0.0
        %v5065 = vmax.f32 %v4248, 0.0
        %v5066 = vmax.f32 %v4493, 0.0
        %v5067 = vmax.f32 %v4738, 0.0
        %v5068 = vmax.f32 %v4983, 0.0
        %v5069 = vmax.f32 %v3271, 0.0
        %v5070 = vmax.f32 %v3516, 0.0
        %v5071 = vmax.f32 %v3761, 0.0
        %v5072 = vmax.f32 %v4006, 0.0
        %v5073 = vmax.f32 %v4251, 0.0
        %v5074 = vmax.f32 %v4496, 0.0
        %v5075 = vmax.f32 %v4741, 0.0
        %v5076 = vmax.f32 %v4986, 0.0
        %v5077 = vmax.f32 %v3273, 0.0
        %v5078 = vmax.f32 %v3518, 0.0
        %v5079 = vmax.f32 %v3763, 0.0
        %v5080 = vmax.f32 %v4008, 0.0
        %v5081 = vmax.f32 %v4253, 0.0
        %v5082 = vmax.f32 %v4498, 0.0
        %v5083 = vmax.f32 %v4743, 0.0
        %v5084 = vmax.f32 %v4988, 0.0
        %v5085 = vmax.f32 %v3276, 0.0
        %v5086 = vmax.f32 %v3521, 0.0
        %v5087 = vmax.f32 %v3766, 0.0
        %v5088 = vmax.f32 %v4011, 0.0
        %v5089 = vmax.f32 %v4256, 0.0
        %v5090 = vmax.f32 %v4501, 0.0
        %v5091 = vmax.f32 %v4746, 0.0
        %v5092 = vmax.f32 %v4991, 0.0
        %v5093 = vmax.f32 %v3278, 0.0
        %v5094 = vmax.f32 %v3523, 0.0
        %v5095 = vmax.f32 %v3768, 0.0
        %v5096 = vmax.f32 %v4013, 0.0
        %v5097 = vmax.f32 %v4258, 0.0
        %v5098 = vmax.f32 %v4503, 0.0
        %v5099 = vmax.f32 %v4748, 0.0
        %v5100 = vmax.f32 %v4993, 0.0
        %v5101 = vmax.f32 %v3281, 0.0
        %v5102 = vmax.f32 %v3526, 0.0
        %v5103 = vmax.f32 %v3771, 0.0
        %v5104 = vmax.f32 %v4016, 0.0
        %v5105 = vmax.f32 %v4261, 0.0
        %v5106 = vmax.f32 %v4506, 0.0
        %v5107 = vmax.f32 %v4751, 0.0
        %v5108 = vmax.f32 %v4996, 0.0
        %v5109 = vmax.f32 %v3283, 0.0
        %v5110 = vmax.f32 %v3528, 0.0
        %v5111 = vmax.f32 %v3773, 0.0
        %v5112 = vmax.f32 %v4018, 0.0
        %v5113 = vmax.f32 %v4263, 0.0
        %v5114 = vmax.f32 %v4508, 0.0
        %v5115 = vmax.f32 %v4753, 0.0
        %v5116 = vmax.f32 %v4998, 0.0
        %v5117 = vmax.f32 %v3286, 0.0
        %v5118 = vmax.f32 %v3531, 0.0
        %v5119 = vmax.f32 %v3776, 0.0
        %v5120 = vmax.f32 %v4021, 0.0
        %v5121 = vmax.f32 %v4266, 0.0
        %v5122 = vmax.f32 %v4511, 0.0
        %v5123 = vmax.f32 %v4756, 0.0
        %v5124 = vmax.f32 %v5001, 0.0
        %v5125 = vmax.f32 %v3288, 0.0
        %v5126 = vmax.f32 %v3533, 0.0
        %v5127 = vmax.f32 %v3778, 0.0
        %v5128 = vmax.f32 %v4023, 0.0
        %v5129 = vmax.f32 %v4268, 0.0
        %v5130 = vmax.f32 %v4513, 0.0
        %v5131 = vmax.f32 %v4758, 0.0
        %v5132 = vmax.f32 %v5003, 0.0
        %v5133 = vld [vmem:[%s3] sm:$0xff]
        %v5134 = vld [vmem:[%s3 + $0x8] sm:$0xff]
        %v5135 = vld [vmem:[%s3 + $0x10] sm:$0xff]
        %v5136 = vld [vmem:[%s3 + $0x18] sm:$0xff]
        %v5137 = vld [vmem:[%s3 + $0x20] sm:$0xff]
        %v5138 = vld [vmem:[%s3 + $0x28] sm:$0xff]
        %v5139 = vld [vmem:[%s3 + $0x30] sm:$0xff]
        %v5140 = vld [vmem:[%s3 + $0x38] sm:$0xff]
        %v5141 = vld [vmem:[%s3 + $0x40] sm:$0xff]
        %v5142 = vld [vmem:[%s3 + $0x48] sm:$0xff]
        %v5143 = vld [vmem:[%s3 + $0x50] sm:$0xff]
        %v5144 = vld [vmem:[%s3 + $0x58] sm:$0xff]
        %v5145 = vld [vmem:[%s3 + $0x60] sm:$0xff]
        %v5146 = vld [vmem:[%s3 + $0x68] sm:$0xff]
        %v5147 = vld [vmem:[%s3 + $0x70] sm:$0x7]
        %v5148 = vld [vmem:[%s4] sm:$0xff]
        %v5149 = vld [vmem:[%s4 + $0x8] sm:$0xff]
        %v5150 = vld [vmem:[%s4 + $0x10] sm:$0xff]
        %v5151 = vld [vmem:[%s4 + $0x18] sm:$0xff]
        %v5152 = vld [vmem:[%s4 + $0x20] sm:$0xff]
        %v5153 = vld [vmem:[%s4 + $0x28] sm:$0xff]
        %v5154 = vld [vmem:[%s4 + $0x30] sm:$0xff]
        %v5155 = vld [vmem:[%s4 + $0x38] sm:$0xff]
        %v5156 = vld [vmem:[%s4 + $0x40] sm:$0xff]
        %v5157 = vld [vmem:[%s4 + $0x48] sm:$0xff]
        %v5158 = vld [vmem:[%s4 + $0x50] sm:$0xff]
        %v5159 = vld [vmem:[%s4 + $0x58] sm:$0xff]
        %v5160 = vld [vmem:[%s4 + $0x60] sm:$0xff]
        %v5161 = vld [vmem:[%s4 + $0x68] sm:$0xff]
        %v5162 = vld [vmem:[%s4 + $0x70] sm:$0x7]
        %5164 = vset.pattern.permute.xlu0 0
        %5165 = vperm.xlu0 %5164, %v5148
        %v5166 = vpop.permute.xlu0 %5165
        %5169 = vset.pattern.permute.xlu0 0
        %5170 = vperm.xlu0 %5169, %v5149
        %v5171 = vpop.permute.xlu0 %5170
        %5174 = vset.pattern.permute.xlu0 0
        %5175 = vperm.xlu0 %5174, %v5150
        %v5176 = vpop.permute.xlu0 %5175
        %5179 = vset.pattern.permute.xlu0 0
        %5180 = vperm.xlu0 %5179, %v5151
        %v5181 = vpop.permute.xlu0 %5180
        %5184 = vset.pattern.permute.xlu0 0
        %5185 = vperm.xlu0 %5184, %v5152
        %v5186 = vpop.permute.xlu0 %5185
        %5189 = vset.pattern.permute.xlu0 0
        %5190 = vperm.xlu0 %5189, %v5153
        %v5191 = vpop.permute.xlu0 %5190
        %5194 = vset.pattern.permute.xlu0 0
        %5195 = vperm.xlu0 %5194, %v5154
        %v5196 = vpop.permute.xlu0 %5195
        %5199 = vset.pattern.permute.xlu0 0
        %5200 = vperm.xlu0 %5199, %v5155
        %v5201 = vpop.permute.xlu0 %5200
        %5204 = vset.pattern.permute.xlu0 0
        %5205 = vperm.xlu0 %5204, %v5156
        %v5206 = vpop.permute.xlu0 %5205
        %5209 = vset.pattern.permute.xlu0 0
        %5210 = vperm.xlu0 %5209, %v5157
        %v5211 = vpop.permute.xlu0 %5210
        %5214 = vset.pattern.permute.xlu0 0
        %5215 = vperm.xlu0 %5214, %v5158
        %v5216 = vpop.permute.xlu0 %5215
        %5219 = vset.pattern.permute.xlu0 0
        %5220 = vperm.xlu0 %5219, %v5159
        %v5221 = vpop.permute.xlu0 %5220
        %5224 = vset.pattern.permute.xlu0 0
        %5225 = vperm.xlu0 %5224, %v5160
        %v5226 = vpop.permute.xlu0 %5225
        %5229 = vset.pattern.permute.xlu0 0
        %5230 = vperm.xlu0 %5229, %v5161
        %v5231 = vpop.permute.xlu0 %5230
        %5234 = vset.pattern.permute.xlu0 0
        %5235 = vperm.xlu0 %5234, %v5162
        %v5236 = vpop.permute.xlu0 %5235
        %5238 = vmatpush.msra.mxu0 %v5125
        %5239 = vmatpush.msra.mxu0 %v5117
        %5240 = vmatpush.msra.mxu0 %v5109
        %5241 = vmatpush.msra.mxu0 %v5101
        %5242 = vmatpush.msra.mxu0 %v5093
        %5243 = vmatpush.msra.mxu0 %v5085
        %5244 = vmatpush.msra.mxu0 %v5077
        %5245 = vmatpush.msra.mxu0 %v5069
        %5246 = vmatpush.msra.mxu0 %v5061
        %5247 = vmatpush.msra.mxu0 %v5053
        %5248 = vmatpush.msra.mxu0 %v5045
        %5249 = vmatpush.msra.mxu0 %v5037
        %5250 = vmatpush.msra.mxu0 %v5029
        %5251 = vmatpush.msra.mxu0 %v5021
        %5252 = vmatpush.msra.mxu0 %v5013
        %5253 = vmatpush.msra.mxu0 %v5005
        %5254 = vmatmul.f32.gmra.mxu0 %v5133
        %v5255 = vpop.f32.mrf.mxu0
        %v5256 = vadd.f32 %v5166, %v5255
        %5257 = vmatmul.f32.gmra.mxu0 %v5134
        %v5258 = vpop.f32.mrf.mxu0
        %v5259 = vadd.f32 %v5171, %v5258
        %5260 = vmatmul.f32.gmra.mxu0 %v5135
        %v5261 = vpop.f32.mrf.mxu0
        %v5262 = vadd.f32 %v5176, %v5261
        %5263 = vmatmul.f32.gmra.mxu0 %v5136
        %v5264 = vpop.f32.mrf.mxu0
        %v5265 = vadd.f32 %v5181, %v5264
        %5266 = vmatmul.f32.gmra.mxu0 %v5137
        %v5267 = vpop.f32.mrf.mxu0
        %v5268 = vadd.f32 %v5186, %v5267
        %5269 = vmatmul.f32.gmra.mxu0 %v5138
        %v5270 = vpop.f32.mrf.mxu0
        %v5271 = vadd.f32 %v5191, %v5270
        %5272 = vmatmul.f32.gmra.mxu0 %v5139
        %v5273 = vpop.f32.mrf.mxu0
        %v5274 = vadd.f32 %v5196, %v5273
        %5275 = vmatmul.f32.gmra.mxu0 %v5140
        %v5276 = vpop.f32.mrf.mxu0
        %v5277 = vadd.f32 %v5201, %v5276
        %5278 = vmatmul.f32.gmra.mxu0 %v5141
        %v5279 = vpop.f32.mrf.mxu0
        %v5280 = vadd.f32 %v5206, %v5279
        %5281 = vmatmul.f32.gmra.mxu0 %v5142
        %v5282 = vpop.f32.mrf.mxu0
        %v5283 = vadd.f32 %v5211, %v5282
        %5284 = vmatmul.f32.gmra.mxu0 %v5143
        %v5285 = vpop.f32.mrf.mxu0
        %v5286 = vadd.f32 %v5216, %v5285
        %5287 = vmatmul.f32.gmra.mxu0 %v5144
        %v5288 = vpop.f32.mrf.mxu0
        %v5289 = vadd.f32 %v5221, %v5288
        %5290 = vmatmul.f32.gmra.mxu0 %v5145
        %v5291 = vpop.f32.mrf.mxu0
        %v5292 = vadd.f32 %v5226, %v5291
        %5293 = vmatmul.f32.gmra.mxu0 %v5146
        %v5294 = vpop.f32.mrf.mxu0
        %v5295 = vadd.f32 %v5231, %v5294
        %5296 = vmatmul.f32.gmra.mxu0 %v5147
        %v5297 = vpop.f32.mrf.mxu0
        %v5298 = vadd.f32 %v5236, %v5297
        %5299 = vdwg.mxu0
        %5300 = vmatpush.msra.mxu0 %v5126
        %5301 = vmatpush.msra.mxu0 %v5118
        %5302 = vmatpush.msra.mxu0 %v5110
        %5303 = vmatpush.msra.mxu0 %v5102
        %5304 = vmatpush.msra.mxu0 %v5094
        %5305 = vmatpush.msra.mxu0 %v5086
        %5306 = vmatpush.msra.mxu0 %v5078
        %5307 = vmatpush.msra.mxu0 %v5070
        %5308 = vmatpush.msra.mxu0 %v5062
        %5309 = vmatpush.msra.mxu0 %v5054
        %5310 = vmatpush.msra.mxu0 %v5046
        %5311 = vmatpush.msra.mxu0 %v5038
        %5312 = vmatpush.msra.mxu0 %v5030
        %5313 = vmatpush.msra.mxu0 %v5022
        %5314 = vmatpush.msra.mxu0 %v5014
        %5315 = vmatpush.msra.mxu0 %v5006
        %5316 = vmatmul.f32.gmra.mxu0 %v5133
        %v5317 = vpop.f32.mrf.mxu0
        %v5318 = vadd.f32 %v5166, %v5317
        %5319 = vmatmul.f32.gmra.mxu0 %v5134
        %v5320 = vpop.f32.mrf.mxu0
        %v5321 = vadd.f32 %v5171, %v5320
        %5322 = vmatmul.f32.gmra.mxu0 %v5135
        %v5323 = vpop.f32.mrf.mxu0
        %v5324 = vadd.f32 %v5176, %v5323
        %5325 = vmatmul.f32.gmra.mxu0 %v5136
        %v5326 = vpop.f32.mrf.mxu0
        %v5327 = vadd.f32 %v5181, %v5326
        %5328 = vmatmul.f32.gmra.mxu0 %v5137
        %v5329 = vpop.f32.mrf.mxu0
        %v5330 = vadd.f32 %v5186, %v5329
        %5331 = vmatmul.f32.gmra.mxu0 %v5138
        %v5332 = vpop.f32.mrf.mxu0
        %v5333 = vadd.f32 %v5191, %v5332
        %5334 = vmatmul.f32.gmra.mxu0 %v5139
        %v5335 = vpop.f32.mrf.mxu0
        %v5336 = vadd.f32 %v5196, %v5335
        %5337 = vmatmul.f32.gmra.mxu0 %v5140
        %v5338 = vpop.f32.mrf.mxu0
        %v5339 = vadd.f32 %v5201, %v5338
        %5340 = vmatmul.f32.gmra.mxu0 %v5141
        %v5341 = vpop.f32.mrf.mxu0
        %v5342 = vadd.f32 %v5206, %v5341
        %5343 = vmatmul.f32.gmra.mxu0 %v5142
        %v5344 = vpop.f32.mrf.mxu0
        %v5345 = vadd.f32 %v5211, %v5344
        %5346 = vmatmul.f32.gmra.mxu0 %v5143
        %v5347 = vpop.f32.mrf.mxu0
        %v5348 = vadd.f32 %v5216, %v5347
        %5349 = vmatmul.f32.gmra.mxu0 %v5144
        %v5350 = vpop.f32.mrf.mxu0
        %v5351 = vadd.f32 %v5221, %v5350
        %5352 = vmatmul.f32.gmra.mxu0 %v5145
        %v5353 = vpop.f32.mrf.mxu0
        %v5354 = vadd.f32 %v5226, %v5353
        %5355 = vmatmul.f32.gmra.mxu0 %v5146
        %v5356 = vpop.f32.mrf.mxu0
        %v5357 = vadd.f32 %v5231, %v5356
        %5358 = vmatmul.f32.gmra.mxu0 %v5147
        %v5359 = vpop.f32.mrf.mxu0
        %v5360 = vadd.f32 %v5236, %v5359
        %5361 = vdwg.mxu0
        %5362 = vmatpush.msra.mxu0 %v5127
        %5363 = vmatpush.msra.mxu0 %v5119
        %5364 = vmatpush.msra.mxu0 %v5111
        %5365 = vmatpush.msra.mxu0 %v5103
        %5366 = vmatpush.msra.mxu0 %v5095
        %5367 = vmatpush.msra.mxu0 %v5087
        %5368 = vmatpush.msra.mxu0 %v5079
        %5369 = vmatpush.msra.mxu0 %v5071
        %5370 = vmatpush.msra.mxu0 %v5063
        %5371 = vmatpush.msra.mxu0 %v5055
        %5372 = vmatpush.msra.mxu0 %v5047
        %5373 = vmatpush.msra.mxu0 %v5039
        %5374 = vmatpush.msra.mxu0 %v5031
        %5375 = vmatpush.msra.mxu0 %v5023
        %5376 = vmatpush.msra.mxu0 %v5015
        %5377 = vmatpush.msra.mxu0 %v5007
        %5378 = vmatmul.f32.gmra.mxu0 %v5133
        %v5379 = vpop.f32.mrf.mxu0
        %v5380 = vadd.f32 %v5166, %v5379
        %5381 = vmatmul.f32.gmra.mxu0 %v5134
        %v5382 = vpop.f32.mrf.mxu0
        %v5383 = vadd.f32 %v5171, %v5382
        %5384 = vmatmul.f32.gmra.mxu0 %v5135
        %v5385 = vpop.f32.mrf.mxu0
        %v5386 = vadd.f32 %v5176, %v5385
        %5387 = vmatmul.f32.gmra.mxu0 %v5136
        %v5388 = vpop.f32.mrf.mxu0
        %v5389 = vadd.f32 %v5181, %v5388
        %5390 = vmatmul.f32.gmra.mxu0 %v5137
        %v5391 = vpop.f32.mrf.mxu0
        %v5392 = vadd.f32 %v5186, %v5391
        %5393 = vmatmul.f32.gmra.mxu0 %v5138
        %v5394 = vpop.f32.mrf.mxu0
        %v5395 = vadd.f32 %v5191, %v5394
        %5396 = vmatmul.f32.gmra.mxu0 %v5139
        %v5397 = vpop.f32.mrf.mxu0
        %v5398 = vadd.f32 %v5196, %v5397
        %5399 = vmatmul.f32.gmra.mxu0 %v5140
        %v5400 = vpop.f32.mrf.mxu0
        %v5401 = vadd.f32 %v5201, %v5400
        %5402 = vmatmul.f32.gmra.mxu0 %v5141
        %v5403 = vpop.f32.mrf.mxu0
        %v5404 = vadd.f32 %v5206, %v5403
        %5405 = vmatmul.f32.gmra.mxu0 %v5142
        %v5406 = vpop.f32.mrf.mxu0
        %v5407 = vadd.f32 %v5211, %v5406
        %5408 = vmatmul.f32.gmra.mxu0 %v5143
        %v5409 = vpop.f32.mrf.mxu0
        %v5410 = vadd.f32 %v5216, %v5409
        %5411 = vmatmul.f32.gmra.mxu0 %v5144
        %v5412 = vpop.f32.mrf.mxu0
        %v5413 = vadd.f32 %v5221, %v5412
        %5414 = vmatmul.f32.gmra.mxu0 %v5145
        %v5415 = vpop.f32.mrf.mxu0
        %v5416 = vadd.f32 %v5226, %v5415
        %5417 = vmatmul.f32.gmra.mxu0 %v5146
        %v5418 = vpop.f32.mrf.mxu0
        %v5419 = vadd.f32 %v5231, %v5418
        %5420 = vmatmul.f32.gmra.mxu0 %v5147
        %v5421 = vpop.f32.mrf.mxu0
        %v5422 = vadd.f32 %v5236, %v5421
        %5423 = vdwg.mxu0
        %5424 = vmatpush.msra.mxu0 %v5128
        %5425 = vmatpush.msra.mxu0 %v5120
        %5426 = vmatpush.msra.mxu0 %v5112
        %5427 = vmatpush.msra.mxu0 %v5104
        %5428 = vmatpush.msra.mxu0 %v5096
        %5429 = vmatpush.msra.mxu0 %v5088
        %5430 = vmatpush.msra.mxu0 %v5080
        %5431 = vmatpush.msra.mxu0 %v5072
        %5432 = vmatpush.msra.mxu0 %v5064
        %5433 = vmatpush.msra.mxu0 %v5056
        %5434 = vmatpush.msra.mxu0 %v5048
        %5435 = vmatpush.msra.mxu0 %v5040
        %5436 = vmatpush.msra.mxu0 %v5032
        %5437 = vmatpush.msra.mxu0 %v5024
        %5438 = vmatpush.msra.mxu0 %v5016
        %5439 = vmatpush.msra.mxu0 %v5008
        %5440 = vmatmul.f32.gmra.mxu0 %v5133
        %v5441 = vpop.f32.mrf.mxu0
        %v5442 = vadd.f32 %v5166, %v5441
        %5443 = vmatmul.f32.gmra.mxu0 %v5134
        %v5444 = vpop.f32.mrf.mxu0
        %v5445 = vadd.f32 %v5171, %v5444
        %5446 = vmatmul.f32.gmra.mxu0 %v5135
        %v5447 = vpop.f32.mrf.mxu0
        %v5448 = vadd.f32 %v5176, %v5447
        %5449 = vmatmul.f32.gmra.mxu0 %v5136
        %v5450 = vpop.f32.mrf.mxu0
        %v5451 = vadd.f32 %v5181, %v5450
        %5452 = vmatmul.f32.gmra.mxu0 %v5137
        %v5453 = vpop.f32.mrf.mxu0
        %v5454 = vadd.f32 %v5186, %v5453
        %5455 = vmatmul.f32.gmra.mxu0 %v5138
        %v5456 = vpop.f32.mrf.mxu0
        %v5457 = vadd.f32 %v5191, %v5456
        %5458 = vmatmul.f32.gmra.mxu0 %v5139
        %v5459 = vpop.f32.mrf.mxu0
        %v5460 = vadd.f32 %v5196, %v5459
        %5461 = vmatmul.f32.gmra.mxu0 %v5140
        %v5462 = vpop.f32.mrf.mxu0
        %v5463 = vadd.f32 %v5201, %v5462
        %5464 = vmatmul.f32.gmra.mxu0 %v5141
        %v5465 = vpop.f32.mrf.mxu0
        %v5466 = vadd.f32 %v5206, %v5465
        %5467 = vmatmul.f32.gmra.mxu0 %v5142
        %v5468 = vpop.f32.mrf.mxu0
        %v5469 = vadd.f32 %v5211, %v5468
        %5470 = vmatmul.f32.gmra.mxu0 %v5143
        %v5471 = vpop.f32.mrf.mxu0
        %v5472 = vadd.f32 %v5216, %v5471
        %5473 = vmatmul.f32.gmra.mxu0 %v5144
        %v5474 = vpop.f32.mrf.mxu0
        %v5475 = vadd.f32 %v5221, %v5474
        %5476 = vmatmul.f32.gmra.mxu0 %v5145
        %v5477 = vpop.f32.mrf.mxu0
        %v5478 = vadd.f32 %v5226, %v5477
        %5479 = vmatmul.f32.gmra.mxu0 %v5146
        %v5480 = vpop.f32.mrf.mxu0
        %v5481 = vadd.f32 %v5231, %v5480
        %5482 = vmatmul.f32.gmra.mxu0 %v5147
        %v5483 = vpop.f32.mrf.mxu0
        %v5484 = vadd.f32 %v5236, %v5483
        %5485 = vdwg.mxu0
        %5486 = vmatpush.msra.mxu0 %v5129
        %5487 = vmatpush.msra.mxu0 %v5121
        %5488 = vmatpush.msra.mxu0 %v5113
        %5489 = vmatpush.msra.mxu0 %v5105
        %5490 = vmatpush.msra.mxu0 %v5097
        %5491 = vmatpush.msra.mxu0 %v5089
        %5492 = vmatpush.msra.mxu0 %v5081
        %5493 = vmatpush.msra.mxu0 %v5073
        %5494 = vmatpush.msra.mxu0 %v5065
        %5495 = vmatpush.msra.mxu0 %v5057
        %5496 = vmatpush.msra.mxu0 %v5049
        %5497 = vmatpush.msra.mxu0 %v5041
        %5498 = vmatpush.msra.mxu0 %v5033
        %5499 = vmatpush.msra.mxu0 %v5025
        %5500 = vmatpush.msra.mxu0 %v5017
        %5501 = vmatpush.msra.mxu0 %v5009
        %5502 = vmatmul.f32.gmra.mxu0 %v5133
        %v5503 = vpop.f32.mrf.mxu0
        %v5504 = vadd.f32 %v5166, %v5503
        %5505 = vmatmul.f32.gmra.mxu0 %v5134
        %v5506 = vpop.f32.mrf.mxu0
        %v5507 = vadd.f32 %v5171, %v5506
        %5508 = vmatmul.f32.gmra.mxu0 %v5135
        %v5509 = vpop.f32.mrf.mxu0
        %v5510 = vadd.f32 %v5176, %v5509
        %5511 = vmatmul.f32.gmra.mxu0 %v5136
        %v5512 = vpop.f32.mrf.mxu0
        %v5513 = vadd.f32 %v5181, %v5512
        %5514 = vmatmul.f32.gmra.mxu0 %v5137
        %v5515 = vpop.f32.mrf.mxu0
        %v5516 = vadd.f32 %v5186, %v5515
        %5517 = vmatmul.f32.gmra.mxu0 %v5138
        %v5518 = vpop.f32.mrf.mxu0
        %v5519 = vadd.f32 %v5191, %v5518
        %5520 = vmatmul.f32.gmra.mxu0 %v5139
        %v5521 = vpop.f32.mrf.mxu0
        %v5522 = vadd.f32 %v5196, %v5521
        %5523 = vmatmul.f32.gmra.mxu0 %v5140
        %v5524 = vpop.f32.mrf.mxu0
        %v5525 = vadd.f32 %v5201, %v5524
        %5526 = vmatmul.f32.gmra.mxu0 %v5141
        %v5527 = vpop.f32.mrf.mxu0
        %v5528 = vadd.f32 %v5206, %v5527
        %5529 = vmatmul.f32.gmra.mxu0 %v5142
        %v5530 = vpop.f32.mrf.mxu0
        %v5531 = vadd.f32 %v5211, %v5530
        %5532 = vmatmul.f32.gmra.mxu0 %v5143
        %v5533 = vpop.f32.mrf.mxu0
        %v5534 = vadd.f32 %v5216, %v5533
        %5535 = vmatmul.f32.gmra.mxu0 %v5144
        %v5536 = vpop.f32.mrf.mxu0
        %v5537 = vadd.f32 %v5221, %v5536
        %5538 = vmatmul.f32.gmra.mxu0 %v5145
        %v5539 = vpop.f32.mrf.mxu0
        %v5540 = vadd.f32 %v5226, %v5539
        %5541 = vmatmul.f32.gmra.mxu0 %v5146
        %v5542 = vpop.f32.mrf.mxu0
        %v5543 = vadd.f32 %v5231, %v5542
        %5544 = vmatmul.f32.gmra.mxu0 %v5147
        %v5545 = vpop.f32.mrf.mxu0
        %v5546 = vadd.f32 %v5236, %v5545
        %5547 = vdwg.mxu0
        %5548 = vmatpush.msra.mxu0 %v5130
        %5549 = vmatpush.msra.mxu0 %v5122
        %5550 = vmatpush.msra.mxu0 %v5114
        %5551 = vmatpush.msra.mxu0 %v5106
        %5552 = vmatpush.msra.mxu0 %v5098
        %5553 = vmatpush.msra.mxu0 %v5090
        %5554 = vmatpush.msra.mxu0 %v5082
        %5555 = vmatpush.msra.mxu0 %v5074
        %5556 = vmatpush.msra.mxu0 %v5066
        %5557 = vmatpush.msra.mxu0 %v5058
        %5558 = vmatpush.msra.mxu0 %v5050
        %5559 = vmatpush.msra.mxu0 %v5042
        %5560 = vmatpush.msra.mxu0 %v5034
        %5561 = vmatpush.msra.mxu0 %v5026
        %5562 = vmatpush.msra.mxu0 %v5018
        %5563 = vmatpush.msra.mxu0 %v5010
        %5564 = vmatmul.f32.gmra.mxu0 %v5133
        %v5565 = vpop.f32.mrf.mxu0
        %v5566 = vadd.f32 %v5166, %v5565
        %5567 = vmatmul.f32.gmra.mxu0 %v5134
        %v5568 = vpop.f32.mrf.mxu0
        %v5569 = vadd.f32 %v5171, %v5568
        %5570 = vmatmul.f32.gmra.mxu0 %v5135
        %v5571 = vpop.f32.mrf.mxu0
        %v5572 = vadd.f32 %v5176, %v5571
        %5573 = vmatmul.f32.gmra.mxu0 %v5136
        %v5574 = vpop.f32.mrf.mxu0
        %v5575 = vadd.f32 %v5181, %v5574
        %5576 = vmatmul.f32.gmra.mxu0 %v5137
        %v5577 = vpop.f32.mrf.mxu0
        %v5578 = vadd.f32 %v5186, %v5577
        %5579 = vmatmul.f32.gmra.mxu0 %v5138
        %v5580 = vpop.f32.mrf.mxu0
        %v5581 = vadd.f32 %v5191, %v5580
        %5582 = vmatmul.f32.gmra.mxu0 %v5139
        %v5583 = vpop.f32.mrf.mxu0
        %v5584 = vadd.f32 %v5196, %v5583
        %5585 = vmatmul.f32.gmra.mxu0 %v5140
        %v5586 = vpop.f32.mrf.mxu0
        %v5587 = vadd.f32 %v5201, %v5586
        %5588 = vmatmul.f32.gmra.mxu0 %v5141
        %v5589 = vpop.f32.mrf.mxu0
        %v5590 = vadd.f32 %v5206, %v5589
        %5591 = vmatmul.f32.gmra.mxu0 %v5142
        %v5592 = vpop.f32.mrf.mxu0
        %v5593 = vadd.f32 %v5211, %v5592
        %5594 = vmatmul.f32.gmra.mxu0 %v5143
        %v5595 = vpop.f32.mrf.mxu0
        %v5596 = vadd.f32 %v5216, %v5595
        %5597 = vmatmul.f32.gmra.mxu0 %v5144
        %v5598 = vpop.f32.mrf.mxu0
        %v5599 = vadd.f32 %v5221, %v5598
        %5600 = vmatmul.f32.gmra.mxu0 %v5145
        %v5601 = vpop.f32.mrf.mxu0
        %v5602 = vadd.f32 %v5226, %v5601
        %5603 = vmatmul.f32.gmra.mxu0 %v5146
        %v5604 = vpop.f32.mrf.mxu0
        %v5605 = vadd.f32 %v5231, %v5604
        %5606 = vmatmul.f32.gmra.mxu0 %v5147
        %v5607 = vpop.f32.mrf.mxu0
        %v5608 = vadd.f32 %v5236, %v5607
        %5609 = vdwg.mxu0
        %5610 = vmatpush.msra.mxu0 %v5131
        %5611 = vmatpush.msra.mxu0 %v5123
        %5612 = vmatpush.msra.mxu0 %v5115
        %5613 = vmatpush.msra.mxu0 %v5107
        %5614 = vmatpush.msra.mxu0 %v5099
        %5615 = vmatpush.msra.mxu0 %v5091
        %5616 = vmatpush.msra.mxu0 %v5083
        %5617 = vmatpush.msra.mxu0 %v5075
        %5618 = vmatpush.msra.mxu0 %v5067
        %5619 = vmatpush.msra.mxu0 %v5059
        %5620 = vmatpush.msra.mxu0 %v5051
        %5621 = vmatpush.msra.mxu0 %v5043
        %5622 = vmatpush.msra.mxu0 %v5035
        %5623 = vmatpush.msra.mxu0 %v5027
        %5624 = vmatpush.msra.mxu0 %v5019
        %5625 = vmatpush.msra.mxu0 %v5011
        %5626 = vmatmul.f32.gmra.mxu0 %v5133
        %v5627 = vpop.f32.mrf.mxu0
        %v5628 = vadd.f32 %v5166, %v5627
        %5629 = vmatmul.f32.gmra.mxu0 %v5134
        %v5630 = vpop.f32.mrf.mxu0
        %v5631 = vadd.f32 %v5171, %v5630
        %5632 = vmatmul.f32.gmra.mxu0 %v5135
        %v5633 = vpop.f32.mrf.mxu0
        %v5634 = vadd.f32 %v5176, %v5633
        %5635 = vmatmul.f32.gmra.mxu0 %v5136
        %v5636 = vpop.f32.mrf.mxu0
        %v5637 = vadd.f32 %v5181, %v5636
        %5638 = vmatmul.f32.gmra.mxu0 %v5137
        %v5639 = vpop.f32.mrf.mxu0
        %v5640 = vadd.f32 %v5186, %v5639
        %5641 = vmatmul.f32.gmra.mxu0 %v5138
        %v5642 = vpop.f32.mrf.mxu0
        %v5643 = vadd.f32 %v5191, %v5642
        %5644 = vmatmul.f32.gmra.mxu0 %v5139
        %v5645 = vpop.f32.mrf.mxu0
        %v5646 = vadd.f32 %v5196, %v5645
        %5647 = vmatmul.f32.gmra.mxu0 %v5140
        %v5648 = vpop.f32.mrf.mxu0
        %v5649 = vadd.f32 %v5201, %v5648
        %5650 = vmatmul.f32.gmra.mxu0 %v5141
        %v5651 = vpop.f32.mrf.mxu0
        %v5652 = vadd.f32 %v5206, %v5651
        %5653 = vmatmul.f32.gmra.mxu0 %v5142
        %v5654 = vpop.f32.mrf.mxu0
        %v5655 = vadd.f32 %v5211, %v5654
        %5656 = vmatmul.f32.gmra.mxu0 %v5143
        %v5657 = vpop.f32.mrf.mxu0
        %v5658 = vadd.f32 %v5216, %v5657
        %5659 = vmatmul.f32.gmra.mxu0 %v5144
        %v5660 = vpop.f32.mrf.mxu0
        %v5661 = vadd.f32 %v5221, %v5660
        %5662 = vmatmul.f32.gmra.mxu0 %v5145
        %v5663 = vpop.f32.mrf.mxu0
        %v5664 = vadd.f32 %v5226, %v5663
        %5665 = vmatmul.f32.gmra.mxu0 %v5146
        %v5666 = vpop.f32.mrf.mxu0
        %v5667 = vadd.f32 %v5231, %v5666
        %5668 = vmatmul.f32.gmra.mxu0 %v5147
        %v5669 = vpop.f32.mrf.mxu0
        %v5670 = vadd.f32 %v5236, %v5669
        %5671 = vdwg.mxu0
        %5672 = vmatpush.msra.mxu0 %v5132
        %5673 = vmatpush.msra.mxu0 %v5124
        %5674 = vmatpush.msra.mxu0 %v5116
        %5675 = vmatpush.msra.mxu0 %v5108
        %5676 = vmatpush.msra.mxu0 %v5100
        %5677 = vmatpush.msra.mxu0 %v5092
        %5678 = vmatpush.msra.mxu0 %v5084
        %5679 = vmatpush.msra.mxu0 %v5076
        %5680 = vmatpush.msra.mxu0 %v5068
        %5681 = vmatpush.msra.mxu0 %v5060
        %5682 = vmatpush.msra.mxu0 %v5052
        %5683 = vmatpush.msra.mxu0 %v5044
        %5684 = vmatpush.msra.mxu0 %v5036
        %5685 = vmatpush.msra.mxu0 %v5028
        %5686 = vmatpush.msra.mxu0 %v5020
        %5687 = vmatpush.msra.mxu0 %v5012
        %5688 = vmatmul.f32.gmra.mxu0 %v5133
        %v5689 = vpop.f32.mrf.mxu0
        %v5690 = vadd.f32 %v5166, %v5689
        %5691 = vmatmul.f32.gmra.mxu0 %v5134
        %v5692 = vpop.f32.mrf.mxu0
        %v5693 = vadd.f32 %v5171, %v5692
        %5694 = vmatmul.f32.gmra.mxu0 %v5135
        %v5695 = vpop.f32.mrf.mxu0
        %v5696 = vadd.f32 %v5176, %v5695
        %5697 = vmatmul.f32.gmra.mxu0 %v5136
        %v5698 = vpop.f32.mrf.mxu0
        %v5699 = vadd.f32 %v5181, %v5698
        %5700 = vmatmul.f32.gmra.mxu0 %v5137
        %v5701 = vpop.f32.mrf.mxu0
        %v5702 = vadd.f32 %v5186, %v5701
        %5703 = vmatmul.f32.gmra.mxu0 %v5138
        %v5704 = vpop.f32.mrf.mxu0
        %v5705 = vadd.f32 %v5191, %v5704
        %5706 = vmatmul.f32.gmra.mxu0 %v5139
        %v5707 = vpop.f32.mrf.mxu0
        %v5708 = vadd.f32 %v5196, %v5707
        %5709 = vmatmul.f32.gmra.mxu0 %v5140
        %v5710 = vpop.f32.mrf.mxu0
        %v5711 = vadd.f32 %v5201, %v5710
        %5712 = vmatmul.f32.gmra.mxu0 %v5141
        %v5713 = vpop.f32.mrf.mxu0
        %v5714 = vadd.f32 %v5206, %v5713
        %5715 = vmatmul.f32.gmra.mxu0 %v5142
        %v5716 = vpop.f32.mrf.mxu0
        %v5717 = vadd.f32 %v5211, %v5716
        %5718 = vmatmul.f32.gmra.mxu0 %v5143
        %v5719 = vpop.f32.mrf.mxu0
        %v5720 = vadd.f32 %v5216, %v5719
        %5721 = vmatmul.f32.gmra.mxu0 %v5144
        %v5722 = vpop.f32.mrf.mxu0
        %v5723 = vadd.f32 %v5221, %v5722
        %5724 = vmatmul.f32.gmra.mxu0 %v5145
        %v5725 = vpop.f32.mrf.mxu0
        %v5726 = vadd.f32 %v5226, %v5725
        %5727 = vmatmul.f32.gmra.mxu0 %v5146
        %v5728 = vpop.f32.mrf.mxu0
        %v5729 = vadd.f32 %v5231, %v5728
        %5730 = vmatmul.f32.gmra.mxu0 %v5147
        %v5731 = vpop.f32.mrf.mxu0
        %v5732 = vadd.f32 %v5236, %v5731
        %5733 = vdwg.mxu0
        %v5734 = vmax.f32 %v5256, %v5259
        %v5735 = vmax.f32 %v5734, %v5262
        %v5736 = vmax.f32 %v5735, %v5265
        %v5737 = vrot.slane %v5736, 4
        %v5738 = vmax.f32 %v5736, %v5737
        %v5739 = vrot.slane %v5738, 2
        %v5740 = vmax.f32 %v5738, %v5739
        %v5741 = vrot.slane %v5740, 1
        %v5742 = vmax.f32 %v5740, %v5741
        %v5743 = vmax.f32 %v5318, %v5321
        %v5744 = vmax.f32 %v5743, %v5324
        %v5745 = vmax.f32 %v5744, %v5327
        %v5746 = vrot.slane %v5745, 4
        %v5747 = vmax.f32 %v5745, %v5746
        %v5748 = vrot.slane %v5747, 2
        %v5749 = vmax.f32 %v5747, %v5748
        %v5750 = vrot.slane %v5749, 1
        %v5751 = vmax.f32 %v5749, %v5750
        %v5752 = vmax.f32 %v5380, %v5383
        %v5753 = vmax.f32 %v5752, %v5386
        %v5754 = vmax.f32 %v5753, %v5389
        %v5755 = vrot.slane %v5754, 4
        %v5756 = vmax.f32 %v5754, %v5755
        %v5757 = vrot.slane %v5756, 2
        %v5758 = vmax.f32 %v5756, %v5757
        %v5759 = vrot.slane %v5758, 1
        %v5760 = vmax.f32 %v5758, %v5759
        %v5761 = vmax.f32 %v5442, %v5445
        %v5762 = vmax.f32 %v5761, %v5448
        %v5763 = vmax.f32 %v5762, %v5451
        %v5764 = vrot.slane %v5763, 4
        %v5765 = vmax.f32 %v5763, %v5764
        %v5766 = vrot.slane %v5765, 2
        %v5767 = vmax.f32 %v5765, %v5766
        %v5768 = vrot.slane %v5767, 1
        %v5769 = vmax.f32 %v5767, %v5768
        %v5770 = vmax.f32 %v5504, %v5507
        %v5771 = vmax.f32 %v5770, %v5510
        %v5772 = vmax.f32 %v5771, %v5513
        %v5773 = vrot.slane %v5772, 4
        %v5774 = vmax.f32 %v5772, %v5773
        %v5775 = vrot.slane %v5774, 2
        %v5776 = vmax.f32 %v5774, %v5775
        %v5777 = vrot.slane %v5776, 1
        %v5778 = vmax.f32 %v5776, %v5777
        %v5779 = vmax.f32 %v5566, %v5569
        %v5780 = vmax.f32 %v5779, %v5572
        %v5781 = vmax.f32 %v5780, %v5575
        %v5782 = vrot.slane %v5781, 4
        %v5783 = vmax.f32 %v5781, %v5782
        %v5784 = vrot.slane %v5783, 2
        %v5785 = vmax.f32 %v5783, %v5784
        %v5786 = vrot.slane %v5785, 1
        %v5787 = vmax.f32 %v5785, %v5786
        %v5788 = vmax.f32 %v5628, %v5631
        %v5789 = vmax.f32 %v5788, %v5634
        %v5790 = vmax.f32 %v5789, %v5637
        %v5791 = vrot.slane %v5790, 4
        %v5792 = vmax.f32 %v5790, %v5791
        %v5793 = vrot.slane %v5792, 2
        %v5794 = vmax.f32 %v5792, %v5793
        %v5795 = vrot.slane %v5794, 1
        %v5796 = vmax.f32 %v5794, %v5795
        %v5797 = vmax.f32 %v5690, %v5693
        %v5798 = vmax.f32 %v5797, %v5696
        %v5799 = vmax.f32 %v5798, %v5699
        %v5800 = vrot.slane %v5799, 4
        %v5801 = vmax.f32 %v5799, %v5800
        %v5802 = vrot.slane %v5801, 2
        %v5803 = vmax.f32 %v5801, %v5802
        %v5804 = vrot.slane %v5803, 1
        %v5805 = vmax.f32 %v5803, %v5804
        %v5806 = vsub.f32 %v5256, %v5742
        %v5807 = vsub.f32 %v5318, %v5751
        %v5808 = vsub.f32 %v5380, %v5760
        %v5809 = vsub.f32 %v5442, %v5769
        %v5810 = vsub.f32 %v5504, %v5778
        %v5811 = vsub.f32 %v5566, %v5787
        %v5812 = vsub.f32 %v5628, %v5796
        %v5813 = vsub.f32 %v5690, %v5805
        %v5814 = vsub.f32 %v5259, %v5742
        %v5815 = vsub.f32 %v5321, %v5751
        %v5816 = vsub.f32 %v5383, %v5760
        %v5817 = vsub.f32 %v5445, %v5769
        %v5818 = vsub.f32 %v5507, %v5778
        %v5819 = vsub.f32 %v5569, %v5787
        %v5820 = vsub.f32 %v5631, %v5796
        %v5821 = vsub.f32 %v5693, %v5805
        %v5822 = vsub.f32 %v5262, %v5742
        %v5823 = vsub.f32 %v5324, %v5751
        %v5824 = vsub.f32 %v5386, %v5760
        %v5825 = vsub.f32 %v5448, %v5769
        %v5826 = vsub.f32 %v5510, %v5778
        %v5827 = vsub.f32 %v5572, %v5787
        %v5828 = vsub.f32 %v5634, %v5796
        %v5829 = vsub.f32 %v5696, %v5805
        %v5830 = vsub.f32 %v5265, %v5742
        %v5831 = vsub.f32 %v5327, %v5751
        %v5832 = vsub.f32 %v5389, %v5760
        %v5833 = vsub.f32 %v5451, %v5769
        %v5834 = vsub.f32 %v5513, %v5778
        %v5835 = vsub.f32 %v5575, %v5787
        %v5836 = vsub.f32 %v5637, %v5796
        %v5837 = vsub.f32 %v5699, %v5805
        %v5838 = vmul.f32 %v5806, 1.442695
        %v5839 = vpow.pop %v5838
        %v5840 = vmul.f32 %v5807, 1.442695
        %v5841 = vpow.pop %v5840
        %v5842 = vmul.f32 %v5808, 1.442695
        %v5843 = vpow.pop %v5842
        %v5844 = vmul.f32 %v5809, 1.442695
        %v5845 = vpow.pop %v5844
        %v5846 = vmul.f32 %v5810, 1.442695
        %v5847 = vpow.pop %v5846
        %v5848 = vmul.f32 %v5811, 1.442695
        %v5849 = vpow.pop %v5848
        %v5850 = vmul.f32 %v5812, 1.442695
        %v5851 = vpow.pop %v5850
        %v5852 = vmul.f32 %v5813, 1.442695
        %v5853 = vpow.pop %v5852
        %v5854 = vmul.f32 %v5814, 1.442695
        %v5855 = vpow.pop %v5854
        %v5856 = vmul.f32 %v5815, 1.442695
        %v5857 = vpow.pop %v5856
        %v5858 = vmul.f32 %v5816, 1.442695
        %v5859 = vpow.pop %v5858
        %v5860 = vmul.f32 %v5817, 1.442695
        %v5861 = vpow.pop %v5860
        %v5862 = vmul.f32 %v5818, 1.442695
        %v5863 = vpow.pop %v5862
        %v5864 = vmul.f32 %v5819, 1.442695
        %v5865 = vpow.pop %v5864
        %v5866 = vmul.f32 %v5820, 1.442695
        %v5867 = vpow.pop %v5866
        %v5868 = vmul.f32 %v5821, 1.442695
        %v5869 = vpow.pop %v5868
        %v5870 = vmul.f32 %v5822, 1.442695
        %v5871 = vpow.pop %v5870
        %v5872 = vmul.f32 %v5823, 1.442695
        %v5873 = vpow.pop %v5872
        %v5874 = vmul.f32 %v5824, 1.442695
        %v5875 = vpow.pop %v5874
        %v5876 = vmul.f32 %v5825, 1.442695
        %v5877 = vpow.pop %v5876
        %v5878 = vmul.f32 %v5826, 1.442695
        %v5879 = vpow.pop %v5878
        %v5880 = vmul.f32 %v5827, 1.442695
        %v5881 = vpow.pop %v5880
        %v5882 = vmul.f32 %v5828, 1.442695
        %v5883 = vpow.pop %v5882
        %v5884 = vmul.f32 %v5829, 1.442695
        %v5885 = vpow.pop %v5884
        %v5886 = vmul.f32 %v5830, 1.442695
        %v5887 = vpow.pop %v5886
        %v5888 = vmul.f32 %v5831, 1.442695
        %v5889 = vpow.pop %v5888
        %v5890 = vmul.f32 %v5832, 1.442695
        %v5891 = vpow.pop %v5890
        %v5892 = vmul.f32 %v5833, 1.442695
        %v5893 = vpow.pop %v5892
        %v5894 = vmul.f32 %v5834, 1.442695
        %v5895 = vpow.pop %v5894
        %v5896 = vmul.f32 %v5835, 1.442695
        %v5897 = vpow.pop %v5896
        %v5898 = vmul.f32 %v5836, 1.442695
        %v5899 = vpow.pop %v5898
        %v5900 = vmul.f32 %v5837, 1.442695
        %v5901 = vpow.pop %v5900
        %v5902 = vadd.f32 %v5839, %v5855
        %v5903 = vadd.f32 %v5902, %v5871
        %v5904 = vadd.f32 %v5903, %v5887
        %v5905 = vrot.slane %v5904, 4
        %v5906 = vadd.f32 %v5904, %v5905
        %v5907 = vrot.slane %v5906, 2
        %v5908 = vadd.f32 %v5906, %v5907
        %v5909 = vrot.slane %v5908, 1
        %v5910 = vadd.f32 %v5908, %v5909
        %v5911 = vadd.f32 %v5841, %v5857
        %v5912 = vadd.f32 %v5911, %v5873
        %v5913 = vadd.f32 %v5912, %v5889
        %v5914 = vrot.slane %v5913, 4
        %v5915 = vadd.f32 %v5913, %v5914
        %v5916 = vrot.slane %v5915, 2
        %v5917 = vadd.f32 %v5915, %v5916
        %v5918 = vrot.slane %v5917, 1
        %v5919 = vadd.f32 %v5917, %v5918
        %v5920 = vadd.f32 %v5843, %v5859
        %v5921 = vadd.f32 %v5920, %v5875
        %v5922 = vadd.f32 %v5921, %v5891
        %v5923 = vrot.slane %v5922, 4
        %v5924 = vadd.f32 %v5922, %v5923
        %v5925 = vrot.slane %v5924, 2
        %v5926 = vadd.f32 %v5924, %v5925
        %v5927 = vrot.slane %v5926, 1
        %v5928 = vadd.f32 %v5926, %v5927
        %v5929 = vadd.f32 %v5845, %v5861
        %v5930 = vadd.f32 %v5929, %v5877
        %v5931 = vadd.f32 %v5930, %v5893
        %v5932 = vrot.slane %v5931, 4
        %v5933 = vadd.f32 %v5931, %v5932
        %v5934 = vrot.slane %v5933, 2
        %v5935 = vadd.f32 %v5933, %v5934
        %v5936 = vrot.slane %v5935, 1
        %v5937 = vadd.f32 %v5935, %v5936
        %v5938 = vadd.f32 %v5847, %v5863
        %v5939 = vadd.f32 %v5938, %v5879
        %v5940 = vadd.f32 %v5939, %v5895
        %v5941 = vrot.slane %v5940, 4
        %v5942 = vadd.f32 %v5940, %v5941
        %v5943 = vrot.slane %v5942, 2
        %v5944 = vadd.f32 %v5942, %v5943
        %v5945 = vrot.slane %v5944, 1
        %v5946 = vadd.f32 %v5944, %v5945
        %v5947 = vadd.f32 %v5849, %v5865
        %v5948 = vadd.f32 %v5947, %v5881
        %v5949 = vadd.f32 %v5948, %v5897
        %v5950 = vrot.slane %v5949, 4
        %v5951 = vadd.f32 %v5949, %v5950
        %v5952 = vrot.slane %v5951, 2
        %v5953 = vadd.f32 %v5951, %v5952
        %v5954 = vrot.slane %v5953, 1
        %v5955 = vadd.f32 %v5953, %v5954
        %v5956 = vadd.f32 %v5851, %v5867
        %v5957 = vadd.f32 %v5956, %v5883
        %v5958 = vadd.f32 %v5957, %v5899
        %v5959 = vrot.slane %v5958, 4
        %v5960 = vadd.f32 %v5958, %v5959
        %v5961 = vrot.slane %v5960, 2
        %v5962 = vadd.f32 %v5960, %v5961
        %v5963 = vrot.slane %v5962, 1
        %v5964 = vadd.f32 %v5962, %v5963
        %v5965 = vadd.f32 %v5853, %v5869
        %v5966 = vadd.f32 %v5965, %v5885
        %v5967 = vadd.f32 %v5966, %v5901
        %v5968 = vrot.slane %v5967, 4
        %v5969 = vadd.f32 %v5967, %v5968
        %v5970 = vrot.slane %v5969, 2
        %v5971 = vadd.f32 %v5969, %v5970
        %v5972 = vrot.slane %v5971, 1
        %v5973 = vadd.f32 %v5971, %v5972
        %v5974 = vlog2.pop %v5910
        %v5975 = vmul.f32 %v5974, 0.6931472
        %v5976 = vlog2.pop %v5919
        %v5977 = vmul.f32 %v5976, 0.6931472
        %v5978 = vlog2.pop %v5928
        %v5979 = vmul.f32 %v5978, 0.6931472
        %v5980 = vlog2.pop %v5937
        %v5981 = vmul.f32 %v5980, 0.6931472
        %v5982 = vlog2.pop %v5946
        %v5983 = vmul.f32 %v5982, 0.6931472
        %v5984 = vlog2.pop %v5955
        %v5985 = vmul.f32 %v5984, 0.6931472
        %v5986 = vlog2.pop %v5964
        %v5987 = vmul.f32 %v5986, 0.6931472
        %v5988 = vlog2.pop %v5973
        %v5989 = vmul.f32 %v5988, 0.6931472
        %v5990 = vsub.f32 %v5806, %v5975
        %v5991 = vsub.f32 %v5807, %v5977
        %v5992 = vsub.f32 %v5808, %v5979
        %v5993 = vsub.f32 %v5809, %v5981
        %v5994 = vsub.f32 %v5810, %v5983
        %v5995 = vsub.f32 %v5811, %v5985
        %v5996 = vsub.f32 %v5812, %v5987
        %v5997 = vsub.f32 %v5813, %v5989
        %v5998 = vsub.f32 %v5814, %v5975
        %v5999 = vsub.f32 %v5815, %v5977
        %v6000 = vsub.f32 %v5816, %v5979
        %v6001 = vsub.f32 %v5817, %v5981
        %v6002 = vsub.f32 %v5818, %v5983
        %v6003 = vsub.f32 %v5819, %v5985
        %v6004 = vsub.f32 %v5820, %v5987
        %v6005 = vsub.f32 %v5821, %v5989
        %v6006 = vsub.f32 %v5822, %v5975
        %v6007 = vsub.f32 %v5823, %v5977
        %v6008 = vsub.f32 %v5824, %v5979
        %v6009 = vsub.f32 %v5825, %v5981
        %v6010 = vsub.f32 %v5826, %v5983
        %v6011 = vsub.f32 %v5827, %v5985
        %v6012 = vsub.f32 %v5828, %v5987
        %v6013 = vsub.f32 %v5829, %v5989
        %v6014 = vsub.f32 %v5830, %v5975
        %v6015 = vsub.f32 %v5831, %v5977
        %v6016 = vsub.f32 %v5832, %v5979
        %v6017 = vsub.f32 %v5833, %v5981
        %v6018 = vsub.f32 %v5834, %v5983
        %v6019 = vsub.f32 %v5835, %v5985
        %v6020 = vsub.f32 %v5836, %v5987
        %v6021 = vsub.f32 %v5837, %v5989
        %6022 = vst [vmem:[%s912] sm:$0xff] %v5990
        %6023 = vst [vmem:[%s912 + $0x8] sm:$0xff] %v5991
        %6024 = vst [vmem:[%s912 + $0x10] sm:$0xff] %v5992
        %6025 = vst [vmem:[%s912 + $0x18] sm:$0xff] %v5993
        %6026 = vst [vmem:[%s912 + $0x20] sm:$0xff] %v5994
        %6027 = vst [vmem:[%s912 + $0x28] sm:$0xff] %v5995
        %6028 = vst [vmem:[%s912 + $0x30] sm:$0xff] %v5996
        %6029 = vst [vmem:[%s912 + $0x38] sm:$0xff] %v5997
        %6030 = vst [vmem:[%s912 + $0x40] sm:$0xff] %v5998
        %6031 = vst [vmem:[%s912 + $0x48] sm:$0xff] %v5999
        %6032 = vst [vmem:[%s912 + $0x50] sm:$0xff] %v6000
        %6033 = vst [vmem:[%s912 + $0x58] sm:$0xff] %v6001
        %6034 = vst [vmem:[%s912 + $0x60] sm:$0xff] %v6002
        %6035 = vst [vmem:[%s912 + $0x68] sm:$0xff] %v6003
        %6036 = vst [vmem:[%s912 + $0x70] sm:$0xff] %v6004
        %6037 = vst [vmem:[%s912 + $0x78] sm:$0xff] %v6005
        %6038 = vst [vmem:[%s912 + $0x80] sm:$0xff] %v6006
        %6039 = vst [vmem:[%s912 + $0x88] sm:$0xff] %v6007
        %6040 = vst [vmem:[%s912 + $0x90] sm:$0xff] %v6008
        %6041 = vst [vmem:[%s912 + $0x98] sm:$0xff] %v6009
        %6042 = vst [vmem:[%s912 + $0xa0] sm:$0xff] %v6010
        %6043 = vst [vmem:[%s912 + $0xa8] sm:$0xff] %v6011
        %6044 = vst [vmem:[%s912 + $0xb0] sm:$0xff] %v6012
        %6045 = vst [vmem:[%s912 + $0xb8] sm:$0xff] %v6013
        %6046 = vst [vmem:[%s912 + $0xc0] sm:$0xff] %v6014
        %6047 = vst [vmem:[%s912 + $0xc8] sm:$0xff] %v6015
        %6048 = vst [vmem:[%s912 + $0xd0] sm:$0xff] %v6016
        %6049 = vst [vmem:[%s912 + $0xd8] sm:$0xff] %v6017
        %6050 = vst [vmem:[%s912 + $0xe0] sm:$0xff] %v6018
        %6051 = vst [vmem:[%s912 + $0xe8] sm:$0xff] %v6019
        %6052 = vst [vmem:[%s912 + $0xf0] sm:$0xff] %v6020
        %6053 = vst [vmem:[%s912 + $0xf8] sm:$0xff] %v6021
        %v6054 = vld [vmem:[%s5] sm:$0xff]
        %v6055 = vld [vmem:[%s5 + $0x8] sm:$0xff]
        %v6056 = vld [vmem:[%s5 + $0x10] sm:$0xff]
        %v6057 = vld [vmem:[%s5 + $0x18] sm:$0xff]
        %v6058 = vld [vmem:[%s5 + $0x20] sm:$0xff]
        %v6059 = vld [vmem:[%s5 + $0x28] sm:$0xff]
        %v6060 = vld [vmem:[%s5 + $0x30] sm:$0xff]
        %v6061 = vld [vmem:[%s5 + $0x38] sm:$0xff]
        %v6062 = vld [vmem:[%s5 + $0x40] sm:$0xff]
        %v6063 = vld [vmem:[%s5 + $0x48] sm:$0xff]
        %v6064 = vld [vmem:[%s5 + $0x50] sm:$0x7]
        %v6065 = vlaneseq
        %v6066 = vshrl.u32 %v6065, 7
        %v6067 = vadd.s32 %v6066, 8
        %v6068 = vadd.s32 %v6066, 16
        %v6069 = vadd.s32 %v6066, 24
        %v6070 = vadd.s32 %v6066, 32
        %v6071 = vadd.s32 %v6066, 40
        %v6072 = vadd.s32 %v6066, 48
        %v6073 = vadd.s32 %v6066, 56
        %v6074 = vadd.s32 %v6066, 64
        %v6075 = vadd.s32 %v6066, 72
        %v6076 = vadd.s32 %v6066, 80
        %v6077 = vadd.s32 %v6066, 88
        %v6078 = vadd.s32 %v6066, 96
        %v6079 = vadd.s32 %v6066, 104
        %v6080 = vadd.s32 %v6066, 112
        %v6081 = vadd.s32 %v6066, 120
        %v6082 = vadd.s32 %v6066, 128
        %v6083 = vadd.s32 %v6066, 136
        %v6084 = vadd.s32 %v6066, 144
        %v6085 = vadd.s32 %v6066, 152
        %v6086 = vadd.s32 %v6066, 160
        %v6087 = vadd.s32 %v6066, 168
        %v6088 = vadd.s32 %v6066, 176
        %v6089 = vadd.s32 %v6066, 184
        %v6090 = vadd.s32 %v6066, 192
        %v6091 = vadd.s32 %v6066, 200
        %v6092 = vadd.s32 %v6066, 208
        %v6093 = vadd.s32 %v6066, 216
        %v6094 = vadd.s32 %v6066, 224
        %v6095 = vadd.s32 %v6066, 232
        %v6096 = vadd.s32 %v6066, 240
        %v6097 = vadd.s32 %v6066, 248
        %v6098 = vadd.s32 %v6066, 256
        %v6099 = vadd.s32 %v6066, 264
        %v6100 = vadd.s32 %v6066, 272
        %v6101 = vadd.s32 %v6066, 280
        %v6102 = vadd.s32 %v6066, 288
        %v6103 = vadd.s32 %v6066, 296
        %v6104 = vadd.s32 %v6066, 304
        %v6105 = vadd.s32 %v6066, 312
        %v6106 = vadd.s32 %v6066, 320
        %v6107 = vadd.s32 %v6066, 328
        %v6108 = vadd.s32 %v6066, 336
        %v6109 = vadd.s32 %v6066, 344
        %v6110 = vadd.s32 %v6066, 352
        %v6111 = vadd.s32 %v6066, 360
        %v6112 = vadd.s32 %v6066, 368
        %v6113 = vadd.s32 %v6066, 376
        %v6114 = vadd.s32 %v6066, 384
        %v6115 = vadd.s32 %v6066, 392
        %v6116 = vadd.s32 %v6066, 400
        %v6117 = vadd.s32 %v6066, 408
        %v6118 = vadd.s32 %v6066, 416
        %v6119 = vadd.s32 %v6066, 424
        %v6120 = vadd.s32 %v6066, 432
        %v6121 = vadd.s32 %v6066, 440
        %v6122 = vadd.s32 %v6066, 448
        %v6123 = vadd.s32 %v6066, 456
        %v6124 = vadd.s32 %v6066, 464
        %v6125 = vadd.s32 %v6066, 472
        %v6126 = vadd.s32 %v6066, 480
        %v6127 = vadd.s32 %v6066, 488
        %v6128 = vadd.s32 %v6066, 496
        %v6129 = vadd.s32 %v6066, 504
        %v6130 = vadd.s32 %v6066, 512
        %v6131 = vadd.s32 %v6066, 520
        %v6132 = vadd.s32 %v6066, 528
        %v6133 = vadd.s32 %v6066, 536
        %v6134 = vadd.s32 %v6066, 544
        %v6135 = vadd.s32 %v6066, 552
        %v6136 = vadd.s32 %v6066, 560
        %v6137 = vadd.s32 %v6066, 568
        %v6138 = vadd.s32 %v6066, 576
        %v6139 = vadd.s32 %v6066, 584
        %v6140 = vadd.s32 %v6066, 592
        %v6141 = vadd.s32 %v6066, 600
        %v6142 = vadd.s32 %v6066, 608
        %v6143 = vadd.s32 %v6066, 616
        %v6144 = vadd.s32 %v6066, 624
        %v6145 = vadd.s32 %v6066, 632
        %v6146 = vadd.s32 %v6066, 640
        %v6147 = vadd.s32 %v6066, 648
        %v6148 = vadd.s32 %v6066, 656
        %v6149 = vadd.s32 %v6066, 664
        %v6150 = vadd.s32 %v6066, 672
        %v6151 = vadd.s32 %v6066, 680
        %v6152 = vadd.s32 %v6066, 688
        %v6153 = vadd.s32 %v6066, 696
        %v6154 = vadd.s32 %v6066, 704
        %v6155 = vadd.s32 %v6066, 712
        %v6156 = vadd.s32 %v6066, 720
        %v6157 = vadd.s32 %v6066, 728
        %v6158 = vadd.s32 %v6066, 736
        %v6159 = vadd.s32 %v6066, 744
        %v6160 = vadd.s32 %v6066, 752
        %v6161 = vadd.s32 %v6066, 760
        %v6162 = vadd.s32 %v6066, 768
        %v6163 = vadd.s32 %v6066, 776
        %v6164 = vadd.s32 %v6066, 784
        %v6165 = vadd.s32 %v6066, 792
        %v6166 = vadd.s32 %v6066, 800
        %v6167 = vadd.s32 %v6066, 808
        %v6168 = vadd.s32 %v6066, 816
        %v6169 = vadd.s32 %v6066, 824
        %v6170 = vadd.s32 %v6066, 832
        %v6171 = vadd.s32 %v6066, 840
        %v6172 = vadd.s32 %v6066, 848
        %v6173 = vadd.s32 %v6066, 856
        %v6174 = vadd.s32 %v6066, 864
        %v6175 = vadd.s32 %v6066, 872
        %v6176 = vadd.s32 %v6066, 880
        %v6177 = vadd.s32 %v6066, 888
        %v6178 = vadd.s32 %v6066, 896
        %v6179 = vadd.s32 %v6066, 904
        %v6180 = vadd.s32 %v6066, 912
        %v6181 = vadd.s32 %v6066, 920
        %v6182 = vadd.s32 %v6066, 928
        %v6183 = vadd.s32 %v6066, 936
        %v6184 = vadd.s32 %v6066, 944
        %v6185 = vadd.s32 %v6066, 952
        %v6186 = vadd.s32 %v6066, 960
        %v6187 = vadd.s32 %v6066, 968
        %v6188 = vadd.s32 %v6066, 976
        %v6189 = vadd.s32 %v6066, 984
        %v6190 = vadd.s32 %v6066, 992
        %v6191 = vadd.s32 %v6066, 1000
        %v6192 = vadd.s32 %v6066, 1008
        %v6193 = vadd.s32 %v6066, 1016
        %v6194 = vlaneseq
        %v6195 = vand.u32 %v6194, 127
        %v6196 = vshra.s32 %v6066, 6
        %v6197 = vshra.s32 %v6067, 6
        %v6198 = vshra.s32 %v6068, 6
        %v6199 = vshra.s32 %v6069, 6
        %v6200 = vshra.s32 %v6070, 6
        %v6201 = vshra.s32 %v6071, 6
        %v6202 = vshra.s32 %v6072, 6
        %v6203 = vshra.s32 %v6073, 6
        %v6204 = vshra.s32 %v6074, 6
        %v6205 = vshra.s32 %v6075, 6
        %v6206 = vshra.s32 %v6076, 6
        %v6207 = vshra.s32 %v6077, 6
        %v6208 = vshra.s32 %v6078, 6
        %v6209 = vshra.s32 %v6079, 6
        %v6210 = vshra.s32 %v6080, 6
        %v6211 = vshra.s32 %v6081, 6
        %v6212 = vshra.s32 %v6082, 6
        %v6213 = vshra.s32 %v6083, 6
        %v6214 = vshra.s32 %v6084, 6
        %v6215 = vshra.s32 %v6085, 6
        %v6216 = vshra.s32 %v6086, 6
        %v6217 = vshra.s32 %v6087, 6
        %v6218 = vshra.s32 %v6088, 6
        %v6219 = vshra.s32 %v6089, 6
        %v6220 = vshra.s32 %v6090, 6
        %v6221 = vshra.s32 %v6091, 6
        %v6222 = vshra.s32 %v6092, 6
        %v6223 = vshra.s32 %v6093, 6
        %v6224 = vshra.s32 %v6094, 6
        %v6225 = vshra.s32 %v6095, 6
        %v6226 = vshra.s32 %v6096, 6
        %v6227 = vshra.s32 %v6097, 6
        %v6228 = vshra.s32 %v6098, 6
        %v6229 = vshra.s32 %v6099, 6
        %v6230 = vshra.s32 %v6100, 6
        %v6231 = vshra.s32 %v6101, 6
        %v6232 = vshra.s32 %v6102, 6
        %v6233 = vshra.s32 %v6103, 6
        %v6234 = vshra.s32 %v6104, 6
        %v6235 = vshra.s32 %v6105, 6
        %v6236 = vshra.s32 %v6106, 6
        %v6237 = vshra.s32 %v6107, 6
        %v6238 = vshra.s32 %v6108, 6
        %v6239 = vshra.s32 %v6109, 6
        %v6240 = vshra.s32 %v6110, 6
        %v6241 = vshra.s32 %v6111, 6
        %v6242 = vshra.s32 %v6112, 6
        %v6243 = vshra.s32 %v6113, 6
        %v6244 = vshra.s32 %v6114, 6
        %v6245 = vshra.s32 %v6115, 6
        %v6246 = vshra.s32 %v6116, 6
        %v6247 = vshra.s32 %v6117, 6
        %v6248 = vshra.s32 %v6118, 6
        %v6249 = vshra.s32 %v6119, 6
        %v6250 = vshra.s32 %v6120, 6
        %v6251 = vshra.s32 %v6121, 6
        %v6252 = vshra.s32 %v6122, 6
        %v6253 = vshra.s32 %v6123, 6
        %v6254 = vshra.s32 %v6124, 6
        %v6255 = vshra.s32 %v6125, 6
        %v6256 = vshra.s32 %v6126, 6
        %v6257 = vshra.s32 %v6127, 6
        %v6258 = vshra.s32 %v6128, 6
        %v6259 = vshra.s32 %v6129, 6
        %v6260 = vshra.s32 %v6130, 6
        %v6261 = vshra.s32 %v6131, 6
        %v6262 = vshra.s32 %v6132, 6
        %v6263 = vshra.s32 %v6133, 6
        %v6264 = vshra.s32 %v6134, 6
        %v6265 = vshra.s32 %v6135, 6
        %v6266 = vshra.s32 %v6136, 6
        %v6267 = vshra.s32 %v6137, 6
        %v6268 = vshra.s32 %v6138, 6
        %v6269 = vshra.s32 %v6139, 6
        %v6270 = vshra.s32 %v6140, 6
        %v6271 = vshra.s32 %v6141, 6
        %v6272 = vshra.s32 %v6142, 6
        %v6273 = vshra.s32 %v6143, 6
        %v6274 = vshra.s32 %v6144, 6
        %v6275 = vshra.s32 %v6145, 6
        %v6276 = vshra.s32 %v6146, 6
        %v6277 = vshra.s32 %v6147, 6
        %v6278 = vshra.s32 %v6148, 6
        %v6279 = vshra.s32 %v6149, 6
        %v6280 = vshra.s32 %v6150, 6
        %v6281 = vshra.s32 %v6151, 6
        %v6282 = vshra.s32 %v6152, 6
        %v6283 = vshra.s32 %v6153, 6
        %v6284 = vshra.s32 %v6154, 6
        %v6285 = vshra.s32 %v6155, 6
        %v6286 = vshra.s32 %v6156, 6
        %v6287 = vshra.s32 %v6157, 6
        %v6288 = vshra.s32 %v6158, 6
        %v6289 = vshra.s32 %v6159, 6
        %v6290 = vshra.s32 %v6160, 6
        %v6291 = vshra.s32 %v6161, 6
        %v6292 = vshra.s32 %v6162, 6
        %v6293 = vshra.s32 %v6163, 6
        %v6294 = vshra.s32 %v6164, 6
        %v6295 = vshra.s32 %v6165, 6
        %v6296 = vshra.s32 %v6166, 6
        %v6297 = vshra.s32 %v6167, 6
        %v6298 = vshra.s32 %v6168, 6
        %v6299 = vshra.s32 %v6169, 6
        %v6300 = vshra.s32 %v6170, 6
        %v6301 = vshra.s32 %v6171, 6
        %v6302 = vshra.s32 %v6172, 6
        %v6303 = vshra.s32 %v6173, 6
        %v6304 = vshra.s32 %v6174, 6
        %v6305 = vshra.s32 %v6175, 6
        %v6306 = vshra.s32 %v6176, 6
        %v6307 = vshra.s32 %v6177, 6
        %v6308 = vshra.s32 %v6178, 6
        %v6309 = vshra.s32 %v6179, 6
        %v6310 = vshra.s32 %v6180, 6
        %v6311 = vshra.s32 %v6181, 6
        %v6312 = vshra.s32 %v6182, 6
        %v6313 = vshra.s32 %v6183, 6
        %v6314 = vshra.s32 %v6184, 6
        %v6315 = vshra.s32 %v6185, 6
        %v6316 = vshra.s32 %v6186, 6
        %v6317 = vshra.s32 %v6187, 6
        %v6318 = vshra.s32 %v6188, 6
        %v6319 = vshra.s32 %v6189, 6
        %v6320 = vshra.s32 %v6190, 6
        %v6321 = vshra.s32 %v6191, 6
        %v6322 = vshra.s32 %v6192, 6
        %v6323 = vshra.s32 %v6193, 6
        %s6324 = smul.u32 %s25, 16
        %v6325 = vstv %s6324
        %v6326 = vadd.s32 %v6196, %v6325
        %v6327 = vadd.s32 %v6197, %v6325
        %v6328 = vadd.s32 %v6198, %v6325
        %v6329 = vadd.s32 %v6199, %v6325
        %v6330 = vadd.s32 %v6200, %v6325
        %v6331 = vadd.s32 %v6201, %v6325
        %v6332 = vadd.s32 %v6202, %v6325
        %v6333 = vadd.s32 %v6203, %v6325
        %v6334 = vadd.s32 %v6204, %v6325
        %v6335 = vadd.s32 %v6205, %v6325
        %v6336 = vadd.s32 %v6206, %v6325
        %v6337 = vadd.s32 %v6207, %v6325
        %v6338 = vadd.s32 %v6208, %v6325
        %v6339 = vadd.s32 %v6209, %v6325
        %v6340 = vadd.s32 %v6210, %v6325
        %v6341 = vadd.s32 %v6211, %v6325
        %v6342 = vadd.s32 %v6212, %v6325
        %v6343 = vadd.s32 %v6213, %v6325
        %v6344 = vadd.s32 %v6214, %v6325
        %v6345 = vadd.s32 %v6215, %v6325
        %v6346 = vadd.s32 %v6216, %v6325
        %v6347 = vadd.s32 %v6217, %v6325
        %v6348 = vadd.s32 %v6218, %v6325
        %v6349 = vadd.s32 %v6219, %v6325
        %v6350 = vadd.s32 %v6220, %v6325
        %v6351 = vadd.s32 %v6221, %v6325
        %v6352 = vadd.s32 %v6222, %v6325
        %v6353 = vadd.s32 %v6223, %v6325
        %v6354 = vadd.s32 %v6224, %v6325
        %v6355 = vadd.s32 %v6225, %v6325
        %v6356 = vadd.s32 %v6226, %v6325
        %v6357 = vadd.s32 %v6227, %v6325
        %v6358 = vadd.s32 %v6228, %v6325
        %v6359 = vadd.s32 %v6229, %v6325
        %v6360 = vadd.s32 %v6230, %v6325
        %v6361 = vadd.s32 %v6231, %v6325
        %v6362 = vadd.s32 %v6232, %v6325
        %v6363 = vadd.s32 %v6233, %v6325
        %v6364 = vadd.s32 %v6234, %v6325
        %v6365 = vadd.s32 %v6235, %v6325
        %v6366 = vadd.s32 %v6236, %v6325
        %v6367 = vadd.s32 %v6237, %v6325
        %v6368 = vadd.s32 %v6238, %v6325
        %v6369 = vadd.s32 %v6239, %v6325
        %v6370 = vadd.s32 %v6240, %v6325
        %v6371 = vadd.s32 %v6241, %v6325
        %v6372 = vadd.s32 %v6242, %v6325
        %v6373 = vadd.s32 %v6243, %v6325
        %v6374 = vadd.s32 %v6244, %v6325
        %v6375 = vadd.s32 %v6245, %v6325
        %v6376 = vadd.s32 %v6246, %v6325
        %v6377 = vadd.s32 %v6247, %v6325
        %v6378 = vadd.s32 %v6248, %v6325
        %v6379 = vadd.s32 %v6249, %v6325
        %v6380 = vadd.s32 %v6250, %v6325
        %v6381 = vadd.s32 %v6251, %v6325
        %v6382 = vadd.s32 %v6252, %v6325
        %v6383 = vadd.s32 %v6253, %v6325
        %v6384 = vadd.s32 %v6254, %v6325
        %v6385 = vadd.s32 %v6255, %v6325
        %v6386 = vadd.s32 %v6256, %v6325
        %v6387 = vadd.s32 %v6257, %v6325
        %v6388 = vadd.s32 %v6258, %v6325
        %v6389 = vadd.s32 %v6259, %v6325
        %v6390 = vadd.s32 %v6260, %v6325
        %v6391 = vadd.s32 %v6261, %v6325
        %v6392 = vadd.s32 %v6262, %v6325
        %v6393 = vadd.s32 %v6263, %v6325
        %v6394 = vadd.s32 %v6264, %v6325
        %v6395 = vadd.s32 %v6265, %v6325
        %v6396 = vadd.s32 %v6266, %v6325
        %v6397 = vadd.s32 %v6267, %v6325
        %v6398 = vadd.s32 %v6268, %v6325
        %v6399 = vadd.s32 %v6269, %v6325
        %v6400 = vadd.s32 %v6270, %v6325
        %v6401 = vadd.s32 %v6271, %v6325
        %v6402 = vadd.s32 %v6272, %v6325
        %v6403 = vadd.s32 %v6273, %v6325
        %v6404 = vadd.s32 %v6274, %v6325
        %v6405 = vadd.s32 %v6275, %v6325
        %v6406 = vadd.s32 %v6276, %v6325
        %v6407 = vadd.s32 %v6277, %v6325
        %v6408 = vadd.s32 %v6278, %v6325
        %v6409 = vadd.s32 %v6279, %v6325
        %v6410 = vadd.s32 %v6280, %v6325
        %v6411 = vadd.s32 %v6281, %v6325
        %v6412 = vadd.s32 %v6282, %v6325
        %v6413 = vadd.s32 %v6283, %v6325
        %v6414 = vadd.s32 %v6284, %v6325
        %v6415 = vadd.s32 %v6285, %v6325
        %v6416 = vadd.s32 %v6286, %v6325
        %v6417 = vadd.s32 %v6287, %v6325
        %v6418 = vadd.s32 %v6288, %v6325
        %v6419 = vadd.s32 %v6289, %v6325
        %v6420 = vadd.s32 %v6290, %v6325
        %v6421 = vadd.s32 %v6291, %v6325
        %v6422 = vadd.s32 %v6292, %v6325
        %v6423 = vadd.s32 %v6293, %v6325
        %v6424 = vadd.s32 %v6294, %v6325
        %v6425 = vadd.s32 %v6295, %v6325
        %v6426 = vadd.s32 %v6296, %v6325
        %v6427 = vadd.s32 %v6297, %v6325
        %v6428 = vadd.s32 %v6298, %v6325
        %v6429 = vadd.s32 %v6299, %v6325
        %v6430 = vadd.s32 %v6300, %v6325
        %v6431 = vadd.s32 %v6301, %v6325
        %v6432 = vadd.s32 %v6302, %v6325
        %v6433 = vadd.s32 %v6303, %v6325
        %v6434 = vadd.s32 %v6304, %v6325
        %v6435 = vadd.s32 %v6305, %v6325
        %v6436 = vadd.s32 %v6306, %v6325
        %v6437 = vadd.s32 %v6307, %v6325
        %v6438 = vadd.s32 %v6308, %v6325
        %v6439 = vadd.s32 %v6309, %v6325
        %v6440 = vadd.s32 %v6310, %v6325
        %v6441 = vadd.s32 %v6311, %v6325
        %v6442 = vadd.s32 %v6312, %v6325
        %v6443 = vadd.s32 %v6313, %v6325
        %v6444 = vadd.s32 %v6314, %v6325
        %v6445 = vadd.s32 %v6315, %v6325
        %v6446 = vadd.s32 %v6316, %v6325
        %v6447 = vadd.s32 %v6317, %v6325
        %v6448 = vadd.s32 %v6318, %v6325
        %v6449 = vadd.s32 %v6319, %v6325
        %v6450 = vadd.s32 %v6320, %v6325
        %v6451 = vadd.s32 %v6321, %v6325
        %v6452 = vadd.s32 %v6322, %v6325
        %v6453 = vadd.s32 %v6323, %v6325
        %vm6454 = vcmp.eq.s32.totalorder %v6326, %v6195
        %vm6455 = vcmp.eq.s32.totalorder %v6327, %v6195
        %vm6456 = vcmp.eq.s32.totalorder %v6328, %v6195
        %vm6457 = vcmp.eq.s32.totalorder %v6329, %v6195
        %vm6458 = vcmp.eq.s32.totalorder %v6330, %v6195
        %vm6459 = vcmp.eq.s32.totalorder %v6331, %v6195
        %vm6460 = vcmp.eq.s32.totalorder %v6332, %v6195
        %vm6461 = vcmp.eq.s32.totalorder %v6333, %v6195
        %vm6462 = vcmp.eq.s32.totalorder %v6334, %v6195
        %vm6463 = vcmp.eq.s32.totalorder %v6335, %v6195
        %vm6464 = vcmp.eq.s32.totalorder %v6336, %v6195
        %vm6465 = vcmp.eq.s32.totalorder %v6337, %v6195
        %vm6466 = vcmp.eq.s32.totalorder %v6338, %v6195
        %vm6467 = vcmp.eq.s32.totalorder %v6339, %v6195
        %vm6468 = vcmp.eq.s32.totalorder %v6340, %v6195
        %vm6469 = vcmp.eq.s32.totalorder %v6341, %v6195
        %vm6470 = vcmp.eq.s32.totalorder %v6342, %v6195
        %vm6471 = vcmp.eq.s32.totalorder %v6343, %v6195
        %vm6472 = vcmp.eq.s32.totalorder %v6344, %v6195
        %vm6473 = vcmp.eq.s32.totalorder %v6345, %v6195
        %vm6474 = vcmp.eq.s32.totalorder %v6346, %v6195
        %vm6475 = vcmp.eq.s32.totalorder %v6347, %v6195
        %vm6476 = vcmp.eq.s32.totalorder %v6348, %v6195
        %vm6477 = vcmp.eq.s32.totalorder %v6349, %v6195
        %vm6478 = vcmp.eq.s32.totalorder %v6350, %v6195
        %vm6479 = vcmp.eq.s32.totalorder %v6351, %v6195
        %vm6480 = vcmp.eq.s32.totalorder %v6352, %v6195
        %vm6481 = vcmp.eq.s32.totalorder %v6353, %v6195
        %vm6482 = vcmp.eq.s32.totalorder %v6354, %v6195
        %vm6483 = vcmp.eq.s32.totalorder %v6355, %v6195
        %vm6484 = vcmp.eq.s32.totalorder %v6356, %v6195
        %vm6485 = vcmp.eq.s32.totalorder %v6357, %v6195
        %vm6486 = vcmp.eq.s32.totalorder %v6358, %v6195
        %vm6487 = vcmp.eq.s32.totalorder %v6359, %v6195
        %vm6488 = vcmp.eq.s32.totalorder %v6360, %v6195
        %vm6489 = vcmp.eq.s32.totalorder %v6361, %v6195
        %vm6490 = vcmp.eq.s32.totalorder %v6362, %v6195
        %vm6491 = vcmp.eq.s32.totalorder %v6363, %v6195
        %vm6492 = vcmp.eq.s32.totalorder %v6364, %v6195
        %vm6493 = vcmp.eq.s32.totalorder %v6365, %v6195
        %vm6494 = vcmp.eq.s32.totalorder %v6366, %v6195
        %vm6495 = vcmp.eq.s32.totalorder %v6367, %v6195
        %vm6496 = vcmp.eq.s32.totalorder %v6368, %v6195
        %vm6497 = vcmp.eq.s32.totalorder %v6369, %v6195
        %vm6498 = vcmp.eq.s32.totalorder %v6370, %v6195
        %vm6499 = vcmp.eq.s32.totalorder %v6371, %v6195
        %vm6500 = vcmp.eq.s32.totalorder %v6372, %v6195
        %vm6501 = vcmp.eq.s32.totalorder %v6373, %v6195
        %vm6502 = vcmp.eq.s32.totalorder %v6374, %v6195
        %vm6503 = vcmp.eq.s32.totalorder %v6375, %v6195
        %vm6504 = vcmp.eq.s32.totalorder %v6376, %v6195
        %vm6505 = vcmp.eq.s32.totalorder %v6377, %v6195
        %vm6506 = vcmp.eq.s32.totalorder %v6378, %v6195
        %vm6507 = vcmp.eq.s32.totalorder %v6379, %v6195
        %vm6508 = vcmp.eq.s32.totalorder %v6380, %v6195
        %vm6509 = vcmp.eq.s32.totalorder %v6381, %v6195
        %vm6510 = vcmp.eq.s32.totalorder %v6382, %v6195
        %vm6511 = vcmp.eq.s32.totalorder %v6383, %v6195
        %vm6512 = vcmp.eq.s32.totalorder %v6384, %v6195
        %vm6513 = vcmp.eq.s32.totalorder %v6385, %v6195
        %vm6514 = vcmp.eq.s32.totalorder %v6386, %v6195
        %vm6515 = vcmp.eq.s32.totalorder %v6387, %v6195
        %vm6516 = vcmp.eq.s32.totalorder %v6388, %v6195
        %vm6517 = vcmp.eq.s32.totalorder %v6389, %v6195
        %vm6518 = vcmp.eq.s32.totalorder %v6390, %v6195
        %vm6519 = vcmp.eq.s32.totalorder %v6391, %v6195
        %vm6520 = vcmp.eq.s32.totalorder %v6392, %v6195
        %vm6521 = vcmp.eq.s32.totalorder %v6393, %v6195
        %vm6522 = vcmp.eq.s32.totalorder %v6394, %v6195
        %vm6523 = vcmp.eq.s32.totalorder %v6395, %v6195
        %vm6524 = vcmp.eq.s32.totalorder %v6396, %v6195
        %vm6525 = vcmp.eq.s32.totalorder %v6397, %v6195
        %vm6526 = vcmp.eq.s32.totalorder %v6398, %v6195
        %vm6527 = vcmp.eq.s32.totalorder %v6399, %v6195
        %vm6528 = vcmp.eq.s32.totalorder %v6400, %v6195
        %vm6529 = vcmp.eq.s32.totalorder %v6401, %v6195
        %vm6530 = vcmp.eq.s32.totalorder %v6402, %v6195
        %vm6531 = vcmp.eq.s32.totalorder %v6403, %v6195
        %vm6532 = vcmp.eq.s32.totalorder %v6404, %v6195
        %vm6533 = vcmp.eq.s32.totalorder %v6405, %v6195
        %vm6534 = vcmp.eq.s32.totalorder %v6406, %v6195
        %vm6535 = vcmp.eq.s32.totalorder %v6407, %v6195
        %vm6536 = vcmp.eq.s32.totalorder %v6408, %v6195
        %vm6537 = vcmp.eq.s32.totalorder %v6409, %v6195
        %vm6538 = vcmp.eq.s32.totalorder %v6410, %v6195
        %vm6539 = vcmp.eq.s32.totalorder %v6411, %v6195
        %vm6540 = vcmp.eq.s32.totalorder %v6412, %v6195
        %vm6541 = vcmp.eq.s32.totalorder %v6413, %v6195
        %vm6542 = vcmp.eq.s32.totalorder %v6414, %v6195
        %vm6543 = vcmp.eq.s32.totalorder %v6415, %v6195
        %vm6544 = vcmp.eq.s32.totalorder %v6416, %v6195
        %vm6545 = vcmp.eq.s32.totalorder %v6417, %v6195
        %vm6546 = vcmp.eq.s32.totalorder %v6418, %v6195
        %vm6547 = vcmp.eq.s32.totalorder %v6419, %v6195
        %vm6548 = vcmp.eq.s32.totalorder %v6420, %v6195
        %vm6549 = vcmp.eq.s32.totalorder %v6421, %v6195
        %vm6550 = vcmp.eq.s32.totalorder %v6422, %v6195
        %vm6551 = vcmp.eq.s32.totalorder %v6423, %v6195
        %vm6552 = vcmp.eq.s32.totalorder %v6424, %v6195
        %vm6553 = vcmp.eq.s32.totalorder %v6425, %v6195
        %vm6554 = vcmp.eq.s32.totalorder %v6426, %v6195
        %vm6555 = vcmp.eq.s32.totalorder %v6427, %v6195
        %vm6556 = vcmp.eq.s32.totalorder %v6428, %v6195
        %vm6557 = vcmp.eq.s32.totalorder %v6429, %v6195
        %vm6558 = vcmp.eq.s32.totalorder %v6430, %v6195
        %vm6559 = vcmp.eq.s32.totalorder %v6431, %v6195
        %vm6560 = vcmp.eq.s32.totalorder %v6432, %v6195
        %vm6561 = vcmp.eq.s32.totalorder %v6433, %v6195
        %vm6562 = vcmp.eq.s32.totalorder %v6434, %v6195
        %vm6563 = vcmp.eq.s32.totalorder %v6435, %v6195
        %vm6564 = vcmp.eq.s32.totalorder %v6436, %v6195
        %vm6565 = vcmp.eq.s32.totalorder %v6437, %v6195
        %vm6566 = vcmp.eq.s32.totalorder %v6438, %v6195
        %vm6567 = vcmp.eq.s32.totalorder %v6439, %v6195
        %vm6568 = vcmp.eq.s32.totalorder %v6440, %v6195
        %vm6569 = vcmp.eq.s32.totalorder %v6441, %v6195
        %vm6570 = vcmp.eq.s32.totalorder %v6442, %v6195
        %vm6571 = vcmp.eq.s32.totalorder %v6443, %v6195
        %vm6572 = vcmp.eq.s32.totalorder %v6444, %v6195
        %vm6573 = vcmp.eq.s32.totalorder %v6445, %v6195
        %vm6574 = vcmp.eq.s32.totalorder %v6446, %v6195
        %vm6575 = vcmp.eq.s32.totalorder %v6447, %v6195
        %vm6576 = vcmp.eq.s32.totalorder %v6448, %v6195
        %vm6577 = vcmp.eq.s32.totalorder %v6449, %v6195
        %vm6578 = vcmp.eq.s32.totalorder %v6450, %v6195
        %vm6579 = vcmp.eq.s32.totalorder %v6451, %v6195
        %vm6580 = vcmp.eq.s32.totalorder %v6452, %v6195
        %vm6581 = vcmp.eq.s32.totalorder %v6453, %v6195
        %v6582 = vsel %vm6454, 1.0, 0.0
        %v6583 = vsel %vm6455, 1.0, 0.0
        %v6584 = vsel %vm6456, 1.0, 0.0
        %v6585 = vsel %vm6457, 1.0, 0.0
        %v6586 = vsel %vm6458, 1.0, 0.0
        %v6587 = vsel %vm6459, 1.0, 0.0
        %v6588 = vsel %vm6460, 1.0, 0.0
        %v6589 = vsel %vm6461, 1.0, 0.0
        %v6590 = vsel %vm6462, 1.0, 0.0
        %v6591 = vsel %vm6463, 1.0, 0.0
        %v6592 = vsel %vm6464, 1.0, 0.0
        %v6593 = vsel %vm6465, 1.0, 0.0
        %v6594 = vsel %vm6466, 1.0, 0.0
        %v6595 = vsel %vm6467, 1.0, 0.0
        %v6596 = vsel %vm6468, 1.0, 0.0
        %v6597 = vsel %vm6469, 1.0, 0.0
        %v6598 = vsel %vm6470, 1.0, 0.0
        %v6599 = vsel %vm6471, 1.0, 0.0
        %v6600 = vsel %vm6472, 1.0, 0.0
        %v6601 = vsel %vm6473, 1.0, 0.0
        %v6602 = vsel %vm6474, 1.0, 0.0
        %v6603 = vsel %vm6475, 1.0, 0.0
        %v6604 = vsel %vm6476, 1.0, 0.0
        %v6605 = vsel %vm6477, 1.0, 0.0
        %v6606 = vsel %vm6478, 1.0, 0.0
        %v6607 = vsel %vm6479, 1.0, 0.0
        %v6608 = vsel %vm6480, 1.0, 0.0
        %v6609 = vsel %vm6481, 1.0, 0.0
        %v6610 = vsel %vm6482, 1.0, 0.0
        %v6611 = vsel %vm6483, 1.0, 0.0
        %v6612 = vsel %vm6484, 1.0, 0.0
        %v6613 = vsel %vm6485, 1.0, 0.0
        %v6614 = vsel %vm6486, 1.0, 0.0
        %v6615 = vsel %vm6487, 1.0, 0.0
        %v6616 = vsel %vm6488, 1.0, 0.0
        %v6617 = vsel %vm6489, 1.0, 0.0
        %v6618 = vsel %vm6490, 1.0, 0.0
        %v6619 = vsel %vm6491, 1.0, 0.0
        %v6620 = vsel %vm6492, 1.0, 0.0
        %v6621 = vsel %vm6493, 1.0, 0.0
        %v6622 = vsel %vm6494, 1.0, 0.0
        %v6623 = vsel %vm6495, 1.0, 0.0
        %v6624 = vsel %vm6496, 1.0, 0.0
        %v6625 = vsel %vm6497, 1.0, 0.0
        %v6626 = vsel %vm6498, 1.0, 0.0
        %v6627 = vsel %vm6499, 1.0, 0.0
        %v6628 = vsel %vm6500, 1.0, 0.0
        %v6629 = vsel %vm6501, 1.0, 0.0
        %v6630 = vsel %vm6502, 1.0, 0.0
        %v6631 = vsel %vm6503, 1.0, 0.0
        %v6632 = vsel %vm6504, 1.0, 0.0
        %v6633 = vsel %vm6505, 1.0, 0.0
        %v6634 = vsel %vm6506, 1.0, 0.0
        %v6635 = vsel %vm6507, 1.0, 0.0
        %v6636 = vsel %vm6508, 1.0, 0.0
        %v6637 = vsel %vm6509, 1.0, 0.0
        %v6638 = vsel %vm6510, 1.0, 0.0
        %v6639 = vsel %vm6511, 1.0, 0.0
        %v6640 = vsel %vm6512, 1.0, 0.0
        %v6641 = vsel %vm6513, 1.0, 0.0
        %v6642 = vsel %vm6514, 1.0, 0.0
        %v6643 = vsel %vm6515, 1.0, 0.0
        %v6644 = vsel %vm6516, 1.0, 0.0
        %v6645 = vsel %vm6517, 1.0, 0.0
        %v6646 = vsel %vm6518, 1.0, 0.0
        %v6647 = vsel %vm6519, 1.0, 0.0
        %v6648 = vsel %vm6520, 1.0, 0.0
        %v6649 = vsel %vm6521, 1.0, 0.0
        %v6650 = vsel %vm6522, 1.0, 0.0
        %v6651 = vsel %vm6523, 1.0, 0.0
        %v6652 = vsel %vm6524, 1.0, 0.0
        %v6653 = vsel %vm6525, 1.0, 0.0
        %v6654 = vsel %vm6526, 1.0, 0.0
        %v6655 = vsel %vm6527, 1.0, 0.0
        %v6656 = vsel %vm6528, 1.0, 0.0
        %v6657 = vsel %vm6529, 1.0, 0.0
        %v6658 = vsel %vm6530, 1.0, 0.0
        %v6659 = vsel %vm6531, 1.0, 0.0
        %v6660 = vsel %vm6532, 1.0, 0.0
        %v6661 = vsel %vm6533, 1.0, 0.0
        %v6662 = vsel %vm6534, 1.0, 0.0
        %v6663 = vsel %vm6535, 1.0, 0.0
        %v6664 = vsel %vm6536, 1.0, 0.0
        %v6665 = vsel %vm6537, 1.0, 0.0
        %v6666 = vsel %vm6538, 1.0, 0.0
        %v6667 = vsel %vm6539, 1.0, 0.0
        %v6668 = vsel %vm6540, 1.0, 0.0
        %v6669 = vsel %vm6541, 1.0, 0.0
        %v6670 = vsel %vm6542, 1.0, 0.0
        %v6671 = vsel %vm6543, 1.0, 0.0
        %v6672 = vsel %vm6544, 1.0, 0.0
        %v6673 = vsel %vm6545, 1.0, 0.0
        %v6674 = vsel %vm6546, 1.0, 0.0
        %v6675 = vsel %vm6547, 1.0, 0.0
        %v6676 = vsel %vm6548, 1.0, 0.0
        %v6677 = vsel %vm6549, 1.0, 0.0
        %v6678 = vsel %vm6550, 1.0, 0.0
        %v6679 = vsel %vm6551, 1.0, 0.0
        %v6680 = vsel %vm6552, 1.0, 0.0
        %v6681 = vsel %vm6553, 1.0, 0.0
        %v6682 = vsel %vm6554, 1.0, 0.0
        %v6683 = vsel %vm6555, 1.0, 0.0
        %v6684 = vsel %vm6556, 1.0, 0.0
        %v6685 = vsel %vm6557, 1.0, 0.0
        %v6686 = vsel %vm6558, 1.0, 0.0
        %v6687 = vsel %vm6559, 1.0, 0.0
        %v6688 = vsel %vm6560, 1.0, 0.0
        %v6689 = vsel %vm6561, 1.0, 0.0
        %v6690 = vsel %vm6562, 1.0, 0.0
        %v6691 = vsel %vm6563, 1.0, 0.0
        %v6692 = vsel %vm6564, 1.0, 0.0
        %v6693 = vsel %vm6565, 1.0, 0.0
        %v6694 = vsel %vm6566, 1.0, 0.0
        %v6695 = vsel %vm6567, 1.0, 0.0
        %v6696 = vsel %vm6568, 1.0, 0.0
        %v6697 = vsel %vm6569, 1.0, 0.0
        %v6698 = vsel %vm6570, 1.0, 0.0
        %v6699 = vsel %vm6571, 1.0, 0.0
        %v6700 = vsel %vm6572, 1.0, 0.0
        %v6701 = vsel %vm6573, 1.0, 0.0
        %v6702 = vsel %vm6574, 1.0, 0.0
        %v6703 = vsel %vm6575, 1.0, 0.0
        %v6704 = vsel %vm6576, 1.0, 0.0
        %v6705 = vsel %vm6577, 1.0, 0.0
        %v6706 = vsel %vm6578, 1.0, 0.0
        %v6707 = vsel %vm6579, 1.0, 0.0
        %v6708 = vsel %vm6580, 1.0, 0.0
        %v6709 = vsel %vm6581, 1.0, 0.0
        %v6710 = vand.u32 %v6066, 63
        %v6711 = vand.u32 %v6067, 63
        %v6712 = vand.u32 %v6068, 63
        %v6713 = vand.u32 %v6069, 63
        %v6714 = vand.u32 %v6070, 63
        %v6715 = vand.u32 %v6071, 63
        %v6716 = vand.u32 %v6072, 63
        %v6717 = vand.u32 %v6073, 63
        %v6718 = vand.u32 %v6074, 63
        %v6719 = vand.u32 %v6075, 63
        %v6720 = vand.u32 %v6076, 63
        %v6721 = vand.u32 %v6077, 63
        %v6722 = vand.u32 %v6078, 63
        %v6723 = vand.u32 %v6079, 63
        %v6724 = vand.u32 %v6080, 63
        %v6725 = vand.u32 %v6081, 63
        %v6726 = vand.u32 %v6082, 63
        %v6727 = vand.u32 %v6083, 63
        %v6728 = vand.u32 %v6084, 63
        %v6729 = vand.u32 %v6085, 63
        %v6730 = vand.u32 %v6086, 63
        %v6731 = vand.u32 %v6087, 63
        %v6732 = vand.u32 %v6088, 63
        %v6733 = vand.u32 %v6089, 63
        %v6734 = vand.u32 %v6090, 63
        %v6735 = vand.u32 %v6091, 63
        %v6736 = vand.u32 %v6092, 63
        %v6737 = vand.u32 %v6093, 63
        %v6738 = vand.u32 %v6094, 63
        %v6739 = vand.u32 %v6095, 63
        %v6740 = vand.u32 %v6096, 63
        %v6741 = vand.u32 %v6097, 63
        %v6742 = vand.u32 %v6098, 63
        %v6743 = vand.u32 %v6099, 63
        %v6744 = vand.u32 %v6100, 63
        %v6745 = vand.u32 %v6101, 63
        %v6746 = vand.u32 %v6102, 63
        %v6747 = vand.u32 %v6103, 63
        %v6748 = vand.u32 %v6104, 63
        %v6749 = vand.u32 %v6105, 63
        %v6750 = vand.u32 %v6106, 63
        %v6751 = vand.u32 %v6107, 63
        %v6752 = vand.u32 %v6108, 63
        %v6753 = vand.u32 %v6109, 63
        %v6754 = vand.u32 %v6110, 63
        %v6755 = vand.u32 %v6111, 63
        %v6756 = vand.u32 %v6112, 63
        %v6757 = vand.u32 %v6113, 63
        %v6758 = vand.u32 %v6114, 63
        %v6759 = vand.u32 %v6115, 63
        %v6760 = vand.u32 %v6116, 63
        %v6761 = vand.u32 %v6117, 63
        %v6762 = vand.u32 %v6118, 63
        %v6763 = vand.u32 %v6119, 63
        %v6764 = vand.u32 %v6120, 63
        %v6765 = vand.u32 %v6121, 63
        %v6766 = vand.u32 %v6122, 63
        %v6767 = vand.u32 %v6123, 63
        %v6768 = vand.u32 %v6124, 63
        %v6769 = vand.u32 %v6125, 63
        %v6770 = vand.u32 %v6126, 63
        %v6771 = vand.u32 %v6127, 63
        %v6772 = vand.u32 %v6128, 63
        %v6773 = vand.u32 %v6129, 63
        %v6774 = vand.u32 %v6130, 63
        %v6775 = vand.u32 %v6131, 63
        %v6776 = vand.u32 %v6132, 63
        %v6777 = vand.u32 %v6133, 63
        %v6778 = vand.u32 %v6134, 63
        %v6779 = vand.u32 %v6135, 63
        %v6780 = vand.u32 %v6136, 63
        %v6781 = vand.u32 %v6137, 63
        %v6782 = vand.u32 %v6138, 63
        %v6783 = vand.u32 %v6139, 63
        %v6784 = vand.u32 %v6140, 63
        %v6785 = vand.u32 %v6141, 63
        %v6786 = vand.u32 %v6142, 63
        %v6787 = vand.u32 %v6143, 63
        %v6788 = vand.u32 %v6144, 63
        %v6789 = vand.u32 %v6145, 63
        %v6790 = vand.u32 %v6146, 63
        %v6791 = vand.u32 %v6147, 63
        %v6792 = vand.u32 %v6148, 63
        %v6793 = vand.u32 %v6149, 63
        %v6794 = vand.u32 %v6150, 63
        %v6795 = vand.u32 %v6151, 63
        %v6796 = vand.u32 %v6152, 63
        %v6797 = vand.u32 %v6153, 63
        %v6798 = vand.u32 %v6154, 63
        %v6799 = vand.u32 %v6155, 63
        %v6800 = vand.u32 %v6156, 63
        %v6801 = vand.u32 %v6157, 63
        %v6802 = vand.u32 %v6158, 63
        %v6803 = vand.u32 %v6159, 63
        %v6804 = vand.u32 %v6160, 63
        %v6805 = vand.u32 %v6161, 63
        %v6806 = vand.u32 %v6162, 63
        %v6807 = vand.u32 %v6163, 63
        %v6808 = vand.u32 %v6164, 63
        %v6809 = vand.u32 %v6165, 63
        %v6810 = vand.u32 %v6166, 63
        %v6811 = vand.u32 %v6167, 63
        %v6812 = vand.u32 %v6168, 63
        %v6813 = vand.u32 %v6169, 63
        %v6814 = vand.u32 %v6170, 63
        %v6815 = vand.u32 %v6171, 63
        %v6816 = vand.u32 %v6172, 63
        %v6817 = vand.u32 %v6173, 63
        %v6818 = vand.u32 %v6174, 63
        %v6819 = vand.u32 %v6175, 63
        %v6820 = vand.u32 %v6176, 63
        %v6821 = vand.u32 %v6177, 63
        %v6822 = vand.u32 %v6178, 63
        %v6823 = vand.u32 %v6179, 63
        %v6824 = vand.u32 %v6180, 63
        %v6825 = vand.u32 %v6181, 63
        %v6826 = vand.u32 %v6182, 63
        %v6827 = vand.u32 %v6183, 63
        %v6828 = vand.u32 %v6184, 63
        %v6829 = vand.u32 %v6185, 63
        %v6830 = vand.u32 %v6186, 63
        %v6831 = vand.u32 %v6187, 63
        %v6832 = vand.u32 %v6188, 63
        %v6833 = vand.u32 %v6189, 63
        %v6834 = vand.u32 %v6190, 63
        %v6835 = vand.u32 %v6191, 63
        %v6836 = vand.u32 %v6192, 63
        %v6837 = vand.u32 %v6193, 63
        %vm6838 = vcmp.eq.s32.totalorder %v6710, %v6195
        %vm6839 = vcmp.eq.s32.totalorder %v6711, %v6195
        %vm6840 = vcmp.eq.s32.totalorder %v6712, %v6195
        %vm6841 = vcmp.eq.s32.totalorder %v6713, %v6195
        %vm6842 = vcmp.eq.s32.totalorder %v6714, %v6195
        %vm6843 = vcmp.eq.s32.totalorder %v6715, %v6195
        %vm6844 = vcmp.eq.s32.totalorder %v6716, %v6195
        %vm6845 = vcmp.eq.s32.totalorder %v6717, %v6195
        %vm6846 = vcmp.eq.s32.totalorder %v6718, %v6195
        %vm6847 = vcmp.eq.s32.totalorder %v6719, %v6195
        %vm6848 = vcmp.eq.s32.totalorder %v6720, %v6195
        %vm6849 = vcmp.eq.s32.totalorder %v6721, %v6195
        %vm6850 = vcmp.eq.s32.totalorder %v6722, %v6195
        %vm6851 = vcmp.eq.s32.totalorder %v6723, %v6195
        %vm6852 = vcmp.eq.s32.totalorder %v6724, %v6195
        %vm6853 = vcmp.eq.s32.totalorder %v6725, %v6195
        %vm6854 = vcmp.eq.s32.totalorder %v6726, %v6195
        %vm6855 = vcmp.eq.s32.totalorder %v6727, %v6195
        %vm6856 = vcmp.eq.s32.totalorder %v6728, %v6195
        %vm6857 = vcmp.eq.s32.totalorder %v6729, %v6195
        %vm6858 = vcmp.eq.s32.totalorder %v6730, %v6195
        %vm6859 = vcmp.eq.s32.totalorder %v6731, %v6195
        %vm6860 = vcmp.eq.s32.totalorder %v6732, %v6195
        %vm6861 = vcmp.eq.s32.totalorder %v6733, %v6195
        %vm6862 = vcmp.eq.s32.totalorder %v6734, %v6195
        %vm6863 = vcmp.eq.s32.totalorder %v6735, %v6195
        %vm6864 = vcmp.eq.s32.totalorder %v6736, %v6195
        %vm6865 = vcmp.eq.s32.totalorder %v6737, %v6195
        %vm6866 = vcmp.eq.s32.totalorder %v6738, %v6195
        %vm6867 = vcmp.eq.s32.totalorder %v6739, %v6195
        %vm6868 = vcmp.eq.s32.totalorder %v6740, %v6195
        %vm6869 = vcmp.eq.s32.totalorder %v6741, %v6195
        %vm6870 = vcmp.eq.s32.totalorder %v6742, %v6195
        %vm6871 = vcmp.eq.s32.totalorder %v6743, %v6195
        %vm6872 = vcmp.eq.s32.totalorder %v6744, %v6195
        %vm6873 = vcmp.eq.s32.totalorder %v6745, %v6195
        %vm6874 = vcmp.eq.s32.totalorder %v6746, %v6195
        %vm6875 = vcmp.eq.s32.totalorder %v6747, %v6195
        %vm6876 = vcmp.eq.s32.totalorder %v6748, %v6195
        %vm6877 = vcmp.eq.s32.totalorder %v6749, %v6195
        %vm6878 = vcmp.eq.s32.totalorder %v6750, %v6195
        %vm6879 = vcmp.eq.s32.totalorder %v6751, %v6195
        %vm6880 = vcmp.eq.s32.totalorder %v6752, %v6195
        %vm6881 = vcmp.eq.s32.totalorder %v6753, %v6195
        %vm6882 = vcmp.eq.s32.totalorder %v6754, %v6195
        %vm6883 = vcmp.eq.s32.totalorder %v6755, %v6195
        %vm6884 = vcmp.eq.s32.totalorder %v6756, %v6195
        %vm6885 = vcmp.eq.s32.totalorder %v6757, %v6195
        %vm6886 = vcmp.eq.s32.totalorder %v6758, %v6195
        %vm6887 = vcmp.eq.s32.totalorder %v6759, %v6195
        %vm6888 = vcmp.eq.s32.totalorder %v6760, %v6195
        %vm6889 = vcmp.eq.s32.totalorder %v6761, %v6195
        %vm6890 = vcmp.eq.s32.totalorder %v6762, %v6195
        %vm6891 = vcmp.eq.s32.totalorder %v6763, %v6195
        %vm6892 = vcmp.eq.s32.totalorder %v6764, %v6195
        %vm6893 = vcmp.eq.s32.totalorder %v6765, %v6195
        %vm6894 = vcmp.eq.s32.totalorder %v6766, %v6195
        %vm6895 = vcmp.eq.s32.totalorder %v6767, %v6195
        %vm6896 = vcmp.eq.s32.totalorder %v6768, %v6195
        %vm6897 = vcmp.eq.s32.totalorder %v6769, %v6195
        %vm6898 = vcmp.eq.s32.totalorder %v6770, %v6195
        %vm6899 = vcmp.eq.s32.totalorder %v6771, %v6195
        %vm6900 = vcmp.eq.s32.totalorder %v6772, %v6195
        %vm6901 = vcmp.eq.s32.totalorder %v6773, %v6195
        %vm6902 = vcmp.eq.s32.totalorder %v6774, %v6195
        %vm6903 = vcmp.eq.s32.totalorder %v6775, %v6195
        %vm6904 = vcmp.eq.s32.totalorder %v6776, %v6195
        %vm6905 = vcmp.eq.s32.totalorder %v6777, %v6195
        %vm6906 = vcmp.eq.s32.totalorder %v6778, %v6195
        %vm6907 = vcmp.eq.s32.totalorder %v6779, %v6195
        %vm6908 = vcmp.eq.s32.totalorder %v6780, %v6195
        %vm6909 = vcmp.eq.s32.totalorder %v6781, %v6195
        %vm6910 = vcmp.eq.s32.totalorder %v6782, %v6195
        %vm6911 = vcmp.eq.s32.totalorder %v6783, %v6195
        %vm6912 = vcmp.eq.s32.totalorder %v6784, %v6195
        %vm6913 = vcmp.eq.s32.totalorder %v6785, %v6195
        %vm6914 = vcmp.eq.s32.totalorder %v6786, %v6195
        %vm6915 = vcmp.eq.s32.totalorder %v6787, %v6195
        %vm6916 = vcmp.eq.s32.totalorder %v6788, %v6195
        %vm6917 = vcmp.eq.s32.totalorder %v6789, %v6195
        %vm6918 = vcmp.eq.s32.totalorder %v6790, %v6195
        %vm6919 = vcmp.eq.s32.totalorder %v6791, %v6195
        %vm6920 = vcmp.eq.s32.totalorder %v6792, %v6195
        %vm6921 = vcmp.eq.s32.totalorder %v6793, %v6195
        %vm6922 = vcmp.eq.s32.totalorder %v6794, %v6195
        %vm6923 = vcmp.eq.s32.totalorder %v6795, %v6195
        %vm6924 = vcmp.eq.s32.totalorder %v6796, %v6195
        %vm6925 = vcmp.eq.s32.totalorder %v6797, %v6195
        %vm6926 = vcmp.eq.s32.totalorder %v6798, %v6195
        %vm6927 = vcmp.eq.s32.totalorder %v6799, %v6195
        %vm6928 = vcmp.eq.s32.totalorder %v6800, %v6195
        %vm6929 = vcmp.eq.s32.totalorder %v6801, %v6195
        %vm6930 = vcmp.eq.s32.totalorder %v6802, %v6195
        %vm6931 = vcmp.eq.s32.totalorder %v6803, %v6195
        %vm6932 = vcmp.eq.s32.totalorder %v6804, %v6195
        %vm6933 = vcmp.eq.s32.totalorder %v6805, %v6195
        %vm6934 = vcmp.eq.s32.totalorder %v6806, %v6195
        %vm6935 = vcmp.eq.s32.totalorder %v6807, %v6195
        %vm6936 = vcmp.eq.s32.totalorder %v6808, %v6195
        %vm6937 = vcmp.eq.s32.totalorder %v6809, %v6195
        %vm6938 = vcmp.eq.s32.totalorder %v6810, %v6195
        %vm6939 = vcmp.eq.s32.totalorder %v6811, %v6195
        %vm6940 = vcmp.eq.s32.totalorder %v6812, %v6195
        %vm6941 = vcmp.eq.s32.totalorder %v6813, %v6195
        %vm6942 = vcmp.eq.s32.totalorder %v6814, %v6195
        %vm6943 = vcmp.eq.s32.totalorder %v6815, %v6195
        %vm6944 = vcmp.eq.s32.totalorder %v6816, %v6195
        %vm6945 = vcmp.eq.s32.totalorder %v6817, %v6195
        %vm6946 = vcmp.eq.s32.totalorder %v6818, %v6195
        %vm6947 = vcmp.eq.s32.totalorder %v6819, %v6195
        %vm6948 = vcmp.eq.s32.totalorder %v6820, %v6195
        %vm6949 = vcmp.eq.s32.totalorder %v6821, %v6195
        %vm6950 = vcmp.eq.s32.totalorder %v6822, %v6195
        %vm6951 = vcmp.eq.s32.totalorder %v6823, %v6195
        %vm6952 = vcmp.eq.s32.totalorder %v6824, %v6195
        %vm6953 = vcmp.eq.s32.totalorder %v6825, %v6195
        %vm6954 = vcmp.eq.s32.totalorder %v6826, %v6195
        %vm6955 = vcmp.eq.s32.totalorder %v6827, %v6195
        %vm6956 = vcmp.eq.s32.totalorder %v6828, %v6195
        %vm6957 = vcmp.eq.s32.totalorder %v6829, %v6195
        %vm6958 = vcmp.eq.s32.totalorder %v6830, %v6195
        %vm6959 = vcmp.eq.s32.totalorder %v6831, %v6195
        %vm6960 = vcmp.eq.s32.totalorder %v6832, %v6195
        %vm6961 = vcmp.eq.s32.totalorder %v6833, %v6195
        %vm6962 = vcmp.eq.s32.totalorder %v6834, %v6195
        %vm6963 = vcmp.eq.s32.totalorder %v6835, %v6195
        %vm6964 = vcmp.eq.s32.totalorder %v6836, %v6195
        %vm6965 = vcmp.eq.s32.totalorder %v6837, %v6195
        %v6966 = vsel %vm6838, 1.0, 0.0
        %v6967 = vsel %vm6839, 1.0, 0.0
        %v6968 = vsel %vm6840, 1.0, 0.0
        %v6969 = vsel %vm6841, 1.0, 0.0
        %v6970 = vsel %vm6842, 1.0, 0.0
        %v6971 = vsel %vm6843, 1.0, 0.0
        %v6972 = vsel %vm6844, 1.0, 0.0
        %v6973 = vsel %vm6845, 1.0, 0.0
        %v6974 = vsel %vm6846, 1.0, 0.0
        %v6975 = vsel %vm6847, 1.0, 0.0
        %v6976 = vsel %vm6848, 1.0, 0.0
        %v6977 = vsel %vm6849, 1.0, 0.0
        %v6978 = vsel %vm6850, 1.0, 0.0
        %v6979 = vsel %vm6851, 1.0, 0.0
        %v6980 = vsel %vm6852, 1.0, 0.0
        %v6981 = vsel %vm6853, 1.0, 0.0
        %v6982 = vsel %vm6854, 1.0, 0.0
        %v6983 = vsel %vm6855, 1.0, 0.0
        %v6984 = vsel %vm6856, 1.0, 0.0
        %v6985 = vsel %vm6857, 1.0, 0.0
        %v6986 = vsel %vm6858, 1.0, 0.0
        %v6987 = vsel %vm6859, 1.0, 0.0
        %v6988 = vsel %vm6860, 1.0, 0.0
        %v6989 = vsel %vm6861, 1.0, 0.0
        %v6990 = vsel %vm6862, 1.0, 0.0
        %v6991 = vsel %vm6863, 1.0, 0.0
        %v6992 = vsel %vm6864, 1.0, 0.0
        %v6993 = vsel %vm6865, 1.0, 0.0
        %v6994 = vsel %vm6866, 1.0, 0.0
        %v6995 = vsel %vm6867, 1.0, 0.0
        %v6996 = vsel %vm6868, 1.0, 0.0
        %v6997 = vsel %vm6869, 1.0, 0.0
        %v6998 = vsel %vm6870, 1.0, 0.0
        %v6999 = vsel %vm6871, 1.0, 0.0
        %v7000 = vsel %vm6872, 1.0, 0.0
        %v7001 = vsel %vm6873, 1.0, 0.0
        %v7002 = vsel %vm6874, 1.0, 0.0
        %v7003 = vsel %vm6875, 1.0, 0.0
        %v7004 = vsel %vm6876, 1.0, 0.0
        %v7005 = vsel %vm6877, 1.0, 0.0
        %v7006 = vsel %vm6878, 1.0, 0.0
        %v7007 = vsel %vm6879, 1.0, 0.0
        %v7008 = vsel %vm6880, 1.0, 0.0
        %v7009 = vsel %vm6881, 1.0, 0.0
        %v7010 = vsel %vm6882, 1.0, 0.0
        %v7011 = vsel %vm6883, 1.0, 0.0
        %v7012 = vsel %vm6884, 1.0, 0.0
        %v7013 = vsel %vm6885, 1.0, 0.0
        %v7014 = vsel %vm6886, 1.0, 0.0
        %v7015 = vsel %vm6887, 1.0, 0.0
        %v7016 = vsel %vm6888, 1.0, 0.0
        %v7017 = vsel %vm6889, 1.0, 0.0
        %v7018 = vsel %vm6890, 1.0, 0.0
        %v7019 = vsel %vm6891, 1.0, 0.0
        %v7020 = vsel %vm6892, 1.0, 0.0
        %v7021 = vsel %vm6893, 1.0, 0.0
        %v7022 = vsel %vm6894, 1.0, 0.0
        %v7023 = vsel %vm6895, 1.0, 0.0
        %v7024 = vsel %vm6896, 1.0, 0.0
        %v7025 = vsel %vm6897, 1.0, 0.0
        %v7026 = vsel %vm6898, 1.0, 0.0
        %v7027 = vsel %vm6899, 1.0, 0.0
        %v7028 = vsel %vm6900, 1.0, 0.0
        %v7029 = vsel %vm6901, 1.0, 0.0
        %v7030 = vsel %vm6902, 1.0, 0.0
        %v7031 = vsel %vm6903, 1.0, 0.0
        %v7032 = vsel %vm6904, 1.0, 0.0
        %v7033 = vsel %vm6905, 1.0, 0.0
        %v7034 = vsel %vm6906, 1.0, 0.0
        %v7035 = vsel %vm6907, 1.0, 0.0
        %v7036 = vsel %vm6908, 1.0, 0.0
        %v7037 = vsel %vm6909, 1.0, 0.0
        %v7038 = vsel %vm6910, 1.0, 0.0
        %v7039 = vsel %vm6911, 1.0, 0.0
        %v7040 = vsel %vm6912, 1.0, 0.0
        %v7041 = vsel %vm6913, 1.0, 0.0
        %v7042 = vsel %vm6914, 1.0, 0.0
        %v7043 = vsel %vm6915, 1.0, 0.0
        %v7044 = vsel %vm6916, 1.0, 0.0
        %v7045 = vsel %vm6917, 1.0, 0.0
        %v7046 = vsel %vm6918, 1.0, 0.0
        %v7047 = vsel %vm6919, 1.0, 0.0
        %v7048 = vsel %vm6920, 1.0, 0.0
        %v7049 = vsel %vm6921, 1.0, 0.0
        %v7050 = vsel %vm6922, 1.0, 0.0
        %v7051 = vsel %vm6923, 1.0, 0.0
        %v7052 = vsel %vm6924, 1.0, 0.0
        %v7053 = vsel %vm6925, 1.0, 0.0
        %v7054 = vsel %vm6926, 1.0, 0.0
        %v7055 = vsel %vm6927, 1.0, 0.0
        %v7056 = vsel %vm6928, 1.0, 0.0
        %v7057 = vsel %vm6929, 1.0, 0.0
        %v7058 = vsel %vm6930, 1.0, 0.0
        %v7059 = vsel %vm6931, 1.0, 0.0
        %v7060 = vsel %vm6932, 1.0, 0.0
        %v7061 = vsel %vm6933, 1.0, 0.0
        %v7062 = vsel %vm6934, 1.0, 0.0
        %v7063 = vsel %vm6935, 1.0, 0.0
        %v7064 = vsel %vm6936, 1.0, 0.0
        %v7065 = vsel %vm6937, 1.0, 0.0
        %v7066 = vsel %vm6938, 1.0, 0.0
        %v7067 = vsel %vm6939, 1.0, 0.0
        %v7068 = vsel %vm6940, 1.0, 0.0
        %v7069 = vsel %vm6941, 1.0, 0.0
        %v7070 = vsel %vm6942, 1.0, 0.0
        %v7071 = vsel %vm6943, 1.0, 0.0
        %v7072 = vsel %vm6944, 1.0, 0.0
        %v7073 = vsel %vm6945, 1.0, 0.0
        %v7074 = vsel %vm6946, 1.0, 0.0
        %v7075 = vsel %vm6947, 1.0, 0.0
        %v7076 = vsel %vm6948, 1.0, 0.0
        %v7077 = vsel %vm6949, 1.0, 0.0
        %v7078 = vsel %vm6950, 1.0, 0.0
        %v7079 = vsel %vm6951, 1.0, 0.0
        %v7080 = vsel %vm6952, 1.0, 0.0
        %v7081 = vsel %vm6953, 1.0, 0.0
        %v7082 = vsel %vm6954, 1.0, 0.0
        %v7083 = vsel %vm6955, 1.0, 0.0
        %v7084 = vsel %vm6956, 1.0, 0.0
        %v7085 = vsel %vm6957, 1.0, 0.0
        %v7086 = vsel %vm6958, 1.0, 0.0
        %v7087 = vsel %vm6959, 1.0, 0.0
        %v7088 = vsel %vm6960, 1.0, 0.0
        %v7089 = vsel %vm6961, 1.0, 0.0
        %v7090 = vsel %vm6962, 1.0, 0.0
        %v7091 = vsel %vm6963, 1.0, 0.0
        %v7092 = vsel %vm6964, 1.0, 0.0
        %v7093 = vsel %vm6965, 1.0, 0.0
        %v7094 = vadd.s32 %v6195, 128
        %v7095 = vadd.s32 %v6195, 256
        %v7096 = vadd.s32 %v6195, 384
        %v7097 = vadd.s32 %v6195, 512
        %v7098 = vadd.s32 %v6195, 640
        %v7099 = vadd.s32 %v6195, 768
        %v7100 = vadd.s32 %v6195, 896
        %v7101 = vshra.s32 %v6195, 6
        %v7102 = vshra.s32 %v7094, 6
        %v7103 = vshra.s32 %v7095, 6
        %v7104 = vshra.s32 %v7096, 6
        %v7105 = vshra.s32 %v7097, 6
        %v7106 = vshra.s32 %v7098, 6
        %v7107 = vshra.s32 %v7099, 6
        %v7108 = vshra.s32 %v7100, 6
        %v7109 = vadd.s32 %v7101, %v6325
        %v7110 = vadd.s32 %v7102, %v6325
        %v7111 = vadd.s32 %v7103, %v6325
        %v7112 = vadd.s32 %v7104, %v6325
        %v7113 = vadd.s32 %v7105, %v6325
        %v7114 = vadd.s32 %v7106, %v6325
        %v7115 = vadd.s32 %v7107, %v6325
        %v7116 = vadd.s32 %v7108, %v6325
        %vm7117 = vcmp.eq.s32.totalorder %v6066, %v7109
        %vm7118 = vcmp.eq.s32.totalorder %v6066, %v7110
        %vm7119 = vcmp.eq.s32.totalorder %v6066, %v7111
        %vm7120 = vcmp.eq.s32.totalorder %v6066, %v7112
        %vm7121 = vcmp.eq.s32.totalorder %v6066, %v7113
        %vm7122 = vcmp.eq.s32.totalorder %v6066, %v7114
        %vm7123 = vcmp.eq.s32.totalorder %v6066, %v7115
        %vm7124 = vcmp.eq.s32.totalorder %v6066, %v7116
        %vm7125 = vcmp.eq.s32.totalorder %v6067, %v7109
        %vm7126 = vcmp.eq.s32.totalorder %v6067, %v7110
        %vm7127 = vcmp.eq.s32.totalorder %v6067, %v7111
        %vm7128 = vcmp.eq.s32.totalorder %v6067, %v7112
        %vm7129 = vcmp.eq.s32.totalorder %v6067, %v7113
        %vm7130 = vcmp.eq.s32.totalorder %v6067, %v7114
        %vm7131 = vcmp.eq.s32.totalorder %v6067, %v7115
        %vm7132 = vcmp.eq.s32.totalorder %v6067, %v7116
        %vm7133 = vcmp.eq.s32.totalorder %v6068, %v7109
        %vm7134 = vcmp.eq.s32.totalorder %v6068, %v7110
        %vm7135 = vcmp.eq.s32.totalorder %v6068, %v7111
        %vm7136 = vcmp.eq.s32.totalorder %v6068, %v7112
        %vm7137 = vcmp.eq.s32.totalorder %v6068, %v7113
        %vm7138 = vcmp.eq.s32.totalorder %v6068, %v7114
        %vm7139 = vcmp.eq.s32.totalorder %v6068, %v7115
        %vm7140 = vcmp.eq.s32.totalorder %v6068, %v7116
        %vm7141 = vcmp.eq.s32.totalorder %v6069, %v7109
        %vm7142 = vcmp.eq.s32.totalorder %v6069, %v7110
        %vm7143 = vcmp.eq.s32.totalorder %v6069, %v7111
        %vm7144 = vcmp.eq.s32.totalorder %v6069, %v7112
        %vm7145 = vcmp.eq.s32.totalorder %v6069, %v7113
        %vm7146 = vcmp.eq.s32.totalorder %v6069, %v7114
        %vm7147 = vcmp.eq.s32.totalorder %v6069, %v7115
        %vm7148 = vcmp.eq.s32.totalorder %v6069, %v7116
        %vm7149 = vcmp.eq.s32.totalorder %v6070, %v7109
        %vm7150 = vcmp.eq.s32.totalorder %v6070, %v7110
        %vm7151 = vcmp.eq.s32.totalorder %v6070, %v7111
        %vm7152 = vcmp.eq.s32.totalorder %v6070, %v7112
        %vm7153 = vcmp.eq.s32.totalorder %v6070, %v7113
        %vm7154 = vcmp.eq.s32.totalorder %v6070, %v7114
        %vm7155 = vcmp.eq.s32.totalorder %v6070, %v7115
        %vm7156 = vcmp.eq.s32.totalorder %v6070, %v7116
        %vm7157 = vcmp.eq.s32.totalorder %v6071, %v7109
        %vm7158 = vcmp.eq.s32.totalorder %v6071, %v7110
        %vm7159 = vcmp.eq.s32.totalorder %v6071, %v7111
        %vm7160 = vcmp.eq.s32.totalorder %v6071, %v7112
        %vm7161 = vcmp.eq.s32.totalorder %v6071, %v7113
        %vm7162 = vcmp.eq.s32.totalorder %v6071, %v7114
        %vm7163 = vcmp.eq.s32.totalorder %v6071, %v7115
        %vm7164 = vcmp.eq.s32.totalorder %v6071, %v7116
        %vm7165 = vcmp.eq.s32.totalorder %v6072, %v7109
        %vm7166 = vcmp.eq.s32.totalorder %v6072, %v7110
        %vm7167 = vcmp.eq.s32.totalorder %v6072, %v7111
        %vm7168 = vcmp.eq.s32.totalorder %v6072, %v7112
        %vm7169 = vcmp.eq.s32.totalorder %v6072, %v7113
        %vm7170 = vcmp.eq.s32.totalorder %v6072, %v7114
        %vm7171 = vcmp.eq.s32.totalorder %v6072, %v7115
        %vm7172 = vcmp.eq.s32.totalorder %v6072, %v7116
        %vm7173 = vcmp.eq.s32.totalorder %v6073, %v7109
        %vm7174 = vcmp.eq.s32.totalorder %v6073, %v7110
        %vm7175 = vcmp.eq.s32.totalorder %v6073, %v7111
        %vm7176 = vcmp.eq.s32.totalorder %v6073, %v7112
        %vm7177 = vcmp.eq.s32.totalorder %v6073, %v7113
        %vm7178 = vcmp.eq.s32.totalorder %v6073, %v7114
        %vm7179 = vcmp.eq.s32.totalorder %v6073, %v7115
        %vm7180 = vcmp.eq.s32.totalorder %v6073, %v7116
        %v7181 = vsel %vm7117, 1.0, 0.0
        %v7182 = vsel %vm7118, 1.0, 0.0
        %v7183 = vsel %vm7119, 1.0, 0.0
        %v7184 = vsel %vm7120, 1.0, 0.0
        %v7185 = vsel %vm7121, 1.0, 0.0
        %v7186 = vsel %vm7122, 1.0, 0.0
        %v7187 = vsel %vm7123, 1.0, 0.0
        %v7188 = vsel %vm7124, 1.0, 0.0
        %v7189 = vsel %vm7125, 1.0, 0.0
        %v7190 = vsel %vm7126, 1.0, 0.0
        %v7191 = vsel %vm7127, 1.0, 0.0
        %v7192 = vsel %vm7128, 1.0, 0.0
        %v7193 = vsel %vm7129, 1.0, 0.0
        %v7194 = vsel %vm7130, 1.0, 0.0
        %v7195 = vsel %vm7131, 1.0, 0.0
        %v7196 = vsel %vm7132, 1.0, 0.0
        %v7197 = vsel %vm7133, 1.0, 0.0
        %v7198 = vsel %vm7134, 1.0, 0.0
        %v7199 = vsel %vm7135, 1.0, 0.0
        %v7200 = vsel %vm7136, 1.0, 0.0
        %v7201 = vsel %vm7137, 1.0, 0.0
        %v7202 = vsel %vm7138, 1.0, 0.0
        %v7203 = vsel %vm7139, 1.0, 0.0
        %v7204 = vsel %vm7140, 1.0, 0.0
        %v7205 = vsel %vm7141, 1.0, 0.0
        %v7206 = vsel %vm7142, 1.0, 0.0
        %v7207 = vsel %vm7143, 1.0, 0.0
        %v7208 = vsel %vm7144, 1.0, 0.0
        %v7209 = vsel %vm7145, 1.0, 0.0
        %v7210 = vsel %vm7146, 1.0, 0.0
        %v7211 = vsel %vm7147, 1.0, 0.0
        %v7212 = vsel %vm7148, 1.0, 0.0
        %v7213 = vsel %vm7149, 1.0, 0.0
        %v7214 = vsel %vm7150, 1.0, 0.0
        %v7215 = vsel %vm7151, 1.0, 0.0
        %v7216 = vsel %vm7152, 1.0, 0.0
        %v7217 = vsel %vm7153, 1.0, 0.0
        %v7218 = vsel %vm7154, 1.0, 0.0
        %v7219 = vsel %vm7155, 1.0, 0.0
        %v7220 = vsel %vm7156, 1.0, 0.0
        %v7221 = vsel %vm7157, 1.0, 0.0
        %v7222 = vsel %vm7158, 1.0, 0.0
        %v7223 = vsel %vm7159, 1.0, 0.0
        %v7224 = vsel %vm7160, 1.0, 0.0
        %v7225 = vsel %vm7161, 1.0, 0.0
        %v7226 = vsel %vm7162, 1.0, 0.0
        %v7227 = vsel %vm7163, 1.0, 0.0
        %v7228 = vsel %vm7164, 1.0, 0.0
        %v7229 = vsel %vm7165, 1.0, 0.0
        %v7230 = vsel %vm7166, 1.0, 0.0
        %v7231 = vsel %vm7167, 1.0, 0.0
        %v7232 = vsel %vm7168, 1.0, 0.0
        %v7233 = vsel %vm7169, 1.0, 0.0
        %v7234 = vsel %vm7170, 1.0, 0.0
        %v7235 = vsel %vm7171, 1.0, 0.0
        %v7236 = vsel %vm7172, 1.0, 0.0
        %v7237 = vsel %vm7173, 1.0, 0.0
        %v7238 = vsel %vm7174, 1.0, 0.0
        %v7239 = vsel %vm7175, 1.0, 0.0
        %v7240 = vsel %vm7176, 1.0, 0.0
        %v7241 = vsel %vm7177, 1.0, 0.0
        %v7242 = vsel %vm7178, 1.0, 0.0
        %v7243 = vsel %vm7179, 1.0, 0.0
        %v7244 = vsel %vm7180, 1.0, 0.0
        %v7245 = vand.u32 %v6195, 63
        %v7246 = vand.u32 %v7094, 63
        %v7247 = vand.u32 %v7095, 63
        %v7248 = vand.u32 %v7096, 63
        %v7249 = vand.u32 %v7097, 63
        %v7250 = vand.u32 %v7098, 63
        %v7251 = vand.u32 %v7099, 63
        %v7252 = vand.u32 %v7100, 63
        %vm7253 = vcmp.eq.s32.totalorder %v6066, %v7245
        %vm7254 = vcmp.eq.s32.totalorder %v6066, %v7246
        %vm7255 = vcmp.eq.s32.totalorder %v6066, %v7247
        %vm7256 = vcmp.eq.s32.totalorder %v6066, %v7248
        %vm7257 = vcmp.eq.s32.totalorder %v6066, %v7249
        %vm7258 = vcmp.eq.s32.totalorder %v6066, %v7250
        %vm7259 = vcmp.eq.s32.totalorder %v6066, %v7251
        %vm7260 = vcmp.eq.s32.totalorder %v6066, %v7252
        %vm7261 = vcmp.eq.s32.totalorder %v6067, %v7245
        %vm7262 = vcmp.eq.s32.totalorder %v6067, %v7246
        %vm7263 = vcmp.eq.s32.totalorder %v6067, %v7247
        %vm7264 = vcmp.eq.s32.totalorder %v6067, %v7248
        %vm7265 = vcmp.eq.s32.totalorder %v6067, %v7249
        %vm7266 = vcmp.eq.s32.totalorder %v6067, %v7250
        %vm7267 = vcmp.eq.s32.totalorder %v6067, %v7251
        %vm7268 = vcmp.eq.s32.totalorder %v6067, %v7252
        %vm7269 = vcmp.eq.s32.totalorder %v6068, %v7245
        %vm7270 = vcmp.eq.s32.totalorder %v6068, %v7246
        %vm7271 = vcmp.eq.s32.totalorder %v6068, %v7247
        %vm7272 = vcmp.eq.s32.totalorder %v6068, %v7248
        %vm7273 = vcmp.eq.s32.totalorder %v6068, %v7249
        %vm7274 = vcmp.eq.s32.totalorder %v6068, %v7250
        %vm7275 = vcmp.eq.s32.totalorder %v6068, %v7251
        %vm7276 = vcmp.eq.s32.totalorder %v6068, %v7252
        %vm7277 = vcmp.eq.s32.totalorder %v6069, %v7245
        %vm7278 = vcmp.eq.s32.totalorder %v6069, %v7246
        %vm7279 = vcmp.eq.s32.totalorder %v6069, %v7247
        %vm7280 = vcmp.eq.s32.totalorder %v6069, %v7248
        %vm7281 = vcmp.eq.s32.totalorder %v6069, %v7249
        %vm7282 = vcmp.eq.s32.totalorder %v6069, %v7250
        %vm7283 = vcmp.eq.s32.totalorder %v6069, %v7251
        %vm7284 = vcmp.eq.s32.totalorder %v6069, %v7252
        %vm7285 = vcmp.eq.s32.totalorder %v6070, %v7245
        %vm7286 = vcmp.eq.s32.totalorder %v6070, %v7246
        %vm7287 = vcmp.eq.s32.totalorder %v6070, %v7247
        %vm7288 = vcmp.eq.s32.totalorder %v6070, %v7248
        %vm7289 = vcmp.eq.s32.totalorder %v6070, %v7249
        %vm7290 = vcmp.eq.s32.totalorder %v6070, %v7250
        %vm7291 = vcmp.eq.s32.totalorder %v6070, %v7251
        %vm7292 = vcmp.eq.s32.totalorder %v6070, %v7252
        %vm7293 = vcmp.eq.s32.totalorder %v6071, %v7245
        %vm7294 = vcmp.eq.s32.totalorder %v6071, %v7246
        %vm7295 = vcmp.eq.s32.totalorder %v6071, %v7247
        %vm7296 = vcmp.eq.s32.totalorder %v6071, %v7248
        %vm7297 = vcmp.eq.s32.totalorder %v6071, %v7249
        %vm7298 = vcmp.eq.s32.totalorder %v6071, %v7250
        %vm7299 = vcmp.eq.s32.totalorder %v6071, %v7251
        %vm7300 = vcmp.eq.s32.totalorder %v6071, %v7252
        %vm7301 = vcmp.eq.s32.totalorder %v6072, %v7245
        %vm7302 = vcmp.eq.s32.totalorder %v6072, %v7246
        %vm7303 = vcmp.eq.s32.totalorder %v6072, %v7247
        %vm7304 = vcmp.eq.s32.totalorder %v6072, %v7248
        %vm7305 = vcmp.eq.s32.totalorder %v6072, %v7249
        %vm7306 = vcmp.eq.s32.totalorder %v6072, %v7250
        %vm7307 = vcmp.eq.s32.totalorder %v6072, %v7251
        %vm7308 = vcmp.eq.s32.totalorder %v6072, %v7252
        %vm7309 = vcmp.eq.s32.totalorder %v6073, %v7245
        %vm7310 = vcmp.eq.s32.totalorder %v6073, %v7246
        %vm7311 = vcmp.eq.s32.totalorder %v6073, %v7247
        %vm7312 = vcmp.eq.s32.totalorder %v6073, %v7248
        %vm7313 = vcmp.eq.s32.totalorder %v6073, %v7249
        %vm7314 = vcmp.eq.s32.totalorder %v6073, %v7250
        %vm7315 = vcmp.eq.s32.totalorder %v6073, %v7251
        %vm7316 = vcmp.eq.s32.totalorder %v6073, %v7252
        %v7317 = vsel %vm7253, 1.0, 0.0
        %v7318 = vsel %vm7254, 1.0, 0.0
        %v7319 = vsel %vm7255, 1.0, 0.0
        %v7320 = vsel %vm7256, 1.0, 0.0
        %v7321 = vsel %vm7257, 1.0, 0.0
        %v7322 = vsel %vm7258, 1.0, 0.0
        %v7323 = vsel %vm7259, 1.0, 0.0
        %v7324 = vsel %vm7260, 1.0, 0.0
        %v7325 = vsel %vm7261, 1.0, 0.0
        %v7326 = vsel %vm7262, 1.0, 0.0
        %v7327 = vsel %vm7263, 1.0, 0.0
        %v7328 = vsel %vm7264, 1.0, 0.0
        %v7329 = vsel %vm7265, 1.0, 0.0
        %v7330 = vsel %vm7266, 1.0, 0.0
        %v7331 = vsel %vm7267, 1.0, 0.0
        %v7332 = vsel %vm7268, 1.0, 0.0
        %v7333 = vsel %vm7269, 1.0, 0.0
        %v7334 = vsel %vm7270, 1.0, 0.0
        %v7335 = vsel %vm7271, 1.0, 0.0
        %v7336 = vsel %vm7272, 1.0, 0.0
        %v7337 = vsel %vm7273, 1.0, 0.0
        %v7338 = vsel %vm7274, 1.0, 0.0
        %v7339 = vsel %vm7275, 1.0, 0.0
        %v7340 = vsel %vm7276, 1.0, 0.0
        %v7341 = vsel %vm7277, 1.0, 0.0
        %v7342 = vsel %vm7278, 1.0, 0.0
        %v7343 = vsel %vm7279, 1.0, 0.0
        %v7344 = vsel %vm7280, 1.0, 0.0
        %v7345 = vsel %vm7281, 1.0, 0.0
        %v7346 = vsel %vm7282, 1.0, 0.0
        %v7347 = vsel %vm7283, 1.0, 0.0
        %v7348 = vsel %vm7284, 1.0, 0.0
        %v7349 = vsel %vm7285, 1.0, 0.0
        %v7350 = vsel %vm7286, 1.0, 0.0
        %v7351 = vsel %vm7287, 1.0, 0.0
        %v7352 = vsel %vm7288, 1.0, 0.0
        %v7353 = vsel %vm7289, 1.0, 0.0
        %v7354 = vsel %vm7290, 1.0, 0.0
        %v7355 = vsel %vm7291, 1.0, 0.0
        %v7356 = vsel %vm7292, 1.0, 0.0
        %v7357 = vsel %vm7293, 1.0, 0.0
        %v7358 = vsel %vm7294, 1.0, 0.0
        %v7359 = vsel %vm7295, 1.0, 0.0
        %v7360 = vsel %vm7296, 1.0, 0.0
        %v7361 = vsel %vm7297, 1.0, 0.0
        %v7362 = vsel %vm7298, 1.0, 0.0
        %v7363 = vsel %vm7299, 1.0, 0.0
        %v7364 = vsel %vm7300, 1.0, 0.0
        %v7365 = vsel %vm7301, 1.0, 0.0
        %v7366 = vsel %vm7302, 1.0, 0.0
        %v7367 = vsel %vm7303, 1.0, 0.0
        %v7368 = vsel %vm7304, 1.0, 0.0
        %v7369 = vsel %vm7305, 1.0, 0.0
        %v7370 = vsel %vm7306, 1.0, 0.0
        %v7371 = vsel %vm7307, 1.0, 0.0
        %v7372 = vsel %vm7308, 1.0, 0.0
        %v7373 = vsel %vm7309, 1.0, 0.0
        %v7374 = vsel %vm7310, 1.0, 0.0
        %v7375 = vsel %vm7311, 1.0, 0.0
        %v7376 = vsel %vm7312, 1.0, 0.0
        %v7377 = vsel %vm7313, 1.0, 0.0
        %v7378 = vsel %vm7314, 1.0, 0.0
        %v7379 = vsel %vm7315, 1.0, 0.0
        %v7380 = vsel %vm7316, 1.0, 0.0
        %vm7381 = vcmask 523264
        %v7383 = vsel %vm7381, %v6054, 0
        %v7386 = vsel %vm7381, %v6055, 0
        %v7389 = vsel %vm7381, %v6056, 0
        %v7392 = vsel %vm7381, %v6057, 0
        %v7395 = vsel %vm7381, %v6058, 0
        %v7398 = vsel %vm7381, %v6059, 0
        %v7401 = vsel %vm7381, %v6060, 0
        %v7404 = vsel %vm7381, %v6061, 0
        %v7407 = vsel %vm7381, %v6062, 0
        %v7410 = vsel %vm7381, %v6063, 0
        %v7413 = vsel %vm7381, %v6064, 0
        %7415 = vmatpush.msra.mxu0 0.0
        %7416 = vmatpush.msra.mxu0 0.0
        %7417 = vmatpush.msra.mxu0 0.0
        %7418 = vmatpush.msra.mxu0 0.0
        %7419 = vmatpush.msra.mxu0 0.0
        %7420 = vmatpush.msra.mxu0 0.0
        %7421 = vmatpush.msra.mxu0 0.0
        %7422 = vmatpush.msra.mxu0 0.0
        %7423 = vmatpush.msra.mxu0 %v7373
        %7424 = vmatpush.msra.mxu0 %v7365
        %7425 = vmatpush.msra.mxu0 %v7357
        %7426 = vmatpush.msra.mxu0 %v7349
        %7427 = vmatpush.msra.mxu0 %v7341
        %7428 = vmatpush.msra.mxu0 %v7333
        %7429 = vmatpush.msra.mxu0 %v7325
        %7430 = vmatpush.msra.mxu0 %v7317
        %7431 = vmatmul.f32.gmra.mxu0 %v7383
        %v7432 = vpop.f32.mrf.mxu0
        %v7433 = vadd.f32 0.0, %v7432
        %7434 = vmatmul.f32.gmra.mxu0 %v7386
        %v7435 = vpop.f32.mrf.mxu0
        %v7436 = vadd.f32 0.0, %v7435
        %7437 = vmatmul.f32.gmra.mxu0 %v7389
        %v7438 = vpop.f32.mrf.mxu0
        %v7439 = vadd.f32 0.0, %v7438
        %7440 = vmatmul.f32.gmra.mxu0 %v7392
        %v7441 = vpop.f32.mrf.mxu0
        %v7442 = vadd.f32 0.0, %v7441
        %7443 = vmatmul.f32.gmra.mxu0 %v7395
        %v7444 = vpop.f32.mrf.mxu0
        %v7445 = vadd.f32 0.0, %v7444
        %7446 = vmatmul.f32.gmra.mxu0 %v7398
        %v7447 = vpop.f32.mrf.mxu0
        %v7448 = vadd.f32 0.0, %v7447
        %7449 = vmatmul.f32.gmra.mxu0 %v7401
        %v7450 = vpop.f32.mrf.mxu0
        %v7451 = vadd.f32 0.0, %v7450
        %7452 = vmatmul.f32.gmra.mxu0 %v7404
        %v7453 = vpop.f32.mrf.mxu0
        %v7454 = vadd.f32 0.0, %v7453
        %7455 = vmatmul.f32.gmra.mxu0 %v7407
        %v7456 = vpop.f32.mrf.mxu0
        %v7457 = vadd.f32 0.0, %v7456
        %7458 = vmatmul.f32.gmra.mxu0 %v7410
        %v7459 = vpop.f32.mrf.mxu0
        %v7460 = vadd.f32 0.0, %v7459
        %7461 = vmatmul.f32.gmra.mxu0 %v7413
        %v7462 = vpop.f32.mrf.mxu0
        %v7463 = vadd.f32 0.0, %v7462
        %7464 = vdwg.mxu0
        %7465 = vmatpush.msra.mxu0 0.0
        %7466 = vmatpush.msra.mxu0 0.0
        %7467 = vmatpush.msra.mxu0 0.0
        %7468 = vmatpush.msra.mxu0 0.0
        %7469 = vmatpush.msra.mxu0 0.0
        %7470 = vmatpush.msra.mxu0 0.0
        %7471 = vmatpush.msra.mxu0 0.0
        %7472 = vmatpush.msra.mxu0 0.0
        %7473 = vmatpush.msra.mxu0 %v7374
        %7474 = vmatpush.msra.mxu0 %v7366
        %7475 = vmatpush.msra.mxu0 %v7358
        %7476 = vmatpush.msra.mxu0 %v7350
        %7477 = vmatpush.msra.mxu0 %v7342
        %7478 = vmatpush.msra.mxu0 %v7334
        %7479 = vmatpush.msra.mxu0 %v7326
        %7480 = vmatpush.msra.mxu0 %v7318
        %7481 = vmatmul.f32.gmra.mxu0 %v7383
        %v7482 = vpop.f32.mrf.mxu0
        %v7483 = vadd.f32 0.0, %v7482
        %7484 = vmatmul.f32.gmra.mxu0 %v7386
        %v7485 = vpop.f32.mrf.mxu0
        %v7486 = vadd.f32 0.0, %v7485
        %7487 = vmatmul.f32.gmra.mxu0 %v7389
        %v7488 = vpop.f32.mrf.mxu0
        %v7489 = vadd.f32 0.0, %v7488
        %7490 = vmatmul.f32.gmra.mxu0 %v7392
        %v7491 = vpop.f32.mrf.mxu0
        %v7492 = vadd.f32 0.0, %v7491
        %7493 = vmatmul.f32.gmra.mxu0 %v7395
        %v7494 = vpop.f32.mrf.mxu0
        %v7495 = vadd.f32 0.0, %v7494
        %7496 = vmatmul.f32.gmra.mxu0 %v7398
        %v7497 = vpop.f32.mrf.mxu0
        %v7498 = vadd.f32 0.0, %v7497
        %7499 = vmatmul.f32.gmra.mxu0 %v7401
        %v7500 = vpop.f32.mrf.mxu0
        %v7501 = vadd.f32 0.0, %v7500
        %7502 = vmatmul.f32.gmra.mxu0 %v7404
        %v7503 = vpop.f32.mrf.mxu0
        %v7504 = vadd.f32 0.0, %v7503
        %7505 = vmatmul.f32.gmra.mxu0 %v7407
        %v7506 = vpop.f32.mrf.mxu0
        %v7507 = vadd.f32 0.0, %v7506
        %7508 = vmatmul.f32.gmra.mxu0 %v7410
        %v7509 = vpop.f32.mrf.mxu0
        %v7510 = vadd.f32 0.0, %v7509
        %7511 = vmatmul.f32.gmra.mxu0 %v7413
        %v7512 = vpop.f32.mrf.mxu0
        %v7513 = vadd.f32 0.0, %v7512
        %7514 = vdwg.mxu0
        %7515 = vmatpush.msra.mxu0 0.0
        %7516 = vmatpush.msra.mxu0 0.0
        %7517 = vmatpush.msra.mxu0 0.0
        %7518 = vmatpush.msra.mxu0 0.0
        %7519 = vmatpush.msra.mxu0 0.0
        %7520 = vmatpush.msra.mxu0 0.0
        %7521 = vmatpush.msra.mxu0 0.0
        %7522 = vmatpush.msra.mxu0 0.0
        %7523 = vmatpush.msra.mxu0 %v7375
        %7524 = vmatpush.msra.mxu0 %v7367
        %7525 = vmatpush.msra.mxu0 %v7359
        %7526 = vmatpush.msra.mxu0 %v7351
        %7527 = vmatpush.msra.mxu0 %v7343
        %7528 = vmatpush.msra.mxu0 %v7335
        %7529 = vmatpush.msra.mxu0 %v7327
        %7530 = vmatpush.msra.mxu0 %v7319
        %7531 = vmatmul.f32.gmra.mxu0 %v7383
        %v7532 = vpop.f32.mrf.mxu0
        %v7533 = vadd.f32 0.0, %v7532
        %7534 = vmatmul.f32.gmra.mxu0 %v7386
        %v7535 = vpop.f32.mrf.mxu0
        %v7536 = vadd.f32 0.0, %v7535
        %7537 = vmatmul.f32.gmra.mxu0 %v7389
        %v7538 = vpop.f32.mrf.mxu0
        %v7539 = vadd.f32 0.0, %v7538
        %7540 = vmatmul.f32.gmra.mxu0 %v7392
        %v7541 = vpop.f32.mrf.mxu0
        %v7542 = vadd.f32 0.0, %v7541
        %7543 = vmatmul.f32.gmra.mxu0 %v7395
        %v7544 = vpop.f32.mrf.mxu0
        %v7545 = vadd.f32 0.0, %v7544
        %7546 = vmatmul.f32.gmra.mxu0 %v7398
        %v7547 = vpop.f32.mrf.mxu0
        %v7548 = vadd.f32 0.0, %v7547
        %7549 = vmatmul.f32.gmra.mxu0 %v7401
        %v7550 = vpop.f32.mrf.mxu0
        %v7551 = vadd.f32 0.0, %v7550
        %7552 = vmatmul.f32.gmra.mxu0 %v7404
        %v7553 = vpop.f32.mrf.mxu0
        %v7554 = vadd.f32 0.0, %v7553
        %7555 = vmatmul.f32.gmra.mxu0 %v7407
        %v7556 = vpop.f32.mrf.mxu0
        %v7557 = vadd.f32 0.0, %v7556
        %7558 = vmatmul.f32.gmra.mxu0 %v7410
        %v7559 = vpop.f32.mrf.mxu0
        %v7560 = vadd.f32 0.0, %v7559
        %7561 = vmatmul.f32.gmra.mxu0 %v7413
        %v7562 = vpop.f32.mrf.mxu0
        %v7563 = vadd.f32 0.0, %v7562
        %7564 = vdwg.mxu0
        %7565 = vmatpush.msra.mxu0 0.0
        %7566 = vmatpush.msra.mxu0 0.0
        %7567 = vmatpush.msra.mxu0 0.0
        %7568 = vmatpush.msra.mxu0 0.0
        %7569 = vmatpush.msra.mxu0 0.0
        %7570 = vmatpush.msra.mxu0 0.0
        %7571 = vmatpush.msra.mxu0 0.0
        %7572 = vmatpush.msra.mxu0 0.0
        %7573 = vmatpush.msra.mxu0 %v7376
        %7574 = vmatpush.msra.mxu0 %v7368
        %7575 = vmatpush.msra.mxu0 %v7360
        %7576 = vmatpush.msra.mxu0 %v7352
        %7577 = vmatpush.msra.mxu0 %v7344
        %7578 = vmatpush.msra.mxu0 %v7336
        %7579 = vmatpush.msra.mxu0 %v7328
        %7580 = vmatpush.msra.mxu0 %v7320
        %7581 = vmatmul.f32.gmra.mxu0 %v7383
        %v7582 = vpop.f32.mrf.mxu0
        %v7583 = vadd.f32 0.0, %v7582
        %7584 = vmatmul.f32.gmra.mxu0 %v7386
        %v7585 = vpop.f32.mrf.mxu0
        %v7586 = vadd.f32 0.0, %v7585
        %7587 = vmatmul.f32.gmra.mxu0 %v7389
        %v7588 = vpop.f32.mrf.mxu0
        %v7589 = vadd.f32 0.0, %v7588
        %7590 = vmatmul.f32.gmra.mxu0 %v7392
        %v7591 = vpop.f32.mrf.mxu0
        %v7592 = vadd.f32 0.0, %v7591
        %7593 = vmatmul.f32.gmra.mxu0 %v7395
        %v7594 = vpop.f32.mrf.mxu0
        %v7595 = vadd.f32 0.0, %v7594
        %7596 = vmatmul.f32.gmra.mxu0 %v7398
        %v7597 = vpop.f32.mrf.mxu0
        %v7598 = vadd.f32 0.0, %v7597
        %7599 = vmatmul.f32.gmra.mxu0 %v7401
        %v7600 = vpop.f32.mrf.mxu0
        %v7601 = vadd.f32 0.0, %v7600
        %7602 = vmatmul.f32.gmra.mxu0 %v7404
        %v7603 = vpop.f32.mrf.mxu0
        %v7604 = vadd.f32 0.0, %v7603
        %7605 = vmatmul.f32.gmra.mxu0 %v7407
        %v7606 = vpop.f32.mrf.mxu0
        %v7607 = vadd.f32 0.0, %v7606
        %7608 = vmatmul.f32.gmra.mxu0 %v7410
        %v7609 = vpop.f32.mrf.mxu0
        %v7610 = vadd.f32 0.0, %v7609
        %7611 = vmatmul.f32.gmra.mxu0 %v7413
        %v7612 = vpop.f32.mrf.mxu0
        %v7613 = vadd.f32 0.0, %v7612
        %7614 = vdwg.mxu0
        %7615 = vmatpush.msra.mxu0 0.0
        %7616 = vmatpush.msra.mxu0 0.0
        %7617 = vmatpush.msra.mxu0 0.0
        %7618 = vmatpush.msra.mxu0 0.0
        %7619 = vmatpush.msra.mxu0 0.0
        %7620 = vmatpush.msra.mxu0 0.0
        %7621 = vmatpush.msra.mxu0 0.0
        %7622 = vmatpush.msra.mxu0 0.0
        %7623 = vmatpush.msra.mxu0 %v7377
        %7624 = vmatpush.msra.mxu0 %v7369
        %7625 = vmatpush.msra.mxu0 %v7361
        %7626 = vmatpush.msra.mxu0 %v7353
        %7627 = vmatpush.msra.mxu0 %v7345
        %7628 = vmatpush.msra.mxu0 %v7337
        %7629 = vmatpush.msra.mxu0 %v7329
        %7630 = vmatpush.msra.mxu0 %v7321
        %7631 = vmatmul.f32.gmra.mxu0 %v7383
        %v7632 = vpop.f32.mrf.mxu0
        %v7633 = vadd.f32 0.0, %v7632
        %7634 = vmatmul.f32.gmra.mxu0 %v7386
        %v7635 = vpop.f32.mrf.mxu0
        %v7636 = vadd.f32 0.0, %v7635
        %7637 = vmatmul.f32.gmra.mxu0 %v7389
        %v7638 = vpop.f32.mrf.mxu0
        %v7639 = vadd.f32 0.0, %v7638
        %7640 = vmatmul.f32.gmra.mxu0 %v7392
        %v7641 = vpop.f32.mrf.mxu0
        %v7642 = vadd.f32 0.0, %v7641
        %7643 = vmatmul.f32.gmra.mxu0 %v7395
        %v7644 = vpop.f32.mrf.mxu0
        %v7645 = vadd.f32 0.0, %v7644
        %7646 = vmatmul.f32.gmra.mxu0 %v7398
        %v7647 = vpop.f32.mrf.mxu0
        %v7648 = vadd.f32 0.0, %v7647
        %7649 = vmatmul.f32.gmra.mxu0 %v7401
        %v7650 = vpop.f32.mrf.mxu0
        %v7651 = vadd.f32 0.0, %v7650
        %7652 = vmatmul.f32.gmra.mxu0 %v7404
        %v7653 = vpop.f32.mrf.mxu0
        %v7654 = vadd.f32 0.0, %v7653
        %7655 = vmatmul.f32.gmra.mxu0 %v7407
        %v7656 = vpop.f32.mrf.mxu0
        %v7657 = vadd.f32 0.0, %v7656
        %7658 = vmatmul.f32.gmra.mxu0 %v7410
        %v7659 = vpop.f32.mrf.mxu0
        %v7660 = vadd.f32 0.0, %v7659
        %7661 = vmatmul.f32.gmra.mxu0 %v7413
        %v7662 = vpop.f32.mrf.mxu0
        %v7663 = vadd.f32 0.0, %v7662
        %7664 = vdwg.mxu0
        %7665 = vmatpush.msra.mxu0 0.0
        %7666 = vmatpush.msra.mxu0 0.0
        %7667 = vmatpush.msra.mxu0 0.0
        %7668 = vmatpush.msra.mxu0 0.0
        %7669 = vmatpush.msra.mxu0 0.0
        %7670 = vmatpush.msra.mxu0 0.0
        %7671 = vmatpush.msra.mxu0 0.0
        %7672 = vmatpush.msra.mxu0 0.0
        %7673 = vmatpush.msra.mxu0 %v7378
        %7674 = vmatpush.msra.mxu0 %v7370
        %7675 = vmatpush.msra.mxu0 %v7362
        %7676 = vmatpush.msra.mxu0 %v7354
        %7677 = vmatpush.msra.mxu0 %v7346
        %7678 = vmatpush.msra.mxu0 %v7338
        %7679 = vmatpush.msra.mxu0 %v7330
        %7680 = vmatpush.msra.mxu0 %v7322
        %7681 = vmatmul.f32.gmra.mxu0 %v7383
        %v7682 = vpop.f32.mrf.mxu0
        %v7683 = vadd.f32 0.0, %v7682
        %7684 = vmatmul.f32.gmra.mxu0 %v7386
        %v7685 = vpop.f32.mrf.mxu0
        %v7686 = vadd.f32 0.0, %v7685
        %7687 = vmatmul.f32.gmra.mxu0 %v7389
        %v7688 = vpop.f32.mrf.mxu0
        %v7689 = vadd.f32 0.0, %v7688
        %7690 = vmatmul.f32.gmra.mxu0 %v7392
        %v7691 = vpop.f32.mrf.mxu0
        %v7692 = vadd.f32 0.0, %v7691
        %7693 = vmatmul.f32.gmra.mxu0 %v7395
        %v7694 = vpop.f32.mrf.mxu0
        %v7695 = vadd.f32 0.0, %v7694
        %7696 = vmatmul.f32.gmra.mxu0 %v7398
        %v7697 = vpop.f32.mrf.mxu0
        %v7698 = vadd.f32 0.0, %v7697
        %7699 = vmatmul.f32.gmra.mxu0 %v7401
        %v7700 = vpop.f32.mrf.mxu0
        %v7701 = vadd.f32 0.0, %v7700
        %7702 = vmatmul.f32.gmra.mxu0 %v7404
        %v7703 = vpop.f32.mrf.mxu0
        %v7704 = vadd.f32 0.0, %v7703
        %7705 = vmatmul.f32.gmra.mxu0 %v7407
        %v7706 = vpop.f32.mrf.mxu0
        %v7707 = vadd.f32 0.0, %v7706
        %7708 = vmatmul.f32.gmra.mxu0 %v7410
        %v7709 = vpop.f32.mrf.mxu0
        %v7710 = vadd.f32 0.0, %v7709
        %7711 = vmatmul.f32.gmra.mxu0 %v7413
        %v7712 = vpop.f32.mrf.mxu0
        %v7713 = vadd.f32 0.0, %v7712
        %7714 = vdwg.mxu0
        %7715 = vmatpush.msra.mxu0 0.0
        %7716 = vmatpush.msra.mxu0 0.0
        %7717 = vmatpush.msra.mxu0 0.0
        %7718 = vmatpush.msra.mxu0 0.0
        %7719 = vmatpush.msra.mxu0 0.0
        %7720 = vmatpush.msra.mxu0 0.0
        %7721 = vmatpush.msra.mxu0 0.0
        %7722 = vmatpush.msra.mxu0 0.0
        %7723 = vmatpush.msra.mxu0 %v7379
        %7724 = vmatpush.msra.mxu0 %v7371
        %7725 = vmatpush.msra.mxu0 %v7363
        %7726 = vmatpush.msra.mxu0 %v7355
        %7727 = vmatpush.msra.mxu0 %v7347
        %7728 = vmatpush.msra.mxu0 %v7339
        %7729 = vmatpush.msra.mxu0 %v7331
        %7730 = vmatpush.msra.mxu0 %v7323
        %7731 = vmatmul.f32.gmra.mxu0 %v7383
        %v7732 = vpop.f32.mrf.mxu0
        %v7733 = vadd.f32 0.0, %v7732
        %7734 = vmatmul.f32.gmra.mxu0 %v7386
        %v7735 = vpop.f32.mrf.mxu0
        %v7736 = vadd.f32 0.0, %v7735
        %7737 = vmatmul.f32.gmra.mxu0 %v7389
        %v7738 = vpop.f32.mrf.mxu0
        %v7739 = vadd.f32 0.0, %v7738
        %7740 = vmatmul.f32.gmra.mxu0 %v7392
        %v7741 = vpop.f32.mrf.mxu0
        %v7742 = vadd.f32 0.0, %v7741
        %7743 = vmatmul.f32.gmra.mxu0 %v7395
        %v7744 = vpop.f32.mrf.mxu0
        %v7745 = vadd.f32 0.0, %v7744
        %7746 = vmatmul.f32.gmra.mxu0 %v7398
        %v7747 = vpop.f32.mrf.mxu0
        %v7748 = vadd.f32 0.0, %v7747
        %7749 = vmatmul.f32.gmra.mxu0 %v7401
        %v7750 = vpop.f32.mrf.mxu0
        %v7751 = vadd.f32 0.0, %v7750
        %7752 = vmatmul.f32.gmra.mxu0 %v7404
        %v7753 = vpop.f32.mrf.mxu0
        %v7754 = vadd.f32 0.0, %v7753
        %7755 = vmatmul.f32.gmra.mxu0 %v7407
        %v7756 = vpop.f32.mrf.mxu0
        %v7757 = vadd.f32 0.0, %v7756
        %7758 = vmatmul.f32.gmra.mxu0 %v7410
        %v7759 = vpop.f32.mrf.mxu0
        %v7760 = vadd.f32 0.0, %v7759
        %7761 = vmatmul.f32.gmra.mxu0 %v7413
        %v7762 = vpop.f32.mrf.mxu0
        %v7763 = vadd.f32 0.0, %v7762
        %7764 = vdwg.mxu0
        %7765 = vmatpush.msra.mxu0 0.0
        %7766 = vmatpush.msra.mxu0 0.0
        %7767 = vmatpush.msra.mxu0 0.0
        %7768 = vmatpush.msra.mxu0 0.0
        %7769 = vmatpush.msra.mxu0 0.0
        %7770 = vmatpush.msra.mxu0 0.0
        %7771 = vmatpush.msra.mxu0 0.0
        %7772 = vmatpush.msra.mxu0 0.0
        %7773 = vmatpush.msra.mxu0 %v7380
        %7774 = vmatpush.msra.mxu0 %v7372
        %7775 = vmatpush.msra.mxu0 %v7364
        %7776 = vmatpush.msra.mxu0 %v7356
        %7777 = vmatpush.msra.mxu0 %v7348
        %7778 = vmatpush.msra.mxu0 %v7340
        %7779 = vmatpush.msra.mxu0 %v7332
        %7780 = vmatpush.msra.mxu0 %v7324
        %7781 = vmatmul.f32.gmra.mxu0 %v7383
        %v7782 = vpop.f32.mrf.mxu0
        %v7783 = vadd.f32 0.0, %v7782
        %7784 = vmatmul.f32.gmra.mxu0 %v7386
        %v7785 = vpop.f32.mrf.mxu0
        %v7786 = vadd.f32 0.0, %v7785
        %7787 = vmatmul.f32.gmra.mxu0 %v7389
        %v7788 = vpop.f32.mrf.mxu0
        %v7789 = vadd.f32 0.0, %v7788
        %7790 = vmatmul.f32.gmra.mxu0 %v7392
        %v7791 = vpop.f32.mrf.mxu0
        %v7792 = vadd.f32 0.0, %v7791
        %7793 = vmatmul.f32.gmra.mxu0 %v7395
        %v7794 = vpop.f32.mrf.mxu0
        %v7795 = vadd.f32 0.0, %v7794
        %7796 = vmatmul.f32.gmra.mxu0 %v7398
        %v7797 = vpop.f32.mrf.mxu0
        %v7798 = vadd.f32 0.0, %v7797
        %7799 = vmatmul.f32.gmra.mxu0 %v7401
        %v7800 = vpop.f32.mrf.mxu0
        %v7801 = vadd.f32 0.0, %v7800
        %7802 = vmatmul.f32.gmra.mxu0 %v7404
        %v7803 = vpop.f32.mrf.mxu0
        %v7804 = vadd.f32 0.0, %v7803
        %7805 = vmatmul.f32.gmra.mxu0 %v7407
        %v7806 = vpop.f32.mrf.mxu0
        %v7807 = vadd.f32 0.0, %v7806
        %7808 = vmatmul.f32.gmra.mxu0 %v7410
        %v7809 = vpop.f32.mrf.mxu0
        %v7810 = vadd.f32 0.0, %v7809
        %7811 = vmatmul.f32.gmra.mxu0 %v7413
        %v7812 = vpop.f32.mrf.mxu0
        %v7813 = vadd.f32 0.0, %v7812
        %7814 = vdwg.mxu0
        %7815 = vmatpush.msra.mxu0 0.0
        %7816 = vmatpush.msra.mxu0 0.0
        %7817 = vmatpush.msra.mxu0 0.0
        %7818 = vmatpush.msra.mxu0 0.0
        %7819 = vmatpush.msra.mxu0 0.0
        %7820 = vmatpush.msra.mxu0 0.0
        %7821 = vmatpush.msra.mxu0 0.0
        %7822 = vmatpush.msra.mxu0 0.0
        %7823 = vmatpush.msra.mxu0 %v7237
        %7824 = vmatpush.msra.mxu0 %v7229
        %7825 = vmatpush.msra.mxu0 %v7221
        %7826 = vmatpush.msra.mxu0 %v7213
        %7827 = vmatpush.msra.mxu0 %v7205
        %7828 = vmatpush.msra.mxu0 %v7197
        %7829 = vmatpush.msra.mxu0 %v7189
        %7830 = vmatpush.msra.mxu0 %v7181
        %7831 = vmatmul.f32.gmra.mxu0 %v7383
        %v7832 = vpop.f32.mrf.mxu0
        %v7833 = vadd.f32 0.0, %v7832
        %7834 = vmatmul.f32.gmra.mxu0 %v7386
        %v7835 = vpop.f32.mrf.mxu0
        %v7836 = vadd.f32 0.0, %v7835
        %7837 = vmatmul.f32.gmra.mxu0 %v7389
        %v7838 = vpop.f32.mrf.mxu0
        %v7839 = vadd.f32 0.0, %v7838
        %7840 = vmatmul.f32.gmra.mxu0 %v7392
        %v7841 = vpop.f32.mrf.mxu0
        %v7842 = vadd.f32 0.0, %v7841
        %7843 = vmatmul.f32.gmra.mxu0 %v7395
        %v7844 = vpop.f32.mrf.mxu0
        %v7845 = vadd.f32 0.0, %v7844
        %7846 = vmatmul.f32.gmra.mxu0 %v7398
        %v7847 = vpop.f32.mrf.mxu0
        %v7848 = vadd.f32 0.0, %v7847
        %7849 = vmatmul.f32.gmra.mxu0 %v7401
        %v7850 = vpop.f32.mrf.mxu0
        %v7851 = vadd.f32 0.0, %v7850
        %7852 = vmatmul.f32.gmra.mxu0 %v7404
        %v7853 = vpop.f32.mrf.mxu0
        %v7854 = vadd.f32 0.0, %v7853
        %7855 = vmatmul.f32.gmra.mxu0 %v7407
        %v7856 = vpop.f32.mrf.mxu0
        %v7857 = vadd.f32 0.0, %v7856
        %7858 = vmatmul.f32.gmra.mxu0 %v7410
        %v7859 = vpop.f32.mrf.mxu0
        %v7860 = vadd.f32 0.0, %v7859
        %7861 = vmatmul.f32.gmra.mxu0 %v7413
        %v7862 = vpop.f32.mrf.mxu0
        %v7863 = vadd.f32 0.0, %v7862
        %7864 = vdwg.mxu0
        %7865 = vmatpush.msra.mxu0 0.0
        %7866 = vmatpush.msra.mxu0 0.0
        %7867 = vmatpush.msra.mxu0 0.0
        %7868 = vmatpush.msra.mxu0 0.0
        %7869 = vmatpush.msra.mxu0 0.0
        %7870 = vmatpush.msra.mxu0 0.0
        %7871 = vmatpush.msra.mxu0 0.0
        %7872 = vmatpush.msra.mxu0 0.0
        %7873 = vmatpush.msra.mxu0 %v7238
        %7874 = vmatpush.msra.mxu0 %v7230
        %7875 = vmatpush.msra.mxu0 %v7222
        %7876 = vmatpush.msra.mxu0 %v7214
        %7877 = vmatpush.msra.mxu0 %v7206
        %7878 = vmatpush.msra.mxu0 %v7198
        %7879 = vmatpush.msra.mxu0 %v7190
        %7880 = vmatpush.msra.mxu0 %v7182
        %7881 = vmatmul.f32.gmra.mxu0 %v7383
        %v7882 = vpop.f32.mrf.mxu0
        %v7883 = vadd.f32 0.0, %v7882
        %7884 = vmatmul.f32.gmra.mxu0 %v7386
        %v7885 = vpop.f32.mrf.mxu0
        %v7886 = vadd.f32 0.0, %v7885
        %7887 = vmatmul.f32.gmra.mxu0 %v7389
        %v7888 = vpop.f32.mrf.mxu0
        %v7889 = vadd.f32 0.0, %v7888
        %7890 = vmatmul.f32.gmra.mxu0 %v7392
        %v7891 = vpop.f32.mrf.mxu0
        %v7892 = vadd.f32 0.0, %v7891
        %7893 = vmatmul.f32.gmra.mxu0 %v7395
        %v7894 = vpop.f32.mrf.mxu0
        %v7895 = vadd.f32 0.0, %v7894
        %7896 = vmatmul.f32.gmra.mxu0 %v7398
        %v7897 = vpop.f32.mrf.mxu0
        %v7898 = vadd.f32 0.0, %v7897
        %7899 = vmatmul.f32.gmra.mxu0 %v7401
        %v7900 = vpop.f32.mrf.mxu0
        %v7901 = vadd.f32 0.0, %v7900
        %7902 = vmatmul.f32.gmra.mxu0 %v7404
        %v7903 = vpop.f32.mrf.mxu0
        %v7904 = vadd.f32 0.0, %v7903
        %7905 = vmatmul.f32.gmra.mxu0 %v7407
        %v7906 = vpop.f32.mrf.mxu0
        %v7907 = vadd.f32 0.0, %v7906
        %7908 = vmatmul.f32.gmra.mxu0 %v7410
        %v7909 = vpop.f32.mrf.mxu0
        %v7910 = vadd.f32 0.0, %v7909
        %7911 = vmatmul.f32.gmra.mxu0 %v7413
        %v7912 = vpop.f32.mrf.mxu0
        %v7913 = vadd.f32 0.0, %v7912
        %7914 = vdwg.mxu0
        %7915 = vmatpush.msra.mxu0 0.0
        %7916 = vmatpush.msra.mxu0 0.0
        %7917 = vmatpush.msra.mxu0 0.0
        %7918 = vmatpush.msra.mxu0 0.0
        %7919 = vmatpush.msra.mxu0 0.0
        %7920 = vmatpush.msra.mxu0 0.0
        %7921 = vmatpush.msra.mxu0 0.0
        %7922 = vmatpush.msra.mxu0 0.0
        %7923 = vmatpush.msra.mxu0 %v7239
        %7924 = vmatpush.msra.mxu0 %v7231
        %7925 = vmatpush.msra.mxu0 %v7223
        %7926 = vmatpush.msra.mxu0 %v7215
        %7927 = vmatpush.msra.mxu0 %v7207
        %7928 = vmatpush.msra.mxu0 %v7199
        %7929 = vmatpush.msra.mxu0 %v7191
        %7930 = vmatpush.msra.mxu0 %v7183
        %7931 = vmatmul.f32.gmra.mxu0 %v7383
        %v7932 = vpop.f32.mrf.mxu0
        %v7933 = vadd.f32 0.0, %v7932
        %7934 = vmatmul.f32.gmra.mxu0 %v7386
        %v7935 = vpop.f32.mrf.mxu0
        %v7936 = vadd.f32 0.0, %v7935
        %7937 = vmatmul.f32.gmra.mxu0 %v7389
        %v7938 = vpop.f32.mrf.mxu0
        %v7939 = vadd.f32 0.0, %v7938
        %7940 = vmatmul.f32.gmra.mxu0 %v7392
        %v7941 = vpop.f32.mrf.mxu0
        %v7942 = vadd.f32 0.0, %v7941
        %7943 = vmatmul.f32.gmra.mxu0 %v7395
        %v7944 = vpop.f32.mrf.mxu0
        %v7945 = vadd.f32 0.0, %v7944
        %7946 = vmatmul.f32.gmra.mxu0 %v7398
        %v7947 = vpop.f32.mrf.mxu0
        %v7948 = vadd.f32 0.0, %v7947
        %7949 = vmatmul.f32.gmra.mxu0 %v7401
        %v7950 = vpop.f32.mrf.mxu0
        %v7951 = vadd.f32 0.0, %v7950
        %7952 = vmatmul.f32.gmra.mxu0 %v7404
        %v7953 = vpop.f32.mrf.mxu0
        %v7954 = vadd.f32 0.0, %v7953
        %7955 = vmatmul.f32.gmra.mxu0 %v7407
        %v7956 = vpop.f32.mrf.mxu0
        %v7957 = vadd.f32 0.0, %v7956
        %7958 = vmatmul.f32.gmra.mxu0 %v7410
        %v7959 = vpop.f32.mrf.mxu0
        %v7960 = vadd.f32 0.0, %v7959
        %7961 = vmatmul.f32.gmra.mxu0 %v7413
        %v7962 = vpop.f32.mrf.mxu0
        %v7963 = vadd.f32 0.0, %v7962
        %7964 = vdwg.mxu0
        %7965 = vmatpush.msra.mxu0 0.0
        %7966 = vmatpush.msra.mxu0 0.0
        %7967 = vmatpush.msra.mxu0 0.0
        %7968 = vmatpush.msra.mxu0 0.0
        %7969 = vmatpush.msra.mxu0 0.0
        %7970 = vmatpush.msra.mxu0 0.0
        %7971 = vmatpush.msra.mxu0 0.0
        %7972 = vmatpush.msra.mxu0 0.0
        %7973 = vmatpush.msra.mxu0 %v7240
        %7974 = vmatpush.msra.mxu0 %v7232
        %7975 = vmatpush.msra.mxu0 %v7224
        %7976 = vmatpush.msra.mxu0 %v7216
        %7977 = vmatpush.msra.mxu0 %v7208
        %7978 = vmatpush.msra.mxu0 %v7200
        %7979 = vmatpush.msra.mxu0 %v7192
        %7980 = vmatpush.msra.mxu0 %v7184
        %7981 = vmatmul.f32.gmra.mxu0 %v7383
        %v7982 = vpop.f32.mrf.mxu0
        %v7983 = vadd.f32 0.0, %v7982
        %7984 = vmatmul.f32.gmra.mxu0 %v7386
        %v7985 = vpop.f32.mrf.mxu0
        %v7986 = vadd.f32 0.0, %v7985
        %7987 = vmatmul.f32.gmra.mxu0 %v7389
        %v7988 = vpop.f32.mrf.mxu0
        %v7989 = vadd.f32 0.0, %v7988
        %7990 = vmatmul.f32.gmra.mxu0 %v7392
        %v7991 = vpop.f32.mrf.mxu0
        %v7992 = vadd.f32 0.0, %v7991
        %7993 = vmatmul.f32.gmra.mxu0 %v7395
        %v7994 = vpop.f32.mrf.mxu0
        %v7995 = vadd.f32 0.0, %v7994
        %7996 = vmatmul.f32.gmra.mxu0 %v7398
        %v7997 = vpop.f32.mrf.mxu0
        %v7998 = vadd.f32 0.0, %v7997
        %7999 = vmatmul.f32.gmra.mxu0 %v7401
        %v8000 = vpop.f32.mrf.mxu0
        %v8001 = vadd.f32 0.0, %v8000
        %8002 = vmatmul.f32.gmra.mxu0 %v7404
        %v8003 = vpop.f32.mrf.mxu0
        %v8004 = vadd.f32 0.0, %v8003
        %8005 = vmatmul.f32.gmra.mxu0 %v7407
        %v8006 = vpop.f32.mrf.mxu0
        %v8007 = vadd.f32 0.0, %v8006
        %8008 = vmatmul.f32.gmra.mxu0 %v7410
        %v8009 = vpop.f32.mrf.mxu0
        %v8010 = vadd.f32 0.0, %v8009
        %8011 = vmatmul.f32.gmra.mxu0 %v7413
        %v8012 = vpop.f32.mrf.mxu0
        %v8013 = vadd.f32 0.0, %v8012
        %8014 = vdwg.mxu0
        %8015 = vmatpush.msra.mxu0 0.0
        %8016 = vmatpush.msra.mxu0 0.0
        %8017 = vmatpush.msra.mxu0 0.0
        %8018 = vmatpush.msra.mxu0 0.0
        %8019 = vmatpush.msra.mxu0 0.0
        %8020 = vmatpush.msra.mxu0 0.0
        %8021 = vmatpush.msra.mxu0 0.0
        %8022 = vmatpush.msra.mxu0 0.0
        %8023 = vmatpush.msra.mxu0 %v7241
        %8024 = vmatpush.msra.mxu0 %v7233
        %8025 = vmatpush.msra.mxu0 %v7225
        %8026 = vmatpush.msra.mxu0 %v7217
        %8027 = vmatpush.msra.mxu0 %v7209
        %8028 = vmatpush.msra.mxu0 %v7201
        %8029 = vmatpush.msra.mxu0 %v7193
        %8030 = vmatpush.msra.mxu0 %v7185
        %8031 = vmatmul.f32.gmra.mxu0 %v7383
        %v8032 = vpop.f32.mrf.mxu0
        %v8033 = vadd.f32 0.0, %v8032
        %8034 = vmatmul.f32.gmra.mxu0 %v7386
        %v8035 = vpop.f32.mrf.mxu0
        %v8036 = vadd.f32 0.0, %v8035
        %8037 = vmatmul.f32.gmra.mxu0 %v7389
        %v8038 = vpop.f32.mrf.mxu0
        %v8039 = vadd.f32 0.0, %v8038
        %8040 = vmatmul.f32.gmra.mxu0 %v7392
        %v8041 = vpop.f32.mrf.mxu0
        %v8042 = vadd.f32 0.0, %v8041
        %8043 = vmatmul.f32.gmra.mxu0 %v7395
        %v8044 = vpop.f32.mrf.mxu0
        %v8045 = vadd.f32 0.0, %v8044
        %8046 = vmatmul.f32.gmra.mxu0 %v7398
        %v8047 = vpop.f32.mrf.mxu0
        %v8048 = vadd.f32 0.0, %v8047
        %8049 = vmatmul.f32.gmra.mxu0 %v7401
        %v8050 = vpop.f32.mrf.mxu0
        %v8051 = vadd.f32 0.0, %v8050
        %8052 = vmatmul.f32.gmra.mxu0 %v7404
        %v8053 = vpop.f32.mrf.mxu0
        %v8054 = vadd.f32 0.0, %v8053
        %8055 = vmatmul.f32.gmra.mxu0 %v7407
        %v8056 = vpop.f32.mrf.mxu0
        %v8057 = vadd.f32 0.0, %v8056
        %8058 = vmatmul.f32.gmra.mxu0 %v7410
        %v8059 = vpop.f32.mrf.mxu0
        %v8060 = vadd.f32 0.0, %v8059
        %8061 = vmatmul.f32.gmra.mxu0 %v7413
        %v8062 = vpop.f32.mrf.mxu0
        %v8063 = vadd.f32 0.0, %v8062
        %8064 = vdwg.mxu0
        %8065 = vmatpush.msra.mxu0 0.0
        %8066 = vmatpush.msra.mxu0 0.0
        %8067 = vmatpush.msra.mxu0 0.0
        %8068 = vmatpush.msra.mxu0 0.0
        %8069 = vmatpush.msra.mxu0 0.0
        %8070 = vmatpush.msra.mxu0 0.0
        %8071 = vmatpush.msra.mxu0 0.0
        %8072 = vmatpush.msra.mxu0 0.0
        %8073 = vmatpush.msra.mxu0 %v7242
        %8074 = vmatpush.msra.mxu0 %v7234
        %8075 = vmatpush.msra.mxu0 %v7226
        %8076 = vmatpush.msra.mxu0 %v7218
        %8077 = vmatpush.msra.mxu0 %v7210
        %8078 = vmatpush.msra.mxu0 %v7202
        %8079 = vmatpush.msra.mxu0 %v7194
        %8080 = vmatpush.msra.mxu0 %v7186
        %8081 = vmatmul.f32.gmra.mxu0 %v7383
        %v8082 = vpop.f32.mrf.mxu0
        %v8083 = vadd.f32 0.0, %v8082
        %8084 = vmatmul.f32.gmra.mxu0 %v7386
        %v8085 = vpop.f32.mrf.mxu0
        %v8086 = vadd.f32 0.0, %v8085
        %8087 = vmatmul.f32.gmra.mxu0 %v7389
        %v8088 = vpop.f32.mrf.mxu0
        %v8089 = vadd.f32 0.0, %v8088
        %8090 = vmatmul.f32.gmra.mxu0 %v7392
        %v8091 = vpop.f32.mrf.mxu0
        %v8092 = vadd.f32 0.0, %v8091
        %8093 = vmatmul.f32.gmra.mxu0 %v7395
        %v8094 = vpop.f32.mrf.mxu0
        %v8095 = vadd.f32 0.0, %v8094
        %8096 = vmatmul.f32.gmra.mxu0 %v7398
        %v8097 = vpop.f32.mrf.mxu0
        %v8098 = vadd.f32 0.0, %v8097
        %8099 = vmatmul.f32.gmra.mxu0 %v7401
        %v8100 = vpop.f32.mrf.mxu0
        %v8101 = vadd.f32 0.0, %v8100
        %8102 = vmatmul.f32.gmra.mxu0 %v7404
        %v8103 = vpop.f32.mrf.mxu0
        %v8104 = vadd.f32 0.0, %v8103
        %8105 = vmatmul.f32.gmra.mxu0 %v7407
        %v8106 = vpop.f32.mrf.mxu0
        %v8107 = vadd.f32 0.0, %v8106
        %8108 = vmatmul.f32.gmra.mxu0 %v7410
        %v8109 = vpop.f32.mrf.mxu0
        %v8110 = vadd.f32 0.0, %v8109
        %8111 = vmatmul.f32.gmra.mxu0 %v7413
        %v8112 = vpop.f32.mrf.mxu0
        %v8113 = vadd.f32 0.0, %v8112
        %8114 = vdwg.mxu0
        %8115 = vmatpush.msra.mxu0 0.0
        %8116 = vmatpush.msra.mxu0 0.0
        %8117 = vmatpush.msra.mxu0 0.0
        %8118 = vmatpush.msra.mxu0 0.0
        %8119 = vmatpush.msra.mxu0 0.0
        %8120 = vmatpush.msra.mxu0 0.0
        %8121 = vmatpush.msra.mxu0 0.0
        %8122 = vmatpush.msra.mxu0 0.0
        %8123 = vmatpush.msra.mxu0 %v7243
        %8124 = vmatpush.msra.mxu0 %v7235
        %8125 = vmatpush.msra.mxu0 %v7227
        %8126 = vmatpush.msra.mxu0 %v7219
        %8127 = vmatpush.msra.mxu0 %v7211
        %8128 = vmatpush.msra.mxu0 %v7203
        %8129 = vmatpush.msra.mxu0 %v7195
        %8130 = vmatpush.msra.mxu0 %v7187
        %8131 = vmatmul.f32.gmra.mxu0 %v7383
        %v8132 = vpop.f32.mrf.mxu0
        %v8133 = vadd.f32 0.0, %v8132
        %8134 = vmatmul.f32.gmra.mxu0 %v7386
        %v8135 = vpop.f32.mrf.mxu0
        %v8136 = vadd.f32 0.0, %v8135
        %8137 = vmatmul.f32.gmra.mxu0 %v7389
        %v8138 = vpop.f32.mrf.mxu0
        %v8139 = vadd.f32 0.0, %v8138
        %8140 = vmatmul.f32.gmra.mxu0 %v7392
        %v8141 = vpop.f32.mrf.mxu0
        %v8142 = vadd.f32 0.0, %v8141
        %8143 = vmatmul.f32.gmra.mxu0 %v7395
        %v8144 = vpop.f32.mrf.mxu0
        %v8145 = vadd.f32 0.0, %v8144
        %8146 = vmatmul.f32.gmra.mxu0 %v7398
        %v8147 = vpop.f32.mrf.mxu0
        %v8148 = vadd.f32 0.0, %v8147
        %8149 = vmatmul.f32.gmra.mxu0 %v7401
        %v8150 = vpop.f32.mrf.mxu0
        %v8151 = vadd.f32 0.0, %v8150
        %8152 = vmatmul.f32.gmra.mxu0 %v7404
        %v8153 = vpop.f32.mrf.mxu0
        %v8154 = vadd.f32 0.0, %v8153
        %8155 = vmatmul.f32.gmra.mxu0 %v7407
        %v8156 = vpop.f32.mrf.mxu0
        %v8157 = vadd.f32 0.0, %v8156
        %8158 = vmatmul.f32.gmra.mxu0 %v7410
        %v8159 = vpop.f32.mrf.mxu0
        %v8160 = vadd.f32 0.0, %v8159
        %8161 = vmatmul.f32.gmra.mxu0 %v7413
        %v8162 = vpop.f32.mrf.mxu0
        %v8163 = vadd.f32 0.0, %v8162
        %8164 = vdwg.mxu0
        %8165 = vmatpush.msra.mxu0 0.0
        %8166 = vmatpush.msra.mxu0 0.0
        %8167 = vmatpush.msra.mxu0 0.0
        %8168 = vmatpush.msra.mxu0 0.0
        %8169 = vmatpush.msra.mxu0 0.0
        %8170 = vmatpush.msra.mxu0 0.0
        %8171 = vmatpush.msra.mxu0 0.0
        %8172 = vmatpush.msra.mxu0 0.0
        %8173 = vmatpush.msra.mxu0 %v7244
        %8174 = vmatpush.msra.mxu0 %v7236
        %8175 = vmatpush.msra.mxu0 %v7228
        %8176 = vmatpush.msra.mxu0 %v7220
        %8177 = vmatpush.msra.mxu0 %v7212
        %8178 = vmatpush.msra.mxu0 %v7204
        %8179 = vmatpush.msra.mxu0 %v7196
        %8180 = vmatpush.msra.mxu0 %v7188
        %8181 = vmatmul.f32.gmra.mxu0 %v7383
        %v8182 = vpop.f32.mrf.mxu0
        %v8183 = vadd.f32 0.0, %v8182
        %8184 = vmatmul.f32.gmra.mxu0 %v7386
        %v8185 = vpop.f32.mrf.mxu0
        %v8186 = vadd.f32 0.0, %v8185
        %8187 = vmatmul.f32.gmra.mxu0 %v7389
        %v8188 = vpop.f32.mrf.mxu0
        %v8189 = vadd.f32 0.0, %v8188
        %8190 = vmatmul.f32.gmra.mxu0 %v7392
        %v8191 = vpop.f32.mrf.mxu0
        %v8192 = vadd.f32 0.0, %v8191
        %8193 = vmatmul.f32.gmra.mxu0 %v7395
        %v8194 = vpop.f32.mrf.mxu0
        %v8195 = vadd.f32 0.0, %v8194
        %8196 = vmatmul.f32.gmra.mxu0 %v7398
        %v8197 = vpop.f32.mrf.mxu0
        %v8198 = vadd.f32 0.0, %v8197
        %8199 = vmatmul.f32.gmra.mxu0 %v7401
        %v8200 = vpop.f32.mrf.mxu0
        %v8201 = vadd.f32 0.0, %v8200
        %8202 = vmatmul.f32.gmra.mxu0 %v7404
        %v8203 = vpop.f32.mrf.mxu0
        %v8204 = vadd.f32 0.0, %v8203
        %8205 = vmatmul.f32.gmra.mxu0 %v7407
        %v8206 = vpop.f32.mrf.mxu0
        %v8207 = vadd.f32 0.0, %v8206
        %8208 = vmatmul.f32.gmra.mxu0 %v7410
        %v8209 = vpop.f32.mrf.mxu0
        %v8210 = vadd.f32 0.0, %v8209
        %8211 = vmatmul.f32.gmra.mxu0 %v7413
        %v8212 = vpop.f32.mrf.mxu0
        %v8213 = vadd.f32 0.0, %v8212
        %8214 = vdwg.mxu0
        %v8215 = vmul.f32 %v5268, %v7433
        %v8216 = vmul.f32 %v5330, %v7483
        %v8217 = vmul.f32 %v5392, %v7533
        %v8218 = vmul.f32 %v5454, %v7583
        %v8219 = vmul.f32 %v5516, %v7633
        %v8220 = vmul.f32 %v5578, %v7683
        %v8221 = vmul.f32 %v5640, %v7733
        %v8222 = vmul.f32 %v5702, %v7783
        %v8223 = vmul.f32 %v5271, %v7436
        %v8224 = vmul.f32 %v5333, %v7486
        %v8225 = vmul.f32 %v5395, %v7536
        %v8226 = vmul.f32 %v5457, %v7586
        %v8227 = vmul.f32 %v5519, %v7636
        %v8228 = vmul.f32 %v5581, %v7686
        %v8229 = vmul.f32 %v5643, %v7736
        %v8230 = vmul.f32 %v5705, %v7786
        %v8231 = vmul.f32 %v5274, %v7439
        %v8232 = vmul.f32 %v5336, %v7489
        %v8233 = vmul.f32 %v5398, %v7539
        %v8234 = vmul.f32 %v5460, %v7589
        %v8235 = vmul.f32 %v5522, %v7639
        %v8236 = vmul.f32 %v5584, %v7689
        %v8237 = vmul.f32 %v5646, %v7739
        %v8238 = vmul.f32 %v5708, %v7789
        %v8239 = vmul.f32 %v5277, %v7442
        %v8240 = vmul.f32 %v5339, %v7492
        %v8241 = vmul.f32 %v5401, %v7542
        %v8242 = vmul.f32 %v5463, %v7592
        %v8243 = vmul.f32 %v5525, %v7642
        %v8244 = vmul.f32 %v5587, %v7692
        %v8245 = vmul.f32 %v5649, %v7742
        %v8246 = vmul.f32 %v5711, %v7792
        %v8247 = vmul.f32 %v5280, %v7445
        %v8248 = vmul.f32 %v5342, %v7495
        %v8249 = vmul.f32 %v5404, %v7545
        %v8250 = vmul.f32 %v5466, %v7595
        %v8251 = vmul.f32 %v5528, %v7645
        %v8252 = vmul.f32 %v5590, %v7695
        %v8253 = vmul.f32 %v5652, %v7745
        %v8254 = vmul.f32 %v5714, %v7795
        %v8255 = vmul.f32 %v5283, %v7448
        %v8256 = vmul.f32 %v5345, %v7498
        %v8257 = vmul.f32 %v5407, %v7548
        %v8258 = vmul.f32 %v5469, %v7598
        %v8259 = vmul.f32 %v5531, %v7648
        %v8260 = vmul.f32 %v5593, %v7698
        %v8261 = vmul.f32 %v5655, %v7748
        %v8262 = vmul.f32 %v5717, %v7798
        %v8263 = vmul.f32 %v5286, %v7451
        %v8264 = vmul.f32 %v5348, %v7501
        %v8265 = vmul.f32 %v5410, %v7551
        %v8266 = vmul.f32 %v5472, %v7601
        %v8267 = vmul.f32 %v5534, %v7651
        %v8268 = vmul.f32 %v5596, %v7701
        %v8269 = vmul.f32 %v5658, %v7751
        %v8270 = vmul.f32 %v5720, %v7801
        %v8271 = vmul.f32 %v5289, %v7454
        %v8272 = vmul.f32 %v5351, %v7504
        %v8273 = vmul.f32 %v5413, %v7554
        %v8274 = vmul.f32 %v5475, %v7604
        %v8275 = vmul.f32 %v5537, %v7654
        %v8276 = vmul.f32 %v5599, %v7704
        %v8277 = vmul.f32 %v5661, %v7754
        %v8278 = vmul.f32 %v5723, %v7804
        %v8279 = vmul.f32 %v5292, %v7457
        %v8280 = vmul.f32 %v5354, %v7507
        %v8281 = vmul.f32 %v5416, %v7557
        %v8282 = vmul.f32 %v5478, %v7607
        %v8283 = vmul.f32 %v5540, %v7657
        %v8284 = vmul.f32 %v5602, %v7707
        %v8285 = vmul.f32 %v5664, %v7757
        %v8286 = vmul.f32 %v5726, %v7807
        %v8287 = vmul.f32 %v5295, %v7460
        %v8288 = vmul.f32 %v5357, %v7510
        %v8289 = vmul.f32 %v5419, %v7560
        %v8290 = vmul.f32 %v5481, %v7610
        %v8291 = vmul.f32 %v5543, %v7660
        %v8292 = vmul.f32 %v5605, %v7710
        %v8293 = vmul.f32 %v5667, %v7760
        %v8294 = vmul.f32 %v5729, %v7810
        %v8295 = vmul.f32 %v5298, %v7463
        %v8296 = vmul.f32 %v5360, %v7513
        %v8297 = vmul.f32 %v5422, %v7563
        %v8298 = vmul.f32 %v5484, %v7613
        %v8299 = vmul.f32 %v5546, %v7663
        %v8300 = vmul.f32 %v5608, %v7713
        %v8301 = vmul.f32 %v5670, %v7763
        %v8302 = vmul.f32 %v5732, %v7813
        %8303 = vmatpush.msra.mxu0 %v6597
        %8304 = vmatpush.msra.mxu0 %v6596
        %8305 = vmatpush.msra.mxu0 %v6595
        %8306 = vmatpush.msra.mxu0 %v6594
        %8307 = vmatpush.msra.mxu0 %v6593
        %8308 = vmatpush.msra.mxu0 %v6592
        %8309 = vmatpush.msra.mxu0 %v6591
        %8310 = vmatpush.msra.mxu0 %v6590
        %8311 = vmatpush.msra.mxu0 %v6589
        %8312 = vmatpush.msra.mxu0 %v6588
        %8313 = vmatpush.msra.mxu0 %v6587
        %8314 = vmatpush.msra.mxu0 %v6586
        %8315 = vmatpush.msra.mxu0 %v6585
        %8316 = vmatpush.msra.mxu0 %v6584
        %8317 = vmatpush.msra.mxu0 %v6583
        %8318 = vmatpush.msra.mxu0 %v6582
        %8319 = vmatmul.f32.gmra.mxu0 %v8215
        %v8320 = vpop.f32.mrf.mxu0
        %v8321 = vadd.f32 0.0, %v8320
        %8322 = vmatmul.f32.gmra.mxu0 %v8223
        %v8323 = vpop.f32.mrf.mxu0
        %v8324 = vadd.f32 0.0, %v8323
        %8325 = vmatmul.f32.gmra.mxu0 %v8231
        %v8326 = vpop.f32.mrf.mxu0
        %v8327 = vadd.f32 0.0, %v8326
        %8328 = vmatmul.f32.gmra.mxu0 %v8239
        %v8329 = vpop.f32.mrf.mxu0
        %v8330 = vadd.f32 0.0, %v8329
        %8331 = vmatmul.f32.gmra.mxu0 %v8247
        %v8332 = vpop.f32.mrf.mxu0
        %v8333 = vadd.f32 0.0, %v8332
        %8334 = vmatmul.f32.gmra.mxu0 %v8255
        %v8335 = vpop.f32.mrf.mxu0
        %v8336 = vadd.f32 0.0, %v8335
        %8337 = vmatmul.f32.gmra.mxu0 %v8263
        %v8338 = vpop.f32.mrf.mxu0
        %v8339 = vadd.f32 0.0, %v8338
        %8340 = vmatmul.f32.gmra.mxu0 %v8271
        %v8341 = vpop.f32.mrf.mxu0
        %v8342 = vadd.f32 0.0, %v8341
        %8343 = vmatmul.f32.gmra.mxu0 %v8279
        %v8344 = vpop.f32.mrf.mxu0
        %v8345 = vadd.f32 0.0, %v8344
        %8346 = vmatmul.f32.gmra.mxu0 %v8287
        %v8347 = vpop.f32.mrf.mxu0
        %v8348 = vadd.f32 0.0, %v8347
        %8349 = vmatmul.f32.gmra.mxu0 %v8295
        %v8350 = vpop.f32.mrf.mxu0
        %v8351 = vadd.f32 0.0, %v8350
        %8352 = vdwg.mxu0
        %8353 = vmatpush.msra.mxu0 %v6613
        %8354 = vmatpush.msra.mxu0 %v6612
        %8355 = vmatpush.msra.mxu0 %v6611
        %8356 = vmatpush.msra.mxu0 %v6610
        %8357 = vmatpush.msra.mxu0 %v6609
        %8358 = vmatpush.msra.mxu0 %v6608
        %8359 = vmatpush.msra.mxu0 %v6607
        %8360 = vmatpush.msra.mxu0 %v6606
        %8361 = vmatpush.msra.mxu0 %v6605
        %8362 = vmatpush.msra.mxu0 %v6604
        %8363 = vmatpush.msra.mxu0 %v6603
        %8364 = vmatpush.msra.mxu0 %v6602
        %8365 = vmatpush.msra.mxu0 %v6601
        %8366 = vmatpush.msra.mxu0 %v6600
        %8367 = vmatpush.msra.mxu0 %v6599
        %8368 = vmatpush.msra.mxu0 %v6598
        %8369 = vmatmul.f32.gmra.mxu0 %v8216
        %v8370 = vpop.f32.mrf.mxu0
        %v8371 = vadd.f32 %v8321, %v8370
        %8372 = vmatmul.f32.gmra.mxu0 %v8224
        %v8373 = vpop.f32.mrf.mxu0
        %v8374 = vadd.f32 %v8324, %v8373
        %8375 = vmatmul.f32.gmra.mxu0 %v8232
        %v8376 = vpop.f32.mrf.mxu0
        %v8377 = vadd.f32 %v8327, %v8376
        %8378 = vmatmul.f32.gmra.mxu0 %v8240
        %v8379 = vpop.f32.mrf.mxu0
        %v8380 = vadd.f32 %v8330, %v8379
        %8381 = vmatmul.f32.gmra.mxu0 %v8248
        %v8382 = vpop.f32.mrf.mxu0
        %v8383 = vadd.f32 %v8333, %v8382
        %8384 = vmatmul.f32.gmra.mxu0 %v8256
        %v8385 = vpop.f32.mrf.mxu0
        %v8386 = vadd.f32 %v8336, %v8385
        %8387 = vmatmul.f32.gmra.mxu0 %v8264
        %v8388 = vpop.f32.mrf.mxu0
        %v8389 = vadd.f32 %v8339, %v8388
        %8390 = vmatmul.f32.gmra.mxu0 %v8272
        %v8391 = vpop.f32.mrf.mxu0
        %v8392 = vadd.f32 %v8342, %v8391
        %8393 = vmatmul.f32.gmra.mxu0 %v8280
        %v8394 = vpop.f32.mrf.mxu0
        %v8395 = vadd.f32 %v8345, %v8394
        %8396 = vmatmul.f32.gmra.mxu0 %v8288
        %v8397 = vpop.f32.mrf.mxu0
        %v8398 = vadd.f32 %v8348, %v8397
        %8399 = vmatmul.f32.gmra.mxu0 %v8296
        %v8400 = vpop.f32.mrf.mxu0
        %v8401 = vadd.f32 %v8351, %v8400
        %8402 = vdwg.mxu0
        %8403 = vmatpush.msra.mxu0 %v6629
        %8404 = vmatpush.msra.mxu0 %v6628
        %8405 = vmatpush.msra.mxu0 %v6627
        %8406 = vmatpush.msra.mxu0 %v6626
        %8407 = vmatpush.msra.mxu0 %v6625
        %8408 = vmatpush.msra.mxu0 %v6624
        %8409 = vmatpush.msra.mxu0 %v6623
        %8410 = vmatpush.msra.mxu0 %v6622
        %8411 = vmatpush.msra.mxu0 %v6621
        %8412 = vmatpush.msra.mxu0 %v6620
        %8413 = vmatpush.msra.mxu0 %v6619
        %8414 = vmatpush.msra.mxu0 %v6618
        %8415 = vmatpush.msra.mxu0 %v6617
        %8416 = vmatpush.msra.mxu0 %v6616
        %8417 = vmatpush.msra.mxu0 %v6615
        %8418 = vmatpush.msra.mxu0 %v6614
        %8419 = vmatmul.f32.gmra.mxu0 %v8217
        %v8420 = vpop.f32.mrf.mxu0
        %v8421 = vadd.f32 %v8371, %v8420
        %8422 = vmatmul.f32.gmra.mxu0 %v8225
        %v8423 = vpop.f32.mrf.mxu0
        %v8424 = vadd.f32 %v8374, %v8423
        %8425 = vmatmul.f32.gmra.mxu0 %v8233
        %v8426 = vpop.f32.mrf.mxu0
        %v8427 = vadd.f32 %v8377, %v8426
        %8428 = vmatmul.f32.gmra.mxu0 %v8241
        %v8429 = vpop.f32.mrf.mxu0
        %v8430 = vadd.f32 %v8380, %v8429
        %8431 = vmatmul.f32.gmra.mxu0 %v8249
        %v8432 = vpop.f32.mrf.mxu0
        %v8433 = vadd.f32 %v8383, %v8432
        %8434 = vmatmul.f32.gmra.mxu0 %v8257
        %v8435 = vpop.f32.mrf.mxu0
        %v8436 = vadd.f32 %v8386, %v8435
        %8437 = vmatmul.f32.gmra.mxu0 %v8265
        %v8438 = vpop.f32.mrf.mxu0
        %v8439 = vadd.f32 %v8389, %v8438
        %8440 = vmatmul.f32.gmra.mxu0 %v8273
        %v8441 = vpop.f32.mrf.mxu0
        %v8442 = vadd.f32 %v8392, %v8441
        %8443 = vmatmul.f32.gmra.mxu0 %v8281
        %v8444 = vpop.f32.mrf.mxu0
        %v8445 = vadd.f32 %v8395, %v8444
        %8446 = vmatmul.f32.gmra.mxu0 %v8289
        %v8447 = vpop.f32.mrf.mxu0
        %v8448 = vadd.f32 %v8398, %v8447
        %8449 = vmatmul.f32.gmra.mxu0 %v8297
        %v8450 = vpop.f32.mrf.mxu0
        %v8451 = vadd.f32 %v8401, %v8450
        %8452 = vdwg.mxu0
        %8453 = vmatpush.msra.mxu0 %v6645
        %8454 = vmatpush.msra.mxu0 %v6644
        %8455 = vmatpush.msra.mxu0 %v6643
        %8456 = vmatpush.msra.mxu0 %v6642
        %8457 = vmatpush.msra.mxu0 %v6641
        %8458 = vmatpush.msra.mxu0 %v6640
        %8459 = vmatpush.msra.mxu0 %v6639
        %8460 = vmatpush.msra.mxu0 %v6638
        %8461 = vmatpush.msra.mxu0 %v6637
        %8462 = vmatpush.msra.mxu0 %v6636
        %8463 = vmatpush.msra.mxu0 %v6635
        %8464 = vmatpush.msra.mxu0 %v6634
        %8465 = vmatpush.msra.mxu0 %v6633
        %8466 = vmatpush.msra.mxu0 %v6632
        %8467 = vmatpush.msra.mxu0 %v6631
        %8468 = vmatpush.msra.mxu0 %v6630
        %8469 = vmatmul.f32.gmra.mxu0 %v8218
        %v8470 = vpop.f32.mrf.mxu0
        %v8471 = vadd.f32 %v8421, %v8470
        %8472 = vmatmul.f32.gmra.mxu0 %v8226
        %v8473 = vpop.f32.mrf.mxu0
        %v8474 = vadd.f32 %v8424, %v8473
        %8475 = vmatmul.f32.gmra.mxu0 %v8234
        %v8476 = vpop.f32.mrf.mxu0
        %v8477 = vadd.f32 %v8427, %v8476
        %8478 = vmatmul.f32.gmra.mxu0 %v8242
        %v8479 = vpop.f32.mrf.mxu0
        %v8480 = vadd.f32 %v8430, %v8479
        %8481 = vmatmul.f32.gmra.mxu0 %v8250
        %v8482 = vpop.f32.mrf.mxu0
        %v8483 = vadd.f32 %v8433, %v8482
        %8484 = vmatmul.f32.gmra.mxu0 %v8258
        %v8485 = vpop.f32.mrf.mxu0
        %v8486 = vadd.f32 %v8436, %v8485
        %8487 = vmatmul.f32.gmra.mxu0 %v8266
        %v8488 = vpop.f32.mrf.mxu0
        %v8489 = vadd.f32 %v8439, %v8488
        %8490 = vmatmul.f32.gmra.mxu0 %v8274
        %v8491 = vpop.f32.mrf.mxu0
        %v8492 = vadd.f32 %v8442, %v8491
        %8493 = vmatmul.f32.gmra.mxu0 %v8282
        %v8494 = vpop.f32.mrf.mxu0
        %v8495 = vadd.f32 %v8445, %v8494
        %8496 = vmatmul.f32.gmra.mxu0 %v8290
        %v8497 = vpop.f32.mrf.mxu0
        %v8498 = vadd.f32 %v8448, %v8497
        %8499 = vmatmul.f32.gmra.mxu0 %v8298
        %v8500 = vpop.f32.mrf.mxu0
        %v8501 = vadd.f32 %v8451, %v8500
        %8502 = vdwg.mxu0
        %8503 = vmatpush.msra.mxu0 %v6661
        %8504 = vmatpush.msra.mxu0 %v6660
        %8505 = vmatpush.msra.mxu0 %v6659
        %8506 = vmatpush.msra.mxu0 %v6658
        %8507 = vmatpush.msra.mxu0 %v6657
        %8508 = vmatpush.msra.mxu0 %v6656
        %8509 = vmatpush.msra.mxu0 %v6655
        %8510 = vmatpush.msra.mxu0 %v6654
        %8511 = vmatpush.msra.mxu0 %v6653
        %8512 = vmatpush.msra.mxu0 %v6652
        %8513 = vmatpush.msra.mxu0 %v6651
        %8514 = vmatpush.msra.mxu0 %v6650
        %8515 = vmatpush.msra.mxu0 %v6649
        %8516 = vmatpush.msra.mxu0 %v6648
        %8517 = vmatpush.msra.mxu0 %v6647
        %8518 = vmatpush.msra.mxu0 %v6646
        %8519 = vmatmul.f32.gmra.mxu0 %v8219
        %v8520 = vpop.f32.mrf.mxu0
        %v8521 = vadd.f32 %v8471, %v8520
        %8522 = vmatmul.f32.gmra.mxu0 %v8227
        %v8523 = vpop.f32.mrf.mxu0
        %v8524 = vadd.f32 %v8474, %v8523
        %8525 = vmatmul.f32.gmra.mxu0 %v8235
        %v8526 = vpop.f32.mrf.mxu0
        %v8527 = vadd.f32 %v8477, %v8526
        %8528 = vmatmul.f32.gmra.mxu0 %v8243
        %v8529 = vpop.f32.mrf.mxu0
        %v8530 = vadd.f32 %v8480, %v8529
        %8531 = vmatmul.f32.gmra.mxu0 %v8251
        %v8532 = vpop.f32.mrf.mxu0
        %v8533 = vadd.f32 %v8483, %v8532
        %8534 = vmatmul.f32.gmra.mxu0 %v8259
        %v8535 = vpop.f32.mrf.mxu0
        %v8536 = vadd.f32 %v8486, %v8535
        %8537 = vmatmul.f32.gmra.mxu0 %v8267
        %v8538 = vpop.f32.mrf.mxu0
        %v8539 = vadd.f32 %v8489, %v8538
        %8540 = vmatmul.f32.gmra.mxu0 %v8275
        %v8541 = vpop.f32.mrf.mxu0
        %v8542 = vadd.f32 %v8492, %v8541
        %8543 = vmatmul.f32.gmra.mxu0 %v8283
        %v8544 = vpop.f32.mrf.mxu0
        %v8545 = vadd.f32 %v8495, %v8544
        %8546 = vmatmul.f32.gmra.mxu0 %v8291
        %v8547 = vpop.f32.mrf.mxu0
        %v8548 = vadd.f32 %v8498, %v8547
        %8549 = vmatmul.f32.gmra.mxu0 %v8299
        %v8550 = vpop.f32.mrf.mxu0
        %v8551 = vadd.f32 %v8501, %v8550
        %8552 = vdwg.mxu0
        %8553 = vmatpush.msra.mxu0 %v6677
        %8554 = vmatpush.msra.mxu0 %v6676
        %8555 = vmatpush.msra.mxu0 %v6675
        %8556 = vmatpush.msra.mxu0 %v6674
        %8557 = vmatpush.msra.mxu0 %v6673
        %8558 = vmatpush.msra.mxu0 %v6672
        %8559 = vmatpush.msra.mxu0 %v6671
        %8560 = vmatpush.msra.mxu0 %v6670
        %8561 = vmatpush.msra.mxu0 %v6669
        %8562 = vmatpush.msra.mxu0 %v6668
        %8563 = vmatpush.msra.mxu0 %v6667
        %8564 = vmatpush.msra.mxu0 %v6666
        %8565 = vmatpush.msra.mxu0 %v6665
        %8566 = vmatpush.msra.mxu0 %v6664
        %8567 = vmatpush.msra.mxu0 %v6663
        %8568 = vmatpush.msra.mxu0 %v6662
        %8569 = vmatmul.f32.gmra.mxu0 %v8220
        %v8570 = vpop.f32.mrf.mxu0
        %v8571 = vadd.f32 %v8521, %v8570
        %8572 = vmatmul.f32.gmra.mxu0 %v8228
        %v8573 = vpop.f32.mrf.mxu0
        %v8574 = vadd.f32 %v8524, %v8573
        %8575 = vmatmul.f32.gmra.mxu0 %v8236
        %v8576 = vpop.f32.mrf.mxu0
        %v8577 = vadd.f32 %v8527, %v8576
        %8578 = vmatmul.f32.gmra.mxu0 %v8244
        %v8579 = vpop.f32.mrf.mxu0
        %v8580 = vadd.f32 %v8530, %v8579
        %8581 = vmatmul.f32.gmra.mxu0 %v8252
        %v8582 = vpop.f32.mrf.mxu0
        %v8583 = vadd.f32 %v8533, %v8582
        %8584 = vmatmul.f32.gmra.mxu0 %v8260
        %v8585 = vpop.f32.mrf.mxu0
        %v8586 = vadd.f32 %v8536, %v8585
        %8587 = vmatmul.f32.gmra.mxu0 %v8268
        %v8588 = vpop.f32.mrf.mxu0
        %v8589 = vadd.f32 %v8539, %v8588
        %8590 = vmatmul.f32.gmra.mxu0 %v8276
        %v8591 = vpop.f32.mrf.mxu0
        %v8592 = vadd.f32 %v8542, %v8591
        %8593 = vmatmul.f32.gmra.mxu0 %v8284
        %v8594 = vpop.f32.mrf.mxu0
        %v8595 = vadd.f32 %v8545, %v8594
        %8596 = vmatmul.f32.gmra.mxu0 %v8292
        %v8597 = vpop.f32.mrf.mxu0
        %v8598 = vadd.f32 %v8548, %v8597
        %8599 = vmatmul.f32.gmra.mxu0 %v8300
        %v8600 = vpop.f32.mrf.mxu0
        %v8601 = vadd.f32 %v8551, %v8600
        %8602 = vdwg.mxu0
        %8603 = vmatpush.msra.mxu0 %v6693
        %8604 = vmatpush.msra.mxu0 %v6692
        %8605 = vmatpush.msra.mxu0 %v6691
        %8606 = vmatpush.msra.mxu0 %v6690
        %8607 = vmatpush.msra.mxu0 %v6689
        %8608 = vmatpush.msra.mxu0 %v6688
        %8609 = vmatpush.msra.mxu0 %v6687
        %8610 = vmatpush.msra.mxu0 %v6686
        %8611 = vmatpush.msra.mxu0 %v6685
        %8612 = vmatpush.msra.mxu0 %v6684
        %8613 = vmatpush.msra.mxu0 %v6683
        %8614 = vmatpush.msra.mxu0 %v6682
        %8615 = vmatpush.msra.mxu0 %v6681
        %8616 = vmatpush.msra.mxu0 %v6680
        %8617 = vmatpush.msra.mxu0 %v6679
        %8618 = vmatpush.msra.mxu0 %v6678
        %8619 = vmatmul.f32.gmra.mxu0 %v8221
        %v8620 = vpop.f32.mrf.mxu0
        %v8621 = vadd.f32 %v8571, %v8620
        %8622 = vmatmul.f32.gmra.mxu0 %v8229
        %v8623 = vpop.f32.mrf.mxu0
        %v8624 = vadd.f32 %v8574, %v8623
        %8625 = vmatmul.f32.gmra.mxu0 %v8237
        %v8626 = vpop.f32.mrf.mxu0
        %v8627 = vadd.f32 %v8577, %v8626
        %8628 = vmatmul.f32.gmra.mxu0 %v8245
        %v8629 = vpop.f32.mrf.mxu0
        %v8630 = vadd.f32 %v8580, %v8629
        %8631 = vmatmul.f32.gmra.mxu0 %v8253
        %v8632 = vpop.f32.mrf.mxu0
        %v8633 = vadd.f32 %v8583, %v8632
        %8634 = vmatmul.f32.gmra.mxu0 %v8261
        %v8635 = vpop.f32.mrf.mxu0
        %v8636 = vadd.f32 %v8586, %v8635
        %8637 = vmatmul.f32.gmra.mxu0 %v8269
        %v8638 = vpop.f32.mrf.mxu0
        %v8639 = vadd.f32 %v8589, %v8638
        %8640 = vmatmul.f32.gmra.mxu0 %v8277
        %v8641 = vpop.f32.mrf.mxu0
        %v8642 = vadd.f32 %v8592, %v8641
        %8643 = vmatmul.f32.gmra.mxu0 %v8285
        %v8644 = vpop.f32.mrf.mxu0
        %v8645 = vadd.f32 %v8595, %v8644
        %8646 = vmatmul.f32.gmra.mxu0 %v8293
        %v8647 = vpop.f32.mrf.mxu0
        %v8648 = vadd.f32 %v8598, %v8647
        %8649 = vmatmul.f32.gmra.mxu0 %v8301
        %v8650 = vpop.f32.mrf.mxu0
        %v8651 = vadd.f32 %v8601, %v8650
        %8652 = vdwg.mxu0
        %8653 = vmatpush.msra.mxu0 %v6709
        %8654 = vmatpush.msra.mxu0 %v6708
        %8655 = vmatpush.msra.mxu0 %v6707
        %8656 = vmatpush.msra.mxu0 %v6706
        %8657 = vmatpush.msra.mxu0 %v6705
        %8658 = vmatpush.msra.mxu0 %v6704
        %8659 = vmatpush.msra.mxu0 %v6703
        %8660 = vmatpush.msra.mxu0 %v6702
        %8661 = vmatpush.msra.mxu0 %v6701
        %8662 = vmatpush.msra.mxu0 %v6700
        %8663 = vmatpush.msra.mxu0 %v6699
        %8664 = vmatpush.msra.mxu0 %v6698
        %8665 = vmatpush.msra.mxu0 %v6697
        %8666 = vmatpush.msra.mxu0 %v6696
        %8667 = vmatpush.msra.mxu0 %v6695
        %8668 = vmatpush.msra.mxu0 %v6694
        %8669 = vmatmul.f32.gmra.mxu0 %v8222
        %v8670 = vpop.f32.mrf.mxu0
        %v8671 = vadd.f32 %v8621, %v8670
        %8672 = vmatmul.f32.gmra.mxu0 %v8230
        %v8673 = vpop.f32.mrf.mxu0
        %v8674 = vadd.f32 %v8624, %v8673
        %8675 = vmatmul.f32.gmra.mxu0 %v8238
        %v8676 = vpop.f32.mrf.mxu0
        %v8677 = vadd.f32 %v8627, %v8676
        %8678 = vmatmul.f32.gmra.mxu0 %v8246
        %v8679 = vpop.f32.mrf.mxu0
        %v8680 = vadd.f32 %v8630, %v8679
        %8681 = vmatmul.f32.gmra.mxu0 %v8254
        %v8682 = vpop.f32.mrf.mxu0
        %v8683 = vadd.f32 %v8633, %v8682
        %8684 = vmatmul.f32.gmra.mxu0 %v8262
        %v8685 = vpop.f32.mrf.mxu0
        %v8686 = vadd.f32 %v8636, %v8685
        %8687 = vmatmul.f32.gmra.mxu0 %v8270
        %v8688 = vpop.f32.mrf.mxu0
        %v8689 = vadd.f32 %v8639, %v8688
        %8690 = vmatmul.f32.gmra.mxu0 %v8278
        %v8691 = vpop.f32.mrf.mxu0
        %v8692 = vadd.f32 %v8642, %v8691
        %8693 = vmatmul.f32.gmra.mxu0 %v8286
        %v8694 = vpop.f32.mrf.mxu0
        %v8695 = vadd.f32 %v8645, %v8694
        %8696 = vmatmul.f32.gmra.mxu0 %v8294
        %v8697 = vpop.f32.mrf.mxu0
        %v8698 = vadd.f32 %v8648, %v8697
        %8699 = vmatmul.f32.gmra.mxu0 %v8302
        %v8700 = vpop.f32.mrf.mxu0
        %v8701 = vadd.f32 %v8651, %v8700
        %8702 = vdwg.mxu0
        %v8703 = vmul.f32 %v5268, %v7833
        %v8704 = vmul.f32 %v5330, %v7883
        %v8705 = vmul.f32 %v5392, %v7933
        %v8706 = vmul.f32 %v5454, %v7983
        %v8707 = vmul.f32 %v5516, %v8033
        %v8708 = vmul.f32 %v5578, %v8083
        %v8709 = vmul.f32 %v5640, %v8133
        %v8710 = vmul.f32 %v5702, %v8183
        %v8711 = vmul.f32 %v5271, %v7836
        %v8712 = vmul.f32 %v5333, %v7886
        %v8713 = vmul.f32 %v5395, %v7936
        %v8714 = vmul.f32 %v5457, %v7986
        %v8715 = vmul.f32 %v5519, %v8036
        %v8716 = vmul.f32 %v5581, %v8086
        %v8717 = vmul.f32 %v5643, %v8136
        %v8718 = vmul.f32 %v5705, %v8186
        %v8719 = vmul.f32 %v5274, %v7839
        %v8720 = vmul.f32 %v5336, %v7889
        %v8721 = vmul.f32 %v5398, %v7939
        %v8722 = vmul.f32 %v5460, %v7989
        %v8723 = vmul.f32 %v5522, %v8039
        %v8724 = vmul.f32 %v5584, %v8089
        %v8725 = vmul.f32 %v5646, %v8139
        %v8726 = vmul.f32 %v5708, %v8189
        %v8727 = vmul.f32 %v5277, %v7842
        %v8728 = vmul.f32 %v5339, %v7892
        %v8729 = vmul.f32 %v5401, %v7942
        %v8730 = vmul.f32 %v5463, %v7992
        %v8731 = vmul.f32 %v5525, %v8042
        %v8732 = vmul.f32 %v5587, %v8092
        %v8733 = vmul.f32 %v5649, %v8142
        %v8734 = vmul.f32 %v5711, %v8192
        %v8735 = vmul.f32 %v5280, %v7845
        %v8736 = vmul.f32 %v5342, %v7895
        %v8737 = vmul.f32 %v5404, %v7945
        %v8738 = vmul.f32 %v5466, %v7995
        %v8739 = vmul.f32 %v5528, %v8045
        %v8740 = vmul.f32 %v5590, %v8095
        %v8741 = vmul.f32 %v5652, %v8145
        %v8742 = vmul.f32 %v5714, %v8195
        %v8743 = vmul.f32 %v5283, %v7848
        %v8744 = vmul.f32 %v5345, %v7898
        %v8745 = vmul.f32 %v5407, %v7948
        %v8746 = vmul.f32 %v5469, %v7998
        %v8747 = vmul.f32 %v5531, %v8048
        %v8748 = vmul.f32 %v5593, %v8098
        %v8749 = vmul.f32 %v5655, %v8148
        %v8750 = vmul.f32 %v5717, %v8198
        %v8751 = vmul.f32 %v5286, %v7851
        %v8752 = vmul.f32 %v5348, %v7901
        %v8753 = vmul.f32 %v5410, %v7951
        %v8754 = vmul.f32 %v5472, %v8001
        %v8755 = vmul.f32 %v5534, %v8051
        %v8756 = vmul.f32 %v5596, %v8101
        %v8757 = vmul.f32 %v5658, %v8151
        %v8758 = vmul.f32 %v5720, %v8201
        %v8759 = vmul.f32 %v5289, %v7854
        %v8760 = vmul.f32 %v5351, %v7904
        %v8761 = vmul.f32 %v5413, %v7954
        %v8762 = vmul.f32 %v5475, %v8004
        %v8763 = vmul.f32 %v5537, %v8054
        %v8764 = vmul.f32 %v5599, %v8104
        %v8765 = vmul.f32 %v5661, %v8154
        %v8766 = vmul.f32 %v5723, %v8204
        %v8767 = vmul.f32 %v5292, %v7857
        %v8768 = vmul.f32 %v5354, %v7907
        %v8769 = vmul.f32 %v5416, %v7957
        %v8770 = vmul.f32 %v5478, %v8007
        %v8771 = vmul.f32 %v5540, %v8057
        %v8772 = vmul.f32 %v5602, %v8107
        %v8773 = vmul.f32 %v5664, %v8157
        %v8774 = vmul.f32 %v5726, %v8207
        %v8775 = vmul.f32 %v5295, %v7860
        %v8776 = vmul.f32 %v5357, %v7910
        %v8777 = vmul.f32 %v5419, %v7960
        %v8778 = vmul.f32 %v5481, %v8010
        %v8779 = vmul.f32 %v5543, %v8060
        %v8780 = vmul.f32 %v5605, %v8110
        %v8781 = vmul.f32 %v5667, %v8160
        %v8782 = vmul.f32 %v5729, %v8210
        %v8783 = vmul.f32 %v5298, %v7863
        %v8784 = vmul.f32 %v5360, %v7913
        %v8785 = vmul.f32 %v5422, %v7963
        %v8786 = vmul.f32 %v5484, %v8013
        %v8787 = vmul.f32 %v5546, %v8063
        %v8788 = vmul.f32 %v5608, %v8113
        %v8789 = vmul.f32 %v5670, %v8163
        %v8790 = vmul.f32 %v5732, %v8213
        %8791 = vmatpush.msra.mxu0 %v6981
        %8792 = vmatpush.msra.mxu0 %v6980
        %8793 = vmatpush.msra.mxu0 %v6979
        %8794 = vmatpush.msra.mxu0 %v6978
        %8795 = vmatpush.msra.mxu0 %v6977
        %8796 = vmatpush.msra.mxu0 %v6976
        %8797 = vmatpush.msra.mxu0 %v6975
        %8798 = vmatpush.msra.mxu0 %v6974
        %8799 = vmatpush.msra.mxu0 %v6973
        %8800 = vmatpush.msra.mxu0 %v6972
        %8801 = vmatpush.msra.mxu0 %v6971
        %8802 = vmatpush.msra.mxu0 %v6970
        %8803 = vmatpush.msra.mxu0 %v6969
        %8804 = vmatpush.msra.mxu0 %v6968
        %8805 = vmatpush.msra.mxu0 %v6967
        %8806 = vmatpush.msra.mxu0 %v6966
        %8807 = vmatmul.f32.gmra.mxu0 %v8703
        %v8808 = vpop.f32.mrf.mxu0
        %v8809 = vadd.f32 0.0, %v8808
        %8810 = vmatmul.f32.gmra.mxu0 %v8711
        %v8811 = vpop.f32.mrf.mxu0
        %v8812 = vadd.f32 0.0, %v8811
        %8813 = vmatmul.f32.gmra.mxu0 %v8719
        %v8814 = vpop.f32.mrf.mxu0
        %v8815 = vadd.f32 0.0, %v8814
        %8816 = vmatmul.f32.gmra.mxu0 %v8727
        %v8817 = vpop.f32.mrf.mxu0
        %v8818 = vadd.f32 0.0, %v8817
        %8819 = vmatmul.f32.gmra.mxu0 %v8735
        %v8820 = vpop.f32.mrf.mxu0
        %v8821 = vadd.f32 0.0, %v8820
        %8822 = vmatmul.f32.gmra.mxu0 %v8743
        %v8823 = vpop.f32.mrf.mxu0
        %v8824 = vadd.f32 0.0, %v8823
        %8825 = vmatmul.f32.gmra.mxu0 %v8751
        %v8826 = vpop.f32.mrf.mxu0
        %v8827 = vadd.f32 0.0, %v8826
        %8828 = vmatmul.f32.gmra.mxu0 %v8759
        %v8829 = vpop.f32.mrf.mxu0
        %v8830 = vadd.f32 0.0, %v8829
        %8831 = vmatmul.f32.gmra.mxu0 %v8767
        %v8832 = vpop.f32.mrf.mxu0
        %v8833 = vadd.f32 0.0, %v8832
        %8834 = vmatmul.f32.gmra.mxu0 %v8775
        %v8835 = vpop.f32.mrf.mxu0
        %v8836 = vadd.f32 0.0, %v8835
        %8837 = vmatmul.f32.gmra.mxu0 %v8783
        %v8838 = vpop.f32.mrf.mxu0
        %v8839 = vadd.f32 0.0, %v8838
        %8840 = vdwg.mxu0
        %8841 = vmatpush.msra.mxu0 %v6997
        %8842 = vmatpush.msra.mxu0 %v6996
        %8843 = vmatpush.msra.mxu0 %v6995
        %8844 = vmatpush.msra.mxu0 %v6994
        %8845 = vmatpush.msra.mxu0 %v6993
        %8846 = vmatpush.msra.mxu0 %v6992
        %8847 = vmatpush.msra.mxu0 %v6991
        %8848 = vmatpush.msra.mxu0 %v6990
        %8849 = vmatpush.msra.mxu0 %v6989
        %8850 = vmatpush.msra.mxu0 %v6988
        %8851 = vmatpush.msra.mxu0 %v6987
        %8852 = vmatpush.msra.mxu0 %v6986
        %8853 = vmatpush.msra.mxu0 %v6985
        %8854 = vmatpush.msra.mxu0 %v6984
        %8855 = vmatpush.msra.mxu0 %v6983
        %8856 = vmatpush.msra.mxu0 %v6982
        %8857 = vmatmul.f32.gmra.mxu0 %v8704
        %v8858 = vpop.f32.mrf.mxu0
        %v8859 = vadd.f32 %v8809, %v8858
        %8860 = vmatmul.f32.gmra.mxu0 %v8712
        %v8861 = vpop.f32.mrf.mxu0
        %v8862 = vadd.f32 %v8812, %v8861
        %8863 = vmatmul.f32.gmra.mxu0 %v8720
        %v8864 = vpop.f32.mrf.mxu0
        %v8865 = vadd.f32 %v8815, %v8864
        %8866 = vmatmul.f32.gmra.mxu0 %v8728
        %v8867 = vpop.f32.mrf.mxu0
        %v8868 = vadd.f32 %v8818, %v8867
        %8869 = vmatmul.f32.gmra.mxu0 %v8736
        %v8870 = vpop.f32.mrf.mxu0
        %v8871 = vadd.f32 %v8821, %v8870
        %8872 = vmatmul.f32.gmra.mxu0 %v8744
        %v8873 = vpop.f32.mrf.mxu0
        %v8874 = vadd.f32 %v8824, %v8873
        %8875 = vmatmul.f32.gmra.mxu0 %v8752
        %v8876 = vpop.f32.mrf.mxu0
        %v8877 = vadd.f32 %v8827, %v8876
        %8878 = vmatmul.f32.gmra.mxu0 %v8760
        %v8879 = vpop.f32.mrf.mxu0
        %v8880 = vadd.f32 %v8830, %v8879
        %8881 = vmatmul.f32.gmra.mxu0 %v8768
        %v8882 = vpop.f32.mrf.mxu0
        %v8883 = vadd.f32 %v8833, %v8882
        %8884 = vmatmul.f32.gmra.mxu0 %v8776
        %v8885 = vpop.f32.mrf.mxu0
        %v8886 = vadd.f32 %v8836, %v8885
        %8887 = vmatmul.f32.gmra.mxu0 %v8784
        %v8888 = vpop.f32.mrf.mxu0
        %v8889 = vadd.f32 %v8839, %v8888
        %8890 = vdwg.mxu0
        %8891 = vmatpush.msra.mxu0 %v7013
        %8892 = vmatpush.msra.mxu0 %v7012
        %8893 = vmatpush.msra.mxu0 %v7011
        %8894 = vmatpush.msra.mxu0 %v7010
        %8895 = vmatpush.msra.mxu0 %v7009
        %8896 = vmatpush.msra.mxu0 %v7008
        %8897 = vmatpush.msra.mxu0 %v7007
        %8898 = vmatpush.msra.mxu0 %v7006
        %8899 = vmatpush.msra.mxu0 %v7005
        %8900 = vmatpush.msra.mxu0 %v7004
        %8901 = vmatpush.msra.mxu0 %v7003
        %8902 = vmatpush.msra.mxu0 %v7002
        %8903 = vmatpush.msra.mxu0 %v7001
        %8904 = vmatpush.msra.mxu0 %v7000
        %8905 = vmatpush.msra.mxu0 %v6999
        %8906 = vmatpush.msra.mxu0 %v6998
        %8907 = vmatmul.f32.gmra.mxu0 %v8705
        %v8908 = vpop.f32.mrf.mxu0
        %v8909 = vadd.f32 %v8859, %v8908
        %8910 = vmatmul.f32.gmra.mxu0 %v8713
        %v8911 = vpop.f32.mrf.mxu0
        %v8912 = vadd.f32 %v8862, %v8911
        %8913 = vmatmul.f32.gmra.mxu0 %v8721
        %v8914 = vpop.f32.mrf.mxu0
        %v8915 = vadd.f32 %v8865, %v8914
        %8916 = vmatmul.f32.gmra.mxu0 %v8729
        %v8917 = vpop.f32.mrf.mxu0
        %v8918 = vadd.f32 %v8868, %v8917
        %8919 = vmatmul.f32.gmra.mxu0 %v8737
        %v8920 = vpop.f32.mrf.mxu0
        %v8921 = vadd.f32 %v8871, %v8920
        %8922 = vmatmul.f32.gmra.mxu0 %v8745
        %v8923 = vpop.f32.mrf.mxu0
        %v8924 = vadd.f32 %v8874, %v8923
        %8925 = vmatmul.f32.gmra.mxu0 %v8753
        %v8926 = vpop.f32.mrf.mxu0
        %v8927 = vadd.f32 %v8877, %v8926
        %8928 = vmatmul.f32.gmra.mxu0 %v8761
        %v8929 = vpop.f32.mrf.mxu0
        %v8930 = vadd.f32 %v8880, %v8929
        %8931 = vmatmul.f32.gmra.mxu0 %v8769
        %v8932 = vpop.f32.mrf.mxu0
        %v8933 = vadd.f32 %v8883, %v8932
        %8934 = vmatmul.f32.gmra.mxu0 %v8777
        %v8935 = vpop.f32.mrf.mxu0
        %v8936 = vadd.f32 %v8886, %v8935
        %8937 = vmatmul.f32.gmra.mxu0 %v8785
        %v8938 = vpop.f32.mrf.mxu0
        %v8939 = vadd.f32 %v8889, %v8938
        %8940 = vdwg.mxu0
        %8941 = vmatpush.msra.mxu0 %v7029
        %8942 = vmatpush.msra.mxu0 %v7028
        %8943 = vmatpush.msra.mxu0 %v7027
        %8944 = vmatpush.msra.mxu0 %v7026
        %8945 = vmatpush.msra.mxu0 %v7025
        %8946 = vmatpush.msra.mxu0 %v7024
        %8947 = vmatpush.msra.mxu0 %v7023
        %8948 = vmatpush.msra.mxu0 %v7022
        %8949 = vmatpush.msra.mxu0 %v7021
        %8950 = vmatpush.msra.mxu0 %v7020
        %8951 = vmatpush.msra.mxu0 %v7019
        %8952 = vmatpush.msra.mxu0 %v7018
        %8953 = vmatpush.msra.mxu0 %v7017
        %8954 = vmatpush.msra.mxu0 %v7016
        %8955 = vmatpush.msra.mxu0 %v7015
        %8956 = vmatpush.msra.mxu0 %v7014
        %8957 = vmatmul.f32.gmra.mxu0 %v8706
        %v8958 = vpop.f32.mrf.mxu0
        %v8959 = vadd.f32 %v8909, %v8958
        %8960 = vmatmul.f32.gmra.mxu0 %v8714
        %v8961 = vpop.f32.mrf.mxu0
        %v8962 = vadd.f32 %v8912, %v8961
        %8963 = vmatmul.f32.gmra.mxu0 %v8722
        %v8964 = vpop.f32.mrf.mxu0
        %v8965 = vadd.f32 %v8915, %v8964
        %8966 = vmatmul.f32.gmra.mxu0 %v8730
        %v8967 = vpop.f32.mrf.mxu0
        %v8968 = vadd.f32 %v8918, %v8967
        %8969 = vmatmul.f32.gmra.mxu0 %v8738
        %v8970 = vpop.f32.mrf.mxu0
        %v8971 = vadd.f32 %v8921, %v8970
        %8972 = vmatmul.f32.gmra.mxu0 %v8746
        %v8973 = vpop.f32.mrf.mxu0
        %v8974 = vadd.f32 %v8924, %v8973
        %8975 = vmatmul.f32.gmra.mxu0 %v8754
        %v8976 = vpop.f32.mrf.mxu0
        %v8977 = vadd.f32 %v8927, %v8976
        %8978 = vmatmul.f32.gmra.mxu0 %v8762
        %v8979 = vpop.f32.mrf.mxu0
        %v8980 = vadd.f32 %v8930, %v8979
        %8981 = vmatmul.f32.gmra.mxu0 %v8770
        %v8982 = vpop.f32.mrf.mxu0
        %v8983 = vadd.f32 %v8933, %v8982
        %8984 = vmatmul.f32.gmra.mxu0 %v8778
        %v8985 = vpop.f32.mrf.mxu0
        %v8986 = vadd.f32 %v8936, %v8985
        %8987 = vmatmul.f32.gmra.mxu0 %v8786
        %v8988 = vpop.f32.mrf.mxu0
        %v8989 = vadd.f32 %v8939, %v8988
        %8990 = vdwg.mxu0
        %8991 = vmatpush.msra.mxu0 %v7045
        %8992 = vmatpush.msra.mxu0 %v7044
        %8993 = vmatpush.msra.mxu0 %v7043
        %8994 = vmatpush.msra.mxu0 %v7042
        %8995 = vmatpush.msra.mxu0 %v7041
        %8996 = vmatpush.msra.mxu0 %v7040
        %8997 = vmatpush.msra.mxu0 %v7039
        %8998 = vmatpush.msra.mxu0 %v7038
        %8999 = vmatpush.msra.mxu0 %v7037
        %9000 = vmatpush.msra.mxu0 %v7036
        %9001 = vmatpush.msra.mxu0 %v7035
        %9002 = vmatpush.msra.mxu0 %v7034
        %9003 = vmatpush.msra.mxu0 %v7033
        %9004 = vmatpush.msra.mxu0 %v7032
        %9005 = vmatpush.msra.mxu0 %v7031
        %9006 = vmatpush.msra.mxu0 %v7030
        %9007 = vmatmul.f32.gmra.mxu0 %v8707
        %v9008 = vpop.f32.mrf.mxu0
        %v9009 = vadd.f32 %v8959, %v9008
        %9010 = vmatmul.f32.gmra.mxu0 %v8715
        %v9011 = vpop.f32.mrf.mxu0
        %v9012 = vadd.f32 %v8962, %v9011
        %9013 = vmatmul.f32.gmra.mxu0 %v8723
        %v9014 = vpop.f32.mrf.mxu0
        %v9015 = vadd.f32 %v8965, %v9014
        %9016 = vmatmul.f32.gmra.mxu0 %v8731
        %v9017 = vpop.f32.mrf.mxu0
        %v9018 = vadd.f32 %v8968, %v9017
        %9019 = vmatmul.f32.gmra.mxu0 %v8739
        %v9020 = vpop.f32.mrf.mxu0
        %v9021 = vadd.f32 %v8971, %v9020
        %9022 = vmatmul.f32.gmra.mxu0 %v8747
        %v9023 = vpop.f32.mrf.mxu0
        %v9024 = vadd.f32 %v8974, %v9023
        %9025 = vmatmul.f32.gmra.mxu0 %v8755
        %v9026 = vpop.f32.mrf.mxu0
        %v9027 = vadd.f32 %v8977, %v9026
        %9028 = vmatmul.f32.gmra.mxu0 %v8763
        %v9029 = vpop.f32.mrf.mxu0
        %v9030 = vadd.f32 %v8980, %v9029
        %9031 = vmatmul.f32.gmra.mxu0 %v8771
        %v9032 = vpop.f32.mrf.mxu0
        %v9033 = vadd.f32 %v8983, %v9032
        %9034 = vmatmul.f32.gmra.mxu0 %v8779
        %v9035 = vpop.f32.mrf.mxu0
        %v9036 = vadd.f32 %v8986, %v9035
        %9037 = vmatmul.f32.gmra.mxu0 %v8787
        %v9038 = vpop.f32.mrf.mxu0
        %v9039 = vadd.f32 %v8989, %v9038
        %9040 = vdwg.mxu0
        %9041 = vmatpush.msra.mxu0 %v7061
        %9042 = vmatpush.msra.mxu0 %v7060
        %9043 = vmatpush.msra.mxu0 %v7059
        %9044 = vmatpush.msra.mxu0 %v7058
        %9045 = vmatpush.msra.mxu0 %v7057
        %9046 = vmatpush.msra.mxu0 %v7056
        %9047 = vmatpush.msra.mxu0 %v7055
        %9048 = vmatpush.msra.mxu0 %v7054
        %9049 = vmatpush.msra.mxu0 %v7053
        %9050 = vmatpush.msra.mxu0 %v7052
        %9051 = vmatpush.msra.mxu0 %v7051
        %9052 = vmatpush.msra.mxu0 %v7050
        %9053 = vmatpush.msra.mxu0 %v7049
        %9054 = vmatpush.msra.mxu0 %v7048
        %9055 = vmatpush.msra.mxu0 %v7047
        %9056 = vmatpush.msra.mxu0 %v7046
        %9057 = vmatmul.f32.gmra.mxu0 %v8708
        %v9058 = vpop.f32.mrf.mxu0
        %v9059 = vadd.f32 %v9009, %v9058
        %9060 = vmatmul.f32.gmra.mxu0 %v8716
        %v9061 = vpop.f32.mrf.mxu0
        %v9062 = vadd.f32 %v9012, %v9061
        %9063 = vmatmul.f32.gmra.mxu0 %v8724
        %v9064 = vpop.f32.mrf.mxu0
        %v9065 = vadd.f32 %v9015, %v9064
        %9066 = vmatmul.f32.gmra.mxu0 %v8732
        %v9067 = vpop.f32.mrf.mxu0
        %v9068 = vadd.f32 %v9018, %v9067
        %9069 = vmatmul.f32.gmra.mxu0 %v8740
        %v9070 = vpop.f32.mrf.mxu0
        %v9071 = vadd.f32 %v9021, %v9070
        %9072 = vmatmul.f32.gmra.mxu0 %v8748
        %v9073 = vpop.f32.mrf.mxu0
        %v9074 = vadd.f32 %v9024, %v9073
        %9075 = vmatmul.f32.gmra.mxu0 %v8756
        %v9076 = vpop.f32.mrf.mxu0
        %v9077 = vadd.f32 %v9027, %v9076
        %9078 = vmatmul.f32.gmra.mxu0 %v8764
        %v9079 = vpop.f32.mrf.mxu0
        %v9080 = vadd.f32 %v9030, %v9079
        %9081 = vmatmul.f32.gmra.mxu0 %v8772
        %v9082 = vpop.f32.mrf.mxu0
        %v9083 = vadd.f32 %v9033, %v9082
        %9084 = vmatmul.f32.gmra.mxu0 %v8780
        %v9085 = vpop.f32.mrf.mxu0
        %v9086 = vadd.f32 %v9036, %v9085
        %9087 = vmatmul.f32.gmra.mxu0 %v8788
        %v9088 = vpop.f32.mrf.mxu0
        %v9089 = vadd.f32 %v9039, %v9088
        %9090 = vdwg.mxu0
        %9091 = vmatpush.msra.mxu0 %v7077
        %9092 = vmatpush.msra.mxu0 %v7076
        %9093 = vmatpush.msra.mxu0 %v7075
        %9094 = vmatpush.msra.mxu0 %v7074
        %9095 = vmatpush.msra.mxu0 %v7073
        %9096 = vmatpush.msra.mxu0 %v7072
        %9097 = vmatpush.msra.mxu0 %v7071
        %9098 = vmatpush.msra.mxu0 %v7070
        %9099 = vmatpush.msra.mxu0 %v7069
        %9100 = vmatpush.msra.mxu0 %v7068
        %9101 = vmatpush.msra.mxu0 %v7067
        %9102 = vmatpush.msra.mxu0 %v7066
        %9103 = vmatpush.msra.mxu0 %v7065
        %9104 = vmatpush.msra.mxu0 %v7064
        %9105 = vmatpush.msra.mxu0 %v7063
        %9106 = vmatpush.msra.mxu0 %v7062
        %9107 = vmatmul.f32.gmra.mxu0 %v8709
        %v9108 = vpop.f32.mrf.mxu0
        %v9109 = vadd.f32 %v9059, %v9108
        %9110 = vmatmul.f32.gmra.mxu0 %v8717
        %v9111 = vpop.f32.mrf.mxu0
        %v9112 = vadd.f32 %v9062, %v9111
        %9113 = vmatmul.f32.gmra.mxu0 %v8725
        %v9114 = vpop.f32.mrf.mxu0
        %v9115 = vadd.f32 %v9065, %v9114
        %9116 = vmatmul.f32.gmra.mxu0 %v8733
        %v9117 = vpop.f32.mrf.mxu0
        %v9118 = vadd.f32 %v9068, %v9117
        %9119 = vmatmul.f32.gmra.mxu0 %v8741
        %v9120 = vpop.f32.mrf.mxu0
        %v9121 = vadd.f32 %v9071, %v9120
        %9122 = vmatmul.f32.gmra.mxu0 %v8749
        %v9123 = vpop.f32.mrf.mxu0
        %v9124 = vadd.f32 %v9074, %v9123
        %9125 = vmatmul.f32.gmra.mxu0 %v8757
        %v9126 = vpop.f32.mrf.mxu0
        %v9127 = vadd.f32 %v9077, %v9126
        %9128 = vmatmul.f32.gmra.mxu0 %v8765
        %v9129 = vpop.f32.mrf.mxu0
        %v9130 = vadd.f32 %v9080, %v9129
        %9131 = vmatmul.f32.gmra.mxu0 %v8773
        %v9132 = vpop.f32.mrf.mxu0
        %v9133 = vadd.f32 %v9083, %v9132
        %9134 = vmatmul.f32.gmra.mxu0 %v8781
        %v9135 = vpop.f32.mrf.mxu0
        %v9136 = vadd.f32 %v9086, %v9135
        %9137 = vmatmul.f32.gmra.mxu0 %v8789
        %v9138 = vpop.f32.mrf.mxu0
        %v9139 = vadd.f32 %v9089, %v9138
        %9140 = vdwg.mxu0
        %9141 = vmatpush.msra.mxu0 %v7093
        %9142 = vmatpush.msra.mxu0 %v7092
        %9143 = vmatpush.msra.mxu0 %v7091
        %9144 = vmatpush.msra.mxu0 %v7090
        %9145 = vmatpush.msra.mxu0 %v7089
        %9146 = vmatpush.msra.mxu0 %v7088
        %9147 = vmatpush.msra.mxu0 %v7087
        %9148 = vmatpush.msra.mxu0 %v7086
        %9149 = vmatpush.msra.mxu0 %v7085
        %9150 = vmatpush.msra.mxu0 %v7084
        %9151 = vmatpush.msra.mxu0 %v7083
        %9152 = vmatpush.msra.mxu0 %v7082
        %9153 = vmatpush.msra.mxu0 %v7081
        %9154 = vmatpush.msra.mxu0 %v7080
        %9155 = vmatpush.msra.mxu0 %v7079
        %9156 = vmatpush.msra.mxu0 %v7078
        %9157 = vmatmul.f32.gmra.mxu0 %v8710
        %v9158 = vpop.f32.mrf.mxu0
        %v9159 = vadd.f32 %v9109, %v9158
        %9160 = vmatmul.f32.gmra.mxu0 %v8718
        %v9161 = vpop.f32.mrf.mxu0
        %v9162 = vadd.f32 %v9112, %v9161
        %9163 = vmatmul.f32.gmra.mxu0 %v8726
        %v9164 = vpop.f32.mrf.mxu0
        %v9165 = vadd.f32 %v9115, %v9164
        %9166 = vmatmul.f32.gmra.mxu0 %v8734
        %v9167 = vpop.f32.mrf.mxu0
        %v9168 = vadd.f32 %v9118, %v9167
        %9169 = vmatmul.f32.gmra.mxu0 %v8742
        %v9170 = vpop.f32.mrf.mxu0
        %v9171 = vadd.f32 %v9121, %v9170
        %9172 = vmatmul.f32.gmra.mxu0 %v8750
        %v9173 = vpop.f32.mrf.mxu0
        %v9174 = vadd.f32 %v9124, %v9173
        %9175 = vmatmul.f32.gmra.mxu0 %v8758
        %v9176 = vpop.f32.mrf.mxu0
        %v9177 = vadd.f32 %v9127, %v9176
        %9178 = vmatmul.f32.gmra.mxu0 %v8766
        %v9179 = vpop.f32.mrf.mxu0
        %v9180 = vadd.f32 %v9130, %v9179
        %9181 = vmatmul.f32.gmra.mxu0 %v8774
        %v9182 = vpop.f32.mrf.mxu0
        %v9183 = vadd.f32 %v9133, %v9182
        %9184 = vmatmul.f32.gmra.mxu0 %v8782
        %v9185 = vpop.f32.mrf.mxu0
        %v9186 = vadd.f32 %v9136, %v9185
        %9187 = vmatmul.f32.gmra.mxu0 %v8790
        %v9188 = vpop.f32.mrf.mxu0
        %v9189 = vadd.f32 %v9139, %v9188
        %9190 = vdwg.mxu0
        %9202 = vrot.lane.b32.xlu0 %v9159, 64
        %v9203 = vpop.permute.xlu0 %9202
        %9204 = vrot.lane.b32.xlu0 %v9162, 64
        %v9205 = vpop.permute.xlu0 %9204
        %9206 = vrot.lane.b32.xlu0 %v9165, 64
        %v9207 = vpop.permute.xlu0 %9206
        %9208 = vrot.lane.b32.xlu0 %v9168, 64
        %v9209 = vpop.permute.xlu0 %9208
        %9210 = vrot.lane.b32.xlu0 %v9171, 64
        %v9211 = vpop.permute.xlu0 %9210
        %9212 = vrot.lane.b32.xlu0 %v9174, 64
        %v9213 = vpop.permute.xlu0 %9212
        %9214 = vrot.lane.b32.xlu0 %v9177, 64
        %v9215 = vpop.permute.xlu0 %9214
        %9216 = vrot.lane.b32.xlu0 %v9180, 64
        %v9217 = vpop.permute.xlu0 %9216
        %9218 = vrot.lane.b32.xlu0 %v9183, 64
        %v9219 = vpop.permute.xlu0 %9218
        %9220 = vrot.lane.b32.xlu0 %v9186, 64
        %v9221 = vpop.permute.xlu0 %9220
        %9222 = vrot.lane.b32.xlu0 %v9189, 64
        %v9223 = vpop.permute.xlu0 %9222
        %v9235 = vsel %vm7381, %v8671, %v9203
        %v9236 = vsel %vm7381, %v8674, %v9205
        %v9237 = vsel %vm7381, %v8677, %v9207
        %v9238 = vsel %vm7381, %v8680, %v9209
        %v9239 = vsel %vm7381, %v8683, %v9211
        %v9240 = vsel %vm7381, %v8686, %v9213
        %v9241 = vsel %vm7381, %v8689, %v9215
        %v9242 = vsel %vm7381, %v8692, %v9217
        %v9243 = vsel %vm7381, %v8695, %v9219
        %v9244 = vsel %vm7381, %v8698, %v9221
        %v9245 = vsel %vm7381, %v8701, %v9223
        %p9246 = scmp.eq.s32.totalorder %s25, 0
        // Predicated region
        $region72: #{model_forward.1} parent=66 // pred_check
          %p9247 = pneg %p9246
        $region73: #{model_forward.1} parent=66 // pred_check_branch
          %9249 = sbr.rel (%p9247) target = $region75
        $region74: #{model_forward.1} parent=66 // pred_region
          %v9250 = vld [vmem:[%s6] sm:$0xff]
          %v9251 = vld [vmem:[%s6 + $0x8] sm:$0xff]
          %v9252 = vld [vmem:[%s6 + $0x10] sm:$0xff]
          %v9253 = vld [vmem:[%s6 + $0x18] sm:$0xff]
          %v9254 = vld [vmem:[%s6 + $0x20] sm:$0xff]
          %v9255 = vld [vmem:[%s6 + $0x28] sm:$0xff]
          %v9256 = vld [vmem:[%s6 + $0x30] sm:$0xff]
          %v9257 = vld [vmem:[%s6 + $0x38] sm:$0xff]
          %v9258 = vld [vmem:[%s6 + $0x40] sm:$0xff]
          %v9259 = vld [vmem:[%s6 + $0x48] sm:$0xff]
          %v9260 = vld [vmem:[%s6 + $0x50] sm:$0x7]
          %9262 = vset.pattern.permute.xlu0 0
          %9263 = vperm.xlu0 %9262, %v9250
          %v9264 = vpop.permute.xlu0 %9263
          %9267 = vset.pattern.permute.xlu0 0
          %9268 = vperm.xlu0 %9267, %v9251
          %v9269 = vpop.permute.xlu0 %9268
          %9272 = vset.pattern.permute.xlu0 0
          %9273 = vperm.xlu0 %9272, %v9252
          %v9274 = vpop.permute.xlu0 %9273
          %9277 = vset.pattern.permute.xlu0 0
          %9278 = vperm.xlu0 %9277, %v9253
          %v9279 = vpop.permute.xlu0 %9278
          %9282 = vset.pattern.permute.xlu0 0
          %9283 = vperm.xlu0 %9282, %v9254
          %v9284 = vpop.permute.xlu0 %9283
          %9287 = vset.pattern.permute.xlu0 0
          %9288 = vperm.xlu0 %9287, %v9255
          %v9289 = vpop.permute.xlu0 %9288
          %9292 = vset.pattern.permute.xlu0 0
          %9293 = vperm.xlu0 %9292, %v9256
          %v9294 = vpop.permute.xlu0 %9293
          %9297 = vset.pattern.permute.xlu0 0
          %9298 = vperm.xlu0 %9297, %v9257
          %v9299 = vpop.permute.xlu0 %9298
          %9302 = vset.pattern.permute.xlu0 0
          %9303 = vperm.xlu0 %9302, %v9258
          %v9304 = vpop.permute.xlu0 %9303
          %9307 = vset.pattern.permute.xlu0 0
          %9308 = vperm.xlu0 %9307, %v9259
          %v9309 = vpop.permute.xlu0 %9308
          %9312 = vset.pattern.permute.xlu0 0
          %9313 = vperm.xlu0 %9312, %v9260
          %v9314 = vpop.permute.xlu0 %9313
          %v9316 = vadd.f32 %v9235, %v9264
          %v9317 = vadd.f32 %v9236, %v9269
          %v9318 = vadd.f32 %v9237, %v9274
          %v9319 = vadd.f32 %v9238, %v9279
          %v9320 = vadd.f32 %v9239, %v9284
          %v9321 = vadd.f32 %v9240, %v9289
          %v9322 = vadd.f32 %v9241, %v9294
          %v9323 = vadd.f32 %v9242, %v9299
          %v9324 = vadd.f32 %v9243, %v9304
          %v9325 = vadd.f32 %v9244, %v9309
          %v9326 = vadd.f32 %v9245, %v9314
          %9327 = vst [vmem:[%s926] sm:$0xff] %v9316
          %9328 = vst [vmem:[%s926 + $0x8] sm:$0xff] %v9317
          %9329 = vst [vmem:[%s926 + $0x10] sm:$0xff] %v9318
          %9330 = vst [vmem:[%s926 + $0x18] sm:$0xff] %v9319
          %9331 = vst [vmem:[%s926 + $0x20] sm:$0xff] %v9320
          %9332 = vst [vmem:[%s926 + $0x28] sm:$0xff] %v9321
          %9333 = vst [vmem:[%s926 + $0x30] sm:$0xff] %v9322
          %9334 = vst [vmem:[%s926 + $0x38] sm:$0xff] %v9323
          %9335 = vst [vmem:[%s926 + $0x40] sm:$0xff] %v9324
          %9336 = vst [vmem:[%s926 + $0x48] sm:$0xff] %v9325
          %9337 = vst [vmem:[%s926 + $0x50] sm:$0x7] %v9326
        $region75: #{model_forward.1} parent=66 // pred_fallthru
          _
        %p9338 = scmp.ne.s32.totalorder %s25, 0
        // Predicated region
        $region76: #{model_forward.1} parent=66 // pred_check
          %p9339 = pneg %p9338
        $region77: #{model_forward.1} parent=66 // pred_check_branch
          %9341 = sbr.rel (%p9339) target = $region79
        $region78: #{model_forward.1} parent=66 // pred_region
          %v9342 = vld [vmem:[%s926] sm:$0xff]
          %v9343 = vld [vmem:[%s926 + $0x8] sm:$0xff]
          %v9344 = vld [vmem:[%s926 + $0x10] sm:$0xff]
          %v9345 = vld [vmem:[%s926 + $0x18] sm:$0xff]
          %v9346 = vld [vmem:[%s926 + $0x20] sm:$0xff]
          %v9347 = vld [vmem:[%s926 + $0x28] sm:$0xff]
          %v9348 = vld [vmem:[%s926 + $0x30] sm:$0xff]
          %v9349 = vld [vmem:[%s926 + $0x38] sm:$0xff]
          %v9350 = vld [vmem:[%s926 + $0x40] sm:$0xff]
          %v9351 = vld [vmem:[%s926 + $0x48] sm:$0xff]
          %v9352 = vld [vmem:[%s926 + $0x50] sm:$0x7]
          %v9353 = vadd.f32 %v9342, %v9235
          %v9354 = vadd.f32 %v9343, %v9236
          %v9355 = vadd.f32 %v9344, %v9237
          %v9356 = vadd.f32 %v9345, %v9238
          %v9357 = vadd.f32 %v9346, %v9239
          %v9358 = vadd.f32 %v9347, %v9240
          %v9359 = vadd.f32 %v9348, %v9241
          %v9360 = vadd.f32 %v9349, %v9242
          %v9361 = vadd.f32 %v9350, %v9243
          %v9362 = vadd.f32 %v9351, %v9244
          %v9363 = vadd.f32 %v9352, %v9245
          %9364 = vst [vmem:[%s926] sm:$0xff] %v9353
          %9365 = vst [vmem:[%s926 + $0x8] sm:$0xff] %v9354
          %9366 = vst [vmem:[%s926 + $0x10] sm:$0xff] %v9355
          %9367 = vst [vmem:[%s926 + $0x18] sm:$0xff] %v9356
          %9368 = vst [vmem:[%s926 + $0x20] sm:$0xff] %v9357
          %9369 = vst [vmem:[%s926 + $0x28] sm:$0xff] %v9358
          %9370 = vst [vmem:[%s926 + $0x30] sm:$0xff] %v9359
          %9371 = vst [vmem:[%s926 + $0x38] sm:$0xff] %v9360
          %9372 = vst [vmem:[%s926 + $0x40] sm:$0xff] %v9361
          %9373 = vst [vmem:[%s926 + $0x48] sm:$0xff] %v9362
          %9374 = vst [vmem:[%s926 + $0x50] sm:$0x7] %v9363
        $region79: #{model_forward.1} parent=66 // pred_fallthru
          _
        %p9375 = scmp.eq.s32.totalorder %s25, 3
        // Predicated region
        $region80: #{model_forward.1} parent=66 // pred_check
          %p9376 = pneg %p9375
        $region81: #{model_forward.1} parent=66 // pred_check_branch
          %9378 = sbr.rel (%p9376) target = $region83
        $region82: #{model_forward.1} parent=66 // pred_region
          %v9379 = vld [vmem:[%s926] sm:$0xff]
          %v9380 = vld [vmem:[%s926 + $0x8] sm:$0xff]
          %v9381 = vld [vmem:[%s926 + $0x10] sm:$0xff]
          %v9382 = vld [vmem:[%s926 + $0x18] sm:$0xff]
          %v9383 = vld [vmem:[%s926 + $0x20] sm:$0xff]
          %v9384 = vld [vmem:[%s926 + $0x28] sm:$0xff]
          %v9385 = vld [vmem:[%s926 + $0x30] sm:$0xff]
          %v9386 = vld [vmem:[%s926 + $0x38] sm:$0xff]
          %v9387 = vld [vmem:[%s926 + $0x40] sm:$0xff]
          %v9388 = vld [vmem:[%s926 + $0x48] sm:$0xff]
          %v9389 = vld [vmem:[%s926 + $0x50] sm:$0x7]
          %v9390 = vmax.f32 %v9379, %v9383
          %v9391 = vmax.f32 %v9380, %v9384
          %v9392 = vmax.f32 %v9381, %v9385
          %v9393 = vmax.f32 %v9382, %v9386
          %v9394 = vmax.f32 %v9390, %v9387
          %v9395 = vmax.f32 %v9391, %v9388
          %vm9396 = vcmask 1042432
          %v9397 = vsel %vm9396, %v9389, -inf
          %v9398 = vmax.f32 %v9392, %v9397
          %v9399 = vmax.f32 %v9394, %v9395
          %v9400 = vmax.f32 %v9398, %v9393
          %v9401 = vmax.f32 %v9399, %v9400
          %v9402 = vrot.slane %v9401, 4
          %v9403 = vmax.f32 %v9401, %v9402
          %v9404 = vrot.slane %v9403, 2
          %v9405 = vmax.f32 %v9403, %v9404
          %v9406 = vrot.slane %v9405, 1
          %v9407 = vmax.f32 %v9405, %v9406
          %v9408 = vsub.f32 %v9379, %v9407
          %v9409 = vsub.f32 %v9380, %v9407
          %v9410 = vsub.f32 %v9381, %v9407
          %v9411 = vsub.f32 %v9382, %v9407
          %v9412 = vsub.f32 %v9383, %v9407
          %v9413 = vsub.f32 %v9384, %v9407
          %v9414 = vsub.f32 %v9385, %v9407
          %v9415 = vsub.f32 %v9386, %v9407
          %v9416 = vsub.f32 %v9387, %v9407
          %v9417 = vsub.f32 %v9388, %v9407
          %v9418 = vsub.f32 %v9389, %v9407
          %v9419 = vmul.f32 %v9408, 1.442695
          %v9420 = vpow.pop %v9419
          %v9421 = vmul.f32 %v9409, 1.442695
          %v9422 = vpow.pop %v9421
          %v9423 = vmul.f32 %v9410, 1.442695
          %v9424 = vpow.pop %v9423
          %v9425 = vmul.f32 %v9411, 1.442695
          %v9426 = vpow.pop %v9425
          %v9427 = vmul.f32 %v9412, 1.442695
          %v9428 = vpow.pop %v9427
          %v9429 = vmul.f32 %v9413, 1.442695
          %v9430 = vpow.pop %v9429
          %v9431 = vmul.f32 %v9414, 1.442695
          %v9432 = vpow.pop %v9431
          %v9433 = vmul.f32 %v9415, 1.442695
          %v9434 = vpow.pop %v9433
          %v9435 = vmul.f32 %v9416, 1.442695
          %v9436 = vpow.pop %v9435
          %v9437 = vmul.f32 %v9417, 1.442695
          %v9438 = vpow.pop %v9437
          %v9439 = vmul.f32 %v9418, 1.442695
          %v9440 = vpow.pop %v9439
          %v9441 = vadd.f32 %v9420, %v9422
          %v9442 = vadd.f32 %v9441, %v9424
          %v9443 = vadd.f32 %v9442, %v9426
          %v9444 = vadd.f32 %v9443, %v9428
          %v9445 = vadd.f32 %v9444, %v9430
          %v9446 = vadd.f32 %v9445, %v9432
          %v9447 = vadd.f32 %v9446, %v9434
          %v9448 = vadd.f32 %v9447, %v9436
          %v9449 = vadd.f32 %v9448, %v9438
          %v9450 = vsel %vm9396, %v9440, 0.0
          %v9451 = vadd.f32 %v9449, %v9450
          %v9452 = vrot.slane %v9451, 4
          %v9453 = vadd.f32 %v9451, %v9452
          %v9454 = vrot.slane %v9453, 2
          %v9455 = vadd.f32 %v9453, %v9454
          %v9456 = vrot.slane %v9455, 1
          %v9457 = vadd.f32 %v9455, %v9456
          %v9458 = vlog2.pop %v9457
          %v9459 = vmul.f32 %v9458, 0.6931472
          %v9460 = vsub.f32 %v9408, %v9459
          %v9461 = vsub.f32 %v9409, %v9459
          %v9462 = vsub.f32 %v9410, %v9459
          %v9463 = vsub.f32 %v9411, %v9459
          %v9464 = vsub.f32 %v9412, %v9459
          %v9465 = vsub.f32 %v9413, %v9459
          %v9466 = vsub.f32 %v9414, %v9459
          %v9467 = vsub.f32 %v9415, %v9459
          %v9468 = vsub.f32 %v9416, %v9459
          %v9469 = vsub.f32 %v9417, %v9459
          %v9470 = vsub.f32 %v9418, %v9459
          %9471 = vst [vmem:[%s926] sm:$0xff] %v9460
          %9472 = vst [vmem:[%s926 + $0x8] sm:$0xff] %v9461
          %9473 = vst [vmem:[%s926 + $0x10] sm:$0xff] %v9462
          %9474 = vst [vmem:[%s926 + $0x18] sm:$0xff] %v9463
          %9475 = vst [vmem:[%s926 + $0x20] sm:$0xff] %v9464
          %9476 = vst [vmem:[%s926 + $0x28] sm:$0xff] %v9465
          %9477 = vst [vmem:[%s926 + $0x30] sm:$0xff] %v9466
          %9478 = vst [vmem:[%s926 + $0x38] sm:$0xff] %v9467
          %9479 = vst [vmem:[%s926 + $0x40] sm:$0xff] %v9468
          %9480 = vst [vmem:[%s926 + $0x48] sm:$0xff] %v9469
          %9481 = vst [vmem:[%s926 + $0x50] sm:$0x7] %v9470
        $region83: #{model_forward.1} parent=66 // pred_fallthru
          _
        %s9482 = sand.u32 %s196, 1
        %s9483 = sand.u32 %s196, 1
        %s9484 = smul.addr %s9483, 256
        %s9485 = scalar_lea.vmem [#allocation3], %s9484
        %p9486 = scmp.lt.s32.totalorder %s24, 1
        %s9487 = scalar_select %p9486, %s24, 1
        %s9488 = smul.addr %s9487, 11
        %s9489 = smul.addr %s9488, 8
        %s9490 = scalar_lea.vmem %s8, %s9489
        // Predicated region
        $region84: #{model_forward.1} parent=66 // pred_check
          %p9491 = pneg %p206
        $region85: #{model_forward.1} parent=66 // pred_check_branch
          %9493 = sbr.rel (%p9491) target = $region87
        $region86: #{model_forward.1} parent=66 // pred_region
          %s9494 = smul.u32 8, %s25
          %s9495 = smul.addr %s24, 128
          %s9496 = sadd.s32 %s9494, %s9495
          %s9497 = smul.addr %s9496, 8
          %s9498 = scalar_lea.vmem %s7, %s9497
          // Predicated region
          $region88: #{model_forward.1} parent=86 // pred_check
            _
          $region89: #{model_forward.1} parent=86 // pred_check_branch
            %9500 = sbr.rel (0) target = $region91
          $region90: #{model_forward.1} parent=86 // pred_region
            // Predicated region
            $region92: #{model_forward.1} parent=90 // pred_check
              _
            $region93: #{model_forward.1} parent=90 // pred_check_branch
              %9502 = sbr.rel (0) target = $region95
            $region94: #{model_forward.1} parent=90 // pred_region
              loop: start=0, step=1, limit=1
              $region96: #{model_forward.1} parent=94 // loop_pre_header
                _
              $region97: #{model_forward.1} parent=94 // loop_header
                %s9504 = sphi 0, %s9508
                %p9505 = scmp.ge.s32.totalorder %s9504, 1
                %s9509 = sphi %s9485, %s9485
                %s9510 = sphi %s9498, %s9498
              $region98: #{model_forward.1} parent=94 // loop_header_branch
                %9507 = sbr.rel (%p9505) target = $region102
              $region99: #{model_forward.1} parent=94 // loop_body
                %v9511 = vld [vmem:[%s9509] sm:$0xff]
                %9512 = vst [vmem:[%s9510] sm:$0xff] %v9511
                %v9513 = vld [vmem:[%s9509 + $0x8] sm:$0xff]
                %9514 = vst [vmem:[%s9510 + $0x8] sm:$0xff] %v9513
                %v9515 = vld [vmem:[%s9509 + $0x10] sm:$0xff]
                %9516 = vst [vmem:[%s9510 + $0x10] sm:$0xff] %v9515
                %v9517 = vld [vmem:[%s9509 + $0x18] sm:$0xff]
                %9518 = vst [vmem:[%s9510 + $0x18] sm:$0xff] %v9517
                %v9519 = vld [vmem:[%s9509 + $0x20] sm:$0xff]
                %9520 = vst [vmem:[%s9510 + $0x20] sm:$0xff] %v9519
                %v9521 = vld [vmem:[%s9509 + $0x28] sm:$0xff]
                %9522 = vst [vmem:[%s9510 + $0x28] sm:$0xff] %v9521
                %v9523 = vld [vmem:[%s9509 + $0x30] sm:$0xff]
                %9524 = vst [vmem:[%s9510 + $0x30] sm:$0xff] %v9523
                %v9525 = vld [vmem:[%s9509 + $0x38] sm:$0xff]
                %9526 = vst [vmem:[%s9510 + $0x38] sm:$0xff] %v9525
                %v9527 = vld [vmem:[%s9509 + $0x40] sm:$0xff]
                %9528 = vst [vmem:[%s9510 + $0x100] sm:$0xff] %v9527
                %v9529 = vld [vmem:[%s9509 + $0x48] sm:$0xff]
                %9530 = vst [vmem:[%s9510 + $0x108] sm:$0xff] %v9529
                %v9531 = vld [vmem:[%s9509 + $0x50] sm:$0xff]
                %9532 = vst [vmem:[%s9510 + $0x110] sm:$0xff] %v9531
                %v9533 = vld [vmem:[%s9509 + $0x58] sm:$0xff]
                %9534 = vst [vmem:[%s9510 + $0x118] sm:$0xff] %v9533
                %v9535 = vld [vmem:[%s9509 + $0x60] sm:$0xff]
                %9536 = vst [vmem:[%s9510 + $0x120] sm:$0xff] %v9535
                %v9537 = vld [vmem:[%s9509 + $0x68] sm:$0xff]
                %9538 = vst [vmem:[%s9510 + $0x128] sm:$0xff] %v9537
                %v9539 = vld [vmem:[%s9509 + $0x70] sm:$0xff]
                %9540 = vst [vmem:[%s9510 + $0x130] sm:$0xff] %v9539
                %v9541 = vld [vmem:[%s9509 + $0x78] sm:$0xff]
                %9542 = vst [vmem:[%s9510 + $0x138] sm:$0xff] %v9541
                %v9543 = vld [vmem:[%s9509 + $0x80] sm:$0xff]
                %9544 = vst [vmem:[%s9510 + $0x200] sm:$0xff] %v9543
                %v9545 = vld [vmem:[%s9509 + $0x88] sm:$0xff]
                %9546 = vst [vmem:[%s9510 + $0x208] sm:$0xff] %v9545
                %v9547 = vld [vmem:[%s9509 + $0x90] sm:$0xff]
                %9548 = vst [vmem:[%s9510 + $0x210] sm:$0xff] %v9547
                %v9549 = vld [vmem:[%s9509 + $0x98] sm:$0xff]
                %9550 = vst [vmem:[%s9510 + $0x218] sm:$0xff] %v9549
                %v9551 = vld [vmem:[%s9509 + $0xa0] sm:$0xff]
                %9552 = vst [vmem:[%s9510 + $0x220] sm:$0xff] %v9551
                %v9553 = vld [vmem:[%s9509 + $0xa8] sm:$0xff]
                %9554 = vst [vmem:[%s9510 + $0x228] sm:$0xff] %v9553
                %v9555 = vld [vmem:[%s9509 + $0xb0] sm:$0xff]
                %9556 = vst [vmem:[%s9510 + $0x230] sm:$0xff] %v9555
                %v9557 = vld [vmem:[%s9509 + $0xb8] sm:$0xff]
                %9558 = vst [vmem:[%s9510 + $0x238] sm:$0xff] %v9557
                %v9559 = vld [vmem:[%s9509 + $0xc0] sm:$0xff]
                %9560 = vst [vmem:[%s9510 + $0x300] sm:$0xff] %v9559
                %v9561 = vld [vmem:[%s9509 + $0xc8] sm:$0xff]
                %9562 = vst [vmem:[%s9510 + $0x308] sm:$0xff] %v9561
                %v9563 = vld [vmem:[%s9509 + $0xd0] sm:$0xff]
                %9564 = vst [vmem:[%s9510 + $0x310] sm:$0xff] %v9563
                %v9565 = vld [vmem:[%s9509 + $0xd8] sm:$0xff]
                %9566 = vst [vmem:[%s9510 + $0x318] sm:$0xff] %v9565
                %v9567 = vld [vmem:[%s9509 + $0xe0] sm:$0xff]
                %9568 = vst [vmem:[%s9510 + $0x320] sm:$0xff] %v9567
                %v9569 = vld [vmem:[%s9509 + $0xe8] sm:$0xff]
                %9570 = vst [vmem:[%s9510 + $0x328] sm:$0xff] %v9569
                %v9571 = vld [vmem:[%s9509 + $0xf0] sm:$0xff]
                %9572 = vst [vmem:[%s9510 + $0x330] sm:$0xff] %v9571
                %v9573 = vld [vmem:[%s9509 + $0xf8] sm:$0xff]
                %9574 = vst [vmem:[%s9510 + $0x338] sm:$0xff] %v9573
              $region100: #{model_forward.1} parent=94 // loop_footer
                %s9508 = sadd.s32 1, %s9504
              $region101: #{model_forward.1} parent=94 // loop_footer_branch
                %9503 = sbr.rel target = $region97
              $region102: #{model_forward.1} parent=94 // loop_exit
                _
            $region95: #{model_forward.1} parent=90 // pred_fallthru
              _
            // Predicated region
            $region103: #{model_forward.1} parent=90 // pred_check
              _
            $region104: #{model_forward.1} parent=90 // pred_check_branch
              %9576 = sbr.rel target = $region106
            $region105: #{model_forward.1} parent=90 // pred_region
              _
            $region106: #{model_forward.1} parent=90 // pred_fallthru
              _
          $region91: #{model_forward.1} parent=86 // pred_fallthru
            _
          %9577 = vnop
        $region87: #{model_forward.1} parent=66 // pred_fallthru
          _
        // Predicated region
        $region107: #{model_forward.1} parent=66 // pred_check
          %p9578 = pneg %p232
        $region108: #{model_forward.1} parent=66 // pred_check_branch
          %9580 = sbr.rel (%p9578) target = $region110
        $region109: #{model_forward.1} parent=66 // pred_region
          _
        $region110: #{model_forward.1} parent=66 // pred_fallthru
          _
      $region67: #{model_forward.1} parent=5 // pred_fallthru
        _
      %p9581 = scmp.le.s32.totalorder 2, %s15
      // Predicated region
      $region111: #{model_forward.1} parent=5 // pred_check
        %p9582 = pneg %p9581
      $region112: #{model_forward.1} parent=5 // pred_check_branch
        %9584 = sbr.rel (%p9582) target = $region114
      $region113: #{model_forward.1} parent=5 // pred_region
        %s9585 = ssub.s32 %s15, 2
        // Predicated region
        $region115: #{model_forward.1} parent=113 // pred_check
          %p9586 = pneg %p212
        $region116: #{model_forward.1} parent=113 // pred_check_branch
          %9588 = sbr.rel (%p9586) target = $region118
        $region117: #{model_forward.1} parent=113 // pred_region
          %s9589 = sand.u32 %s197, 1
          %s9590 = sand.u32 %s197, 1
          %s9591 = smul.addr %s9590, 256
          %s9592 = scalar_lea.vmem [#allocation3], %s9591
        $region118: #{model_forward.1} parent=113 // pred_fallthru
          _
        // Predicated region
        $region119: #{model_forward.1} parent=113 // pred_check
          %p9593 = pneg %p238
        $region120: #{model_forward.1} parent=113 // pred_check_branch
          %9595 = sbr.rel (%p9593) target = $region122
        $region121: #{model_forward.1} parent=113 // pred_region
          %p9596 = scmp.lt.s32.totalorder %s26, 1
          %s9597 = scalar_select %p9596, %s26, 1
          %s9598 = smul.addr %s9597, 11
          %s9599 = smul.addr %s9598, 8
          %s9600 = scalar_lea.vmem %s8, %s9599
        $region122: #{model_forward.1} parent=113 // pred_fallthru
          _
      $region114: #{model_forward.1} parent=5 // pred_fallthru
        _
    $region6: #{model_forward.1} parent=1 // loop_footer
      %s19 = sadd.s32 1, %s15
    $region7: #{model_forward.1} parent=1 // loop_footer_branch
      %14 = sbr.rel target = $region3
    $region8: #{model_forward.1} parent=1 // loop_exit
      _

</llo_original>
